<compile_context>
chip_gen: v7x
topology: tpu7x:2x2x1
jax: 0.10.0
libtpu: 0.0.40
codegen_flags: <defaults>
</compile_context>

<pallas_src>
import functools

import jax
import jax.numpy as jnp
from jax.experimental import pallas as pl
from jax.experimental.pallas import tpu as pltpu


def _round_up(n, m):
    return ((n + m - 1) // m) * m


# ----------------------------------------------------------------------------
# Kernel 1: conv2d(valid) + ReLU as a tiled matmul over im2col patches
# ----------------------------------------------------------------------------

def _conv_matmul_kernel(a_ref, w_ref, b_ref, o_ref, acc_ref):
    """out = relu(A @ W + bias), K reduction on grid axis 1.

    a_ref: (TM, TK) bf16, w_ref: (TK, Fp) bf16, b_ref: (1, Fp) f32,
    o_ref: (TM, Fp) bf16, acc_ref: (TM, Fp) f32 scratch.
    """
    k = pl.program_id(1)

    @pl.when(k == 0)
    def _():
        acc_ref[...] = jnp.zeros_like(acc_ref)

    acc_ref[...] += jnp.dot(a_ref[...], w_ref[...],
                            preferred_element_type=jnp.float32)

    @pl.when(k == pl.num_programs(1) - 1)
    def _():
        # f32 epilogue (bias + ReLU), cast to bf16 only at the store.
        o_ref[...] = jnp.maximum(acc_ref[...] + b_ref[...], 0.0).astype(o_ref.dtype)


def _im2col(x, kh, kw):
    """x: (B, C, H, W) NCHW -> patches (B, Ho*Wo, C*kh*kw); channel-major order
    matching torch's weight.reshape(F, C*kh*kw) flattening."""
    B, C, H, W = x.shape
    Ho, Wo = H - kh + 1, W - kw + 1
    cols = []
    for i in range(kh):
        for j in range(kw):
            cols.append(x[:, :, i:i + Ho, j:j + Wo])         # (B, C, Ho, Wo)
    patches = jnp.stack(cols, axis=2)                         # (B, C, kh*kw, Ho, Wo)
    patches = patches.transpose(0, 3, 4, 1, 2)                # (B, Ho, Wo, C, kh*kw)
    return patches.reshape(B, Ho * Wo, C * kh * kw), Ho, Wo


def features(x, weight, bias, *, tm_max=512, tk_max=512):
    """conv2d(valid) + ReLU.

    x: (B, C, H, W) f32 NCHW, weight: (F, C, kh, kw), bias: (F,).
    Returns NHWC bf16 with F padded to a lane multiple: (B, Ho, Wo, Fp).
    Padded channels are exactly zero, so downstream dot-products over Fp match
    dot-products over F.
    """
    B, C, H, W = x.shape
    F, _, kh, kw = weight.shape
    patches, Ho, Wo = _im2col(x, kh, kw)                      # (B, Ho*Wo, K)
    K = C * kh * kw
    M = B * Ho * Wo

    Fp = _round_up(F, 128)
    Kp = _round_up(K, 128)
    tk = min(tk_max, Kp)
    Kp = _round_up(Kp, tk)
    tm = min(tm_max, _round_up(M, 8))
    Mp = _round_up(M, tm)

    # cast to bf16 *before* padding so XLA never materializes padded f32 copies
    a = patches.reshape(M, K).astype(jnp.bfloat16)
    a = jnp.pad(a, ((0, Mp - M), (0, Kp - K)))
    w = weight.reshape(F, K).T.astype(jnp.bfloat16)           # (K, F)
    w = jnp.pad(w, ((0, Kp - K), (0, Fp - F)))
    b = jnp.pad(bias.astype(jnp.float32).reshape(1, F), ((0, 0), (0, Fp - F)))

    out = pl.pallas_call(
        _conv_matmul_kernel,
        out_shape=jax.ShapeDtypeStruct((Mp, Fp), jnp.bfloat16),
        grid=(Mp // tm, Kp // tk),
        in_specs=[pl.BlockSpec((tm, tk), lambda i, k: (i, k)),
                  pl.BlockSpec((tk, Fp), lambda i, k: (k, 0)),
                  pl.BlockSpec((1, Fp), lambda i, k: (0, 0))],
        out_specs=pl.BlockSpec((tm, Fp), lambda i, k: (i, 0)),
        scratch_shapes=[pltpu.VMEM((tm, Fp), jnp.float32)],
        compiler_params=pltpu.CompilerParams(
            dimension_semantics=("parallel", "arbitrary"),
            vmem_limit_bytes=32 * 1024 * 1024),
    )(a, w, b)

    # NHWC, F kept padded (lane-dense); no transpose back to NCHW.
    return out[:M].reshape(B, Ho, Wo, Fp)


# ----------------------------------------------------------------------------
# Kernel 2: fused sliding-window cross-correlation + weighted BCE loss
# ----------------------------------------------------------------------------

def _xcorr_bce_kernel(z_ref, x_ref, y_ref, o_ref,
                      sp_ref, cp_ref, sn_ref, cn_ref,
                      *, hz, wz, Ho, Wo, adjust_scale):
    """Per-batch xcorr (sliding window over VMEM-resident feature maps) fused
    with the weighted-BCE partial sums; final loss written on the last step.

    z_ref: (1, hz, wz, Fp) bf16   template feature (the "kernel")
    x_ref: (1, hx, wx, Fp) bf16   search feature
    y_ref: (1, Ho, Wo)     f32    label
    o_ref: (8, 128)        f32    loss, broadcast (written on last grid step)
    sp/cp/sn/cn: (1, 1)    f32    running sum(bce|pos), count(pos), sum(bce|neg), count(neg)
    """
    b = pl.program_id(0)
    Fp = z_ref.shape[-1]

    @pl.when(b == 0)
    def _():
        sp_ref[...] = jnp.zeros_like(sp_ref)
        cp_ref[...] = jnp.zeros_like(cp_ref)
        sn_ref[...] = jnp.zeros_like(sn_ref)
        cn_ref[...] = jnp.zeros_like(cn_ref)

    # sliding-window cross-correlation: accumulate hz*wz shifted contributions,
    # keeping the F axis on lanes; one XLU lane-reduce per template row.
    score = jnp.zeros((Ho, Wo), jnp.float32)
    for di in range(hz):
        row_acc = jnp.zeros((Ho, Wo, Fp), jnp.float32)
        for dj in range(wz):
            xs = x_ref[0, di:di + Ho, dj:dj + Wo, :].astype(jnp.float32)
            zv = z_ref[0, di, dj:dj + 1, :].astype(jnp.float32).reshape(1, 1, Fp)
            row_acc = row_acc + xs * zv
        score = score + jnp.sum(row_acc, axis=-1)
    score = adjust_scale * score                              # (Ho, Wo)

    # weighted BCE-with-logits partial sums (matches nn.BCEWithLogitsLoss)
    y = y_ref[0]                                              # (Ho, Wo)
    bce = jnp.maximum(score, 0.0) - score * y + jnp.log1p(jnp.exp(-jnp.abs(score)))
    pos = (y == 1.0).astype(jnp.float32)
    neg = (y == 0.0).astype(jnp.float32)
    sp_ref[...] += jnp.sum(bce * pos, keepdims=True)
    cp_ref[...] += jnp.sum(pos, keepdims=True)
    sn_ref[...] += jnp.sum(bce * neg, keepdims=True)
    cn_ref[...] += jnp.sum(neg, keepdims=True)

    @pl.when(b == pl.num_programs(0) - 1)
    def _():
        # max(count, 1) guard: an absent class contributes 0 (the torch
        # index_select path would instead error) -- deliberate difference.
        loss_pos = sp_ref[...] / jnp.maximum(cp_ref[...], 1.0)
        loss_neg = sn_ref[...] / jnp.maximum(cn_ref[...], 1.0)
        loss = 0.5 * loss_pos + 0.5 * loss_neg                # (1, 1)
        o_ref[...] = jnp.broadcast_to(loss, o_ref.shape)


def connect_and_weighted_bce(zf, xf, label, adjust_scale=1e-3):
    """connect_model (full xcorr * adjust_scale) fused with _weighted_BCE.

    zf: (B, hz, wz, Fp) bf16 NHWC, xf: (B, hx, wx, Fp) bf16 NHWC,
    label: (B, 1, Ho, Wo). Returns scalar loss.
    """
    B, hz, wz, Fp = zf.shape
    _, hx, wx, _ = xf.shape
    Ho, Wo = hx - hz + 1, wx - wz + 1
    y = label.reshape(B, Ho, Wo).astype(jnp.float32)

    out = pl.pallas_call(
        functools.partial(_xcorr_bce_kernel, hz=hz, wz=wz, Ho=Ho, Wo=Wo,
                          adjust_scale=adjust_scale),
        out_shape=jax.ShapeDtypeStruct((8, 128), jnp.float32),
        grid=(B,),
        in_specs=[pl.BlockSpec((1, hz, wz, Fp), lambda b: (b, 0, 0, 0)),
                  pl.BlockSpec((1, hx, wx, Fp), lambda b: (b, 0, 0, 0)),
                  pl.BlockSpec((1, Ho, Wo), lambda b: (b, 0, 0))],
        out_specs=pl.BlockSpec((8, 128), lambda b: (0, 0)),
        scratch_shapes=[pltpu.VMEM((1, 1), jnp.float32)] * 4,
        compiler_params=pltpu.CompilerParams(
            dimension_semantics=("arbitrary",),       # running loss accumulators
            vmem_limit_bytes=32 * 1024 * 1024),
    )(zf, xf, y)
    return out[0, 0]


# ----------------------------------------------------------------------------
# SiamFC.forward (training mode)
# ----------------------------------------------------------------------------

@jax.jit
def siamfc_forward(template, search, label, conv_w, conv_b):
    """SiamFC.forward in training mode -> scalar weighted-BCE loss."""
    zf = features(template, conv_w, conv_b)     # (B, hz, wz, Fp) bf16 NHWC
    xf = features(search, conv_w, conv_b)       # (B, hx, wx, Fp) bf16 NHWC
    return connect_and_weighted_bce(zf, xf, label)


# ----------------------------------------------------------------------------
# Demo
# ----------------------------------------------------------------------------

if __name__ == "__main__":
    key = jax.random.PRNGKey(0)
    k_t, k_s, k_l, k_w, k_b = jax.random.split(key, 5)

    B, C, F = 2, 4, 8
    HZ, HX, KH = 8, 16, 3                                     # template / search / conv kernel

    template = jax.random.normal(k_t, (B, C, HZ, HZ), dtype=jnp.float32)
    search = jax.random.normal(k_s, (B, C, HX, HX), dtype=jnp.float32)

    conv_w = 0.1 * jax.random.normal(k_w, (F, C, KH, KH), dtype=jnp.float32)
    conv_b = 0.01 * jax.random.normal(k_b, (F,), dtype=jnp.float32)

    # score map spatial size: (HX-KH+1) - (HZ-KH+1) + 1 = HX - HZ + 1 = 9
    Hs = HX - HZ + 1
    label = jax.random.bernoulli(k_l, p=0.25, shape=(B, 1, Hs, Hs)).astype(jnp.float32)
    # guarantee both classes are present (mirrors the nonzero()/index_select path)
    label = label.at[0, 0, 0, 0].set(1.0).at[0, 0, 0, 1].set(0.0)

    loss = siamfc_forward(template, search, label, conv_w, conv_b)
    loss = jax.block_until_ready(loss)
    assert loss.shape == () and jnp.isfinite(loss)
    print("KERNEL_OK")
</pallas_src>

<mosaic_0001>
module attributes {stable_mosaic.version = 11 : i64} {
  func.func @_conv_matmul_kernel(%arg0: i32, %arg1: i32, %arg2: memref<392x128xbf16, #tpu.memory_space<vmem>>, %arg3: memref<128x128xbf16, #tpu.memory_space<vmem>>, %arg4: memref<1x128xf32, #tpu.memory_space<vmem>>, %arg5: memref<392x128xbf16, #tpu.memory_space<vmem>>, %arg6: memref<392x128xf32, #tpu.memory_space<vmem>>) attributes {dimension_semantics = [#tpu.dimension_semantics<parallel>, #tpu.dimension_semantics<arbitrary>], iteration_bounds = array<i64: 1, 1>, scalar_prefetch = 0 : i64, scratch_operands = 1 : i64, tpu.core_type = #tpu.core_type<tc>, window_params = [{transform_indices = @transform_0, window_bounds = array<i64: 392, 128>}, {transform_indices = @transform_1, window_bounds = array<i64: 128, 128>}, {pipeline_mode = #tpu.pipeline_mode<synchronous>, transform_indices = @transform_2, window_bounds = array<i64: 1, 128>}, {transform_indices = @transform_3, window_bounds = array<i64: 392, 128>}]} {
    %c0_i32 = arith.constant 0 : i32
    %0 = arith.cmpi eq, %arg1, %c0_i32 : i32
    %1 = arith.extui %0 : i1 to i32
    %c0_i32_0 = arith.constant 0 : i32
    %2 = arith.cmpi ne, %1, %c0_i32_0 : i32
    scf.if %2 {
      %cst_10 = arith.constant 0.000000e+00 : f32
      %12 = vector.broadcast %cst_10 : f32 to vector<392x128xf32>
      %c0_11 = arith.constant 0 : index
      %c0_12 = arith.constant 0 : index
      %13 = vector.load %arg6[%c0_11, %c0_12] : memref<392x128xf32, #tpu.memory_space<vmem>>, vector<392x128xf32>
      tpu.vector_store %arg6[%c0_11, %c0_12], %12 {strides = array<i32>} : memref<392x128xf32, #tpu.memory_space<vmem>>, vector<392x128xf32>,
    } else {
    }
    %c0 = arith.constant 0 : index
    %c0_1 = arith.constant 0 : index
    %3 = vector.load %arg6[%c0, %c0_1] : memref<392x128xf32, #tpu.memory_space<vmem>>, vector<392x128xf32>
    %c0_2 = arith.constant 0 : index
    %c0_3 = arith.constant 0 : index
    %4 = vector.load %arg2[%c0_2, %c0_3] : memref<392x128xbf16, #tpu.memory_space<vmem>>, vector<392x128xbf16>
    %c0_4 = arith.constant 0 : index
    %c0_5 = arith.constant 0 : index
    %5 = vector.load %arg3[%c0_4, %c0_5] : memref<128x128xbf16, #tpu.memory_space<vmem>>, vector<128x128xbf16>
    %cst = arith.constant dense<0.000000e+00> : vector<392x128xf32>
    %6 = tpu.matmul %4, %5, %cst {dimension_numbers = #tpu.dot_dimension_numbers<[1], [0], [0], [1], [0, 0, 1, 1], [], []>} : vector<392x128xbf16>, vector<128x128xbf16>, vector<392x128xf32> -> vector<392x128xf32>
    %7 = arith.addf %3, %6 : vector<392x128xf32>
    %c0_6 = arith.constant 0 : index
    %c0_7 = arith.constant 0 : index
    %8 = vector.load %arg6[%c0_6, %c0_7] : memref<392x128xf32, #tpu.memory_space<vmem>>, vector<392x128xf32>
    tpu.vector_store %arg6[%c0_6, %c0_7], %7 {strides = array<i32>} : memref<392x128xf32, #tpu.memory_space<vmem>>, vector<392x128xf32>,
    %c0_i32_8 = arith.constant 0 : i32
    %9 = arith.cmpi eq, %arg1, %c0_i32_8 : i32
    %10 = arith.extui %9 : i1 to i32
    %c0_i32_9 = arith.constant 0 : i32
    %11 = arith.cmpi ne, %10, %c0_i32_9 : i32
    scf.if %11 {
      %c0_10 = arith.constant 0 : index
      %c0_11 = arith.constant 0 : index
      %12 = vector.load %arg6[%c0_10, %c0_11] : memref<392x128xf32, #tpu.memory_space<vmem>>, vector<392x128xf32>
      %c0_12 = arith.constant 0 : index
      %c0_13 = arith.constant 0 : index
      %13 = vector.load %arg4[%c0_12, %c0_13] : memref<1x128xf32, #tpu.memory_space<vmem>>, vector<1x128xf32>
      %14 = vector.broadcast %13 : vector<1x128xf32> to vector<392x128xf32>
      %15 = arith.addf %12, %14 : vector<392x128xf32>
      %cst_14 = arith.constant 0.000000e+00 : f32
      %16 = vector.broadcast %cst_14 : f32 to vector<392x128xf32>
      %17 = arith.maximumf %15, %16 : vector<392x128xf32>
      %18 = arith.truncf %17 : vector<392x128xf32> to vector<392x128xbf16>
      %c0_15 = arith.constant 0 : index
      %c0_16 = arith.constant 0 : index
      %19 = vector.load %arg5[%c0_15, %c0_16] : memref<392x128xbf16, #tpu.memory_space<vmem>>, vector<392x128xbf16>
      tpu.vector_store %arg5[%c0_15, %c0_16], %18 {strides = array<i32>} : memref<392x128xbf16, #tpu.memory_space<vmem>>, vector<392x128xbf16>,
    } else {
    }
    return
  }
  func.func @transform_0(%arg0: i32, %arg1: i32) -> (i32, i32) {
    %c0_i32 = arith.constant 0 : i32
    return %arg0, %arg1 : i32, i32
  }
  func.func @transform_1(%arg0: i32, %arg1: i32) -> (i32, i32) {
    %c0_i32 = arith.constant 0 : i32
    %c0_i32_0 = arith.constant 0 : i32
    return %arg1, %c0_i32 : i32, i32
  }
  func.func @transform_2(%arg0: i32, %arg1: i32) -> (i32, i32) {
    %c0_i32 = arith.constant 0 : i32
    %c0_i32_0 = arith.constant 0 : i32
    %c0_i32_1 = arith.constant 0 : i32
    return %c0_i32, %c0_i32_0 : i32, i32
  }
  func.func @transform_3(%arg0: i32, %arg1: i32) -> (i32, i32) {
    %c0_i32 = arith.constant 0 : i32
    %c0_i32_0 = arith.constant 0 : i32
    return %arg0, %c0_i32 : i32, i32
  }
}

module attributes {stable_mosaic.version = 11 : i64} {
  func.func @_conv_matmul_kernel(%arg0: i32, %arg1: i32, %arg2: memref<72x128xbf16, #tpu.memory_space<vmem>>, %arg3: memref<128x128xbf16, #tpu.memory_space<vmem>>, %arg4: memref<1x128xf32, #tpu.memory_space<vmem>>, %arg5: memref<72x128xbf16, #tpu.memory_space<vmem>>, %arg6: memref<72x128xf32, #tpu.memory_space<vmem>>) attributes {dimension_semantics = [#tpu.dimension_semantics<parallel>, #tpu.dimension_semantics<arbitrary>], iteration_bounds = array<i64: 1, 1>, scalar_prefetch = 0 : i64, scratch_operands = 1 : i64, tpu.core_type = #tpu.core_type<tc>, window_params = [{transform_indices = @transform_0, window_bounds = array<i64: 72, 128>}, {transform_indices = @transform_1, window_bounds = array<i64: 128, 128>}, {pipeline_mode = #tpu.pipeline_mode<synchronous>, transform_indices = @transform_2, window_bounds = array<i64: 1, 128>}, {transform_indices = @transform_3, window_bounds = array<i64: 72, 128>}]} {
    %c0_i32 = arith.constant 0 : i32
    %0 = arith.cmpi eq, %arg1, %c0_i32 : i32
    %1 = arith.extui %0 : i1 to i32
    %c0_i32_0 = arith.constant 0 : i32
    %2 = arith.cmpi ne, %1, %c0_i32_0 : i32
    scf.if %2 {
      %cst_10 = arith.constant 0.000000e+00 : f32
      %12 = vector.broadcast %cst_10 : f32 to vector<72x128xf32>
      %c0_11 = arith.constant 0 : index
      %c0_12 = arith.constant 0 : index
      %13 = vector.load %arg6[%c0_11, %c0_12] : memref<72x128xf32, #tpu.memory_space<vmem>>, vector<72x128xf32>
      tpu.vector_store %arg6[%c0_11, %c0_12], %12 {strides = array<i32>} : memref<72x128xf32, #tpu.memory_space<vmem>>, vector<72x128xf32>,
    } else {
    }
    %c0 = arith.constant 0 : index
    %c0_1 = arith.constant 0 : index
    %3 = vector.load %arg6[%c0, %c0_1] : memref<72x128xf32, #tpu.memory_space<vmem>>, vector<72x128xf32>
    %c0_2 = arith.constant 0 : index
    %c0_3 = arith.constant 0 : index
    %4 = vector.load %arg2[%c0_2, %c0_3] : memref<72x128xbf16, #tpu.memory_space<vmem>>, vector<72x128xbf16>
    %c0_4 = arith.constant 0 : index
    %c0_5 = arith.constant 0 : index
    %5 = vector.load %arg3[%c0_4, %c0_5] : memref<128x128xbf16, #tpu.memory_space<vmem>>, vector<128x128xbf16>
    %cst = arith.constant dense<0.000000e+00> : vector<72x128xf32>
    %6 = tpu.matmul %4, %5, %cst {dimension_numbers = #tpu.dot_dimension_numbers<[1], [0], [0], [1], [0, 0, 1, 1], [], []>} : vector<72x128xbf16>, vector<128x128xbf16>, vector<72x128xf32> -> vector<72x128xf32>
    %7 = arith.addf %3, %6 : vector<72x128xf32>
    %c0_6 = arith.constant 0 : index
    %c0_7 = arith.constant 0 : index
    %8 = vector.load %arg6[%c0_6, %c0_7] : memref<72x128xf32, #tpu.memory_space<vmem>>, vector<72x128xf32>
    tpu.vector_store %arg6[%c0_6, %c0_7], %7 {strides = array<i32>} : memref<72x128xf32, #tpu.memory_space<vmem>>, vector<72x128xf32>,
    %c0_i32_8 = arith.constant 0 : i32
    %9 = arith.cmpi eq, %arg1, %c0_i32_8 : i32
    %10 = arith.extui %9 : i1 to i32
    %c0_i32_9 = arith.constant 0 : i32
    %11 = arith.cmpi ne, %10, %c0_i32_9 : i32
    scf.if %11 {
      %c0_10 = arith.constant 0 : index
      %c0_11 = arith.constant 0 : index
      %12 = vector.load %arg6[%c0_10, %c0_11] : memref<72x128xf32, #tpu.memory_space<vmem>>, vector<72x128xf32>
      %c0_12 = arith.constant 0 : index
      %c0_13 = arith.constant 0 : index
      %13 = vector.load %arg4[%c0_12, %c0_13] : memref<1x128xf32, #tpu.memory_space<vmem>>, vector<1x128xf32>
      %14 = vector.broadcast %13 : vector<1x128xf32> to vector<72x128xf32>
      %15 = arith.addf %12, %14 : vector<72x128xf32>
      %cst_14 = arith.constant 0.000000e+00 : f32
      %16 = vector.broadcast %cst_14 : f32 to vector<72x128xf32>
      %17 = arith.maximumf %15, %16 : vector<72x128xf32>
      %18 = arith.truncf %17 : vector<72x128xf32> to vector<72x128xbf16>
      %c0_15 = arith.constant 0 : index
      %c0_16 = arith.constant 0 : index
      %19 = vector.load %arg5[%c0_15, %c0_16] : memref<72x128xbf16, #tpu.memory_space<vmem>>, vector<72x128xbf16>
      tpu.vector_store %arg5[%c0_15, %c0_16], %18 {strides = array<i32>} : memref<72x128xbf16, #tpu.memory_space<vmem>>, vector<72x128xbf16>,
    } else {
    }
    return
  }
  func.func @transform_0(%arg0: i32, %arg1: i32) -> (i32, i32) {
    %c0_i32 = arith.constant 0 : i32
    return %arg0, %arg1 : i32, i32
  }
  func.func @transform_1(%arg0: i32, %arg1: i32) -> (i32, i32) {
    %c0_i32 = arith.constant 0 : i32
    %c0_i32_0 = arith.constant 0 : i32
    return %arg1, %c0_i32 : i32, i32
  }
  func.func @transform_2(%arg0: i32, %arg1: i32) -> (i32, i32) {
    %c0_i32 = arith.constant 0 : i32
    %c0_i32_0 = arith.constant 0 : i32
    %c0_i32_1 = arith.constant 0 : i32
    return %c0_i32, %c0_i32_0 : i32, i32
  }
  func.func @transform_3(%arg0: i32, %arg1: i32) -> (i32, i32) {
    %c0_i32 = arith.constant 0 : i32
    %c0_i32_0 = arith.constant 0 : i32
    return %arg0, %c0_i32 : i32, i32
  }
}

module attributes {stable_mosaic.version = 11 : i64} {
  func.func @_xcorr_bce_kernel(%arg0: i32, %arg1: memref<1x6x6x128xbf16, #tpu.memory_space<vmem>>, %arg2: memref<1x14x14x128xbf16, #tpu.memory_space<vmem>>, %arg3: memref<1x9x9xf32, #tpu.memory_space<vmem>>, %arg4: memref<8x128xf32, #tpu.memory_space<vmem>>, %arg5: memref<1x1xf32, #tpu.memory_space<vmem>>, %arg6: memref<1x1xf32, #tpu.memory_space<vmem>>, %arg7: memref<1x1xf32, #tpu.memory_space<vmem>>, %arg8: memref<1x1xf32, #tpu.memory_space<vmem>>) attributes {dimension_semantics = [#tpu.dimension_semantics<arbitrary>], iteration_bounds = array<i64: 2>, scalar_prefetch = 0 : i64, scratch_operands = 4 : i64, tpu.core_type = #tpu.core_type<tc>, window_params = [{transform_indices = @transform_0, window_bounds = array<i64: 1, 6, 6, 128>}, {transform_indices = @transform_1, window_bounds = array<i64: 1, 14, 14, 128>}, {transform_indices = @transform_2, window_bounds = array<i64: 1, 9, 9>}, {pipeline_mode = #tpu.pipeline_mode<synchronous>, transform_indices = @transform_3, window_bounds = array<i64: 8, 128>}]} {
    %c0_i32 = arith.constant 0 : i32
    %0 = arith.cmpi eq, %arg0, %c0_i32 : i32
    %1 = arith.extui %0 : i1 to i32
    %c0_i32_0 = arith.constant 0 : i32
    %2 = arith.cmpi ne, %1, %c0_i32_0 : i32
    scf.if %2 {
      %cst_324 = arith.constant 0.000000e+00 : f32
      %441 = vector.broadcast %cst_324 : f32 to vector<1x1xf32>
      %c0_325 = arith.constant 0 : index
      %c0_326 = arith.constant 0 : index
      %442 = vector.load %arg5[%c0_325, %c0_326] : memref<1x1xf32, #tpu.memory_space<vmem>>, vector<1x1xf32>
      tpu.vector_store %arg5[%c0_325, %c0_326], %441 {strides = array<i32>} : memref<1x1xf32, #tpu.memory_space<vmem>>, vector<1x1xf32>,
      %cst_327 = arith.constant 0.000000e+00 : f32
      %443 = vector.broadcast %cst_327 : f32 to vector<1x1xf32>
      %c0_328 = arith.constant 0 : index
      %c0_329 = arith.constant 0 : index
      %444 = vector.load %arg6[%c0_328, %c0_329] : memref<1x1xf32, #tpu.memory_space<vmem>>, vector<1x1xf32>
      tpu.vector_store %arg6[%c0_328, %c0_329], %443 {strides = array<i32>} : memref<1x1xf32, #tpu.memory_space<vmem>>, vector<1x1xf32>,
      %cst_330 = arith.constant 0.000000e+00 : f32
      %445 = vector.broadcast %cst_330 : f32 to vector<1x1xf32>
      %c0_331 = arith.constant 0 : index
      %c0_332 = arith.constant 0 : index
      %446 = vector.load %arg7[%c0_331, %c0_332] : memref<1x1xf32, #tpu.memory_space<vmem>>, vector<1x1xf32>
      tpu.vector_store %arg7[%c0_331, %c0_332], %445 {strides = array<i32>} : memref<1x1xf32, #tpu.memory_space<vmem>>, vector<1x1xf32>,
      %cst_333 = arith.constant 0.000000e+00 : f32
      %447 = vector.broadcast %cst_333 : f32 to vector<1x1xf32>
      %c0_334 = arith.constant 0 : index
      %c0_335 = arith.constant 0 : index
      %448 = vector.load %arg8[%c0_334, %c0_335] : memref<1x1xf32, #tpu.memory_space<vmem>>, vector<1x1xf32>
      tpu.vector_store %arg8[%c0_334, %c0_335], %447 {strides = array<i32>} : memref<1x1xf32, #tpu.memory_space<vmem>>, vector<1x1xf32>,
    } else {
    }
    %cst = arith.constant 0.000000e+00 : f32
    %3 = vector.broadcast %cst : f32 to vector<9x9xf32>
    %cst_1 = arith.constant 0.000000e+00 : f32
    %4 = vector.broadcast %cst_1 : f32 to vector<9x9x128xf32>
    %c0 = arith.constant 0 : index
    %c0_2 = arith.constant 0 : index
    %c0_3 = arith.constant 0 : index
    %c0_4 = arith.constant 0 : index
    %5 = vector.load %arg2[%c0, %c0_2, %c0_3, %c0_4] : memref<1x14x14x128xbf16, #tpu.memory_space<vmem>>, vector<1x9x9x128xbf16>
    %6 = vector.shape_cast %5 : vector<1x9x9x128xbf16> to vector<9x9x128xbf16>
    %7 = arith.extf %6 : vector<9x9x128xbf16> to vector<9x9x128xf32>
    %c0_5 = arith.constant 0 : index
    %c0_6 = arith.constant 0 : index
    %c0_7 = arith.constant 0 : index
    %c0_8 = arith.constant 0 : index
    %8 = vector.load %arg1[%c0_5, %c0_6, %c0_7, %c0_8] : memref<1x6x6x128xbf16, #tpu.memory_space<vmem>>, vector<1x1x1x128xbf16>
    %9 = vector.shape_cast %8 : vector<1x1x1x128xbf16> to vector<1x128xbf16>
    %10 = arith.extf %9 : vector<1x128xbf16> to vector<1x128xf32>
    %11 = vector.shape_cast %10 : vector<1x128xf32> to vector<1x1x128xf32>
    %12 = vector.broadcast %11 : vector<1x1x128xf32> to vector<9x9x128xf32>
    %13 = arith.mulf %7, %12 : vector<9x9x128xf32>
    %14 = arith.addf %4, %13 : vector<9x9x128xf32>
    %c0_9 = arith.constant 0 : index
    %c0_10 = arith.constant 0 : index
    %c1 = arith.constant 1 : index
    %c0_11 = arith.constant 0 : index
    %15 = vector.load %arg2[%c0_9, %c0_10, %c1, %c0_11] : memref<1x14x14x128xbf16, #tpu.memory_space<vmem>>, vector<1x9x9x128xbf16>
    %16 = vector.shape_cast %15 : vector<1x9x9x128xbf16> to vector<9x9x128xbf16>
    %17 = arith.extf %16 : vector<9x9x128xbf16> to vector<9x9x128xf32>
    %c0_12 = arith.constant 0 : index
    %c0_13 = arith.constant 0 : index
    %c1_14 = arith.constant 1 : index
    %c0_15 = arith.constant 0 : index
    %18 = vector.load %arg1[%c0_12, %c0_13, %c1_14, %c0_15] : memref<1x6x6x128xbf16, #tpu.memory_space<vmem>>, vector<1x1x1x128xbf16>
    %19 = vector.shape_cast %18 : vector<1x1x1x128xbf16> to vector<1x128xbf16>
    %20 = arith.extf %19 : vector<1x128xbf16> to vector<1x128xf32>
    %21 = vector.shape_cast %20 : vector<1x128xf32> to vector<1x1x128xf32>
    %22 = vector.broadcast %21 : vector<1x1x128xf32> to vector<9x9x128xf32>
    %23 = arith.mulf %17, %22 : vector<9x9x128xf32>
    %24 = arith.addf %14, %23 : vector<9x9x128xf32>
    %c0_16 = arith.constant 0 : index
    %c0_17 = arith.constant 0 : index
    %c2 = arith.constant 2 : index
    %c0_18 = arith.constant 0 : index
    %25 = vector.load %arg2[%c0_16, %c0_17, %c2, %c0_18] : memref<1x14x14x128xbf16, #tpu.memory_space<vmem>>, vector<1x9x9x128xbf16>
    %26 = vector.shape_cast %25 : vector<1x9x9x128xbf16> to vector<9x9x128xbf16>
    %27 = arith.extf %26 : vector<9x9x128xbf16> to vector<9x9x128xf32>
    %c0_19 = arith.constant 0 : index
    %c0_20 = arith.constant 0 : index
    %c2_21 = arith.constant 2 : index
    %c0_22 = arith.constant 0 : index
    %28 = vector.load %arg1[%c0_19, %c0_20, %c2_21, %c0_22] : memref<1x6x6x128xbf16, #tpu.memory_space<vmem>>, vector<1x1x1x128xbf16>
    %29 = vector.shape_cast %28 : vector<1x1x1x128xbf16> to vector<1x128xbf16>
    %30 = arith.extf %29 : vector<1x128xbf16> to vector<1x128xf32>
    %31 = vector.shape_cast %30 : vector<1x128xf32> to vector<1x1x128xf32>
    %32 = vector.broadcast %31 : vector<1x1x128xf32> to vector<9x9x128xf32>
    %33 = arith.mulf %27, %32 : vector<9x9x128xf32>
    %34 = arith.addf %24, %33 : vector<9x9x128xf32>
    %c0_23 = arith.constant 0 : index
    %c0_24 = arith.constant 0 : index
    %c3 = arith.constant 3 : index
    %c0_25 = arith.constant 0 : index
    %35 = vector.load %arg2[%c0_23, %c0_24, %c3, %c0_25] : memref<1x14x14x128xbf16, #tpu.memory_space<vmem>>, vector<1x9x9x128xbf16>
    %36 = vector.shape_cast %35 : vector<1x9x9x128xbf16> to vector<9x9x128xbf16>
    %37 = arith.extf %36 : vector<9x9x128xbf16> to vector<9x9x128xf32>
    %c0_26 = arith.constant 0 : index
    %c0_27 = arith.constant 0 : index
    %c3_28 = arith.constant 3 : index
    %c0_29 = arith.constant 0 : index
    %38 = vector.load %arg1[%c0_26, %c0_27, %c3_28, %c0_29] : memref<1x6x6x128xbf16, #tpu.memory_space<vmem>>, vector<1x1x1x128xbf16>
    %39 = vector.shape_cast %38 : vector<1x1x1x128xbf16> to vector<1x128xbf16>
    %40 = arith.extf %39 : vector<1x128xbf16> to vector<1x128xf32>
    %41 = vector.shape_cast %40 : vector<1x128xf32> to vector<1x1x128xf32>
    %42 = vector.broadcast %41 : vector<1x1x128xf32> to vector<9x9x128xf32>
    %43 = arith.mulf %37, %42 : vector<9x9x128xf32>
    %44 = arith.addf %34, %43 : vector<9x9x128xf32>
    %c0_30 = arith.constant 0 : index
    %c0_31 = arith.constant 0 : index
    %c4 = arith.constant 4 : index
    %c0_32 = arith.constant 0 : index
    %45 = vector.load %arg2[%c0_30, %c0_31, %c4, %c0_32] : memref<1x14x14x128xbf16, #tpu.memory_space<vmem>>, vector<1x9x9x128xbf16>
    %46 = vector.shape_cast %45 : vector<1x9x9x128xbf16> to vector<9x9x128xbf16>
    %47 = arith.extf %46 : vector<9x9x128xbf16> to vector<9x9x128xf32>
    %c0_33 = arith.constant 0 : index
    %c0_34 = arith.constant 0 : index
    %c4_35 = arith.constant 4 : index
    %c0_36 = arith.constant 0 : index
    %48 = vector.load %arg1[%c0_33, %c0_34, %c4_35, %c0_36] : memref<1x6x6x128xbf16, #tpu.memory_space<vmem>>, vector<1x1x1x128xbf16>
    %49 = vector.shape_cast %48 : vector<1x1x1x128xbf16> to vector<1x128xbf16>
    %50 = arith.extf %49 : vector<1x128xbf16> to vector<1x128xf32>
    %51 = vector.shape_cast %50 : vector<1x128xf32> to vector<1x1x128xf32>
    %52 = vector.broadcast %51 : vector<1x1x128xf32> to vector<9x9x128xf32>
    %53 = arith.mulf %47, %52 : vector<9x9x128xf32>
    %54 = arith.addf %44, %53 : vector<9x9x128xf32>
    %c0_37 = arith.constant 0 : index
    %c0_38 = arith.constant 0 : index
    %c5 = arith.constant 5 : index
    %c0_39 = arith.constant 0 : index
    %55 = vector.load %arg2[%c0_37, %c0_38, %c5, %c0_39] : memref<1x14x14x128xbf16, #tpu.memory_space<vmem>>, vector<1x9x9x128xbf16>
    %56 = vector.shape_cast %55 : vector<1x9x9x128xbf16> to vector<9x9x128xbf16>
    %57 = arith.extf %56 : vector<9x9x128xbf16> to vector<9x9x128xf32>
    %c0_40 = arith.constant 0 : index
    %c0_41 = arith.constant 0 : index
    %c5_42 = arith.constant 5 : index
    %c0_43 = arith.constant 0 : index
    %58 = vector.load %arg1[%c0_40, %c0_41, %c5_42, %c0_43] : memref<1x6x6x128xbf16, #tpu.memory_space<vmem>>, vector<1x1x1x128xbf16>
    %59 = vector.shape_cast %58 : vector<1x1x1x128xbf16> to vector<1x128xbf16>
    %60 = arith.extf %59 : vector<1x128xbf16> to vector<1x128xf32>
    %61 = vector.shape_cast %60 : vector<1x128xf32> to vector<1x1x128xf32>
    %62 = vector.broadcast %61 : vector<1x1x128xf32> to vector<9x9x128xf32>
    %63 = arith.mulf %57, %62 : vector<9x9x128xf32>
    %64 = arith.addf %54, %63 : vector<9x9x128xf32>
    %cst_44 = arith.constant dense<0.000000e+00> : vector<9x9xf32>
    %65 = vector.multi_reduction <add>, %64, %cst_44 [2] : vector<9x9x128xf32> to vector<9x9xf32>
    %66 = arith.addf %3, %65 : vector<9x9xf32>
    %cst_45 = arith.constant 0.000000e+00 : f32
    %67 = vector.broadcast %cst_45 : f32 to vector<9x9x128xf32>
    %c0_46 = arith.constant 0 : index
    %c1_47 = arith.constant 1 : index
    %c0_48 = arith.constant 0 : index
    %c0_49 = arith.constant 0 : index
    %68 = vector.load %arg2[%c0_46, %c1_47, %c0_48, %c0_49] : memref<1x14x14x128xbf16, #tpu.memory_space<vmem>>, vector<1x9x9x128xbf16>
    %69 = vector.shape_cast %68 : vector<1x9x9x128xbf16> to vector<9x9x128xbf16>
    %70 = arith.extf %69 : vector<9x9x128xbf16> to vector<9x9x128xf32>
    %c0_50 = arith.constant 0 : index
    %c1_51 = arith.constant 1 : index
    %c0_52 = arith.constant 0 : index
    %c0_53 = arith.constant 0 : index
    %71 = vector.load %arg1[%c0_50, %c1_51, %c0_52, %c0_53] : memref<1x6x6x128xbf16, #tpu.memory_space<vmem>>, vector<1x1x1x128xbf16>
    %72 = vector.shape_cast %71 : vector<1x1x1x128xbf16> to vector<1x128xbf16>
    %73 = arith.extf %72 : vector<1x128xbf16> to vector<1x128xf32>
    %74 = vector.shape_cast %73 : vector<1x128xf32> to vector<1x1x128xf32>
    %75 = vector.broadcast %74 : vector<1x1x128xf32> to vector<9x9x128xf32>
    %76 = arith.mulf %70, %75 : vector<9x9x128xf32>
    %77 = arith.addf %67, %76 : vector<9x9x128xf32>
    %c0_54 = arith.constant 0 : index
    %c1_55 = arith.constant 1 : index
    %c1_56 = arith.constant 1 : index
    %c0_57 = arith.constant 0 : index
    %78 = vector.load %arg2[%c0_54, %c1_55, %c1_56, %c0_57] : memref<1x14x14x128xbf16, #tpu.memory_space<vmem>>, vector<1x9x9x128xbf16>
    %79 = vector.shape_cast %78 : vector<1x9x9x128xbf16> to vector<9x9x128xbf16>
    %80 = arith.extf %79 : vector<9x9x128xbf16> to vector<9x9x128xf32>
    %c0_58 = arith.constant 0 : index
    %c1_59 = arith.constant 1 : index
    %c1_60 = arith.constant 1 : index
    %c0_61 = arith.constant 0 : index
    %81 = vector.load %arg1[%c0_58, %c1_59, %c1_60, %c0_61] : memref<1x6x6x128xbf16, #tpu.memory_space<vmem>>, vector<1x1x1x128xbf16>
    %82 = vector.shape_cast %81 : vector<1x1x1x128xbf16> to vector<1x128xbf16>
    %83 = arith.extf %82 : vector<1x128xbf16> to vector<1x128xf32>
    %84 = vector.shape_cast %83 : vector<1x128xf32> to vector<1x1x128xf32>
    %85 = vector.broadcast %84 : vector<1x1x128xf32> to vector<9x9x128xf32>
    %86 = arith.mulf %80, %85 : vector<9x9x128xf32>
    %87 = arith.addf %77, %86 : vector<9x9x128xf32>
    %c0_62 = arith.constant 0 : index
    %c1_63 = arith.constant 1 : index
    %c2_64 = arith.constant 2 : index
    %c0_65 = arith.constant 0 : index
    %88 = vector.load %arg2[%c0_62, %c1_63, %c2_64, %c0_65] : memref<1x14x14x128xbf16, #tpu.memory_space<vmem>>, vector<1x9x9x128xbf16>
    %89 = vector.shape_cast %88 : vector<1x9x9x128xbf16> to vector<9x9x128xbf16>
    %90 = arith.extf %89 : vector<9x9x128xbf16> to vector<9x9x128xf32>
    %c0_66 = arith.constant 0 : index
    %c1_67 = arith.constant 1 : index
    %c2_68 = arith.constant 2 : index
    %c0_69 = arith.constant 0 : index
    %91 = vector.load %arg1[%c0_66, %c1_67, %c2_68, %c0_69] : memref<1x6x6x128xbf16, #tpu.memory_space<vmem>>, vector<1x1x1x128xbf16>
    %92 = vector.shape_cast %91 : vector<1x1x1x128xbf16> to vector<1x128xbf16>
    %93 = arith.extf %92 : vector<1x128xbf16> to vector<1x128xf32>
    %94 = vector.shape_cast %93 : vector<1x128xf32> to vector<1x1x128xf32>
    %95 = vector.broadcast %94 : vector<1x1x128xf32> to vector<9x9x128xf32>
    %96 = arith.mulf %90, %95 : vector<9x9x128xf32>
    %97 = arith.addf %87, %96 : vector<9x9x128xf32>
    %c0_70 = arith.constant 0 : index
    %c1_71 = arith.constant 1 : index
    %c3_72 = arith.constant 3 : index
    %c0_73 = arith.constant 0 : index
    %98 = vector.load %arg2[%c0_70, %c1_71, %c3_72, %c0_73] : memref<1x14x14x128xbf16, #tpu.memory_space<vmem>>, vector<1x9x9x128xbf16>
    %99 = vector.shape_cast %98 : vector<1x9x9x128xbf16> to vector<9x9x128xbf16>
    %100 = arith.extf %99 : vector<9x9x128xbf16> to vector<9x9x128xf32>
    %c0_74 = arith.constant 0 : index
    %c1_75 = arith.constant 1 : index
    %c3_76 = arith.constant 3 : index
    %c0_77 = arith.constant 0 : index
    %101 = vector.load %arg1[%c0_74, %c1_75, %c3_76, %c0_77] : memref<1x6x6x128xbf16, #tpu.memory_space<vmem>>, vector<1x1x1x128xbf16>
    %102 = vector.shape_cast %101 : vector<1x1x1x128xbf16> to vector<1x128xbf16>
    %103 = arith.extf %102 : vector<1x128xbf16> to vector<1x128xf32>
    %104 = vector.shape_cast %103 : vector<1x128xf32> to vector<1x1x128xf32>
    %105 = vector.broadcast %104 : vector<1x1x128xf32> to vector<9x9x128xf32>
    %106 = arith.mulf %100, %105 : vector<9x9x128xf32>
    %107 = arith.addf %97, %106 : vector<9x9x128xf32>
    %c0_78 = arith.constant 0 : index
    %c1_79 = arith.constant 1 : index
    %c4_80 = arith.constant 4 : index
    %c0_81 = arith.constant 0 : index
    %108 = vector.load %arg2[%c0_78, %c1_79, %c4_80, %c0_81] : memref<1x14x14x128xbf16, #tpu.memory_space<vmem>>, vector<1x9x9x128xbf16>
    %109 = vector.shape_cast %108 : vector<1x9x9x128xbf16> to vector<9x9x128xbf16>
    %110 = arith.extf %109 : vector<9x9x128xbf16> to vector<9x9x128xf32>
    %c0_82 = arith.constant 0 : index
    %c1_83 = arith.constant 1 : index
    %c4_84 = arith.constant 4 : index
    %c0_85 = arith.constant 0 : index
    %111 = vector.load %arg1[%c0_82, %c1_83, %c4_84, %c0_85] : memref<1x6x6x128xbf16, #tpu.memory_space<vmem>>, vector<1x1x1x128xbf16>
    %112 = vector.shape_cast %111 : vector<1x1x1x128xbf16> to vector<1x128xbf16>
    %113 = arith.extf %112 : vector<1x128xbf16> to vector<1x128xf32>
    %114 = vector.shape_cast %113 : vector<1x128xf32> to vector<1x1x128xf32>
    %115 = vector.broadcast %114 : vector<1x1x128xf32> to vector<9x9x128xf32>
    %116 = arith.mulf %110, %115 : vector<9x9x128xf32>
    %117 = arith.addf %107, %116 : vector<9x9x128xf32>
    %c0_86 = arith.constant 0 : index
    %c1_87 = arith.constant 1 : index
    %c5_88 = arith.constant 5 : index
    %c0_89 = arith.constant 0 : index
    %118 = vector.load %arg2[%c0_86, %c1_87, %c5_88, %c0_89] : memref<1x14x14x128xbf16, #tpu.memory_space<vmem>>, vector<1x9x9x128xbf16>
    %119 = vector.shape_cast %118 : vector<1x9x9x128xbf16> to vector<9x9x128xbf16>
    %120 = arith.extf %119 : vector<9x9x128xbf16> to vector<9x9x128xf32>
    %c0_90 = arith.constant 0 : index
    %c1_91 = arith.constant 1 : index
    %c5_92 = arith.constant 5 : index
    %c0_93 = arith.constant 0 : index
    %121 = vector.load %arg1[%c0_90, %c1_91, %c5_92, %c0_93] : memref<1x6x6x128xbf16, #tpu.memory_space<vmem>>, vector<1x1x1x128xbf16>
    %122 = vector.shape_cast %121 : vector<1x1x1x128xbf16> to vector<1x128xbf16>
    %123 = arith.extf %122 : vector<1x128xbf16> to vector<1x128xf32>
    %124 = vector.shape_cast %123 : vector<1x128xf32> to vector<1x1x128xf32>
    %125 = vector.broadcast %124 : vector<1x1x128xf32> to vector<9x9x128xf32>
    %126 = arith.mulf %120, %125 : vector<9x9x128xf32>
    %127 = arith.addf %117, %126 : vector<9x9x128xf32>
    %cst_94 = arith.constant dense<0.000000e+00> : vector<9x9xf32>
    %128 = vector.multi_reduction <add>, %127, %cst_94 [2] : vector<9x9x128xf32> to vector<9x9xf32>
    %129 = arith.addf %66, %128 : vector<9x9xf32>
    %cst_95 = arith.constant 0.000000e+00 : f32
    %130 = vector.broadcast %cst_95 : f32 to vector<9x9x128xf32>
    %c0_96 = arith.constant 0 : index
    %c2_97 = arith.constant 2 : index
    %c0_98 = arith.constant 0 : index
    %c0_99 = arith.constant 0 : index
    %131 = vector.load %arg2[%c0_96, %c2_97, %c0_98, %c0_99] : memref<1x14x14x128xbf16, #tpu.memory_space<vmem>>, vector<1x9x9x128xbf16>
    %132 = vector.shape_cast %131 : vector<1x9x9x128xbf16> to vector<9x9x128xbf16>
    %133 = arith.extf %132 : vector<9x9x128xbf16> to vector<9x9x128xf32>
    %c0_100 = arith.constant 0 : index
    %c2_101 = arith.constant 2 : index
    %c0_102 = arith.constant 0 : index
    %c0_103 = arith.constant 0 : index
    %134 = vector.load %arg1[%c0_100, %c2_101, %c0_102, %c0_103] : memref<1x6x6x128xbf16, #tpu.memory_space<vmem>>, vector<1x1x1x128xbf16>
    %135 = vector.shape_cast %134 : vector<1x1x1x128xbf16> to vector<1x128xbf16>
    %136 = arith.extf %135 : vector<1x128xbf16> to vector<1x128xf32>
    %137 = vector.shape_cast %136 : vector<1x128xf32> to vector<1x1x128xf32>
    %138 = vector.broadcast %137 : vector<1x1x128xf32> to vector<9x9x128xf32>
    %139 = arith.mulf %133, %138 : vector<9x9x128xf32>
    %140 = arith.addf %130, %139 : vector<9x9x128xf32>
    %c0_104 = arith.constant 0 : index
    %c2_105 = arith.constant 2 : index
    %c1_106 = arith.constant 1 : index
    %c0_107 = arith.constant 0 : index
    %141 = vector.load %arg2[%c0_104, %c2_105, %c1_106, %c0_107] : memref<1x14x14x128xbf16, #tpu.memory_space<vmem>>, vector<1x9x9x128xbf16>
    %142 = vector.shape_cast %141 : vector<1x9x9x128xbf16> to vector<9x9x128xbf16>
    %143 = arith.extf %142 : vector<9x9x128xbf16> to vector<9x9x128xf32>
    %c0_108 = arith.constant 0 : index
    %c2_109 = arith.constant 2 : index
    %c1_110 = arith.constant 1 : index
    %c0_111 = arith.constant 0 : index
    %144 = vector.load %arg1[%c0_108, %c2_109, %c1_110, %c0_111] : memref<1x6x6x128xbf16, #tpu.memory_space<vmem>>, vector<1x1x1x128xbf16>
    %145 = vector.shape_cast %144 : vector<1x1x1x128xbf16> to vector<1x128xbf16>
    %146 = arith.extf %145 : vector<1x128xbf16> to vector<1x128xf32>
    %147 = vector.shape_cast %146 : vector<1x128xf32> to vector<1x1x128xf32>
    %148 = vector.broadcast %147 : vector<1x1x128xf32> to vector<9x9x128xf32>
    %149 = arith.mulf %143, %148 : vector<9x9x128xf32>
    %150 = arith.addf %140, %149 : vector<9x9x128xf32>
    %c0_112 = arith.constant 0 : index
    %c2_113 = arith.constant 2 : index
    %c2_114 = arith.constant 2 : index
    %c0_115 = arith.constant 0 : index
    %151 = vector.load %arg2[%c0_112, %c2_113, %c2_114, %c0_115] : memref<1x14x14x128xbf16, #tpu.memory_space<vmem>>, vector<1x9x9x128xbf16>
    %152 = vector.shape_cast %151 : vector<1x9x9x128xbf16> to vector<9x9x128xbf16>
    %153 = arith.extf %152 : vector<9x9x128xbf16> to vector<9x9x128xf32>
    %c0_116 = arith.constant 0 : index
    %c2_117 = arith.constant 2 : index
    %c2_118 = arith.constant 2 : index
    %c0_119 = arith.constant 0 : index
    %154 = vector.load %arg1[%c0_116, %c2_117, %c2_118, %c0_119] : memref<1x6x6x128xbf16, #tpu.memory_space<vmem>>, vector<1x1x1x128xbf16>
    %155 = vector.shape_cast %154 : vector<1x1x1x128xbf16> to vector<1x128xbf16>
    %156 = arith.extf %155 : vector<1x128xbf16> to vector<1x128xf32>
    %157 = vector.shape_cast %156 : vector<1x128xf32> to vector<1x1x128xf32>
    %158 = vector.broadcast %157 : vector<1x1x128xf32> to vector<9x9x128xf32>
    %159 = arith.mulf %153, %158 : vector<9x9x128xf32>
    %160 = arith.addf %150, %159 : vector<9x9x128xf32>
    %c0_120 = arith.constant 0 : index
    %c2_121 = arith.constant 2 : index
    %c3_122 = arith.constant 3 : index
    %c0_123 = arith.constant 0 : index
    %161 = vector.load %arg2[%c0_120, %c2_121, %c3_122, %c0_123] : memref<1x14x14x128xbf16, #tpu.memory_space<vmem>>, vector<1x9x9x128xbf16>
    %162 = vector.shape_cast %161 : vector<1x9x9x128xbf16> to vector<9x9x128xbf16>
    %163 = arith.extf %162 : vector<9x9x128xbf16> to vector<9x9x128xf32>
    %c0_124 = arith.constant 0 : index
    %c2_125 = arith.constant 2 : index
    %c3_126 = arith.constant 3 : index
    %c0_127 = arith.constant 0 : index
    %164 = vector.load %arg1[%c0_124, %c2_125, %c3_126, %c0_127] : memref<1x6x6x128xbf16, #tpu.memory_space<vmem>>, vector<1x1x1x128xbf16>
    %165 = vector.shape_cast %164 : vector<1x1x1x128xbf16> to vector<1x128xbf16>
    %166 = arith.extf %165 : vector<1x128xbf16> to vector<1x128xf32>
    %167 = vector.shape_cast %166 : vector<1x128xf32> to vector<1x1x128xf32>
    %168 = vector.broadcast %167 : vector<1x1x128xf32> to vector<9x9x128xf32>
    %169 = arith.mulf %163, %168 : vector<9x9x128xf32>
    %170 = arith.addf %160, %169 : vector<9x9x128xf32>
    %c0_128 = arith.constant 0 : index
    %c2_129 = arith.constant 2 : index
    %c4_130 = arith.constant 4 : index
    %c0_131 = arith.constant 0 : index
    %171 = vector.load %arg2[%c0_128, %c2_129, %c4_130, %c0_131] : memref<1x14x14x128xbf16, #tpu.memory_space<vmem>>, vector<1x9x9x128xbf16>
    %172 = vector.shape_cast %171 : vector<1x9x9x128xbf16> to vector<9x9x128xbf16>
    %173 = arith.extf %172 : vector<9x9x128xbf16> to vector<9x9x128xf32>
    %c0_132 = arith.constant 0 : index
    %c2_133 = arith.constant 2 : index
    %c4_134 = arith.constant 4 : index
    %c0_135 = arith.constant 0 : index
    %174 = vector.load %arg1[%c0_132, %c2_133, %c4_134, %c0_135] : memref<1x6x6x128xbf16, #tpu.memory_space<vmem>>, vector<1x1x1x128xbf16>
    %175 = vector.shape_cast %174 : vector<1x1x1x128xbf16> to vector<1x128xbf16>
    %176 = arith.extf %175 : vector<1x128xbf16> to vector<1x128xf32>
    %177 = vector.shape_cast %176 : vector<1x128xf32> to vector<1x1x128xf32>
    %178 = vector.broadcast %177 : vector<1x1x128xf32> to vector<9x9x128xf32>
    %179 = arith.mulf %173, %178 : vector<9x9x128xf32>
    %180 = arith.addf %170, %179 : vector<9x9x128xf32>
    %c0_136 = arith.constant 0 : index
    %c2_137 = arith.constant 2 : index
    %c5_138 = arith.constant 5 : index
    %c0_139 = arith.constant 0 : index
    %181 = vector.load %arg2[%c0_136, %c2_137, %c5_138, %c0_139] : memref<1x14x14x128xbf16, #tpu.memory_space<vmem>>, vector<1x9x9x128xbf16>
    %182 = vector.shape_cast %181 : vector<1x9x9x128xbf16> to vector<9x9x128xbf16>
    %183 = arith.extf %182 : vector<9x9x128xbf16> to vector<9x9x128xf32>
    %c0_140 = arith.constant 0 : index
    %c2_141 = arith.constant 2 : index
    %c5_142 = arith.constant 5 : index
    %c0_143 = arith.constant 0 : index
    %184 = vector.load %arg1[%c0_140, %c2_141, %c5_142, %c0_143] : memref<1x6x6x128xbf16, #tpu.memory_space<vmem>>, vector<1x1x1x128xbf16>
    %185 = vector.shape_cast %184 : vector<1x1x1x128xbf16> to vector<1x128xbf16>
    %186 = arith.extf %185 : vector<1x128xbf16> to vector<1x128xf32>
    %187 = vector.shape_cast %186 : vector<1x128xf32> to vector<1x1x128xf32>
    %188 = vector.broadcast %187 : vector<1x1x128xf32> to vector<9x9x128xf32>
    %189 = arith.mulf %183, %188 : vector<9x9x128xf32>
    %190 = arith.addf %180, %189 : vector<9x9x128xf32>
    %cst_144 = arith.constant dense<0.000000e+00> : vector<9x9xf32>
    %191 = vector.multi_reduction <add>, %190, %cst_144 [2] : vector<9x9x128xf32> to vector<9x9xf32>
    %192 = arith.addf %129, %191 : vector<9x9xf32>
    %cst_145 = arith.constant 0.000000e+00 : f32
    %193 = vector.broadcast %cst_145 : f32 to vector<9x9x128xf32>
    %c0_146 = arith.constant 0 : index
    %c3_147 = arith.constant 3 : index
    %c0_148 = arith.constant 0 : index
    %c0_149 = arith.constant 0 : index
    %194 = vector.load %arg2[%c0_146, %c3_147, %c0_148, %c0_149] : memref<1x14x14x128xbf16, #tpu.memory_space<vmem>>, vector<1x9x9x128xbf16>
    %195 = vector.shape_cast %194 : vector<1x9x9x128xbf16> to vector<9x9x128xbf16>
    %196 = arith.extf %195 : vector<9x9x128xbf16> to vector<9x9x128xf32>
    %c0_150 = arith.constant 0 : index
    %c3_151 = arith.constant 3 : index
    %c0_152 = arith.constant 0 : index
    %c0_153 = arith.constant 0 : index
    %197 = vector.load %arg1[%c0_150, %c3_151, %c0_152, %c0_153] : memref<1x6x6x128xbf16, #tpu.memory_space<vmem>>, vector<1x1x1x128xbf16>
    %198 = vector.shape_cast %197 : vector<1x1x1x128xbf16> to vector<1x128xbf16>
    %199 = arith.extf %198 : vector<1x128xbf16> to vector<1x128xf32>
    %200 = vector.shape_cast %199 : vector<1x128xf32> to vector<1x1x128xf32>
    %201 = vector.broadcast %200 : vector<1x1x128xf32> to vector<9x9x128xf32>
    %202 = arith.mulf %196, %201 : vector<9x9x128xf32>
    %203 = arith.addf %193, %202 : vector<9x9x128xf32>
    %c0_154 = arith.constant 0 : index
    %c3_155 = arith.constant 3 : index
    %c1_156 = arith.constant 1 : index
    %c0_157 = arith.constant 0 : index
    %204 = vector.load %arg2[%c0_154, %c3_155, %c1_156, %c0_157] : memref<1x14x14x128xbf16, #tpu.memory_space<vmem>>, vector<1x9x9x128xbf16>
    %205 = vector.shape_cast %204 : vector<1x9x9x128xbf16> to vector<9x9x128xbf16>
    %206 = arith.extf %205 : vector<9x9x128xbf16> to vector<9x9x128xf32>
    %c0_158 = arith.constant 0 : index
    %c3_159 = arith.constant 3 : index
    %c1_160 = arith.constant 1 : index
    %c0_161 = arith.constant 0 : index
    %207 = vector.load %arg1[%c0_158, %c3_159, %c1_160, %c0_161] : memref<1x6x6x128xbf16, #tpu.memory_space<vmem>>, vector<1x1x1x128xbf16>
    %208 = vector.shape_cast %207 : vector<1x1x1x128xbf16> to vector<1x128xbf16>
    %209 = arith.extf %208 : vector<1x128xbf16> to vector<1x128xf32>
    %210 = vector.shape_cast %209 : vector<1x128xf32> to vector<1x1x128xf32>
    %211 = vector.broadcast %210 : vector<1x1x128xf32> to vector<9x9x128xf32>
    %212 = arith.mulf %206, %211 : vector<9x9x128xf32>
    %213 = arith.addf %203, %212 : vector<9x9x128xf32>
    %c0_162 = arith.constant 0 : index
    %c3_163 = arith.constant 3 : index
    %c2_164 = arith.constant 2 : index
    %c0_165 = arith.constant 0 : index
    %214 = vector.load %arg2[%c0_162, %c3_163, %c2_164, %c0_165] : memref<1x14x14x128xbf16, #tpu.memory_space<vmem>>, vector<1x9x9x128xbf16>
    %215 = vector.shape_cast %214 : vector<1x9x9x128xbf16> to vector<9x9x128xbf16>
    %216 = arith.extf %215 : vector<9x9x128xbf16> to vector<9x9x128xf32>
    %c0_166 = arith.constant 0 : index
    %c3_167 = arith.constant 3 : index
    %c2_168 = arith.constant 2 : index
    %c0_169 = arith.constant 0 : index
    %217 = vector.load %arg1[%c0_166, %c3_167, %c2_168, %c0_169] : memref<1x6x6x128xbf16, #tpu.memory_space<vmem>>, vector<1x1x1x128xbf16>
    %218 = vector.shape_cast %217 : vector<1x1x1x128xbf16> to vector<1x128xbf16>
    %219 = arith.extf %218 : vector<1x128xbf16> to vector<1x128xf32>
    %220 = vector.shape_cast %219 : vector<1x128xf32> to vector<1x1x128xf32>
    %221 = vector.broadcast %220 : vector<1x1x128xf32> to vector<9x9x128xf32>
    %222 = arith.mulf %216, %221 : vector<9x9x128xf32>
    %223 = arith.addf %213, %222 : vector<9x9x128xf32>
    %c0_170 = arith.constant 0 : index
    %c3_171 = arith.constant 3 : index
    %c3_172 = arith.constant 3 : index
    %c0_173 = arith.constant 0 : index
    %224 = vector.load %arg2[%c0_170, %c3_171, %c3_172, %c0_173] : memref<1x14x14x128xbf16, #tpu.memory_space<vmem>>, vector<1x9x9x128xbf16>
    %225 = vector.shape_cast %224 : vector<1x9x9x128xbf16> to vector<9x9x128xbf16>
    %226 = arith.extf %225 : vector<9x9x128xbf16> to vector<9x9x128xf32>
    %c0_174 = arith.constant 0 : index
    %c3_175 = arith.constant 3 : index
    %c3_176 = arith.constant 3 : index
    %c0_177 = arith.constant 0 : index
    %227 = vector.load %arg1[%c0_174, %c3_175, %c3_176, %c0_177] : memref<1x6x6x128xbf16, #tpu.memory_space<vmem>>, vector<1x1x1x128xbf16>
    %228 = vector.shape_cast %227 : vector<1x1x1x128xbf16> to vector<1x128xbf16>
    %229 = arith.extf %228 : vector<1x128xbf16> to vector<1x128xf32>
    %230 = vector.shape_cast %229 : vector<1x128xf32> to vector<1x1x128xf32>
    %231 = vector.broadcast %230 : vector<1x1x128xf32> to vector<9x9x128xf32>
    %232 = arith.mulf %226, %231 : vector<9x9x128xf32>
    %233 = arith.addf %223, %232 : vector<9x9x128xf32>
    %c0_178 = arith.constant 0 : index
    %c3_179 = arith.constant 3 : index
    %c4_180 = arith.constant 4 : index
    %c0_181 = arith.constant 0 : index
    %234 = vector.load %arg2[%c0_178, %c3_179, %c4_180, %c0_181] : memref<1x14x14x128xbf16, #tpu.memory_space<vmem>>, vector<1x9x9x128xbf16>
    %235 = vector.shape_cast %234 : vector<1x9x9x128xbf16> to vector<9x9x128xbf16>
    %236 = arith.extf %235 : vector<9x9x128xbf16> to vector<9x9x128xf32>
    %c0_182 = arith.constant 0 : index
    %c3_183 = arith.constant 3 : index
    %c4_184 = arith.constant 4 : index
    %c0_185 = arith.constant 0 : index
    %237 = vector.load %arg1[%c0_182, %c3_183, %c4_184, %c0_185] : memref<1x6x6x128xbf16, #tpu.memory_space<vmem>>, vector<1x1x1x128xbf16>
    %238 = vector.shape_cast %237 : vector<1x1x1x128xbf16> to vector<1x128xbf16>
    %239 = arith.extf %238 : vector<1x128xbf16> to vector<1x128xf32>
    %240 = vector.shape_cast %239 : vector<1x128xf32> to vector<1x1x128xf32>
    %241 = vector.broadcast %240 : vector<1x1x128xf32> to vector<9x9x128xf32>
    %242 = arith.mulf %236, %241 : vector<9x9x128xf32>
    %243 = arith.addf %233, %242 : vector<9x9x128xf32>
    %c0_186 = arith.constant 0 : index
    %c3_187 = arith.constant 3 : index
    %c5_188 = arith.constant 5 : index
    %c0_189 = arith.constant 0 : index
    %244 = vector.load %arg2[%c0_186, %c3_187, %c5_188, %c0_189] : memref<1x14x14x128xbf16, #tpu.memory_space<vmem>>, vector<1x9x9x128xbf16>
    %245 = vector.shape_cast %244 : vector<1x9x9x128xbf16> to vector<9x9x128xbf16>
    %246 = arith.extf %245 : vector<9x9x128xbf16> to vector<9x9x128xf32>
    %c0_190 = arith.constant 0 : index
    %c3_191 = arith.constant 3 : index
    %c5_192 = arith.constant 5 : index
    %c0_193 = arith.constant 0 : index
    %247 = vector.load %arg1[%c0_190, %c3_191, %c5_192, %c0_193] : memref<1x6x6x128xbf16, #tpu.memory_space<vmem>>, vector<1x1x1x128xbf16>
    %248 = vector.shape_cast %247 : vector<1x1x1x128xbf16> to vector<1x128xbf16>
    %249 = arith.extf %248 : vector<1x128xbf16> to vector<1x128xf32>
    %250 = vector.shape_cast %249 : vector<1x128xf32> to vector<1x1x128xf32>
    %251 = vector.broadcast %250 : vector<1x1x128xf32> to vector<9x9x128xf32>
    %252 = arith.mulf %246, %251 : vector<9x9x128xf32>
    %253 = arith.addf %243, %252 : vector<9x9x128xf32>
    %cst_194 = arith.constant dense<0.000000e+00> : vector<9x9xf32>
    %254 = vector.multi_reduction <add>, %253, %cst_194 [2] : vector<9x9x128xf32> to vector<9x9xf32>
    %255 = arith.addf %192, %254 : vector<9x9xf32>
    %cst_195 = arith.constant 0.000000e+00 : f32
    %256 = vector.broadcast %cst_195 : f32 to vector<9x9x128xf32>
    %c0_196 = arith.constant 0 : index
    %c4_197 = arith.constant 4 : index
    %c0_198 = arith.constant 0 : index
    %c0_199 = arith.constant 0 : index
    %257 = vector.load %arg2[%c0_196, %c4_197, %c0_198, %c0_199] : memref<1x14x14x128xbf16, #tpu.memory_space<vmem>>, vector<1x9x9x128xbf16>
    %258 = vector.shape_cast %257 : vector<1x9x9x128xbf16> to vector<9x9x128xbf16>
    %259 = arith.extf %258 : vector<9x9x128xbf16> to vector<9x9x128xf32>
    %c0_200 = arith.constant 0 : index
    %c4_201 = arith.constant 4 : index
    %c0_202 = arith.constant 0 : index
    %c0_203 = arith.constant 0 : index
    %260 = vector.load %arg1[%c0_200, %c4_201, %c0_202, %c0_203] : memref<1x6x6x128xbf16, #tpu.memory_space<vmem>>, vector<1x1x1x128xbf16>
    %261 = vector.shape_cast %260 : vector<1x1x1x128xbf16> to vector<1x128xbf16>
    %262 = arith.extf %261 : vector<1x128xbf16> to vector<1x128xf32>
    %263 = vector.shape_cast %262 : vector<1x128xf32> to vector<1x1x128xf32>
    %264 = vector.broadcast %263 : vector<1x1x128xf32> to vector<9x9x128xf32>
    %265 = arith.mulf %259, %264 : vector<9x9x128xf32>
    %266 = arith.addf %256, %265 : vector<9x9x128xf32>
    %c0_204 = arith.constant 0 : index
    %c4_205 = arith.constant 4 : index
    %c1_206 = arith.constant 1 : index
    %c0_207 = arith.constant 0 : index
    %267 = vector.load %arg2[%c0_204, %c4_205, %c1_206, %c0_207] : memref<1x14x14x128xbf16, #tpu.memory_space<vmem>>, vector<1x9x9x128xbf16>
    %268 = vector.shape_cast %267 : vector<1x9x9x128xbf16> to vector<9x9x128xbf16>
    %269 = arith.extf %268 : vector<9x9x128xbf16> to vector<9x9x128xf32>
    %c0_208 = arith.constant 0 : index
    %c4_209 = arith.constant 4 : index
    %c1_210 = arith.constant 1 : index
    %c0_211 = arith.constant 0 : index
    %270 = vector.load %arg1[%c0_208, %c4_209, %c1_210, %c0_211] : memref<1x6x6x128xbf16, #tpu.memory_space<vmem>>, vector<1x1x1x128xbf16>
    %271 = vector.shape_cast %270 : vector<1x1x1x128xbf16> to vector<1x128xbf16>
    %272 = arith.extf %271 : vector<1x128xbf16> to vector<1x128xf32>
    %273 = vector.shape_cast %272 : vector<1x128xf32> to vector<1x1x128xf32>
    %274 = vector.broadcast %273 : vector<1x1x128xf32> to vector<9x9x128xf32>
    %275 = arith.mulf %269, %274 : vector<9x9x128xf32>
    %276 = arith.addf %266, %275 : vector<9x9x128xf32>
    %c0_212 = arith.constant 0 : index
    %c4_213 = arith.constant 4 : index
    %c2_214 = arith.constant 2 : index
    %c0_215 = arith.constant 0 : index
    %277 = vector.load %arg2[%c0_212, %c4_213, %c2_214, %c0_215] : memref<1x14x14x128xbf16, #tpu.memory_space<vmem>>, vector<1x9x9x128xbf16>
    %278 = vector.shape_cast %277 : vector<1x9x9x128xbf16> to vector<9x9x128xbf16>
    %279 = arith.extf %278 : vector<9x9x128xbf16> to vector<9x9x128xf32>
    %c0_216 = arith.constant 0 : index
    %c4_217 = arith.constant 4 : index
    %c2_218 = arith.constant 2 : index
    %c0_219 = arith.constant 0 : index
    %280 = vector.load %arg1[%c0_216, %c4_217, %c2_218, %c0_219] : memref<1x6x6x128xbf16, #tpu.memory_space<vmem>>, vector<1x1x1x128xbf16>
    %281 = vector.shape_cast %280 : vector<1x1x1x128xbf16> to vector<1x128xbf16>
    %282 = arith.extf %281 : vector<1x128xbf16> to vector<1x128xf32>
    %283 = vector.shape_cast %282 : vector<1x128xf32> to vector<1x1x128xf32>
    %284 = vector.broadcast %283 : vector<1x1x128xf32> to vector<9x9x128xf32>
    %285 = arith.mulf %279, %284 : vector<9x9x128xf32>
    %286 = arith.addf %276, %285 : vector<9x9x128xf32>
    %c0_220 = arith.constant 0 : index
    %c4_221 = arith.constant 4 : index
    %c3_222 = arith.constant 3 : index
    %c0_223 = arith.constant 0 : index
    %287 = vector.load %arg2[%c0_220, %c4_221, %c3_222, %c0_223] : memref<1x14x14x128xbf16, #tpu.memory_space<vmem>>, vector<1x9x9x128xbf16>
    %288 = vector.shape_cast %287 : vector<1x9x9x128xbf16> to vector<9x9x128xbf16>
    %289 = arith.extf %288 : vector<9x9x128xbf16> to vector<9x9x128xf32>
    %c0_224 = arith.constant 0 : index
    %c4_225 = arith.constant 4 : index
    %c3_226 = arith.constant 3 : index
    %c0_227 = arith.constant 0 : index
    %290 = vector.load %arg1[%c0_224, %c4_225, %c3_226, %c0_227] : memref<1x6x6x128xbf16, #tpu.memory_space<vmem>>, vector<1x1x1x128xbf16>
    %291 = vector.shape_cast %290 : vector<1x1x1x128xbf16> to vector<1x128xbf16>
    %292 = arith.extf %291 : vector<1x128xbf16> to vector<1x128xf32>
    %293 = vector.shape_cast %292 : vector<1x128xf32> to vector<1x1x128xf32>
    %294 = vector.broadcast %293 : vector<1x1x128xf32> to vector<9x9x128xf32>
    %295 = arith.mulf %289, %294 : vector<9x9x128xf32>
    %296 = arith.addf %286, %295 : vector<9x9x128xf32>
    %c0_228 = arith.constant 0 : index
    %c4_229 = arith.constant 4 : index
    %c4_230 = arith.constant 4 : index
    %c0_231 = arith.constant 0 : index
    %297 = vector.load %arg2[%c0_228, %c4_229, %c4_230, %c0_231] : memref<1x14x14x128xbf16, #tpu.memory_space<vmem>>, vector<1x9x9x128xbf16>
    %298 = vector.shape_cast %297 : vector<1x9x9x128xbf16> to vector<9x9x128xbf16>
    %299 = arith.extf %298 : vector<9x9x128xbf16> to vector<9x9x128xf32>
    %c0_232 = arith.constant 0 : index
    %c4_233 = arith.constant 4 : index
    %c4_234 = arith.constant 4 : index
    %c0_235 = arith.constant 0 : index
    %300 = vector.load %arg1[%c0_232, %c4_233, %c4_234, %c0_235] : memref<1x6x6x128xbf16, #tpu.memory_space<vmem>>, vector<1x1x1x128xbf16>
    %301 = vector.shape_cast %300 : vector<1x1x1x128xbf16> to vector<1x128xbf16>
    %302 = arith.extf %301 : vector<1x128xbf16> to vector<1x128xf32>
    %303 = vector.shape_cast %302 : vector<1x128xf32> to vector<1x1x128xf32>
    %304 = vector.broadcast %303 : vector<1x1x128xf32> to vector<9x9x128xf32>
    %305 = arith.mulf %299, %304 : vector<9x9x128xf32>
    %306 = arith.addf %296, %305 : vector<9x9x128xf32>
    %c0_236 = arith.constant 0 : index
    %c4_237 = arith.constant 4 : index
    %c5_238 = arith.constant 5 : index
    %c0_239 = arith.constant 0 : index
    %307 = vector.load %arg2[%c0_236, %c4_237, %c5_238, %c0_239] : memref<1x14x14x128xbf16, #tpu.memory_space<vmem>>, vector<1x9x9x128xbf16>
    %308 = vector.shape_cast %307 : vector<1x9x9x128xbf16> to vector<9x9x128xbf16>
    %309 = arith.extf %308 : vector<9x9x128xbf16> to vector<9x9x128xf32>
    %c0_240 = arith.constant 0 : index
    %c4_241 = arith.constant 4 : index
    %c5_242 = arith.constant 5 : index
    %c0_243 = arith.constant 0 : index
    %310 = vector.load %arg1[%c0_240, %c4_241, %c5_242, %c0_243] : memref<1x6x6x128xbf16, #tpu.memory_space<vmem>>, vector<1x1x1x128xbf16>
    %311 = vector.shape_cast %310 : vector<1x1x1x128xbf16> to vector<1x128xbf16>
    %312 = arith.extf %311 : vector<1x128xbf16> to vector<1x128xf32>
    %313 = vector.shape_cast %312 : vector<1x128xf32> to vector<1x1x128xf32>
    %314 = vector.broadcast %313 : vector<1x1x128xf32> to vector<9x9x128xf32>
    %315 = arith.mulf %309, %314 : vector<9x9x128xf32>
    %316 = arith.addf %306, %315 : vector<9x9x128xf32>
    %cst_244 = arith.constant dense<0.000000e+00> : vector<9x9xf32>
    %317 = vector.multi_reduction <add>, %316, %cst_244 [2] : vector<9x9x128xf32> to vector<9x9xf32>
    %318 = arith.addf %255, %317 : vector<9x9xf32>
    %cst_245 = arith.constant 0.000000e+00 : f32
    %319 = vector.broadcast %cst_245 : f32 to vector<9x9x128xf32>
    %c0_246 = arith.constant 0 : index
    %c5_247 = arith.constant 5 : index
    %c0_248 = arith.constant 0 : index
    %c0_249 = arith.constant 0 : index
    %320 = vector.load %arg2[%c0_246, %c5_247, %c0_248, %c0_249] : memref<1x14x14x128xbf16, #tpu.memory_space<vmem>>, vector<1x9x9x128xbf16>
    %321 = vector.shape_cast %320 : vector<1x9x9x128xbf16> to vector<9x9x128xbf16>
    %322 = arith.extf %321 : vector<9x9x128xbf16> to vector<9x9x128xf32>
    %c0_250 = arith.constant 0 : index
    %c5_251 = arith.constant 5 : index
    %c0_252 = arith.constant 0 : index
    %c0_253 = arith.constant 0 : index
    %323 = vector.load %arg1[%c0_250, %c5_251, %c0_252, %c0_253] : memref<1x6x6x128xbf16, #tpu.memory_space<vmem>>, vector<1x1x1x128xbf16>
    %324 = vector.shape_cast %323 : vector<1x1x1x128xbf16> to vector<1x128xbf16>
    %325 = arith.extf %324 : vector<1x128xbf16> to vector<1x128xf32>
    %326 = vector.shape_cast %325 : vector<1x128xf32> to vector<1x1x128xf32>
    %327 = vector.broadcast %326 : vector<1x1x128xf32> to vector<9x9x128xf32>
    %328 = arith.mulf %322, %327 : vector<9x9x128xf32>
    %329 = arith.addf %319, %328 : vector<9x9x128xf32>
    %c0_254 = arith.constant 0 : index
    %c5_255 = arith.constant 5 : index
    %c1_256 = arith.constant 1 : index
    %c0_257 = arith.constant 0 : index
    %330 = vector.load %arg2[%c0_254, %c5_255, %c1_256, %c0_257] : memref<1x14x14x128xbf16, #tpu.memory_space<vmem>>, vector<1x9x9x128xbf16>
    %331 = vector.shape_cast %330 : vector<1x9x9x128xbf16> to vector<9x9x128xbf16>
    %332 = arith.extf %331 : vector<9x9x128xbf16> to vector<9x9x128xf32>
    %c0_258 = arith.constant 0 : index
    %c5_259 = arith.constant 5 : index
    %c1_260 = arith.constant 1 : index
    %c0_261 = arith.constant 0 : index
    %333 = vector.load %arg1[%c0_258, %c5_259, %c1_260, %c0_261] : memref<1x6x6x128xbf16, #tpu.memory_space<vmem>>, vector<1x1x1x128xbf16>
    %334 = vector.shape_cast %333 : vector<1x1x1x128xbf16> to vector<1x128xbf16>
    %335 = arith.extf %334 : vector<1x128xbf16> to vector<1x128xf32>
    %336 = vector.shape_cast %335 : vector<1x128xf32> to vector<1x1x128xf32>
    %337 = vector.broadcast %336 : vector<1x1x128xf32> to vector<9x9x128xf32>
    %338 = arith.mulf %332, %337 : vector<9x9x128xf32>
    %339 = arith.addf %329, %338 : vector<9x9x128xf32>
    %c0_262 = arith.constant 0 : index
    %c5_263 = arith.constant 5 : index
    %c2_264 = arith.constant 2 : index
    %c0_265 = arith.constant 0 : index
    %340 = vector.load %arg2[%c0_262, %c5_263, %c2_264, %c0_265] : memref<1x14x14x128xbf16, #tpu.memory_space<vmem>>, vector<1x9x9x128xbf16>
    %341 = vector.shape_cast %340 : vector<1x9x9x128xbf16> to vector<9x9x128xbf16>
    %342 = arith.extf %341 : vector<9x9x128xbf16> to vector<9x9x128xf32>
    %c0_266 = arith.constant 0 : index
    %c5_267 = arith.constant 5 : index
    %c2_268 = arith.constant 2 : index
    %c0_269 = arith.constant 0 : index
    %343 = vector.load %arg1[%c0_266, %c5_267, %c2_268, %c0_269] : memref<1x6x6x128xbf16, #tpu.memory_space<vmem>>, vector<1x1x1x128xbf16>
    %344 = vector.shape_cast %343 : vector<1x1x1x128xbf16> to vector<1x128xbf16>
    %345 = arith.extf %344 : vector<1x128xbf16> to vector<1x128xf32>
    %346 = vector.shape_cast %345 : vector<1x128xf32> to vector<1x1x128xf32>
    %347 = vector.broadcast %346 : vector<1x1x128xf32> to vector<9x9x128xf32>
    %348 = arith.mulf %342, %347 : vector<9x9x128xf32>
    %349 = arith.addf %339, %348 : vector<9x9x128xf32>
    %c0_270 = arith.constant 0 : index
    %c5_271 = arith.constant 5 : index
    %c3_272 = arith.constant 3 : index
    %c0_273 = arith.constant 0 : index
    %350 = vector.load %arg2[%c0_270, %c5_271, %c3_272, %c0_273] : memref<1x14x14x128xbf16, #tpu.memory_space<vmem>>, vector<1x9x9x128xbf16>
    %351 = vector.shape_cast %350 : vector<1x9x9x128xbf16> to vector<9x9x128xbf16>
    %352 = arith.extf %351 : vector<9x9x128xbf16> to vector<9x9x128xf32>
    %c0_274 = arith.constant 0 : index
    %c5_275 = arith.constant 5 : index
    %c3_276 = arith.constant 3 : index
    %c0_277 = arith.constant 0 : index
    %353 = vector.load %arg1[%c0_274, %c5_275, %c3_276, %c0_277] : memref<1x6x6x128xbf16, #tpu.memory_space<vmem>>, vector<1x1x1x128xbf16>
    %354 = vector.shape_cast %353 : vector<1x1x1x128xbf16> to vector<1x128xbf16>
    %355 = arith.extf %354 : vector<1x128xbf16> to vector<1x128xf32>
    %356 = vector.shape_cast %355 : vector<1x128xf32> to vector<1x1x128xf32>
    %357 = vector.broadcast %356 : vector<1x1x128xf32> to vector<9x9x128xf32>
    %358 = arith.mulf %352, %357 : vector<9x9x128xf32>
    %359 = arith.addf %349, %358 : vector<9x9x128xf32>
    %c0_278 = arith.constant 0 : index
    %c5_279 = arith.constant 5 : index
    %c4_280 = arith.constant 4 : index
    %c0_281 = arith.constant 0 : index
    %360 = vector.load %arg2[%c0_278, %c5_279, %c4_280, %c0_281] : memref<1x14x14x128xbf16, #tpu.memory_space<vmem>>, vector<1x9x9x128xbf16>
    %361 = vector.shape_cast %360 : vector<1x9x9x128xbf16> to vector<9x9x128xbf16>
    %362 = arith.extf %361 : vector<9x9x128xbf16> to vector<9x9x128xf32>
    %c0_282 = arith.constant 0 : index
    %c5_283 = arith.constant 5 : index
    %c4_284 = arith.constant 4 : index
    %c0_285 = arith.constant 0 : index
    %363 = vector.load %arg1[%c0_282, %c5_283, %c4_284, %c0_285] : memref<1x6x6x128xbf16, #tpu.memory_space<vmem>>, vector<1x1x1x128xbf16>
    %364 = vector.shape_cast %363 : vector<1x1x1x128xbf16> to vector<1x128xbf16>
    %365 = arith.extf %364 : vector<1x128xbf16> to vector<1x128xf32>
    %366 = vector.shape_cast %365 : vector<1x128xf32> to vector<1x1x128xf32>
    %367 = vector.broadcast %366 : vector<1x1x128xf32> to vector<9x9x128xf32>
    %368 = arith.mulf %362, %367 : vector<9x9x128xf32>
    %369 = arith.addf %359, %368 : vector<9x9x128xf32>
    %c0_286 = arith.constant 0 : index
    %c5_287 = arith.constant 5 : index
    %c5_288 = arith.constant 5 : index
    %c0_289 = arith.constant 0 : index
    %370 = vector.load %arg2[%c0_286, %c5_287, %c5_288, %c0_289] : memref<1x14x14x128xbf16, #tpu.memory_space<vmem>>, vector<1x9x9x128xbf16>
    %371 = vector.shape_cast %370 : vector<1x9x9x128xbf16> to vector<9x9x128xbf16>
    %372 = arith.extf %371 : vector<9x9x128xbf16> to vector<9x9x128xf32>
    %c0_290 = arith.constant 0 : index
    %c5_291 = arith.constant 5 : index
    %c5_292 = arith.constant 5 : index
    %c0_293 = arith.constant 0 : index
    %373 = vector.load %arg1[%c0_290, %c5_291, %c5_292, %c0_293] : memref<1x6x6x128xbf16, #tpu.memory_space<vmem>>, vector<1x1x1x128xbf16>
    %374 = vector.shape_cast %373 : vector<1x1x1x128xbf16> to vector<1x128xbf16>
    %375 = arith.extf %374 : vector<1x128xbf16> to vector<1x128xf32>
    %376 = vector.shape_cast %375 : vector<1x128xf32> to vector<1x1x128xf32>
    %377 = vector.broadcast %376 : vector<1x1x128xf32> to vector<9x9x128xf32>
    %378 = arith.mulf %372, %377 : vector<9x9x128xf32>
    %379 = arith.addf %369, %378 : vector<9x9x128xf32>
    %cst_294 = arith.constant dense<0.000000e+00> : vector<9x9xf32>
    %380 = vector.multi_reduction <add>, %379, %cst_294 [2] : vector<9x9x128xf32> to vector<9x9xf32>
    %381 = arith.addf %318, %380 : vector<9x9xf32>
    %cst_295 = arith.constant 1.000000e-03 : f32
    %382 = vector.broadcast %cst_295 : f32 to vector<9x9xf32>
    %383 = arith.mulf %382, %381 : vector<9x9xf32>
    %c0_296 = arith.constant 0 : index
    %c0_297 = arith.constant 0 : index
    %c0_298 = arith.constant 0 : index
    %384 = vector.load %arg3[%c0_296, %c0_297, %c0_298] : memref<1x9x9xf32, #tpu.memory_space<vmem>>, vector<1x9x9xf32>
    %385 = vector.shape_cast %384 : vector<1x9x9xf32> to vector<9x9xf32>
    %cst_299 = arith.constant 0.000000e+00 : f32
    %386 = vector.broadcast %cst_299 : f32 to vector<9x9xf32>
    %387 = arith.maximumf %383, %386 : vector<9x9xf32>
    %388 = arith.mulf %383, %385 : vector<9x9xf32>
    %389 = arith.subf %387, %388 : vector<9x9xf32>
    %390 = math.absf %383 : vector<9x9xf32>
    %cst_300 = arith.constant 0.000000e+00 : f32
    %391 = vector.broadcast %cst_300 : f32 to vector<9x9xf32>
    %392 = arith.subf %391, %390 : vector<9x9xf32>
    %393 = math.exp %392 : vector<9x9xf32>
    %394 = math.log1p %393 : vector<9x9xf32>
    %395 = arith.addf %389, %394 : vector<9x9xf32>
    %cst_301 = arith.constant 1.000000e+00 : f32
    %396 = vector.broadcast %cst_301 : f32 to vector<9x9xf32>
    %397 = arith.cmpf oeq, %385, %396 : vector<9x9xf32>
    %398 = arith.extui %397 : vector<9x9xi1> to vector<9x9xi32>
    %399 = arith.sitofp %398 : vector<9x9xi32> to vector<9x9xf32>
    %cst_302 = arith.constant 0.000000e+00 : f32
    %400 = vector.broadcast %cst_302 : f32 to vector<9x9xf32>
    %401 = arith.cmpf oeq, %385, %400 : vector<9x9xf32>
    %402 = arith.extui %401 : vector<9x9xi1> to vector<9x9xi32>
    %403 = arith.sitofp %402 : vector<9x9xi32> to vector<9x9xf32>
    %c0_303 = arith.constant 0 : index
    %c0_304 = arith.constant 0 : index
    %404 = vector.load %arg5[%c0_303, %c0_304] : memref<1x1xf32, #tpu.memory_space<vmem>>, vector<1x1xf32>
    %405 = arith.mulf %395, %399 : vector<9x9xf32>
    %406 = vector.shape_cast %405 : vector<9x9xf32> to vector<1x9x9xf32>
    %cst_305 = arith.constant dense<0.000000e+00> : vector<1xf32>
    %407 = vector.multi_reduction <add>, %406, %cst_305 [1, 2] : vector<1x9x9xf32> to vector<1xf32>
    %408 = vector.shape_cast %407 : vector<1xf32> to vector<1x1x1xf32>
    %409 = vector.extract %408[0, 0, 0] : f32 from vector<1x1x1xf32>
    %410 = vector.broadcast %409 : f32 to vector<1x1xf32>
    %411 = arith.addf %404, %410 : vector<1x1xf32>
    %c0_306 = arith.constant 0 : index
    %c0_307 = arith.constant 0 : index
    %412 = vector.load %arg5[%c0_306, %c0_307] : memref<1x1xf32, #tpu.memory_space<vmem>>, vector<1x1xf32>
    tpu.vector_store %arg5[%c0_306, %c0_307], %411 {strides = array<i32>} : memref<1x1xf32, #tpu.memory_space<vmem>>, vector<1x1xf32>,
    %c0_308 = arith.constant 0 : index
    %c0_309 = arith.constant 0 : index
    %413 = vector.load %arg6[%c0_308, %c0_309] : memref<1x1xf32, #tpu.memory_space<vmem>>, vector<1x1xf32>
    %414 = vector.shape_cast %399 : vector<9x9xf32> to vector<1x9x9xf32>
    %cst_310 = arith.constant dense<0.000000e+00> : vector<1xf32>
    %415 = vector.multi_reduction <add>, %414, %cst_310 [1, 2] : vector<1x9x9xf32> to vector<1xf32>
    %416 = vector.shape_cast %415 : vector<1xf32> to vector<1x1x1xf32>
    %417 = vector.extract %416[0, 0, 0] : f32 from vector<1x1x1xf32>
    %418 = vector.broadcast %417 : f32 to vector<1x1xf32>
    %419 = arith.addf %413, %418 : vector<1x1xf32>
    %c0_311 = arith.constant 0 : index
    %c0_312 = arith.constant 0 : index
    %420 = vector.load %arg6[%c0_311, %c0_312] : memref<1x1xf32, #tpu.memory_space<vmem>>, vector<1x1xf32>
    tpu.vector_store %arg6[%c0_311, %c0_312], %419 {strides = array<i32>} : memref<1x1xf32, #tpu.memory_space<vmem>>, vector<1x1xf32>,
    %c0_313 = arith.constant 0 : index
    %c0_314 = arith.constant 0 : index
    %421 = vector.load %arg7[%c0_313, %c0_314] : memref<1x1xf32, #tpu.memory_space<vmem>>, vector<1x1xf32>
    %422 = arith.mulf %395, %403 : vector<9x9xf32>
    %423 = vector.shape_cast %422 : vector<9x9xf32> to vector<1x9x9xf32>
    %cst_315 = arith.constant dense<0.000000e+00> : vector<1xf32>
    %424 = vector.multi_reduction <add>, %423, %cst_315 [1, 2] : vector<1x9x9xf32> to vector<1xf32>
    %425 = vector.shape_cast %424 : vector<1xf32> to vector<1x1x1xf32>
    %426 = vector.extract %425[0, 0, 0] : f32 from vector<1x1x1xf32>
    %427 = vector.broadcast %426 : f32 to vector<1x1xf32>
    %428 = arith.addf %421, %427 : vector<1x1xf32>
    %c0_316 = arith.constant 0 : index
    %c0_317 = arith.constant 0 : index
    %429 = vector.load %arg7[%c0_316, %c0_317] : memref<1x1xf32, #tpu.memory_space<vmem>>, vector<1x1xf32>
    tpu.vector_store %arg7[%c0_316, %c0_317], %428 {strides = array<i32>} : memref<1x1xf32, #tpu.memory_space<vmem>>, vector<1x1xf32>,
    %c0_318 = arith.constant 0 : index
    %c0_319 = arith.constant 0 : index
    %430 = vector.load %arg8[%c0_318, %c0_319] : memref<1x1xf32, #tpu.memory_space<vmem>>, vector<1x1xf32>
    %431 = vector.shape_cast %403 : vector<9x9xf32> to vector<1x9x9xf32>
    %cst_320 = arith.constant dense<0.000000e+00> : vector<1xf32>
    %432 = vector.multi_reduction <add>, %431, %cst_320 [1, 2] : vector<1x9x9xf32> to vector<1xf32>
    %433 = vector.shape_cast %432 : vector<1xf32> to vector<1x1x1xf32>
    %434 = vector.extract %433[0, 0, 0] : f32 from vector<1x1x1xf32>
    %435 = vector.broadcast %434 : f32 to vector<1x1xf32>
    %436 = arith.addf %430, %435 : vector<1x1xf32>
    %c0_321 = arith.constant 0 : index
    %c0_322 = arith.constant 0 : index
    %437 = vector.load %arg8[%c0_321, %c0_322] : memref<1x1xf32, #tpu.memory_space<vmem>>, vector<1x1xf32>
    tpu.vector_store %arg8[%c0_321, %c0_322], %436 {strides = array<i32>} : memref<1x1xf32, #tpu.memory_space<vmem>>, vector<1x1xf32>,
    %c1_i32 = arith.constant 1 : i32
    %438 = arith.cmpi eq, %arg0, %c1_i32 : i32
    %439 = arith.extui %438 : i1 to i32
    %c0_i32_323 = arith.constant 0 : i32
    %440 = arith.cmpi ne, %439, %c0_i32_323 : i32
    scf.if %440 {
      %c0_324 = arith.constant 0 : index
      %c0_325 = arith.constant 0 : index
      %441 = vector.load %arg5[%c0_324, %c0_325] : memref<1x1xf32, #tpu.memory_space<vmem>>, vector<1x1xf32>
      %c0_326 = arith.constant 0 : index
      %c0_327 = arith.constant 0 : index
      %442 = vector.load %arg6[%c0_326, %c0_327] : memref<1x1xf32, #tpu.memory_space<vmem>>, vector<1x1xf32>
      %cst_328 = arith.constant 1.000000e+00 : f32
      %443 = vector.broadcast %cst_328 : f32 to vector<1x1xf32>
      %444 = arith.maximumf %442, %443 : vector<1x1xf32>
      %445 = arith.divf %441, %444 : vector<1x1xf32>
      %c0_329 = arith.constant 0 : index
      %c0_330 = arith.constant 0 : index
      %446 = vector.load %arg7[%c0_329, %c0_330] : memref<1x1xf32, #tpu.memory_space<vmem>>, vector<1x1xf32>
      %c0_331 = arith.constant 0 : index
      %c0_332 = arith.constant 0 : index
      %447 = vector.load %arg8[%c0_331, %c0_332] : memref<1x1xf32, #tpu.memory_space<vmem>>, vector<1x1xf32>
      %cst_333 = arith.constant 1.000000e+00 : f32
      %448 = vector.broadcast %cst_333 : f32 to vector<1x1xf32>
      %449 = arith.maximumf %447, %448 : vector<1x1xf32>
      %450 = arith.divf %446, %449 : vector<1x1xf32>
      %cst_334 = arith.constant 5.000000e-01 : f32
      %451 = vector.broadcast %cst_334 : f32 to vector<1x1xf32>
      %452 = arith.mulf %451, %445 : vector<1x1xf32>
      %cst_335 = arith.constant 5.000000e-01 : f32
      %453 = vector.broadcast %cst_335 : f32 to vector<1x1xf32>
      %454 = arith.mulf %453, %450 : vector<1x1xf32>
      %455 = arith.addf %452, %454 : vector<1x1xf32>
      %456 = vector.shape_cast %455 : vector<1x1xf32> to vector<1x1xf32>
      %457 = vector.broadcast %456 : vector<1x1xf32> to vector<8x128xf32>
      %c0_336 = arith.constant 0 : index
      %c0_337 = arith.constant 0 : index
      %458 = vector.load %arg4[%c0_336, %c0_337] : memref<8x128xf32, #tpu.memory_space<vmem>>, vector<8x128xf32>
      tpu.vector_store %arg4[%c0_336, %c0_337], %457 {strides = array<i32>} : memref<8x128xf32, #tpu.memory_space<vmem>>, vector<8x128xf32>,
    } else {
    }
    return
  }
  func.func @transform_0(%arg0: i32) -> (i32, i32, i32, i32) {
    %c0_i32 = arith.constant 0 : i32
    %c0_i32_0 = arith.constant 0 : i32
    %c0_i32_1 = arith.constant 0 : i32
    %c0_i32_2 = arith.constant 0 : i32
    return %arg0, %c0_i32, %c0_i32_0, %c0_i32_1 : i32, i32, i32, i32
  }
  func.func @transform_1(%arg0: i32) -> (i32, i32, i32, i32) {
    %c0_i32 = arith.constant 0 : i32
    %c0_i32_0 = arith.constant 0 : i32
    %c0_i32_1 = arith.constant 0 : i32
    %c0_i32_2 = arith.constant 0 : i32
    return %arg0, %c0_i32, %c0_i32_0, %c0_i32_1 : i32, i32, i32, i32
  }
  func.func @transform_2(%arg0: i32) -> (i32, i32, i32) {
    %c0_i32 = arith.constant 0 : i32
    %c0_i32_0 = arith.constant 0 : i32
    %c0_i32_1 = arith.constant 0 : i32
    return %arg0, %c0_i32, %c0_i32_0 : i32, i32, i32
  }
  func.func @transform_3(%arg0: i32) -> (i32, i32) {
    %c0_i32 = arith.constant 0 : i32
    %c0_i32_0 = arith.constant 0 : i32
    %c0_i32_1 = arith.constant 0 : i32
    return %c0_i32, %c0_i32_0 : i32, i32
  }
}

</mosaic_0001>

<llo_original>
// kernel: siamfc_forward.4
$region0: #{siamfc_forward.4}
  #allocation0 [shape = 'u32[]', space=smem, size = 0x4, offset = 0x4, fixed_abs, tag = 'smem constant byte address 0x4 - core index']
  #allocation1 [shape = 'u32[144,128]{1,0:T(1,128)}', space=vmem, size = 0x12000, scoped, tag = 'internal scratch']
  #allocation2 [shape = 'f32[392,128]{1,0:T(8,128)}', space=vmem, size = 0x31000, scoped, tag = 'scratch operand']
  %s0 = inlined_call_operand.vmem [shape: bf16[392,128], index: 0, kind: input, shape index: {}]
  %s1 = inlined_call_operand.vmem [shape: bf16[128,128], index: 1, kind: input, shape index: {}]
  %s2 = inlined_call_operand.vmem [shape: f32[1,128], index: 2, kind: input, shape index: {}]
  %s3 = inlined_call_operand.vmem [shape: bf16[392,128], index: 3, kind: output, shape index: {}]
  %s4 = sld [smem:[#allocation0]]
  $region30: #{siamfc_forward.4} parent=0
    _
  %s6 = ssub.s32 1, %s4
  %s7 = scalar_select 0, %s6, %s4
  // Predicated region
  $region2: #{siamfc_forward.4} parent=0 // pred_check
    _
  $region3: #{siamfc_forward.4} parent=0 // pred_check_branch
    %9 = sbr.rel (0) target = $region5
  $region4: #{siamfc_forward.4} parent=0 // pred_region
    _
  $region5: #{siamfc_forward.4} parent=0 // pred_fallthru
    _
  // Predicated region
  $region6: #{siamfc_forward.4} parent=0 // pred_check
    _
  $region7: #{siamfc_forward.4} parent=0 // pred_check_branch
    %11 = sbr.rel (0) target = $region9
  $region8: #{siamfc_forward.4} parent=0 // pred_region
    _
  $region9: #{siamfc_forward.4} parent=0 // pred_fallthru
    _
  // Predicated region
  $region10: #{siamfc_forward.4} parent=0 // pred_check
    _
  $region11: #{siamfc_forward.4} parent=0 // pred_check_branch
    %13 = sbr.rel (0) target = $region13
  $region12: #{siamfc_forward.4} parent=0 // pred_region
    _
  $region13: #{siamfc_forward.4} parent=0 // pred_fallthru
    _
  %p15 = scmp.eq.s32.totalorder 0, 0
  // Predicated region
  $region14: #{siamfc_forward.4} parent=0 // pred_check
    %p16 = pneg %p15
  $region15: #{siamfc_forward.4} parent=0 // pred_check_branch
    %18 = sbr.rel (%p16) target = $region17
  $region16: #{siamfc_forward.4} parent=0 // pred_region
    %19 = vst [vmem:[#allocation2] sm:$0xff] 0.0
    %20 = vst [vmem:[#allocation2 + $0x8] sm:$0xff] 0.0
    %21 = vst [vmem:[#allocation2 + $0x10] sm:$0xff] 0.0
    %22 = vst [vmem:[#allocation2 + $0x18] sm:$0xff] 0.0
    %23 = vst [vmem:[#allocation2 + $0x20] sm:$0xff] 0.0
    %24 = vst [vmem:[#allocation2 + $0x28] sm:$0xff] 0.0
    %25 = vst [vmem:[#allocation2 + $0x30] sm:$0xff] 0.0
    %26 = vst [vmem:[#allocation2 + $0x38] sm:$0xff] 0.0
    %27 = vst [vmem:[#allocation2 + $0x40] sm:$0xff] 0.0
    %28 = vst [vmem:[#allocation2 + $0x48] sm:$0xff] 0.0
    %29 = vst [vmem:[#allocation2 + $0x50] sm:$0xff] 0.0
    %30 = vst [vmem:[#allocation2 + $0x58] sm:$0xff] 0.0
    %31 = vst [vmem:[#allocation2 + $0x60] sm:$0xff] 0.0
    %32 = vst [vmem:[#allocation2 + $0x68] sm:$0xff] 0.0
    %33 = vst [vmem:[#allocation2 + $0x70] sm:$0xff] 0.0
    %34 = vst [vmem:[#allocation2 + $0x78] sm:$0xff] 0.0
    %35 = vst [vmem:[#allocation2 + $0x80] sm:$0xff] 0.0
    %36 = vst [vmem:[#allocation2 + $0x88] sm:$0xff] 0.0
    %37 = vst [vmem:[#allocation2 + $0x90] sm:$0xff] 0.0
    %38 = vst [vmem:[#allocation2 + $0x98] sm:$0xff] 0.0
    %39 = vst [vmem:[#allocation2 + $0xa0] sm:$0xff] 0.0
    %40 = vst [vmem:[#allocation2 + $0xa8] sm:$0xff] 0.0
    %41 = vst [vmem:[#allocation2 + $0xb0] sm:$0xff] 0.0
    %42 = vst [vmem:[#allocation2 + $0xb8] sm:$0xff] 0.0
    %43 = vst [vmem:[#allocation2 + $0xc0] sm:$0xff] 0.0
    %44 = vst [vmem:[#allocation2 + $0xc8] sm:$0xff] 0.0
    %45 = vst [vmem:[#allocation2 + $0xd0] sm:$0xff] 0.0
    %46 = vst [vmem:[#allocation2 + $0xd8] sm:$0xff] 0.0
    %47 = vst [vmem:[#allocation2 + $0xe0] sm:$0xff] 0.0
    %48 = vst [vmem:[#allocation2 + $0xe8] sm:$0xff] 0.0
    %49 = vst [vmem:[#allocation2 + $0xf0] sm:$0xff] 0.0
    %50 = vst [vmem:[#allocation2 + $0xf8] sm:$0xff] 0.0
    %51 = vst [vmem:[#allocation2 + $0x100] sm:$0xff] 0.0
    %52 = vst [vmem:[#allocation2 + $0x108] sm:$0xff] 0.0
    %53 = vst [vmem:[#allocation2 + $0x110] sm:$0xff] 0.0
    %54 = vst [vmem:[#allocation2 + $0x118] sm:$0xff] 0.0
    %55 = vst [vmem:[#allocation2 + $0x120] sm:$0xff] 0.0
    %56 = vst [vmem:[#allocation2 + $0x128] sm:$0xff] 0.0
    %57 = vst [vmem:[#allocation2 + $0x130] sm:$0xff] 0.0
    %58 = vst [vmem:[#allocation2 + $0x138] sm:$0xff] 0.0
    %59 = vst [vmem:[#allocation2 + $0x140] sm:$0xff] 0.0
    %60 = vst [vmem:[#allocation2 + $0x148] sm:$0xff] 0.0
    %61 = vst [vmem:[#allocation2 + $0x150] sm:$0xff] 0.0
    %62 = vst [vmem:[#allocation2 + $0x158] sm:$0xff] 0.0
    %63 = vst [vmem:[#allocation2 + $0x160] sm:$0xff] 0.0
    %64 = vst [vmem:[#allocation2 + $0x168] sm:$0xff] 0.0
    %65 = vst [vmem:[#allocation2 + $0x170] sm:$0xff] 0.0
    %66 = vst [vmem:[#allocation2 + $0x178] sm:$0xff] 0.0
    %67 = vst [vmem:[#allocation2 + $0x180] sm:$0xff] 0.0
  $region17: #{siamfc_forward.4} parent=0 // pred_fallthru
    _
  %v68 = vld [vmem:[#allocation2] sm:$0xff]
  %v69 = vld [vmem:[#allocation2 + $0x8] sm:$0xff]
  %v70 = vld [vmem:[#allocation2 + $0x10] sm:$0xff]
  %v71 = vld [vmem:[#allocation2 + $0x18] sm:$0xff]
  %v72 = vld [vmem:[#allocation2 + $0x20] sm:$0xff]
  %v73 = vld [vmem:[#allocation2 + $0x28] sm:$0xff]
  %v74 = vld [vmem:[#allocation2 + $0x30] sm:$0xff]
  %v75 = vld [vmem:[#allocation2 + $0x38] sm:$0xff]
  %v76 = vld [vmem:[#allocation2 + $0x40] sm:$0xff]
  %v77 = vld [vmem:[#allocation2 + $0x48] sm:$0xff]
  %v78 = vld [vmem:[#allocation2 + $0x50] sm:$0xff]
  %v79 = vld [vmem:[#allocation2 + $0x58] sm:$0xff]
  %v80 = vld [vmem:[#allocation2 + $0x60] sm:$0xff]
  %v81 = vld [vmem:[#allocation2 + $0x68] sm:$0xff]
  %v82 = vld [vmem:[#allocation2 + $0x70] sm:$0xff]
  %v83 = vld [vmem:[#allocation2 + $0x78] sm:$0xff]
  %v84 = vld [vmem:[#allocation2 + $0x80] sm:$0xff]
  %v85 = vld [vmem:[#allocation2 + $0x88] sm:$0xff]
  %v86 = vld [vmem:[#allocation2 + $0x90] sm:$0xff]
  %v87 = vld [vmem:[#allocation2 + $0x98] sm:$0xff]
  %v88 = vld [vmem:[#allocation2 + $0xa0] sm:$0xff]
  %v89 = vld [vmem:[#allocation2 + $0xa8] sm:$0xff]
  %v90 = vld [vmem:[#allocation2 + $0xb0] sm:$0xff]
  %v91 = vld [vmem:[#allocation2 + $0xb8] sm:$0xff]
  %v92 = vld [vmem:[#allocation2 + $0xc0] sm:$0xff]
  %v93 = vld [vmem:[#allocation2 + $0xc8] sm:$0xff]
  %v94 = vld [vmem:[#allocation2 + $0xd0] sm:$0xff]
  %v95 = vld [vmem:[#allocation2 + $0xd8] sm:$0xff]
  %v96 = vld [vmem:[#allocation2 + $0xe0] sm:$0xff]
  %v97 = vld [vmem:[#allocation2 + $0xe8] sm:$0xff]
  %v98 = vld [vmem:[#allocation2 + $0xf0] sm:$0xff]
  %v99 = vld [vmem:[#allocation2 + $0xf8] sm:$0xff]
  %v100 = vld [vmem:[#allocation2 + $0x100] sm:$0xff]
  %v101 = vld [vmem:[#allocation2 + $0x108] sm:$0xff]
  %v102 = vld [vmem:[#allocation2 + $0x110] sm:$0xff]
  %v103 = vld [vmem:[#allocation2 + $0x118] sm:$0xff]
  %v104 = vld [vmem:[#allocation2 + $0x120] sm:$0xff]
  %v105 = vld [vmem:[#allocation2 + $0x128] sm:$0xff]
  %v106 = vld [vmem:[#allocation2 + $0x130] sm:$0xff]
  %v107 = vld [vmem:[#allocation2 + $0x138] sm:$0xff]
  %v108 = vld [vmem:[#allocation2 + $0x140] sm:$0xff]
  %v109 = vld [vmem:[#allocation2 + $0x148] sm:$0xff]
  %v110 = vld [vmem:[#allocation2 + $0x150] sm:$0xff]
  %v111 = vld [vmem:[#allocation2 + $0x158] sm:$0xff]
  %v112 = vld [vmem:[#allocation2 + $0x160] sm:$0xff]
  %v113 = vld [vmem:[#allocation2 + $0x168] sm:$0xff]
  %v114 = vld [vmem:[#allocation2 + $0x170] sm:$0xff]
  %v115 = vld [vmem:[#allocation2 + $0x178] sm:$0xff]
  %v116 = vld [vmem:[#allocation2 + $0x180] sm:$0xff]
  %v117 = vld [vmem:[%s0] sm:$0xf]
  %v118 = vld [vmem:[%s0 + $0x4] sm:$0xf]
  %v119 = vld [vmem:[%s0 + $0x8] sm:$0xf]
  %v120 = vld [vmem:[%s0 + $0xc] sm:$0xf]
  %v121 = vld [vmem:[%s0 + $0x10] sm:$0xf]
  %v122 = vld [vmem:[%s0 + $0x14] sm:$0xf]
  %v123 = vld [vmem:[%s0 + $0x18] sm:$0xf]
  %v124 = vld [vmem:[%s0 + $0x1c] sm:$0xf]
  %v125 = vld [vmem:[%s0 + $0x20] sm:$0xf]
  %v126 = vld [vmem:[%s0 + $0x24] sm:$0xf]
  %v127 = vld [vmem:[%s0 + $0x28] sm:$0xf]
  %v128 = vld [vmem:[%s0 + $0x2c] sm:$0xf]
  %v129 = vld [vmem:[%s0 + $0x30] sm:$0xf]
  %v130 = vld [vmem:[%s0 + $0x34] sm:$0xf]
  %v131 = vld [vmem:[%s0 + $0x38] sm:$0xf]
  %v132 = vld [vmem:[%s0 + $0x3c] sm:$0xf]
  %v133 = vld [vmem:[%s0 + $0x40] sm:$0xf]
  %v134 = vld [vmem:[%s0 + $0x44] sm:$0xf]
  %v135 = vld [vmem:[%s0 + $0x48] sm:$0xf]
  %v136 = vld [vmem:[%s0 + $0x4c] sm:$0xf]
  %v137 = vld [vmem:[%s0 + $0x50] sm:$0xf]
  %v138 = vld [vmem:[%s0 + $0x54] sm:$0xf]
  %v139 = vld [vmem:[%s0 + $0x58] sm:$0xf]
  %v140 = vld [vmem:[%s0 + $0x5c] sm:$0xf]
  %v141 = vld [vmem:[%s0 + $0x60] sm:$0xf]
  %v142 = vld [vmem:[%s0 + $0x64] sm:$0xf]
  %v143 = vld [vmem:[%s0 + $0x68] sm:$0xf]
  %v144 = vld [vmem:[%s0 + $0x6c] sm:$0xf]
  %v145 = vld [vmem:[%s0 + $0x70] sm:$0xf]
  %v146 = vld [vmem:[%s0 + $0x74] sm:$0xf]
  %v147 = vld [vmem:[%s0 + $0x78] sm:$0xf]
  %v148 = vld [vmem:[%s0 + $0x7c] sm:$0xf]
  %v149 = vld [vmem:[%s0 + $0x80] sm:$0xf]
  %v150 = vld [vmem:[%s0 + $0x84] sm:$0xf]
  %v151 = vld [vmem:[%s0 + $0x88] sm:$0xf]
  %v152 = vld [vmem:[%s0 + $0x8c] sm:$0xf]
  %v153 = vld [vmem:[%s0 + $0x90] sm:$0xf]
  %v154 = vld [vmem:[%s0 + $0x94] sm:$0xf]
  %v155 = vld [vmem:[%s0 + $0x98] sm:$0xf]
  %v156 = vld [vmem:[%s0 + $0x9c] sm:$0xf]
  %v157 = vld [vmem:[%s0 + $0xa0] sm:$0xf]
  %v158 = vld [vmem:[%s0 + $0xa4] sm:$0xf]
  %v159 = vld [vmem:[%s0 + $0xa8] sm:$0xf]
  %v160 = vld [vmem:[%s0 + $0xac] sm:$0xf]
  %v161 = vld [vmem:[%s0 + $0xb0] sm:$0xf]
  %v162 = vld [vmem:[%s0 + $0xb4] sm:$0xf]
  %v163 = vld [vmem:[%s0 + $0xb8] sm:$0xf]
  %v164 = vld [vmem:[%s0 + $0xbc] sm:$0xf]
  %v165 = vld [vmem:[%s0 + $0xc0] sm:$0xf]
  %v166 = vld [vmem:[%s1] sm:$0xf]
  %v167 = vld [vmem:[%s1 + $0x4] sm:$0xf]
  %v168 = vld [vmem:[%s1 + $0x8] sm:$0xf]
  %v169 = vld [vmem:[%s1 + $0xc] sm:$0xf]
  %v170 = vld [vmem:[%s1 + $0x10] sm:$0xf]
  %v171 = vld [vmem:[%s1 + $0x14] sm:$0xf]
  %v172 = vld [vmem:[%s1 + $0x18] sm:$0xf]
  %v173 = vld [vmem:[%s1 + $0x1c] sm:$0xf]
  %v174 = vld [vmem:[%s1 + $0x20] sm:$0xf]
  %v175 = vld [vmem:[%s1 + $0x24] sm:$0xf]
  %v176 = vld [vmem:[%s1 + $0x28] sm:$0xf]
  %v177 = vld [vmem:[%s1 + $0x2c] sm:$0xf]
  %v178 = vld [vmem:[%s1 + $0x30] sm:$0xf]
  %v179 = vld [vmem:[%s1 + $0x34] sm:$0xf]
  %v180 = vld [vmem:[%s1 + $0x38] sm:$0xf]
  %v181 = vld [vmem:[%s1 + $0x3c] sm:$0xf]
  %v231 = vunpack.c.l.b16 %v117
  %v232 = vunpack.c.l.b16 %v118
  %v233 = vunpack.c.l.b16 %v119
  %v234 = vunpack.c.l.b16 %v120
  %v235 = vunpack.c.l.b16 %v121
  %v236 = vunpack.c.l.b16 %v122
  %v237 = vunpack.c.l.b16 %v123
  %v238 = vunpack.c.l.b16 %v124
  %v239 = vunpack.c.l.b16 %v125
  %v240 = vunpack.c.l.b16 %v126
  %v241 = vunpack.c.l.b16 %v127
  %v242 = vunpack.c.l.b16 %v128
  %v243 = vunpack.c.l.b16 %v129
  %v244 = vunpack.c.l.b16 %v130
  %v245 = vunpack.c.l.b16 %v131
  %v246 = vunpack.c.l.b16 %v132
  %v247 = vunpack.c.l.b16 %v133
  %v248 = vunpack.c.l.b16 %v134
  %v249 = vunpack.c.l.b16 %v135
  %v250 = vunpack.c.l.b16 %v136
  %v251 = vunpack.c.l.b16 %v137
  %v252 = vunpack.c.l.b16 %v138
  %v253 = vunpack.c.l.b16 %v139
  %v254 = vunpack.c.l.b16 %v140
  %v255 = vunpack.c.l.b16 %v141
  %v256 = vunpack.c.l.b16 %v142
  %v257 = vunpack.c.l.b16 %v143
  %v258 = vunpack.c.l.b16 %v144
  %v259 = vunpack.c.l.b16 %v145
  %v260 = vunpack.c.l.b16 %v146
  %v261 = vunpack.c.l.b16 %v147
  %v262 = vunpack.c.l.b16 %v148
  %v263 = vunpack.c.l.b16 %v149
  %v264 = vunpack.c.l.b16 %v150
  %v265 = vunpack.c.l.b16 %v151
  %v266 = vunpack.c.l.b16 %v152
  %v267 = vunpack.c.l.b16 %v153
  %v268 = vunpack.c.l.b16 %v154
  %v269 = vunpack.c.l.b16 %v155
  %v270 = vunpack.c.l.b16 %v156
  %v271 = vunpack.c.l.b16 %v157
  %v272 = vunpack.c.l.b16 %v158
  %v273 = vunpack.c.l.b16 %v159
  %v274 = vunpack.c.l.b16 %v160
  %v275 = vunpack.c.l.b16 %v161
  %v276 = vunpack.c.l.b16 %v162
  %v277 = vunpack.c.l.b16 %v163
  %v278 = vunpack.c.l.b16 %v164
  %v279 = vunpack.c.l.b16 %v165
  %v280 = vpack.c.b16 %v232, %v231
  %v281 = vpack.c.b16 %v234, %v233
  %v282 = vpack.c.b16 %v236, %v235
  %v283 = vpack.c.b16 %v238, %v237
  %v284 = vpack.c.b16 %v240, %v239
  %v285 = vpack.c.b16 %v242, %v241
  %v286 = vpack.c.b16 %v244, %v243
  %v287 = vpack.c.b16 %v246, %v245
  %v288 = vpack.c.b16 %v248, %v247
  %v289 = vpack.c.b16 %v250, %v249
  %v290 = vpack.c.b16 %v252, %v251
  %v291 = vpack.c.b16 %v254, %v253
  %v292 = vpack.c.b16 %v256, %v255
  %v293 = vpack.c.b16 %v258, %v257
  %v294 = vpack.c.b16 %v260, %v259
  %v295 = vpack.c.b16 %v262, %v261
  %v296 = vpack.c.b16 %v264, %v263
  %v297 = vpack.c.b16 %v266, %v265
  %v298 = vpack.c.b16 %v268, %v267
  %v299 = vpack.c.b16 %v270, %v269
  %v300 = vpack.c.b16 %v272, %v271
  %v301 = vpack.c.b16 %v274, %v273
  %v302 = vpack.c.b16 %v276, %v275
  %v303 = vpack.c.b16 %v278, %v277
  %v304 = vpack.c.b16 %v279, %v279
  %v346 = vunpack.c.l.b16 %v166
  %v347 = vunpack.c.l.b16 %v167
  %v348 = vunpack.c.l.b16 %v168
  %v349 = vunpack.c.l.b16 %v169
  %v350 = vunpack.c.l.b16 %v170
  %v351 = vunpack.c.l.b16 %v171
  %v352 = vunpack.c.l.b16 %v172
  %v353 = vunpack.c.l.b16 %v173
  %v354 = vunpack.c.l.b16 %v174
  %v355 = vunpack.c.l.b16 %v175
  %v356 = vunpack.c.l.b16 %v176
  %v357 = vunpack.c.l.b16 %v177
  %v358 = vunpack.c.l.b16 %v178
  %v359 = vunpack.c.l.b16 %v179
  %v360 = vunpack.c.l.b16 %v180
  %v361 = vunpack.c.l.b16 %v181
  %v362 = vpack.c.b16 %v347, %v346
  %v363 = vpack.c.b16 %v349, %v348
  %v364 = vpack.c.b16 %v351, %v350
  %v365 = vpack.c.b16 %v353, %v352
  %v366 = vpack.c.b16 %v355, %v354
  %v367 = vpack.c.b16 %v357, %v356
  %v368 = vpack.c.b16 %v359, %v358
  %v369 = vpack.c.b16 %v361, %v360
  %378 = vmatprep.subr.bf16.mxu0 0
  %379 = vmatpush1.bf16.msra.mxu0 %v362
  %380 = vmatprep.subr.bf16.mxu0 0
  %381 = vmatpush1.bf16.msra.mxu0 %v363
  %382 = vmatprep.subr.bf16.mxu0 0
  %383 = vmatpush1.bf16.msra.mxu0 %v364
  %384 = vmatprep.subr.bf16.mxu0 0
  %385 = vmatpush1.bf16.msra.mxu0 %v365
  %386 = vmatprep.subr.bf16.mxu0 0
  %387 = vmatpush1.bf16.msra.mxu0 %v366
  %388 = vmatprep.subr.bf16.mxu0 0
  %389 = vmatpush1.bf16.msra.mxu0 %v367
  %390 = vmatprep.subr.bf16.mxu0 0
  %391 = vmatpush1.bf16.msra.mxu0 %v368
  %392 = vmatprep.subr.bf16.mxu0 0
  %393 = vmatpush1.bf16.msra.mxu0 %v369
  %394 = vmatprep.subr.bf16.mxu0 0
  %395 = vmatpush1.bf16.msra.mxu0 0
  %396 = vmatprep.subr.bf16.mxu0 0
  %397 = vmatpush1.bf16.msra.mxu0 0
  %398 = vmatprep.subr.bf16.mxu0 0
  %399 = vmatpush1.bf16.msra.mxu0 0
  %400 = vmatprep.subr.bf16.mxu0 0
  %401 = vmatpush1.bf16.msra.mxu0 0
  %402 = vmatprep.subr.bf16.mxu0 0
  %403 = vmatpush1.bf16.msra.mxu0 0
  %404 = vmatprep.subr.bf16.mxu0 0
  %405 = vmatpush1.bf16.msra.mxu0 0
  %406 = vmatprep.subr.bf16.mxu0 0
  %407 = vmatpush1.bf16.msra.mxu0 0
  %408 = vmatprep.subr.bf16.mxu0 0
  %409 = vmatpush1.bf16.msra.mxu0 0
  %410 = vmatprep.mubr.bf16.mxu0 0
  %411 = vmatmul.mubr.bf16.gmra.mrb[0].mxu0 %v280
  %v412 = vpop.f32.mrb[0].mxu0
  %v413 = vadd.f32 0.0, %v412
  %v414 = vpop.f32.mrb[0].mxu0
  %v415 = vpop.f32.mrb[0].mxu0
  %v416 = vadd.f32 0.0, %v415
  %v417 = vpop.f32.mrb[0].mxu0
  %418 = vmatprep.mubr.bf16.mxu0 0
  %419 = vmatmul.mubr.bf16.gmra.mrb[0].mxu0 %v281
  %v420 = vpop.f32.mrb[0].mxu0
  %v421 = vadd.f32 0.0, %v420
  %v422 = vpop.f32.mrb[0].mxu0
  %v423 = vpop.f32.mrb[0].mxu0
  %v424 = vadd.f32 0.0, %v423
  %v425 = vpop.f32.mrb[0].mxu0
  %426 = vmatprep.mubr.bf16.mxu0 0
  %427 = vmatmul.mubr.bf16.gmra.mrb[0].mxu0 %v282
  %v428 = vpop.f32.mrb[0].mxu0
  %v429 = vadd.f32 0.0, %v428
  %v430 = vpop.f32.mrb[0].mxu0
  %v431 = vpop.f32.mrb[0].mxu0
  %v432 = vadd.f32 0.0, %v431
  %v433 = vpop.f32.mrb[0].mxu0
  %434 = vmatprep.mubr.bf16.mxu0 0
  %435 = vmatmul.mubr.bf16.gmra.mrb[0].mxu0 %v283
  %v436 = vpop.f32.mrb[0].mxu0
  %v437 = vadd.f32 0.0, %v436
  %v438 = vpop.f32.mrb[0].mxu0
  %v439 = vpop.f32.mrb[0].mxu0
  %v440 = vadd.f32 0.0, %v439
  %v441 = vpop.f32.mrb[0].mxu0
  %442 = vmatprep.mubr.bf16.mxu0 0
  %443 = vmatmul.mubr.bf16.gmra.mrb[0].mxu0 %v284
  %v444 = vpop.f32.mrb[0].mxu0
  %v445 = vadd.f32 0.0, %v444
  %v446 = vpop.f32.mrb[0].mxu0
  %v447 = vpop.f32.mrb[0].mxu0
  %v448 = vadd.f32 0.0, %v447
  %v449 = vpop.f32.mrb[0].mxu0
  %450 = vmatprep.mubr.bf16.mxu0 0
  %451 = vmatmul.mubr.bf16.gmra.mrb[0].mxu0 %v285
  %v452 = vpop.f32.mrb[0].mxu0
  %v453 = vadd.f32 0.0, %v452
  %v454 = vpop.f32.mrb[0].mxu0
  %v455 = vpop.f32.mrb[0].mxu0
  %v456 = vadd.f32 0.0, %v455
  %v457 = vpop.f32.mrb[0].mxu0
  %458 = vmatprep.mubr.bf16.mxu0 0
  %459 = vmatmul.mubr.bf16.gmra.mrb[0].mxu0 %v286
  %v460 = vpop.f32.mrb[0].mxu0
  %v461 = vadd.f32 0.0, %v460
  %v462 = vpop.f32.mrb[0].mxu0
  %v463 = vpop.f32.mrb[0].mxu0
  %v464 = vadd.f32 0.0, %v463
  %v465 = vpop.f32.mrb[0].mxu0
  %466 = vmatprep.mubr.bf16.mxu0 0
  %467 = vmatmul.mubr.bf16.gmra.mrb[0].mxu0 %v287
  %v468 = vpop.f32.mrb[0].mxu0
  %v469 = vadd.f32 0.0, %v468
  %v470 = vpop.f32.mrb[0].mxu0
  %v471 = vpop.f32.mrb[0].mxu0
  %v472 = vadd.f32 0.0, %v471
  %v473 = vpop.f32.mrb[0].mxu0
  %474 = vmatprep.mubr.bf16.mxu0 0
  %475 = vmatmul.mubr.bf16.gmra.mrb[0].mxu0 %v288
  %v476 = vpop.f32.mrb[0].mxu0
  %v477 = vadd.f32 0.0, %v476
  %v478 = vpop.f32.mrb[0].mxu0
  %v479 = vpop.f32.mrb[0].mxu0
  %v480 = vadd.f32 0.0, %v479
  %v481 = vpop.f32.mrb[0].mxu0
  %482 = vmatprep.mubr.bf16.mxu0 0
  %483 = vmatmul.mubr.bf16.gmra.mrb[0].mxu0 %v289
  %v484 = vpop.f32.mrb[0].mxu0
  %v485 = vadd.f32 0.0, %v484
  %v486 = vpop.f32.mrb[0].mxu0
  %v487 = vpop.f32.mrb[0].mxu0
  %v488 = vadd.f32 0.0, %v487
  %v489 = vpop.f32.mrb[0].mxu0
  %490 = vmatprep.mubr.bf16.mxu0 0
  %491 = vmatmul.mubr.bf16.gmra.mrb[0].mxu0 %v290
  %v492 = vpop.f32.mrb[0].mxu0
  %v493 = vadd.f32 0.0, %v492
  %v494 = vpop.f32.mrb[0].mxu0
  %v495 = vpop.f32.mrb[0].mxu0
  %v496 = vadd.f32 0.0, %v495
  %v497 = vpop.f32.mrb[0].mxu0
  %498 = vmatprep.mubr.bf16.mxu0 0
  %499 = vmatmul.mubr.bf16.gmra.mrb[0].mxu0 %v291
  %v500 = vpop.f32.mrb[0].mxu0
  %v501 = vadd.f32 0.0, %v500
  %v502 = vpop.f32.mrb[0].mxu0
  %v503 = vpop.f32.mrb[0].mxu0
  %v504 = vadd.f32 0.0, %v503
  %v505 = vpop.f32.mrb[0].mxu0
  %506 = vmatprep.mubr.bf16.mxu0 0
  %507 = vmatmul.mubr.bf16.gmra.mrb[0].mxu0 %v292
  %v508 = vpop.f32.mrb[0].mxu0
  %v509 = vadd.f32 0.0, %v508
  %v510 = vpop.f32.mrb[0].mxu0
  %v511 = vpop.f32.mrb[0].mxu0
  %v512 = vadd.f32 0.0, %v511
  %v513 = vpop.f32.mrb[0].mxu0
  %514 = vmatprep.mubr.bf16.mxu0 0
  %515 = vmatmul.mubr.bf16.gmra.mrb[0].mxu0 %v293
  %v516 = vpop.f32.mrb[0].mxu0
  %v517 = vadd.f32 0.0, %v516
  %v518 = vpop.f32.mrb[0].mxu0
  %v519 = vpop.f32.mrb[0].mxu0
  %v520 = vadd.f32 0.0, %v519
  %v521 = vpop.f32.mrb[0].mxu0
  %522 = vmatprep.mubr.bf16.mxu0 0
  %523 = vmatmul.mubr.bf16.gmra.mrb[0].mxu0 %v294
  %v524 = vpop.f32.mrb[0].mxu0
  %v525 = vadd.f32 0.0, %v524
  %v526 = vpop.f32.mrb[0].mxu0
  %v527 = vpop.f32.mrb[0].mxu0
  %v528 = vadd.f32 0.0, %v527
  %v529 = vpop.f32.mrb[0].mxu0
  %530 = vmatprep.mubr.bf16.mxu0 0
  %531 = vmatmul.mubr.bf16.gmra.mrb[0].mxu0 %v295
  %v532 = vpop.f32.mrb[0].mxu0
  %v533 = vadd.f32 0.0, %v532
  %v534 = vpop.f32.mrb[0].mxu0
  %v535 = vpop.f32.mrb[0].mxu0
  %v536 = vadd.f32 0.0, %v535
  %v537 = vpop.f32.mrb[0].mxu0
  %538 = vmatprep.mubr.bf16.mxu0 0
  %539 = vmatmul.mubr.bf16.gmra.mrb[0].mxu0 %v296
  %v540 = vpop.f32.mrb[0].mxu0
  %v541 = vadd.f32 0.0, %v540
  %v542 = vpop.f32.mrb[0].mxu0
  %v543 = vpop.f32.mrb[0].mxu0
  %v544 = vadd.f32 0.0, %v543
  %v545 = vpop.f32.mrb[0].mxu0
  %546 = vmatprep.mubr.bf16.mxu0 0
  %547 = vmatmul.mubr.bf16.gmra.mrb[0].mxu0 %v297
  %v548 = vpop.f32.mrb[0].mxu0
  %v549 = vadd.f32 0.0, %v548
  %v550 = vpop.f32.mrb[0].mxu0
  %v551 = vpop.f32.mrb[0].mxu0
  %v552 = vadd.f32 0.0, %v551
  %v553 = vpop.f32.mrb[0].mxu0
  %554 = vmatprep.mubr.bf16.mxu0 0
  %555 = vmatmul.mubr.bf16.gmra.mrb[0].mxu0 %v298
  %v556 = vpop.f32.mrb[0].mxu0
  %v557 = vadd.f32 0.0, %v556
  %v558 = vpop.f32.mrb[0].mxu0
  %v559 = vpop.f32.mrb[0].mxu0
  %v560 = vadd.f32 0.0, %v559
  %v561 = vpop.f32.mrb[0].mxu0
  %562 = vmatprep.mubr.bf16.mxu0 0
  %563 = vmatmul.mubr.bf16.gmra.mrb[0].mxu0 %v299
  %v564 = vpop.f32.mrb[0].mxu0
  %v565 = vadd.f32 0.0, %v564
  %v566 = vpop.f32.mrb[0].mxu0
  %v567 = vpop.f32.mrb[0].mxu0
  %v568 = vadd.f32 0.0, %v567
  %v569 = vpop.f32.mrb[0].mxu0
  %570 = vmatprep.mubr.bf16.mxu0 0
  %571 = vmatmul.mubr.bf16.gmra.mrb[0].mxu0 %v300
  %v572 = vpop.f32.mrb[0].mxu0
  %v573 = vadd.f32 0.0, %v572
  %v574 = vpop.f32.mrb[0].mxu0
  %v575 = vpop.f32.mrb[0].mxu0
  %v576 = vadd.f32 0.0, %v575
  %v577 = vpop.f32.mrb[0].mxu0
  %578 = vmatprep.mubr.bf16.mxu0 0
  %579 = vmatmul.mubr.bf16.gmra.mrb[0].mxu0 %v301
  %v580 = vpop.f32.mrb[0].mxu0
  %v581 = vadd.f32 0.0, %v580
  %v582 = vpop.f32.mrb[0].mxu0
  %v583 = vpop.f32.mrb[0].mxu0
  %v584 = vadd.f32 0.0, %v583
  %v585 = vpop.f32.mrb[0].mxu0
  %586 = vmatprep.mubr.bf16.mxu0 0
  %587 = vmatmul.mubr.bf16.gmra.mrb[0].mxu0 %v302
  %v588 = vpop.f32.mrb[0].mxu0
  %v589 = vadd.f32 0.0, %v588
  %v590 = vpop.f32.mrb[0].mxu0
  %v591 = vpop.f32.mrb[0].mxu0
  %v592 = vadd.f32 0.0, %v591
  %v593 = vpop.f32.mrb[0].mxu0
  %594 = vmatprep.mubr.bf16.mxu0 0
  %595 = vmatmul.mubr.bf16.gmra.mrb[0].mxu0 %v303
  %v596 = vpop.f32.mrb[0].mxu0
  %v597 = vadd.f32 0.0, %v596
  %v598 = vpop.f32.mrb[0].mxu0
  %v599 = vpop.f32.mrb[0].mxu0
  %v600 = vadd.f32 0.0, %v599
  %v601 = vpop.f32.mrb[0].mxu0
  %602 = vmatprep.mubr.bf16.mxu0 0
  %603 = vmatmul.mubr.bf16.gmra.mrb[0].mxu0 %v304
  %v604 = vpop.f32.mrb[0].mxu0
  %v605 = vadd.f32 0.0, %v604
  %v606 = vpop.f32.mrb[0].mxu0
  %v607 = vpop.f32.mrb[0].mxu0
  %v608 = vpop.f32.mrb[0].mxu0
  %609 = vdwg.mxu0
  %v610 = vadd.f32 %v68, %v413
  %v611 = vadd.f32 %v69, %v416
  %v612 = vadd.f32 %v70, %v421
  %v613 = vadd.f32 %v71, %v424
  %v614 = vadd.f32 %v72, %v429
  %v615 = vadd.f32 %v73, %v432
  %v616 = vadd.f32 %v74, %v437
  %v617 = vadd.f32 %v75, %v440
  %v618 = vadd.f32 %v76, %v445
  %v619 = vadd.f32 %v77, %v448
  %v620 = vadd.f32 %v78, %v453
  %v621 = vadd.f32 %v79, %v456
  %v622 = vadd.f32 %v80, %v461
  %v623 = vadd.f32 %v81, %v464
  %v624 = vadd.f32 %v82, %v469
  %v625 = vadd.f32 %v83, %v472
  %v626 = vadd.f32 %v84, %v477
  %v627 = vadd.f32 %v85, %v480
  %v628 = vadd.f32 %v86, %v485
  %v629 = vadd.f32 %v87, %v488
  %v630 = vadd.f32 %v88, %v493
  %v631 = vadd.f32 %v89, %v496
  %v632 = vadd.f32 %v90, %v501
  %v633 = vadd.f32 %v91, %v504
  %v634 = vadd.f32 %v92, %v509
  %v635 = vadd.f32 %v93, %v512
  %v636 = vadd.f32 %v94, %v517
  %v637 = vadd.f32 %v95, %v520
  %v638 = vadd.f32 %v96, %v525
  %v639 = vadd.f32 %v97, %v528
  %v640 = vadd.f32 %v98, %v533
  %v641 = vadd.f32 %v99, %v536
  %v642 = vadd.f32 %v100, %v541
  %v643 = vadd.f32 %v101, %v544
  %v644 = vadd.f32 %v102, %v549
  %v645 = vadd.f32 %v103, %v552
  %v646 = vadd.f32 %v104, %v557
  %v647 = vadd.f32 %v105, %v560
  %v648 = vadd.f32 %v106, %v565
  %v649 = vadd.f32 %v107, %v568
  %v650 = vadd.f32 %v108, %v573
  %v651 = vadd.f32 %v109, %v576
  %v652 = vadd.f32 %v110, %v581
  %v653 = vadd.f32 %v111, %v584
  %v654 = vadd.f32 %v112, %v589
  %v655 = vadd.f32 %v113, %v592
  %v656 = vadd.f32 %v114, %v597
  %v657 = vadd.f32 %v115, %v600
  %v658 = vadd.f32 %v116, %v605
  %659 = vst [vmem:[#allocation2] sm:$0xff] %v610
  %660 = vst [vmem:[#allocation2 + $0x8] sm:$0xff] %v611
  %661 = vst [vmem:[#allocation2 + $0x10] sm:$0xff] %v612
  %662 = vst [vmem:[#allocation2 + $0x18] sm:$0xff] %v613
  %663 = vst [vmem:[#allocation2 + $0x20] sm:$0xff] %v614
  %664 = vst [vmem:[#allocation2 + $0x28] sm:$0xff] %v615
  %665 = vst [vmem:[#allocation2 + $0x30] sm:$0xff] %v616
  %666 = vst [vmem:[#allocation2 + $0x38] sm:$0xff] %v617
  %667 = vst [vmem:[#allocation2 + $0x40] sm:$0xff] %v618
  %668 = vst [vmem:[#allocation2 + $0x48] sm:$0xff] %v619
  %669 = vst [vmem:[#allocation2 + $0x50] sm:$0xff] %v620
  %670 = vst [vmem:[#allocation2 + $0x58] sm:$0xff] %v621
  %671 = vst [vmem:[#allocation2 + $0x60] sm:$0xff] %v622
  %672 = vst [vmem:[#allocation2 + $0x68] sm:$0xff] %v623
  %673 = vst [vmem:[#allocation2 + $0x70] sm:$0xff] %v624
  %674 = vst [vmem:[#allocation2 + $0x78] sm:$0xff] %v625
  %675 = vst [vmem:[#allocation2 + $0x80] sm:$0xff] %v626
  %676 = vst [vmem:[#allocation2 + $0x88] sm:$0xff] %v627
  %677 = vst [vmem:[#allocation2 + $0x90] sm:$0xff] %v628
  %678 = vst [vmem:[#allocation2 + $0x98] sm:$0xff] %v629
  %679 = vst [vmem:[#allocation2 + $0xa0] sm:$0xff] %v630
  %680 = vst [vmem:[#allocation2 + $0xa8] sm:$0xff] %v631
  %681 = vst [vmem:[#allocation2 + $0xb0] sm:$0xff] %v632
  %682 = vst [vmem:[#allocation2 + $0xb8] sm:$0xff] %v633
  %683 = vst [vmem:[#allocation2 + $0xc0] sm:$0xff] %v634
  %684 = vst [vmem:[#allocation2 + $0xc8] sm:$0xff] %v635
  %685 = vst [vmem:[#allocation2 + $0xd0] sm:$0xff] %v636
  %686 = vst [vmem:[#allocation2 + $0xd8] sm:$0xff] %v637
  %687 = vst [vmem:[#allocation2 + $0xe0] sm:$0xff] %v638
  %688 = vst [vmem:[#allocation2 + $0xe8] sm:$0xff] %v639
  %689 = vst [vmem:[#allocation2 + $0xf0] sm:$0xff] %v640
  %690 = vst [vmem:[#allocation2 + $0xf8] sm:$0xff] %v641
  %691 = vst [vmem:[#allocation2 + $0x100] sm:$0xff] %v642
  %692 = vst [vmem:[#allocation2 + $0x108] sm:$0xff] %v643
  %693 = vst [vmem:[#allocation2 + $0x110] sm:$0xff] %v644
  %694 = vst [vmem:[#allocation2 + $0x118] sm:$0xff] %v645
  %695 = vst [vmem:[#allocation2 + $0x120] sm:$0xff] %v646
  %696 = vst [vmem:[#allocation2 + $0x128] sm:$0xff] %v647
  %697 = vst [vmem:[#allocation2 + $0x130] sm:$0xff] %v648
  %698 = vst [vmem:[#allocation2 + $0x138] sm:$0xff] %v649
  %699 = vst [vmem:[#allocation2 + $0x140] sm:$0xff] %v650
  %700 = vst [vmem:[#allocation2 + $0x148] sm:$0xff] %v651
  %701 = vst [vmem:[#allocation2 + $0x150] sm:$0xff] %v652
  %702 = vst [vmem:[#allocation2 + $0x158] sm:$0xff] %v653
  %703 = vst [vmem:[#allocation2 + $0x160] sm:$0xff] %v654
  %704 = vst [vmem:[#allocation2 + $0x168] sm:$0xff] %v655
  %705 = vst [vmem:[#allocation2 + $0x170] sm:$0xff] %v656
  %706 = vst [vmem:[#allocation2 + $0x178] sm:$0xff] %v657
  %707 = vst [vmem:[#allocation2 + $0x180] sm:$0xff] %v658
  // Predicated region
  $region18: #{siamfc_forward.4} parent=0 // pred_check
    %p708 = pneg %p15
  $region19: #{siamfc_forward.4} parent=0 // pred_check_branch
    %710 = sbr.rel (%p708) target = $region21
  $region20: #{siamfc_forward.4} parent=0 // pred_region
    %v711 = vld [vmem:[#allocation2] sm:$0xff]
    %v712 = vld [vmem:[#allocation2 + $0x8] sm:$0xff]
    %v713 = vld [vmem:[#allocation2 + $0x10] sm:$0xff]
    %v714 = vld [vmem:[#allocation2 + $0x18] sm:$0xff]
    %v715 = vld [vmem:[#allocation2 + $0x20] sm:$0xff]
    %v716 = vld [vmem:[#allocation2 + $0x28] sm:$0xff]
    %v717 = vld [vmem:[#allocation2 + $0x30] sm:$0xff]
    %v718 = vld [vmem:[#allocation2 + $0x38] sm:$0xff]
    %v719 = vld [vmem:[#allocation2 + $0x40] sm:$0xff]
    %v720 = vld [vmem:[#allocation2 + $0x48] sm:$0xff]
    %v721 = vld [vmem:[#allocation2 + $0x50] sm:$0xff]
    %v722 = vld [vmem:[#allocation2 + $0x58] sm:$0xff]
    %v723 = vld [vmem:[#allocation2 + $0x60] sm:$0xff]
    %v724 = vld [vmem:[#allocation2 + $0x68] sm:$0xff]
    %v725 = vld [vmem:[#allocation2 + $0x70] sm:$0xff]
    %v726 = vld [vmem:[#allocation2 + $0x78] sm:$0xff]
    %v727 = vld [vmem:[#allocation2 + $0x80] sm:$0xff]
    %v728 = vld [vmem:[#allocation2 + $0x88] sm:$0xff]
    %v729 = vld [vmem:[#allocation2 + $0x90] sm:$0xff]
    %v730 = vld [vmem:[#allocation2 + $0x98] sm:$0xff]
    %v731 = vld [vmem:[#allocation2 + $0xa0] sm:$0xff]
    %v732 = vld [vmem:[#allocation2 + $0xa8] sm:$0xff]
    %v733 = vld [vmem:[#allocation2 + $0xb0] sm:$0xff]
    %v734 = vld [vmem:[#allocation2 + $0xb8] sm:$0xff]
    %v735 = vld [vmem:[#allocation2 + $0xc0] sm:$0xff]
    %v736 = vld [vmem:[#allocation2 + $0xc8] sm:$0xff]
    %v737 = vld [vmem:[#allocation2 + $0xd0] sm:$0xff]
    %v738 = vld [vmem:[#allocation2 + $0xd8] sm:$0xff]
    %v739 = vld [vmem:[#allocation2 + $0xe0] sm:$0xff]
    %v740 = vld [vmem:[#allocation2 + $0xe8] sm:$0xff]
    %v741 = vld [vmem:[#allocation2 + $0xf0] sm:$0xff]
    %v742 = vld [vmem:[#allocation2 + $0xf8] sm:$0xff]
    %v743 = vld [vmem:[#allocation2 + $0x100] sm:$0xff]
    %v744 = vld [vmem:[#allocation2 + $0x108] sm:$0xff]
    %v745 = vld [vmem:[#allocation2 + $0x110] sm:$0xff]
    %v746 = vld [vmem:[#allocation2 + $0x118] sm:$0xff]
    %v747 = vld [vmem:[#allocation2 + $0x120] sm:$0xff]
    %v748 = vld [vmem:[#allocation2 + $0x128] sm:$0xff]
    %v749 = vld [vmem:[#allocation2 + $0x130] sm:$0xff]
    %v750 = vld [vmem:[#allocation2 + $0x138] sm:$0xff]
    %v751 = vld [vmem:[#allocation2 + $0x140] sm:$0xff]
    %v752 = vld [vmem:[#allocation2 + $0x148] sm:$0xff]
    %v753 = vld [vmem:[#allocation2 + $0x150] sm:$0xff]
    %v754 = vld [vmem:[#allocation2 + $0x158] sm:$0xff]
    %v755 = vld [vmem:[#allocation2 + $0x160] sm:$0xff]
    %v756 = vld [vmem:[#allocation2 + $0x168] sm:$0xff]
    %v757 = vld [vmem:[#allocation2 + $0x170] sm:$0xff]
    %v758 = vld [vmem:[#allocation2 + $0x178] sm:$0xff]
    %v759 = vld [vmem:[#allocation2 + $0x180] sm:$0xff]
    %v760 = vld [vmem:[%s2] sm:$0x1]
    %v762 = vlaneseq
    %v763 = vshrl.u32 %v762, 7
    %v764 = vsub.s32 0, %v763
    %v765 = vrot.slane %v760, %v764
    %v767 = vadd.f32 %v711, %v765
    %v768 = vadd.f32 %v712, %v765
    %v769 = vadd.f32 %v713, %v765
    %v770 = vadd.f32 %v714, %v765
    %v771 = vadd.f32 %v715, %v765
    %v772 = vadd.f32 %v716, %v765
    %v773 = vadd.f32 %v717, %v765
    %v774 = vadd.f32 %v718, %v765
    %v775 = vadd.f32 %v719, %v765
    %v776 = vadd.f32 %v720, %v765
    %v777 = vadd.f32 %v721, %v765
    %v778 = vadd.f32 %v722, %v765
    %v779 = vadd.f32 %v723, %v765
    %v780 = vadd.f32 %v724, %v765
    %v781 = vadd.f32 %v725, %v765
    %v782 = vadd.f32 %v726, %v765
    %v783 = vadd.f32 %v727, %v765
    %v784 = vadd.f32 %v728, %v765
    %v785 = vadd.f32 %v729, %v765
    %v786 = vadd.f32 %v730, %v765
    %v787 = vadd.f32 %v731, %v765
    %v788 = vadd.f32 %v732, %v765
    %v789 = vadd.f32 %v733, %v765
    %v790 = vadd.f32 %v734, %v765
    %v791 = vadd.f32 %v735, %v765
    %v792 = vadd.f32 %v736, %v765
    %v793 = vadd.f32 %v737, %v765
    %v794 = vadd.f32 %v738, %v765
    %v795 = vadd.f32 %v739, %v765
    %v796 = vadd.f32 %v740, %v765
    %v797 = vadd.f32 %v741, %v765
    %v798 = vadd.f32 %v742, %v765
    %v799 = vadd.f32 %v743, %v765
    %v800 = vadd.f32 %v744, %v765
    %v801 = vadd.f32 %v745, %v765
    %v802 = vadd.f32 %v746, %v765
    %v803 = vadd.f32 %v747, %v765
    %v804 = vadd.f32 %v748, %v765
    %v805 = vadd.f32 %v749, %v765
    %v806 = vadd.f32 %v750, %v765
    %v807 = vadd.f32 %v751, %v765
    %v808 = vadd.f32 %v752, %v765
    %v809 = vadd.f32 %v753, %v765
    %v810 = vadd.f32 %v754, %v765
    %v811 = vadd.f32 %v755, %v765
    %v812 = vadd.f32 %v756, %v765
    %v813 = vadd.f32 %v757, %v765
    %v814 = vadd.f32 %v758, %v765
    %v815 = vadd.f32 %v759, %v765
    %v816 = vmax.f32 %v767, 0.0
    %v817 = vmax.f32 %v768, 0.0
    %v818 = vmax.f32 %v769, 0.0
    %v819 = vmax.f32 %v770, 0.0
    %v820 = vmax.f32 %v771, 0.0
    %v821 = vmax.f32 %v772, 0.0
    %v822 = vmax.f32 %v773, 0.0
    %v823 = vmax.f32 %v774, 0.0
    %v824 = vmax.f32 %v775, 0.0
    %v825 = vmax.f32 %v776, 0.0
    %v826 = vmax.f32 %v777, 0.0
    %v827 = vmax.f32 %v778, 0.0
    %v828 = vmax.f32 %v779, 0.0
    %v829 = vmax.f32 %v780, 0.0
    %v830 = vmax.f32 %v781, 0.0
    %v831 = vmax.f32 %v782, 0.0
    %v832 = vmax.f32 %v783, 0.0
    %v833 = vmax.f32 %v784, 0.0
    %v834 = vmax.f32 %v785, 0.0
    %v835 = vmax.f32 %v786, 0.0
    %v836 = vmax.f32 %v787, 0.0
    %v837 = vmax.f32 %v788, 0.0
    %v838 = vmax.f32 %v789, 0.0
    %v839 = vmax.f32 %v790, 0.0
    %v840 = vmax.f32 %v791, 0.0
    %v841 = vmax.f32 %v792, 0.0
    %v842 = vmax.f32 %v793, 0.0
    %v843 = vmax.f32 %v794, 0.0
    %v844 = vmax.f32 %v795, 0.0
    %v845 = vmax.f32 %v796, 0.0
    %v846 = vmax.f32 %v797, 0.0
    %v847 = vmax.f32 %v798, 0.0
    %v848 = vmax.f32 %v799, 0.0
    %v849 = vmax.f32 %v800, 0.0
    %v850 = vmax.f32 %v801, 0.0
    %v851 = vmax.f32 %v802, 0.0
    %v852 = vmax.f32 %v803, 0.0
    %v853 = vmax.f32 %v804, 0.0
    %v854 = vmax.f32 %v805, 0.0
    %v855 = vmax.f32 %v806, 0.0
    %v856 = vmax.f32 %v807, 0.0
    %v857 = vmax.f32 %v808, 0.0
    %v858 = vmax.f32 %v809, 0.0
    %v859 = vmax.f32 %v810, 0.0
    %v860 = vmax.f32 %v811, 0.0
    %v861 = vmax.f32 %v812, 0.0
    %v862 = vmax.f32 %v813, 0.0
    %v863 = vmax.f32 %v814, 0.0
    %v864 = vmax.f32 %v815, 0.0
    %v865 = vpack.c.bf16 %v817, %v816
    %v866 = vpack.c.bf16 %v819, %v818
    %v867 = vpack.c.bf16 %v821, %v820
    %v868 = vpack.c.bf16 %v823, %v822
    %v869 = vpack.c.bf16 %v825, %v824
    %v870 = vpack.c.bf16 %v827, %v826
    %v871 = vpack.c.bf16 %v829, %v828
    %v872 = vpack.c.bf16 %v831, %v830
    %v873 = vpack.c.bf16 %v833, %v832
    %v874 = vpack.c.bf16 %v835, %v834
    %v875 = vpack.c.bf16 %v837, %v836
    %v876 = vpack.c.bf16 %v839, %v838
    %v877 = vpack.c.bf16 %v841, %v840
    %v878 = vpack.c.bf16 %v843, %v842
    %v879 = vpack.c.bf16 %v845, %v844
    %v880 = vpack.c.bf16 %v847, %v846
    %v881 = vpack.c.bf16 %v849, %v848
    %v882 = vpack.c.bf16 %v851, %v850
    %v883 = vpack.c.bf16 %v853, %v852
    %v884 = vpack.c.bf16 %v855, %v854
    %v885 = vpack.c.bf16 %v857, %v856
    %v886 = vpack.c.bf16 %v859, %v858
    %v887 = vpack.c.bf16 %v861, %v860
    %v888 = vpack.c.bf16 %v863, %v862
    %v889 = vpack.c.bf16 %v864, %v864
    %v915 = vunpack.c.l.b16 %v865
    %v916 = vunpack.c.h.b16 %v865
    %v917 = vunpack.c.l.b16 %v866
    %v918 = vunpack.c.h.b16 %v866
    %v919 = vunpack.c.l.b16 %v867
    %v920 = vunpack.c.h.b16 %v867
    %v921 = vunpack.c.l.b16 %v868
    %v922 = vunpack.c.h.b16 %v868
    %v923 = vunpack.c.l.b16 %v869
    %v924 = vunpack.c.h.b16 %v869
    %v925 = vunpack.c.l.b16 %v870
    %v926 = vunpack.c.h.b16 %v870
    %v927 = vunpack.c.l.b16 %v871
    %v928 = vunpack.c.h.b16 %v871
    %v929 = vunpack.c.l.b16 %v872
    %v930 = vunpack.c.h.b16 %v872
    %v931 = vunpack.c.l.b16 %v873
    %v932 = vunpack.c.h.b16 %v873
    %v933 = vunpack.c.l.b16 %v874
    %v934 = vunpack.c.h.b16 %v874
    %v935 = vunpack.c.l.b16 %v875
    %v936 = vunpack.c.h.b16 %v875
    %v937 = vunpack.c.l.b16 %v876
    %v938 = vunpack.c.h.b16 %v876
    %v939 = vunpack.c.l.b16 %v877
    %v940 = vunpack.c.h.b16 %v877
    %v941 = vunpack.c.l.b16 %v878
    %v942 = vunpack.c.h.b16 %v878
    %v943 = vunpack.c.l.b16 %v879
    %v944 = vunpack.c.h.b16 %v879
    %v945 = vunpack.c.l.b16 %v880
    %v946 = vunpack.c.h.b16 %v880
    %v947 = vunpack.c.l.b16 %v881
    %v948 = vunpack.c.h.b16 %v881
    %v949 = vunpack.c.l.b16 %v882
    %v950 = vunpack.c.h.b16 %v882
    %v951 = vunpack.c.l.b16 %v883
    %v952 = vunpack.c.h.b16 %v883
    %v953 = vunpack.c.l.b16 %v884
    %v954 = vunpack.c.h.b16 %v884
    %v955 = vunpack.c.l.b16 %v885
    %v956 = vunpack.c.h.b16 %v885
    %v957 = vunpack.c.l.b16 %v886
    %v958 = vunpack.c.h.b16 %v886
    %v959 = vunpack.c.l.b16 %v887
    %v960 = vunpack.c.h.b16 %v887
    %v961 = vunpack.c.l.b16 %v888
    %v962 = vunpack.c.h.b16 %v888
    %v963 = vunpack.c.l.b16 %v889
    %v964 = vpack.c.b16 %v915, %v915
    %v965 = vpack.c.b16 %v916, %v916
    %v966 = vpack.c.b16 %v917, %v917
    %v967 = vpack.c.b16 %v918, %v918
    %v968 = vpack.c.b16 %v919, %v919
    %v969 = vpack.c.b16 %v920, %v920
    %v970 = vpack.c.b16 %v921, %v921
    %v971 = vpack.c.b16 %v922, %v922
    %v972 = vpack.c.b16 %v923, %v923
    %v973 = vpack.c.b16 %v924, %v924
    %v974 = vpack.c.b16 %v925, %v925
    %v975 = vpack.c.b16 %v926, %v926
    %v976 = vpack.c.b16 %v927, %v927
    %v977 = vpack.c.b16 %v928, %v928
    %v978 = vpack.c.b16 %v929, %v929
    %v979 = vpack.c.b16 %v930, %v930
    %v980 = vpack.c.b16 %v931, %v931
    %v981 = vpack.c.b16 %v932, %v932
    %v982 = vpack.c.b16 %v933, %v933
    %v983 = vpack.c.b16 %v934, %v934
    %v984 = vpack.c.b16 %v935, %v935
    %v985 = vpack.c.b16 %v936, %v936
    %v986 = vpack.c.b16 %v937, %v937
    %v987 = vpack.c.b16 %v938, %v938
    %v988 = vpack.c.b16 %v939, %v939
    %v989 = vpack.c.b16 %v940, %v940
    %v990 = vpack.c.b16 %v941, %v941
    %v991 = vpack.c.b16 %v942, %v942
    %v992 = vpack.c.b16 %v943, %v943
    %v993 = vpack.c.b16 %v944, %v944
    %v994 = vpack.c.b16 %v945, %v945
    %v995 = vpack.c.b16 %v946, %v946
    %v996 = vpack.c.b16 %v947, %v947
    %v997 = vpack.c.b16 %v948, %v948
    %v998 = vpack.c.b16 %v949, %v949
    %v999 = vpack.c.b16 %v950, %v950
    %v1000 = vpack.c.b16 %v951, %v951
    %v1001 = vpack.c.b16 %v952, %v952
    %v1002 = vpack.c.b16 %v953, %v953
    %v1003 = vpack.c.b16 %v954, %v954
    %v1004 = vpack.c.b16 %v955, %v955
    %v1005 = vpack.c.b16 %v956, %v956
    %v1006 = vpack.c.b16 %v957, %v957
    %v1007 = vpack.c.b16 %v958, %v958
    %v1008 = vpack.c.b16 %v959, %v959
    %v1009 = vpack.c.b16 %v960, %v960
    %v1010 = vpack.c.b16 %v961, %v961
    %v1011 = vpack.c.b16 %v962, %v962
    %v1012 = vpack.c.b16 %v963, %v963
    %1062 = vst [vmem:[%s3] sm:$0xf] %v964
    %1063 = vst [vmem:[%s3 + $0x4] sm:$0xf] %v965
    %1064 = vst [vmem:[%s3 + $0x8] sm:$0xf] %v966
    %1065 = vst [vmem:[%s3 + $0xc] sm:$0xf] %v967
    %1066 = vst [vmem:[%s3 + $0x10] sm:$0xf] %v968
    %1067 = vst [vmem:[%s3 + $0x14] sm:$0xf] %v969
    %1068 = vst [vmem:[%s3 + $0x18] sm:$0xf] %v970
    %1069 = vst [vmem:[%s3 + $0x1c] sm:$0xf] %v971
    %1070 = vst [vmem:[%s3 + $0x20] sm:$0xf] %v972
    %1071 = vst [vmem:[%s3 + $0x24] sm:$0xf] %v973
    %1072 = vst [vmem:[%s3 + $0x28] sm:$0xf] %v974
    %1073 = vst [vmem:[%s3 + $0x2c] sm:$0xf] %v975
    %1074 = vst [vmem:[%s3 + $0x30] sm:$0xf] %v976
    %1075 = vst [vmem:[%s3 + $0x34] sm:$0xf] %v977
    %1076 = vst [vmem:[%s3 + $0x38] sm:$0xf] %v978
    %1077 = vst [vmem:[%s3 + $0x3c] sm:$0xf] %v979
    %1078 = vst [vmem:[%s3 + $0x40] sm:$0xf] %v980
    %1079 = vst [vmem:[%s3 + $0x44] sm:$0xf] %v981
    %1080 = vst [vmem:[%s3 + $0x48] sm:$0xf] %v982
    %1081 = vst [vmem:[%s3 + $0x4c] sm:$0xf] %v983
    %1082 = vst [vmem:[%s3 + $0x50] sm:$0xf] %v984
    %1083 = vst [vmem:[%s3 + $0x54] sm:$0xf] %v985
    %1084 = vst [vmem:[%s3 + $0x58] sm:$0xf] %v986
    %1085 = vst [vmem:[%s3 + $0x5c] sm:$0xf] %v987
    %1086 = vst [vmem:[%s3 + $0x60] sm:$0xf] %v988
    %1087 = vst [vmem:[%s3 + $0x64] sm:$0xf] %v989
    %1088 = vst [vmem:[%s3 + $0x68] sm:$0xf] %v990
    %1089 = vst [vmem:[%s3 + $0x6c] sm:$0xf] %v991
    %1090 = vst [vmem:[%s3 + $0x70] sm:$0xf] %v992
    %1091 = vst [vmem:[%s3 + $0x74] sm:$0xf] %v993
    %1092 = vst [vmem:[%s3 + $0x78] sm:$0xf] %v994
    %1093 = vst [vmem:[%s3 + $0x7c] sm:$0xf] %v995
    %1094 = vst [vmem:[%s3 + $0x80] sm:$0xf] %v996
    %1095 = vst [vmem:[%s3 + $0x84] sm:$0xf] %v997
    %1096 = vst [vmem:[%s3 + $0x88] sm:$0xf] %v998
    %1097 = vst [vmem:[%s3 + $0x8c] sm:$0xf] %v999
    %1098 = vst [vmem:[%s3 + $0x90] sm:$0xf] %v1000
    %1099 = vst [vmem:[%s3 + $0x94] sm:$0xf] %v1001
    %1100 = vst [vmem:[%s3 + $0x98] sm:$0xf] %v1002
    %1101 = vst [vmem:[%s3 + $0x9c] sm:$0xf] %v1003
    %1102 = vst [vmem:[%s3 + $0xa0] sm:$0xf] %v1004
    %1103 = vst [vmem:[%s3 + $0xa4] sm:$0xf] %v1005
    %1104 = vst [vmem:[%s3 + $0xa8] sm:$0xf] %v1006
    %1105 = vst [vmem:[%s3 + $0xac] sm:$0xf] %v1007
    %1106 = vst [vmem:[%s3 + $0xb0] sm:$0xf] %v1008
    %1107 = vst [vmem:[%s3 + $0xb4] sm:$0xf] %v1009
    %1108 = vst [vmem:[%s3 + $0xb8] sm:$0xf] %v1010
    %1109 = vst [vmem:[%s3 + $0xbc] sm:$0xf] %v1011
    %1110 = vst [vmem:[%s3 + $0xc0] sm:$0xf] %v1012
  $region21: #{siamfc_forward.4} parent=0 // pred_fallthru
    _
  // Predicated region
  $region22: #{siamfc_forward.4} parent=0 // pred_check
    _
  $region23: #{siamfc_forward.4} parent=0 // pred_check_branch
    %1112 = sbr.rel (0) target = $region25
  $region24: #{siamfc_forward.4} parent=0 // pred_region
    _
  $region25: #{siamfc_forward.4} parent=0 // pred_fallthru
    _
  // Predicated region
  $region26: #{siamfc_forward.4} parent=0 // pred_check
    _
  $region27: #{siamfc_forward.4} parent=0 // pred_check_branch
    %1114 = sbr.rel (0) target = $region29
  $region28: #{siamfc_forward.4} parent=0 // pred_region
    _
  $region29: #{siamfc_forward.4} parent=0 // pred_fallthru
    _

// kernel: siamfc_forward.3
$region0: #{siamfc_forward.3}
  #allocation0 [shape = 'u32[]', space=smem, size = 0x4, offset = 0x4, fixed_abs, tag = 'smem constant byte address 0x4 - core index']
  #allocation1 [shape = 'u32[144,128]{1,0:T(1,128)}', space=vmem, size = 0x12000, scoped, tag = 'internal scratch']
  #allocation2 [shape = 'f32[72,128]{1,0:T(8,128)}', space=vmem, size = 0x9000, scoped, tag = 'scratch operand']
  %s0 = inlined_call_operand.vmem [shape: bf16[72,128], index: 0, kind: input, shape index: {}]
  %s1 = inlined_call_operand.vmem [shape: bf16[128,128], index: 1, kind: input, shape index: {}]
  %s2 = inlined_call_operand.vmem [shape: f32[1,128], index: 2, kind: input, shape index: {}]
  %s3 = inlined_call_operand.vmem [shape: bf16[72,128], index: 3, kind: output, shape index: {}]
  %s4 = sld [smem:[#allocation0]]
  $region30: #{siamfc_forward.3} parent=0
    _
  %s6 = ssub.s32 1, %s4
  %s7 = scalar_select 0, %s6, %s4
  // Predicated region
  $region2: #{siamfc_forward.3} parent=0 // pred_check
    _
  $region3: #{siamfc_forward.3} parent=0 // pred_check_branch
    %9 = sbr.rel (0) target = $region5
  $region4: #{siamfc_forward.3} parent=0 // pred_region
    _
  $region5: #{siamfc_forward.3} parent=0 // pred_fallthru
    _
  // Predicated region
  $region6: #{siamfc_forward.3} parent=0 // pred_check
    _
  $region7: #{siamfc_forward.3} parent=0 // pred_check_branch
    %11 = sbr.rel (0) target = $region9
  $region8: #{siamfc_forward.3} parent=0 // pred_region
    _
  $region9: #{siamfc_forward.3} parent=0 // pred_fallthru
    _
  // Predicated region
  $region10: #{siamfc_forward.3} parent=0 // pred_check
    _
  $region11: #{siamfc_forward.3} parent=0 // pred_check_branch
    %13 = sbr.rel (0) target = $region13
  $region12: #{siamfc_forward.3} parent=0 // pred_region
    _
  $region13: #{siamfc_forward.3} parent=0 // pred_fallthru
    _
  %p15 = scmp.eq.s32.totalorder 0, 0
  // Predicated region
  $region14: #{siamfc_forward.3} parent=0 // pred_check
    %p16 = pneg %p15
  $region15: #{siamfc_forward.3} parent=0 // pred_check_branch
    %18 = sbr.rel (%p16) target = $region17
  $region16: #{siamfc_forward.3} parent=0 // pred_region
    %19 = vst [vmem:[#allocation2] sm:$0xff] 0.0
    %20 = vst [vmem:[#allocation2 + $0x8] sm:$0xff] 0.0
    %21 = vst [vmem:[#allocation2 + $0x10] sm:$0xff] 0.0
    %22 = vst [vmem:[#allocation2 + $0x18] sm:$0xff] 0.0
    %23 = vst [vmem:[#allocation2 + $0x20] sm:$0xff] 0.0
    %24 = vst [vmem:[#allocation2 + $0x28] sm:$0xff] 0.0
    %25 = vst [vmem:[#allocation2 + $0x30] sm:$0xff] 0.0
    %26 = vst [vmem:[#allocation2 + $0x38] sm:$0xff] 0.0
    %27 = vst [vmem:[#allocation2 + $0x40] sm:$0xff] 0.0
  $region17: #{siamfc_forward.3} parent=0 // pred_fallthru
    _
  %v28 = vld [vmem:[#allocation2] sm:$0xff]
  %v29 = vld [vmem:[#allocation2 + $0x8] sm:$0xff]
  %v30 = vld [vmem:[#allocation2 + $0x10] sm:$0xff]
  %v31 = vld [vmem:[#allocation2 + $0x18] sm:$0xff]
  %v32 = vld [vmem:[#allocation2 + $0x20] sm:$0xff]
  %v33 = vld [vmem:[#allocation2 + $0x28] sm:$0xff]
  %v34 = vld [vmem:[#allocation2 + $0x30] sm:$0xff]
  %v35 = vld [vmem:[#allocation2 + $0x38] sm:$0xff]
  %v36 = vld [vmem:[#allocation2 + $0x40] sm:$0xff]
  %v37 = vld [vmem:[%s0] sm:$0xf]
  %v38 = vld [vmem:[%s0 + $0x4] sm:$0xf]
  %v39 = vld [vmem:[%s0 + $0x8] sm:$0xf]
  %v40 = vld [vmem:[%s0 + $0xc] sm:$0xf]
  %v41 = vld [vmem:[%s0 + $0x10] sm:$0xf]
  %v42 = vld [vmem:[%s0 + $0x14] sm:$0xf]
  %v43 = vld [vmem:[%s0 + $0x18] sm:$0xf]
  %v44 = vld [vmem:[%s0 + $0x1c] sm:$0xf]
  %v45 = vld [vmem:[%s0 + $0x20] sm:$0xf]
  %v46 = vld [vmem:[%s1] sm:$0xf]
  %v47 = vld [vmem:[%s1 + $0x4] sm:$0xf]
  %v48 = vld [vmem:[%s1 + $0x8] sm:$0xf]
  %v49 = vld [vmem:[%s1 + $0xc] sm:$0xf]
  %v50 = vld [vmem:[%s1 + $0x10] sm:$0xf]
  %v51 = vld [vmem:[%s1 + $0x14] sm:$0xf]
  %v52 = vld [vmem:[%s1 + $0x18] sm:$0xf]
  %v53 = vld [vmem:[%s1 + $0x1c] sm:$0xf]
  %v54 = vld [vmem:[%s1 + $0x20] sm:$0xf]
  %v55 = vld [vmem:[%s1 + $0x24] sm:$0xf]
  %v56 = vld [vmem:[%s1 + $0x28] sm:$0xf]
  %v57 = vld [vmem:[%s1 + $0x2c] sm:$0xf]
  %v58 = vld [vmem:[%s1 + $0x30] sm:$0xf]
  %v59 = vld [vmem:[%s1 + $0x34] sm:$0xf]
  %v60 = vld [vmem:[%s1 + $0x38] sm:$0xf]
  %v61 = vld [vmem:[%s1 + $0x3c] sm:$0xf]
  %v71 = vunpack.c.l.b16 %v37
  %v72 = vunpack.c.l.b16 %v38
  %v73 = vunpack.c.l.b16 %v39
  %v74 = vunpack.c.l.b16 %v40
  %v75 = vunpack.c.l.b16 %v41
  %v76 = vunpack.c.l.b16 %v42
  %v77 = vunpack.c.l.b16 %v43
  %v78 = vunpack.c.l.b16 %v44
  %v79 = vunpack.c.l.b16 %v45
  %v80 = vpack.c.b16 %v72, %v71
  %v81 = vpack.c.b16 %v74, %v73
  %v82 = vpack.c.b16 %v76, %v75
  %v83 = vpack.c.b16 %v78, %v77
  %v84 = vpack.c.b16 %v79, %v79
  %v106 = vunpack.c.l.b16 %v46
  %v107 = vunpack.c.l.b16 %v47
  %v108 = vunpack.c.l.b16 %v48
  %v109 = vunpack.c.l.b16 %v49
  %v110 = vunpack.c.l.b16 %v50
  %v111 = vunpack.c.l.b16 %v51
  %v112 = vunpack.c.l.b16 %v52
  %v113 = vunpack.c.l.b16 %v53
  %v114 = vunpack.c.l.b16 %v54
  %v115 = vunpack.c.l.b16 %v55
  %v116 = vunpack.c.l.b16 %v56
  %v117 = vunpack.c.l.b16 %v57
  %v118 = vunpack.c.l.b16 %v58
  %v119 = vunpack.c.l.b16 %v59
  %v120 = vunpack.c.l.b16 %v60
  %v121 = vunpack.c.l.b16 %v61
  %v122 = vpack.c.b16 %v107, %v106
  %v123 = vpack.c.b16 %v109, %v108
  %v124 = vpack.c.b16 %v111, %v110
  %v125 = vpack.c.b16 %v113, %v112
  %v126 = vpack.c.b16 %v115, %v114
  %v127 = vpack.c.b16 %v117, %v116
  %v128 = vpack.c.b16 %v119, %v118
  %v129 = vpack.c.b16 %v121, %v120
  %138 = vmatprep.subr.bf16.mxu0 0
  %139 = vmatpush1.bf16.msra.mxu0 %v122
  %140 = vmatprep.subr.bf16.mxu0 0
  %141 = vmatpush1.bf16.msra.mxu0 %v123
  %142 = vmatprep.subr.bf16.mxu0 0
  %143 = vmatpush1.bf16.msra.mxu0 %v124
  %144 = vmatprep.subr.bf16.mxu0 0
  %145 = vmatpush1.bf16.msra.mxu0 %v125
  %146 = vmatprep.subr.bf16.mxu0 0
  %147 = vmatpush1.bf16.msra.mxu0 %v126
  %148 = vmatprep.subr.bf16.mxu0 0
  %149 = vmatpush1.bf16.msra.mxu0 %v127
  %150 = vmatprep.subr.bf16.mxu0 0
  %151 = vmatpush1.bf16.msra.mxu0 %v128
  %152 = vmatprep.subr.bf16.mxu0 0
  %153 = vmatpush1.bf16.msra.mxu0 %v129
  %154 = vmatprep.subr.bf16.mxu0 0
  %155 = vmatpush1.bf16.msra.mxu0 0
  %156 = vmatprep.subr.bf16.mxu0 0
  %157 = vmatpush1.bf16.msra.mxu0 0
  %158 = vmatprep.subr.bf16.mxu0 0
  %159 = vmatpush1.bf16.msra.mxu0 0
  %160 = vmatprep.subr.bf16.mxu0 0
  %161 = vmatpush1.bf16.msra.mxu0 0
  %162 = vmatprep.subr.bf16.mxu0 0
  %163 = vmatpush1.bf16.msra.mxu0 0
  %164 = vmatprep.subr.bf16.mxu0 0
  %165 = vmatpush1.bf16.msra.mxu0 0
  %166 = vmatprep.subr.bf16.mxu0 0
  %167 = vmatpush1.bf16.msra.mxu0 0
  %168 = vmatprep.subr.bf16.mxu0 0
  %169 = vmatpush1.bf16.msra.mxu0 0
  %170 = vmatprep.mubr.bf16.mxu0 0
  %171 = vmatmul.mubr.bf16.gmra.mrb[0].mxu0 %v80
  %v172 = vpop.f32.mrb[0].mxu0
  %v173 = vadd.f32 0.0, %v172
  %v174 = vpop.f32.mrb[0].mxu0
  %v175 = vpop.f32.mrb[0].mxu0
  %v176 = vadd.f32 0.0, %v175
  %v177 = vpop.f32.mrb[0].mxu0
  %178 = vmatprep.mubr.bf16.mxu0 0
  %179 = vmatmul.mubr.bf16.gmra.mrb[0].mxu0 %v81
  %v180 = vpop.f32.mrb[0].mxu0
  %v181 = vadd.f32 0.0, %v180
  %v182 = vpop.f32.mrb[0].mxu0
  %v183 = vpop.f32.mrb[0].mxu0
  %v184 = vadd.f32 0.0, %v183
  %v185 = vpop.f32.mrb[0].mxu0
  %186 = vmatprep.mubr.bf16.mxu0 0
  %187 = vmatmul.mubr.bf16.gmra.mrb[0].mxu0 %v82
  %v188 = vpop.f32.mrb[0].mxu0
  %v189 = vadd.f32 0.0, %v188
  %v190 = vpop.f32.mrb[0].mxu0
  %v191 = vpop.f32.mrb[0].mxu0
  %v192 = vadd.f32 0.0, %v191
  %v193 = vpop.f32.mrb[0].mxu0
  %194 = vmatprep.mubr.bf16.mxu0 0
  %195 = vmatmul.mubr.bf16.gmra.mrb[0].mxu0 %v83
  %v196 = vpop.f32.mrb[0].mxu0
  %v197 = vadd.f32 0.0, %v196
  %v198 = vpop.f32.mrb[0].mxu0
  %v199 = vpop.f32.mrb[0].mxu0
  %v200 = vadd.f32 0.0, %v199
  %v201 = vpop.f32.mrb[0].mxu0
  %202 = vmatprep.mubr.bf16.mxu0 0
  %203 = vmatmul.mubr.bf16.gmra.mrb[0].mxu0 %v84
  %v204 = vpop.f32.mrb[0].mxu0
  %v205 = vadd.f32 0.0, %v204
  %v206 = vpop.f32.mrb[0].mxu0
  %v207 = vpop.f32.mrb[0].mxu0
  %v208 = vpop.f32.mrb[0].mxu0
  %209 = vdwg.mxu0
  %v210 = vadd.f32 %v28, %v173
  %v211 = vadd.f32 %v29, %v176
  %v212 = vadd.f32 %v30, %v181
  %v213 = vadd.f32 %v31, %v184
  %v214 = vadd.f32 %v32, %v189
  %v215 = vadd.f32 %v33, %v192
  %v216 = vadd.f32 %v34, %v197
  %v217 = vadd.f32 %v35, %v200
  %v218 = vadd.f32 %v36, %v205
  %219 = vst [vmem:[#allocation2] sm:$0xff] %v210
  %220 = vst [vmem:[#allocation2 + $0x8] sm:$0xff] %v211
  %221 = vst [vmem:[#allocation2 + $0x10] sm:$0xff] %v212
  %222 = vst [vmem:[#allocation2 + $0x18] sm:$0xff] %v213
  %223 = vst [vmem:[#allocation2 + $0x20] sm:$0xff] %v214
  %224 = vst [vmem:[#allocation2 + $0x28] sm:$0xff] %v215
  %225 = vst [vmem:[#allocation2 + $0x30] sm:$0xff] %v216
  %226 = vst [vmem:[#allocation2 + $0x38] sm:$0xff] %v217
  %227 = vst [vmem:[#allocation2 + $0x40] sm:$0xff] %v218
  // Predicated region
  $region18: #{siamfc_forward.3} parent=0 // pred_check
    %p228 = pneg %p15
  $region19: #{siamfc_forward.3} parent=0 // pred_check_branch
    %230 = sbr.rel (%p228) target = $region21
  $region20: #{siamfc_forward.3} parent=0 // pred_region
    %v231 = vld [vmem:[#allocation2] sm:$0xff]
    %v232 = vld [vmem:[#allocation2 + $0x8] sm:$0xff]
    %v233 = vld [vmem:[#allocation2 + $0x10] sm:$0xff]
    %v234 = vld [vmem:[#allocation2 + $0x18] sm:$0xff]
    %v235 = vld [vmem:[#allocation2 + $0x20] sm:$0xff]
    %v236 = vld [vmem:[#allocation2 + $0x28] sm:$0xff]
    %v237 = vld [vmem:[#allocation2 + $0x30] sm:$0xff]
    %v238 = vld [vmem:[#allocation2 + $0x38] sm:$0xff]
    %v239 = vld [vmem:[#allocation2 + $0x40] sm:$0xff]
    %v240 = vld [vmem:[%s2] sm:$0x1]
    %v242 = vlaneseq
    %v243 = vshrl.u32 %v242, 7
    %v244 = vsub.s32 0, %v243
    %v245 = vrot.slane %v240, %v244
    %v247 = vadd.f32 %v231, %v245
    %v248 = vadd.f32 %v232, %v245
    %v249 = vadd.f32 %v233, %v245
    %v250 = vadd.f32 %v234, %v245
    %v251 = vadd.f32 %v235, %v245
    %v252 = vadd.f32 %v236, %v245
    %v253 = vadd.f32 %v237, %v245
    %v254 = vadd.f32 %v238, %v245
    %v255 = vadd.f32 %v239, %v245
    %v256 = vmax.f32 %v247, 0.0
    %v257 = vmax.f32 %v248, 0.0
    %v258 = vmax.f32 %v249, 0.0
    %v259 = vmax.f32 %v250, 0.0
    %v260 = vmax.f32 %v251, 0.0
    %v261 = vmax.f32 %v252, 0.0
    %v262 = vmax.f32 %v253, 0.0
    %v263 = vmax.f32 %v254, 0.0
    %v264 = vmax.f32 %v255, 0.0
    %v265 = vpack.c.bf16 %v257, %v256
    %v266 = vpack.c.bf16 %v259, %v258
    %v267 = vpack.c.bf16 %v261, %v260
    %v268 = vpack.c.bf16 %v263, %v262
    %v269 = vpack.c.bf16 %v264, %v264
    %v275 = vunpack.c.l.b16 %v265
    %v276 = vunpack.c.h.b16 %v265
    %v277 = vunpack.c.l.b16 %v266
    %v278 = vunpack.c.h.b16 %v266
    %v279 = vunpack.c.l.b16 %v267
    %v280 = vunpack.c.h.b16 %v267
    %v281 = vunpack.c.l.b16 %v268
    %v282 = vunpack.c.h.b16 %v268
    %v283 = vunpack.c.l.b16 %v269
    %v284 = vpack.c.b16 %v275, %v275
    %v285 = vpack.c.b16 %v276, %v276
    %v286 = vpack.c.b16 %v277, %v277
    %v287 = vpack.c.b16 %v278, %v278
    %v288 = vpack.c.b16 %v279, %v279
    %v289 = vpack.c.b16 %v280, %v280
    %v290 = vpack.c.b16 %v281, %v281
    %v291 = vpack.c.b16 %v282, %v282
    %v292 = vpack.c.b16 %v283, %v283
    %302 = vst [vmem:[%s3] sm:$0xf] %v284
    %303 = vst [vmem:[%s3 + $0x4] sm:$0xf] %v285
    %304 = vst [vmem:[%s3 + $0x8] sm:$0xf] %v286
    %305 = vst [vmem:[%s3 + $0xc] sm:$0xf] %v287
    %306 = vst [vmem:[%s3 + $0x10] sm:$0xf] %v288
    %307 = vst [vmem:[%s3 + $0x14] sm:$0xf] %v289
    %308 = vst [vmem:[%s3 + $0x18] sm:$0xf] %v290
    %309 = vst [vmem:[%s3 + $0x1c] sm:$0xf] %v291
    %310 = vst [vmem:[%s3 + $0x20] sm:$0xf] %v292
  $region21: #{siamfc_forward.3} parent=0 // pred_fallthru
    _
  // Predicated region
  $region22: #{siamfc_forward.3} parent=0 // pred_check
    _
  $region23: #{siamfc_forward.3} parent=0 // pred_check_branch
    %312 = sbr.rel (0) target = $region25
  $region24: #{siamfc_forward.3} parent=0 // pred_region
    _
  $region25: #{siamfc_forward.3} parent=0 // pred_fallthru
    _
  // Predicated region
  $region26: #{siamfc_forward.3} parent=0 // pred_check
    _
  $region27: #{siamfc_forward.3} parent=0 // pred_check_branch
    %314 = sbr.rel (0) target = $region29
  $region28: #{siamfc_forward.3} parent=0 // pred_region
    _
  $region29: #{siamfc_forward.3} parent=0 // pred_fallthru
    _

// kernel: siamfc_forward.5
$region0: #{siamfc_forward.5}
  #allocation0 [shape = 'u32[]', space=smem, size = 0x4, offset = 0x4, fixed_abs, tag = 'smem constant byte address 0x4 - core index']
  #allocation1 [shape = 'u32[144,128]{1,0:T(1,128)}', space=vmem, size = 0x12000, scoped, tag = 'internal scratch']
  #allocation2 [shape = 'f32[1,1]{1,0:T(1,128)}', space=vmem, size = 0x200, scoped, tag = 'scratch operand']
  #allocation3 [shape = 'f32[1,1]{1,0:T(1,128)}', space=vmem, size = 0x200, scoped, tag = 'scratch operand']
  #allocation4 [shape = 'f32[1,1]{1,0:T(1,128)}', space=vmem, size = 0x200, scoped, tag = 'scratch operand']
  #allocation5 [shape = 'f32[1,1]{1,0:T(1,128)}', space=vmem, size = 0x200, scoped, tag = 'scratch operand']
  %s0 = inlined_call_operand.vmem [shape: bf16[2,6,6,128], index: 0, kind: input, shape index: {}]
  %s1 = inlined_call_operand.vmem [shape: bf16[2,14,14,128], index: 1, kind: input, shape index: {}]
  %s2 = inlined_call_operand.vmem [shape: f32[2,9,9], index: 2, kind: input, shape index: {}]
  %s3 = inlined_call_operand.vmem [shape: f32[8,128], index: 3, kind: output, shape index: {}]
  %s4 = sld [smem:[#allocation0]]
  $region53: #{siamfc_forward.5} parent=0
    _
  %s6 = ssub.s32 1, %s4
  %s7 = scalar_select 0, %s6, %s4
  loop: start=0, step=1, limit=4
  $region2: #{siamfc_forward.5} parent=0 // loop_pre_header
    _
  $region3: #{siamfc_forward.5} parent=0 // loop_header
    %s9 = sphi 0, %s13
    %p10 = scmp.ge.s32.totalorder %s9, 4
    %s19 = sphi 0, %s21
    %s22 = sphi 0, %s19
    %s23 = sphi 0, %s22
    %s39 = sphi 0, %s23
    %s45 = sphi 0, %s47
    %s48 = sphi 0, %s45
    %s49 = sphi 0, %s48
    %s65 = sphi 0, %s49
    %s71 = sphi 0, %s73
    %s74 = sphi 0, %s71
    %s75 = sphi 0, %s74
    %s91 = sphi 0, %s75
    %s95 = sphi 0, %s95
    %s97 = sphi 0, %s95
    %s98 = sphi 0, %s97
    %s112 = sphi 0, %s98
  $region4: #{siamfc_forward.5} parent=0 // loop_header_branch
    %12 = sbr.rel (%p10) target = $region8
  $region5: #{siamfc_forward.5} parent=0 // loop_body
    %s14 = ssub.s32 %s9, 1
    %s15 = ssub.s32 %s9, 2
    %s16 = sadd.s32 %s9, 1
    %s17 = ssub.s32 %s9, %s16
    %p18 = scmp.eq.s32.totalorder %s17, 0
    %s20 = sadd.s32 %s19, 1
    %s21 = scalar_select %p18, %s19, %s20
    %p24 = pneg %p18
    %p25 = scmp.eq.s32.totalorder %s9, 1
    %p26 = por %p24, %p25
    %p27 = scmp.ne.s32.totalorder %s19, %s22
    %p28 = scmp.eq.s32.totalorder %s9, 0
    %p29 = por %p27, %p28
    %p30 = scmp.ne.s32.totalorder %s19, %s22
    %p31 = scmp.eq.s32.totalorder %s14, 1
    %p32 = por %p30, %p31
    %p33 = scmp.ne.s32.totalorder %s22, %s23
    %p34 = scmp.eq.s32.totalorder %s14, 0
    %p35 = por %p33, %p34
    %p36 = scmp.ne.s32.totalorder %s22, %s23
    %p37 = scmp.eq.s32.totalorder %s15, 1
    %p38 = por %p36, %p37
    %p40 = scmp.ne.s32.totalorder %s23, %s39
    %p41 = scmp.eq.s32.totalorder %s15, 0
    %p42 = por %p40, %p41
    %s43 = ssub.s32 %s9, %s16
    %p44 = scmp.eq.s32.totalorder %s43, 0
    %s46 = sadd.s32 %s45, 1
    %s47 = scalar_select %p44, %s45, %s46
    %p50 = pneg %p44
    %p51 = scmp.eq.s32.totalorder %s9, 1
    %p52 = por %p50, %p51
    %p53 = scmp.ne.s32.totalorder %s45, %s48
    %p54 = scmp.eq.s32.totalorder %s9, 0
    %p55 = por %p53, %p54
    %p56 = scmp.ne.s32.totalorder %s45, %s48
    %p57 = scmp.eq.s32.totalorder %s14, 1
    %p58 = por %p56, %p57
    %p59 = scmp.ne.s32.totalorder %s48, %s49
    %p60 = scmp.eq.s32.totalorder %s14, 0
    %p61 = por %p59, %p60
    %p62 = scmp.ne.s32.totalorder %s48, %s49
    %p63 = scmp.eq.s32.totalorder %s15, 1
    %p64 = por %p62, %p63
    %p66 = scmp.ne.s32.totalorder %s49, %s65
    %p67 = scmp.eq.s32.totalorder %s15, 0
    %p68 = por %p66, %p67
    %s69 = ssub.s32 %s9, %s16
    %p70 = scmp.eq.s32.totalorder %s69, 0
    %s72 = sadd.s32 %s71, 1
    %s73 = scalar_select %p70, %s71, %s72
    %p76 = pneg %p70
    %p77 = scmp.eq.s32.totalorder %s9, 1
    %p78 = por %p76, %p77
    %p79 = scmp.ne.s32.totalorder %s71, %s74
    %p80 = scmp.eq.s32.totalorder %s9, 0
    %p81 = por %p79, %p80
    %p82 = scmp.ne.s32.totalorder %s71, %s74
    %p83 = scmp.eq.s32.totalorder %s14, 1
    %p84 = por %p82, %p83
    %p85 = scmp.ne.s32.totalorder %s74, %s75
    %p86 = scmp.eq.s32.totalorder %s14, 0
    %p87 = por %p85, %p86
    %p88 = scmp.ne.s32.totalorder %s74, %s75
    %p89 = scmp.eq.s32.totalorder %s15, 1
    %p90 = por %p88, %p89
    %p92 = scmp.ne.s32.totalorder %s75, %s91
    %p93 = scmp.eq.s32.totalorder %s15, 0
    %p94 = por %p92, %p93
    %s96 = sadd.s32 %s95, 1
    %p99 = scmp.eq.s32.totalorder %s9, 1
    %p100 = scmp.ne.s32.totalorder %s95, %s97
    %p101 = scmp.eq.s32.totalorder %s9, 0
    %p102 = por %p100, %p101
    %p103 = scmp.ne.s32.totalorder %s95, %s97
    %p104 = scmp.eq.s32.totalorder %s14, 1
    %p105 = por %p103, %p104
    %p106 = scmp.ne.s32.totalorder %s97, %s98
    %p107 = scmp.eq.s32.totalorder %s14, 0
    %p108 = por %p106, %p107
    %p109 = scmp.ne.s32.totalorder %s97, %s98
    %p110 = scmp.eq.s32.totalorder %s15, 1
    %p111 = por %p109, %p110
    %p113 = scmp.ne.s32.totalorder %s98, %s112
    %p114 = scmp.eq.s32.totalorder %s15, 0
    %p115 = por %p113, %p114
    %p116 = scmp.le.s32.totalorder 1, %s9
    %p117 = scmp.lt.s32.totalorder %s9, 3
    %p118 = pnand %p116, %p117
    %p119 = pneg %p118
    // Predicated region
    $region9: #{siamfc_forward.5} parent=5 // pred_check
      _
    $region10: #{siamfc_forward.5} parent=5 // pred_check_branch
      %121 = sbr.rel (%p118) target = $region12
    $region11: #{siamfc_forward.5} parent=5 // pred_region
      %s122 = ssub.s32 %s9, 1
    $region12: #{siamfc_forward.5} parent=5 // pred_fallthru
      _
    %p123 = scmp.lt.s32.totalorder %s9, 2
    // Predicated region
    $region13: #{siamfc_forward.5} parent=5 // pred_check
      %p124 = pneg %p123
    $region14: #{siamfc_forward.5} parent=5 // pred_check_branch
      %126 = sbr.rel (%p124) target = $region16
    $region15: #{siamfc_forward.5} parent=5 // pred_region
      // Predicated region
      $region17: #{siamfc_forward.5} parent=15 // pred_check
        %p127 = pneg %p29
      $region18: #{siamfc_forward.5} parent=15 // pred_check_branch
        %129 = sbr.rel (%p127) target = $region20
      $region19: #{siamfc_forward.5} parent=15 // pred_region
        %p130 = scmp.lt.s32.totalorder %s9, 1
        %s131 = scalar_select %p130, %s9, 1
        %s132 = smul.addr %s131, 6
        %s133 = smul.addr %s132, 4
        %s134 = scalar_lea.vmem %s0, %s133
      $region20: #{siamfc_forward.5} parent=15 // pred_fallthru
        _
      // Predicated region
      $region21: #{siamfc_forward.5} parent=15 // pred_check
        %p135 = pneg %p55
      $region22: #{siamfc_forward.5} parent=15 // pred_check_branch
        %137 = sbr.rel (%p135) target = $region24
      $region23: #{siamfc_forward.5} parent=15 // pred_region
        %p138 = scmp.lt.s32.totalorder %s9, 1
        %s139 = scalar_select %p138, %s9, 1
        %s140 = smul.addr %s139, 28
        %s141 = smul.addr %s140, 4
        %s142 = scalar_lea.vmem %s1, %s141
      $region24: #{siamfc_forward.5} parent=15 // pred_fallthru
        _
      // Predicated region
      $region25: #{siamfc_forward.5} parent=15 // pred_check
        %p143 = pneg %p81
      $region26: #{siamfc_forward.5} parent=15 // pred_check_branch
        %145 = sbr.rel (%p143) target = $region28
      $region27: #{siamfc_forward.5} parent=15 // pred_region
        %p146 = scmp.lt.s32.totalorder %s9, 1
        %s147 = scalar_select %p146, %s9, 1
        %s148 = smul.addr %s147, 2
        %s149 = smul.addr %s148, 8
        %s150 = scalar_lea.vmem %s2, %s149
      $region28: #{siamfc_forward.5} parent=15 // pred_fallthru
        _
    $region16: #{siamfc_forward.5} parent=5 // pred_fallthru
      _
    %p151 = scmp.le.s32.totalorder 1, %s9
    %p152 = scmp.lt.s32.totalorder %s9, 3
    %p153 = pnand %p151, %p152
    %p154 = pneg %p153
    // Predicated region
    $region29: #{siamfc_forward.5} parent=5 // pred_check
      _
    $region30: #{siamfc_forward.5} parent=5 // pred_check_branch
      %156 = sbr.rel (%p153) target = $region32
    $region31: #{siamfc_forward.5} parent=5 // pred_region
      %s157 = ssub.s32 %s9, 1
      %p158 = scmp.lt.s32.totalorder %s14, 1
      %s159 = scalar_select %p158, %s14, 1
      %s160 = smul.addr %s159, 6
      %s161 = smul.addr %s160, 4
      %s162 = scalar_lea.vmem %s0, %s161
      %p163 = pneg %p35
      %p164 = pneg %p32
      %p165 = scmp.lt.s32.totalorder %s14, 1
      %s166 = scalar_select %p165, %s14, 1
      %s167 = smul.addr %s166, 28
      %s168 = smul.addr %s167, 4
      %s169 = scalar_lea.vmem %s1, %s168
      %p170 = pneg %p61
      %p171 = pneg %p58
      %p172 = scmp.lt.s32.totalorder %s14, 1
      %s173 = scalar_select %p172, %s14, 1
      %s174 = smul.addr %s173, 2
      %s175 = smul.addr %s174, 8
      %s176 = scalar_lea.vmem %s2, %s175
      %p177 = pneg %p87
      %p178 = pneg %p84
      %p179 = pneg %p108
      %p180 = pneg %p105
      %p181 = scmp.lt.s32.totalorder %s14, 1
      %s182 = scalar_select %p181, %s14, 1
      %s183 = smul.addr %s182, 6
      %s184 = smul.addr %s183, 4
      %s185 = scalar_lea.vmem %s0, %s184
      %p186 = scmp.lt.s32.totalorder %s14, 1
      %s187 = scalar_select %p186, %s14, 1
      %s188 = smul.addr %s187, 28
      %s189 = smul.addr %s188, 4
      %s190 = scalar_lea.vmem %s1, %s189
      %p191 = scmp.lt.s32.totalorder %s14, 1
      %s192 = scalar_select %p191, %s14, 1
      %s193 = smul.addr %s192, 2
      %s194 = smul.addr %s193, 8
      %s195 = scalar_lea.vmem %s2, %s194
      %p196 = scmp.eq.s32.totalorder %s14, 0
      // Predicated region
      $region33: #{siamfc_forward.5} parent=31 // pred_check
        %p197 = pneg %p196
      $region34: #{siamfc_forward.5} parent=31 // pred_check_branch
        %199 = sbr.rel (%p197) target = $region36
      $region35: #{siamfc_forward.5} parent=31 // pred_region
        %vm200 = vcmask 0
        %201 = vst.msk [vmem:[#allocation2] sm:$0x1] %vm200, 0.0
        %202 = vst.msk [vmem:[#allocation3] sm:$0x1] %vm200, 0.0
        %203 = vst.msk [vmem:[#allocation4] sm:$0x1] %vm200, 0.0
        %204 = vst.msk [vmem:[#allocation5] sm:$0x1] %vm200, 0.0
      $region36: #{siamfc_forward.5} parent=31 // pred_fallthru
        _
      %v205 = vld [vmem:[%s190] sm:$0xf]
      %v206 = vld [vmem:[%s190 + $0x4] sm:$0x1]
      %v207 = vld [vmem:[%s190 + $0x8] sm:$0xf]
      %v208 = vld [vmem:[%s190 + $0xc] sm:$0x1]
      %v209 = vld [vmem:[%s190 + $0x10] sm:$0xf]
      %v210 = vld [vmem:[%s190 + $0x14] sm:$0x1]
      %v211 = vld [vmem:[%s190 + $0x18] sm:$0xf]
      %v212 = vld [vmem:[%s190 + $0x1c] sm:$0x1]
      %v213 = vld [vmem:[%s190 + $0x20] sm:$0xf]
      %v214 = vld [vmem:[%s190 + $0x24] sm:$0x1]
      %v215 = vld [vmem:[%s190 + $0x28] sm:$0xf]
      %v216 = vld [vmem:[%s190 + $0x2c] sm:$0x1]
      %v217 = vld [vmem:[%s190 + $0x30] sm:$0xf]
      %v218 = vld [vmem:[%s190 + $0x34] sm:$0x1]
      %v219 = vld [vmem:[%s190 + $0x38] sm:$0xf]
      %v220 = vld [vmem:[%s190 + $0x3c] sm:$0x1]
      %v221 = vld [vmem:[%s190 + $0x40] sm:$0xf]
      %v222 = vld [vmem:[%s190 + $0x44] sm:$0x1]
      %v223 = vunpack.c.l.bf16 %v205
      %v224 = vunpack.c.l.bf16 %v206
      %v225 = vunpack.c.l.bf16 %v207
      %v226 = vunpack.c.l.bf16 %v208
      %v227 = vunpack.c.l.bf16 %v209
      %v228 = vunpack.c.l.bf16 %v210
      %v229 = vunpack.c.l.bf16 %v211
      %v230 = vunpack.c.l.bf16 %v212
      %v231 = vunpack.c.l.bf16 %v213
      %v232 = vunpack.c.l.bf16 %v214
      %v233 = vunpack.c.l.bf16 %v215
      %v234 = vunpack.c.l.bf16 %v216
      %v235 = vunpack.c.l.bf16 %v217
      %v236 = vunpack.c.l.bf16 %v218
      %v237 = vunpack.c.l.bf16 %v219
      %v238 = vunpack.c.l.bf16 %v220
      %v239 = vunpack.c.l.bf16 %v221
      %v240 = vunpack.c.l.bf16 %v222
      %v241 = vld [vmem:[%s185] sm:$0x1]
      %v242 = vunpack.c.l.bf16 %v241
      %v243 = vlaneseq
      %v244 = vshrl.u32 %v243, 7
      %v245 = vsub.s32 0, %v244
      %v246 = vrot.slane %v242, %v245
      %v247 = vmul.f32 %v223, %v246
      %v248 = vmul.f32 %v224, %v246
      %v249 = vmul.f32 %v225, %v246
      %v250 = vmul.f32 %v226, %v246
      %v251 = vmul.f32 %v227, %v246
      %v252 = vmul.f32 %v228, %v246
      %v253 = vmul.f32 %v229, %v246
      %v254 = vmul.f32 %v230, %v246
      %v255 = vmul.f32 %v231, %v246
      %v256 = vmul.f32 %v232, %v246
      %v257 = vmul.f32 %v233, %v246
      %v258 = vmul.f32 %v234, %v246
      %v259 = vmul.f32 %v235, %v246
      %v260 = vmul.f32 %v236, %v246
      %v261 = vmul.f32 %v237, %v246
      %v262 = vmul.f32 %v238, %v246
      %v263 = vmul.f32 %v239, %v246
      %v264 = vmul.f32 %v240, %v246
      %v265 = vadd.f32 %v247, 0.0
      %v266 = vadd.f32 %v248, 0.0
      %v267 = vadd.f32 %v249, 0.0
      %v268 = vadd.f32 %v250, 0.0
      %v269 = vadd.f32 %v251, 0.0
      %v270 = vadd.f32 %v252, 0.0
      %v271 = vadd.f32 %v253, 0.0
      %v272 = vadd.f32 %v254, 0.0
      %v273 = vadd.f32 %v255, 0.0
      %v274 = vadd.f32 %v256, 0.0
      %v275 = vadd.f32 %v257, 0.0
      %v276 = vadd.f32 %v258, 0.0
      %v277 = vadd.f32 %v259, 0.0
      %v278 = vadd.f32 %v260, 0.0
      %v279 = vadd.f32 %v261, 0.0
      %v280 = vadd.f32 %v262, 0.0
      %v281 = vadd.f32 %v263, 0.0
      %v282 = vadd.f32 %v264, 0.0
      %v283 = vlaneseq
      %v284 = vshrl.u32 %v283, 7
      %v285 = vsub.s32 1, %v284
      %v286 = vrot.slane %v242, %v285
      %v287 = vmul.f32 %v223, %v286
      %v288 = vmul.f32 %v224, %v286
      %v289 = vmul.f32 %v225, %v286
      %v290 = vmul.f32 %v226, %v286
      %v291 = vmul.f32 %v227, %v286
      %v292 = vmul.f32 %v228, %v286
      %v293 = vmul.f32 %v229, %v286
      %v294 = vmul.f32 %v230, %v286
      %v295 = vmul.f32 %v231, %v286
      %v296 = vmul.f32 %v232, %v286
      %v297 = vmul.f32 %v233, %v286
      %v298 = vmul.f32 %v234, %v286
      %v299 = vmul.f32 %v235, %v286
      %v300 = vmul.f32 %v236, %v286
      %v301 = vmul.f32 %v237, %v286
      %v302 = vmul.f32 %v238, %v286
      %v303 = vmul.f32 %v239, %v286
      %v304 = vmul.f32 %v240, %v286
      %vm323 = vcmask 1046528
      %v324 = vrot.slane %v287, 1
      %v325 = vrot.slane %v288, 1
      %v326 = vsel %vm323, %v324, %v325
      %v327 = vrot.slane %v289, 1
      %v328 = vrot.slane %v290, 1
      %v329 = vsel %vm323, %v327, %v328
      %v330 = vrot.slane %v291, 1
      %v331 = vrot.slane %v292, 1
      %v332 = vsel %vm323, %v330, %v331
      %v333 = vrot.slane %v293, 1
      %v334 = vrot.slane %v294, 1
      %v335 = vsel %vm323, %v333, %v334
      %v336 = vrot.slane %v295, 1
      %v337 = vrot.slane %v296, 1
      %v338 = vsel %vm323, %v336, %v337
      %v339 = vrot.slane %v297, 1
      %v340 = vrot.slane %v298, 1
      %v341 = vsel %vm323, %v339, %v340
      %v342 = vrot.slane %v299, 1
      %v343 = vrot.slane %v300, 1
      %v344 = vsel %vm323, %v342, %v343
      %v345 = vrot.slane %v301, 1
      %v346 = vrot.slane %v302, 1
      %v347 = vsel %vm323, %v345, %v346
      %v348 = vrot.slane %v303, 1
      %v349 = vrot.slane %v304, 1
      %v350 = vsel %vm323, %v348, %v349
      %v369 = vadd.f32 %v265, %v326
      %v370 = vadd.f32 %v266, %v325
      %v371 = vadd.f32 %v267, %v329
      %v372 = vadd.f32 %v268, %v328
      %v373 = vadd.f32 %v269, %v332
      %v374 = vadd.f32 %v270, %v331
      %v375 = vadd.f32 %v271, %v335
      %v376 = vadd.f32 %v272, %v334
      %v377 = vadd.f32 %v273, %v338
      %v378 = vadd.f32 %v274, %v337
      %v379 = vadd.f32 %v275, %v341
      %v380 = vadd.f32 %v276, %v340
      %v381 = vadd.f32 %v277, %v344
      %v382 = vadd.f32 %v278, %v343
      %v383 = vadd.f32 %v279, %v347
      %v384 = vadd.f32 %v280, %v346
      %v385 = vadd.f32 %v281, %v350
      %v386 = vadd.f32 %v282, %v349
      %v387 = vld [vmem:[%s190] sm:$0xe]
      %v388 = vld [vmem:[%s190 + $0x4] sm:$0x3]
      %v389 = vld [vmem:[%s190 + $0x8] sm:$0xe]
      %v390 = vld [vmem:[%s190 + $0xc] sm:$0x3]
      %v391 = vld [vmem:[%s190 + $0x10] sm:$0xe]
      %v392 = vld [vmem:[%s190 + $0x14] sm:$0x3]
      %v393 = vld [vmem:[%s190 + $0x18] sm:$0xe]
      %v394 = vld [vmem:[%s190 + $0x1c] sm:$0x3]
      %v395 = vld [vmem:[%s190 + $0x20] sm:$0xe]
      %v396 = vld [vmem:[%s190 + $0x24] sm:$0x3]
      %v397 = vld [vmem:[%s190 + $0x28] sm:$0xe]
      %v398 = vld [vmem:[%s190 + $0x2c] sm:$0x3]
      %v399 = vld [vmem:[%s190 + $0x30] sm:$0xe]
      %v400 = vld [vmem:[%s190 + $0x34] sm:$0x3]
      %v401 = vld [vmem:[%s190 + $0x38] sm:$0xe]
      %v402 = vld [vmem:[%s190 + $0x3c] sm:$0x3]
      %v403 = vld [vmem:[%s190 + $0x40] sm:$0xe]
      %v404 = vld [vmem:[%s190 + $0x44] sm:$0x3]
      %v405 = vunpack.c.l.bf16 %v387
      %v406 = vunpack.c.l.bf16 %v388
      %v407 = vunpack.c.l.bf16 %v389
      %v408 = vunpack.c.l.bf16 %v390
      %v409 = vunpack.c.l.bf16 %v391
      %v410 = vunpack.c.l.bf16 %v392
      %v411 = vunpack.c.l.bf16 %v393
      %v412 = vunpack.c.l.bf16 %v394
      %v413 = vunpack.c.l.bf16 %v395
      %v414 = vunpack.c.l.bf16 %v396
      %v415 = vunpack.c.l.bf16 %v397
      %v416 = vunpack.c.l.bf16 %v398
      %v417 = vunpack.c.l.bf16 %v399
      %v418 = vunpack.c.l.bf16 %v400
      %v419 = vunpack.c.l.bf16 %v401
      %v420 = vunpack.c.l.bf16 %v402
      %v421 = vunpack.c.l.bf16 %v403
      %v422 = vunpack.c.l.bf16 %v404
      %v423 = vld [vmem:[%s185] sm:$0x2]
      %v424 = vunpack.c.l.bf16 %v423
      %v425 = vlaneseq
      %v426 = vshrl.u32 %v425, 7
      %v427 = vsub.s32 2, %v426
      %v428 = vrot.slane %v424, %v427
      %v429 = vmul.f32 %v405, %v428
      %v430 = vmul.f32 %v406, %v428
      %v431 = vmul.f32 %v407, %v428
      %v432 = vmul.f32 %v408, %v428
      %v433 = vmul.f32 %v409, %v428
      %v434 = vmul.f32 %v410, %v428
      %v435 = vmul.f32 %v411, %v428
      %v436 = vmul.f32 %v412, %v428
      %v437 = vmul.f32 %v413, %v428
      %v438 = vmul.f32 %v414, %v428
      %v439 = vmul.f32 %v415, %v428
      %v440 = vmul.f32 %v416, %v428
      %v441 = vmul.f32 %v417, %v428
      %v442 = vmul.f32 %v418, %v428
      %v443 = vmul.f32 %v419, %v428
      %v444 = vmul.f32 %v420, %v428
      %v445 = vmul.f32 %v421, %v428
      %v446 = vmul.f32 %v422, %v428
      %vm465 = vcmask 1045504
      %v466 = vrot.slane %v429, 2
      %v467 = vrot.slane %v430, 2
      %v468 = vsel %vm465, %v466, %v467
      %v469 = vrot.slane %v431, 2
      %v470 = vrot.slane %v432, 2
      %v471 = vsel %vm465, %v469, %v470
      %v472 = vrot.slane %v433, 2
      %v473 = vrot.slane %v434, 2
      %v474 = vsel %vm465, %v472, %v473
      %v475 = vrot.slane %v435, 2
      %v476 = vrot.slane %v436, 2
      %v477 = vsel %vm465, %v475, %v476
      %v478 = vrot.slane %v437, 2
      %v479 = vrot.slane %v438, 2
      %v480 = vsel %vm465, %v478, %v479
      %v481 = vrot.slane %v439, 2
      %v482 = vrot.slane %v440, 2
      %v483 = vsel %vm465, %v481, %v482
      %v484 = vrot.slane %v441, 2
      %v485 = vrot.slane %v442, 2
      %v486 = vsel %vm465, %v484, %v485
      %v487 = vrot.slane %v443, 2
      %v488 = vrot.slane %v444, 2
      %v489 = vsel %vm465, %v487, %v488
      %v490 = vrot.slane %v445, 2
      %v491 = vrot.slane %v446, 2
      %v492 = vsel %vm465, %v490, %v491
      %v511 = vadd.f32 %v369, %v468
      %v512 = vadd.f32 %v370, %v467
      %v513 = vadd.f32 %v371, %v471
      %v514 = vadd.f32 %v372, %v470
      %v515 = vadd.f32 %v373, %v474
      %v516 = vadd.f32 %v374, %v473
      %v517 = vadd.f32 %v375, %v477
      %v518 = vadd.f32 %v376, %v476
      %v519 = vadd.f32 %v377, %v480
      %v520 = vadd.f32 %v378, %v479
      %v521 = vadd.f32 %v379, %v483
      %v522 = vadd.f32 %v380, %v482
      %v523 = vadd.f32 %v381, %v486
      %v524 = vadd.f32 %v382, %v485
      %v525 = vadd.f32 %v383, %v489
      %v526 = vadd.f32 %v384, %v488
      %v527 = vadd.f32 %v385, %v492
      %v528 = vadd.f32 %v386, %v491
      %v529 = vlaneseq
      %v530 = vshrl.u32 %v529, 7
      %v531 = vsub.s32 3, %v530
      %v532 = vrot.slane %v424, %v531
      %v533 = vmul.f32 %v405, %v532
      %v534 = vmul.f32 %v406, %v532
      %v535 = vmul.f32 %v407, %v532
      %v536 = vmul.f32 %v408, %v532
      %v537 = vmul.f32 %v409, %v532
      %v538 = vmul.f32 %v410, %v532
      %v539 = vmul.f32 %v411, %v532
      %v540 = vmul.f32 %v412, %v532
      %v541 = vmul.f32 %v413, %v532
      %v542 = vmul.f32 %v414, %v532
      %v543 = vmul.f32 %v415, %v532
      %v544 = vmul.f32 %v416, %v532
      %v545 = vmul.f32 %v417, %v532
      %v546 = vmul.f32 %v418, %v532
      %v547 = vmul.f32 %v419, %v532
      %v548 = vmul.f32 %v420, %v532
      %v549 = vmul.f32 %v421, %v532
      %v550 = vmul.f32 %v422, %v532
      %vm569 = vcmask 1044480
      %v570 = vrot.slane %v533, 3
      %v571 = vrot.slane %v534, 3
      %v572 = vsel %vm569, %v570, %v571
      %v573 = vrot.slane %v535, 3
      %v574 = vrot.slane %v536, 3
      %v575 = vsel %vm569, %v573, %v574
      %v576 = vrot.slane %v537, 3
      %v577 = vrot.slane %v538, 3
      %v578 = vsel %vm569, %v576, %v577
      %v579 = vrot.slane %v539, 3
      %v580 = vrot.slane %v540, 3
      %v581 = vsel %vm569, %v579, %v580
      %v582 = vrot.slane %v541, 3
      %v583 = vrot.slane %v542, 3
      %v584 = vsel %vm569, %v582, %v583
      %v585 = vrot.slane %v543, 3
      %v586 = vrot.slane %v544, 3
      %v587 = vsel %vm569, %v585, %v586
      %v588 = vrot.slane %v545, 3
      %v589 = vrot.slane %v546, 3
      %v590 = vsel %vm569, %v588, %v589
      %v591 = vrot.slane %v547, 3
      %v592 = vrot.slane %v548, 3
      %v593 = vsel %vm569, %v591, %v592
      %v594 = vrot.slane %v549, 3
      %v595 = vrot.slane %v550, 3
      %v596 = vsel %vm569, %v594, %v595
      %v615 = vadd.f32 %v511, %v572
      %v616 = vadd.f32 %v512, %v571
      %v617 = vadd.f32 %v513, %v575
      %v618 = vadd.f32 %v514, %v574
      %v619 = vadd.f32 %v515, %v578
      %v620 = vadd.f32 %v516, %v577
      %v621 = vadd.f32 %v517, %v581
      %v622 = vadd.f32 %v518, %v580
      %v623 = vadd.f32 %v519, %v584
      %v624 = vadd.f32 %v520, %v583
      %v625 = vadd.f32 %v521, %v587
      %v626 = vadd.f32 %v522, %v586
      %v627 = vadd.f32 %v523, %v590
      %v628 = vadd.f32 %v524, %v589
      %v629 = vadd.f32 %v525, %v593
      %v630 = vadd.f32 %v526, %v592
      %v631 = vadd.f32 %v527, %v596
      %v632 = vadd.f32 %v528, %v595
      %v633 = vld [vmem:[%s190] sm:$0xc]
      %v634 = vld [vmem:[%s190 + $0x4] sm:$0x7]
      %v635 = vld [vmem:[%s190 + $0x8] sm:$0xc]
      %v636 = vld [vmem:[%s190 + $0xc] sm:$0x7]
      %v637 = vld [vmem:[%s190 + $0x10] sm:$0xc]
      %v638 = vld [vmem:[%s190 + $0x14] sm:$0x7]
      %v639 = vld [vmem:[%s190 + $0x18] sm:$0xc]
      %v640 = vld [vmem:[%s190 + $0x1c] sm:$0x7]
      %v641 = vld [vmem:[%s190 + $0x20] sm:$0xc]
      %v642 = vld [vmem:[%s190 + $0x24] sm:$0x7]
      %v643 = vld [vmem:[%s190 + $0x28] sm:$0xc]
      %v644 = vld [vmem:[%s190 + $0x2c] sm:$0x7]
      %v645 = vld [vmem:[%s190 + $0x30] sm:$0xc]
      %v646 = vld [vmem:[%s190 + $0x34] sm:$0x7]
      %v647 = vld [vmem:[%s190 + $0x38] sm:$0xc]
      %v648 = vld [vmem:[%s190 + $0x3c] sm:$0x7]
      %v649 = vld [vmem:[%s190 + $0x40] sm:$0xc]
      %v650 = vld [vmem:[%s190 + $0x44] sm:$0x7]
      %v651 = vunpack.c.l.bf16 %v633
      %v652 = vunpack.c.l.bf16 %v634
      %v653 = vunpack.c.l.bf16 %v635
      %v654 = vunpack.c.l.bf16 %v636
      %v655 = vunpack.c.l.bf16 %v637
      %v656 = vunpack.c.l.bf16 %v638
      %v657 = vunpack.c.l.bf16 %v639
      %v658 = vunpack.c.l.bf16 %v640
      %v659 = vunpack.c.l.bf16 %v641
      %v660 = vunpack.c.l.bf16 %v642
      %v661 = vunpack.c.l.bf16 %v643
      %v662 = vunpack.c.l.bf16 %v644
      %v663 = vunpack.c.l.bf16 %v645
      %v664 = vunpack.c.l.bf16 %v646
      %v665 = vunpack.c.l.bf16 %v647
      %v666 = vunpack.c.l.bf16 %v648
      %v667 = vunpack.c.l.bf16 %v649
      %v668 = vunpack.c.l.bf16 %v650
      %v669 = vld [vmem:[%s185] sm:$0x4]
      %v670 = vunpack.c.l.bf16 %v669
      %v671 = vlaneseq
      %v672 = vshrl.u32 %v671, 7
      %v673 = vsub.s32 4, %v672
      %v674 = vrot.slane %v670, %v673
      %v675 = vmul.f32 %v651, %v674
      %v676 = vmul.f32 %v652, %v674
      %v677 = vmul.f32 %v653, %v674
      %v678 = vmul.f32 %v654, %v674
      %v679 = vmul.f32 %v655, %v674
      %v680 = vmul.f32 %v656, %v674
      %v681 = vmul.f32 %v657, %v674
      %v682 = vmul.f32 %v658, %v674
      %v683 = vmul.f32 %v659, %v674
      %v684 = vmul.f32 %v660, %v674
      %v685 = vmul.f32 %v661, %v674
      %v686 = vmul.f32 %v662, %v674
      %v687 = vmul.f32 %v663, %v674
      %v688 = vmul.f32 %v664, %v674
      %v689 = vmul.f32 %v665, %v674
      %v690 = vmul.f32 %v666, %v674
      %v691 = vmul.f32 %v667, %v674
      %v692 = vmul.f32 %v668, %v674
      %vm711 = vcmask 1043456
      %v712 = vrot.slane %v675, 4
      %v713 = vrot.slane %v676, 4
      %v714 = vsel %vm711, %v712, %v713
      %v715 = vrot.slane %v677, 4
      %v716 = vrot.slane %v678, 4
      %v717 = vsel %vm711, %v715, %v716
      %v718 = vrot.slane %v679, 4
      %v719 = vrot.slane %v680, 4
      %v720 = vsel %vm711, %v718, %v719
      %v721 = vrot.slane %v681, 4
      %v722 = vrot.slane %v682, 4
      %v723 = vsel %vm711, %v721, %v722
      %v724 = vrot.slane %v683, 4
      %v725 = vrot.slane %v684, 4
      %v726 = vsel %vm711, %v724, %v725
      %v727 = vrot.slane %v685, 4
      %v728 = vrot.slane %v686, 4
      %v729 = vsel %vm711, %v727, %v728
      %v730 = vrot.slane %v687, 4
      %v731 = vrot.slane %v688, 4
      %v732 = vsel %vm711, %v730, %v731
      %v733 = vrot.slane %v689, 4
      %v734 = vrot.slane %v690, 4
      %v735 = vsel %vm711, %v733, %v734
      %v736 = vrot.slane %v691, 4
      %v737 = vrot.slane %v692, 4
      %v738 = vsel %vm711, %v736, %v737
      %v757 = vadd.f32 %v615, %v714
      %v758 = vadd.f32 %v616, %v713
      %v759 = vadd.f32 %v617, %v717
      %v760 = vadd.f32 %v618, %v716
      %v761 = vadd.f32 %v619, %v720
      %v762 = vadd.f32 %v620, %v719
      %v763 = vadd.f32 %v621, %v723
      %v764 = vadd.f32 %v622, %v722
      %v765 = vadd.f32 %v623, %v726
      %v766 = vadd.f32 %v624, %v725
      %v767 = vadd.f32 %v625, %v729
      %v768 = vadd.f32 %v626, %v728
      %v769 = vadd.f32 %v627, %v732
      %v770 = vadd.f32 %v628, %v731
      %v771 = vadd.f32 %v629, %v735
      %v772 = vadd.f32 %v630, %v734
      %v773 = vadd.f32 %v631, %v738
      %v774 = vadd.f32 %v632, %v737
      %v775 = vlaneseq
      %v776 = vshrl.u32 %v775, 7
      %v777 = vsub.s32 5, %v776
      %v778 = vrot.slane %v670, %v777
      %v779 = vmul.f32 %v651, %v778
      %v780 = vmul.f32 %v652, %v778
      %v781 = vmul.f32 %v653, %v778
      %v782 = vmul.f32 %v654, %v778
      %v783 = vmul.f32 %v655, %v778
      %v784 = vmul.f32 %v656, %v778
      %v785 = vmul.f32 %v657, %v778
      %v786 = vmul.f32 %v658, %v778
      %v787 = vmul.f32 %v659, %v778
      %v788 = vmul.f32 %v660, %v778
      %v789 = vmul.f32 %v661, %v778
      %v790 = vmul.f32 %v662, %v778
      %v791 = vmul.f32 %v663, %v778
      %v792 = vmul.f32 %v664, %v778
      %v793 = vmul.f32 %v665, %v778
      %v794 = vmul.f32 %v666, %v778
      %v795 = vmul.f32 %v667, %v778
      %v796 = vmul.f32 %v668, %v778
      %vm815 = vcmask 1042432
      %v816 = vrot.slane %v779, 5
      %v817 = vrot.slane %v780, 5
      %v818 = vsel %vm815, %v816, %v817
      %v819 = vrot.slane %v781, 5
      %v820 = vrot.slane %v782, 5
      %v821 = vsel %vm815, %v819, %v820
      %v822 = vrot.slane %v783, 5
      %v823 = vrot.slane %v784, 5
      %v824 = vsel %vm815, %v822, %v823
      %v825 = vrot.slane %v785, 5
      %v826 = vrot.slane %v786, 5
      %v827 = vsel %vm815, %v825, %v826
      %v828 = vrot.slane %v787, 5
      %v829 = vrot.slane %v788, 5
      %v830 = vsel %vm815, %v828, %v829
      %v831 = vrot.slane %v789, 5
      %v832 = vrot.slane %v790, 5
      %v833 = vsel %vm815, %v831, %v832
      %v834 = vrot.slane %v791, 5
      %v835 = vrot.slane %v792, 5
      %v836 = vsel %vm815, %v834, %v835
      %v837 = vrot.slane %v793, 5
      %v838 = vrot.slane %v794, 5
      %v839 = vsel %vm815, %v837, %v838
      %v840 = vrot.slane %v795, 5
      %v841 = vrot.slane %v796, 5
      %v842 = vsel %vm815, %v840, %v841
      %v861 = vadd.f32 %v757, %v818
      %v862 = vadd.f32 %v758, %v817
      %v863 = vadd.f32 %v759, %v821
      %v864 = vadd.f32 %v760, %v820
      %v865 = vadd.f32 %v761, %v824
      %v866 = vadd.f32 %v762, %v823
      %v867 = vadd.f32 %v763, %v827
      %v868 = vadd.f32 %v764, %v826
      %v869 = vadd.f32 %v765, %v830
      %v870 = vadd.f32 %v766, %v829
      %v871 = vadd.f32 %v767, %v833
      %v872 = vadd.f32 %v768, %v832
      %v873 = vadd.f32 %v769, %v836
      %v874 = vadd.f32 %v770, %v835
      %v875 = vadd.f32 %v771, %v839
      %v876 = vadd.f32 %v772, %v838
      %v877 = vadd.f32 %v773, %v842
      %v878 = vadd.f32 %v774, %v841
      %879 = vadd.xlane.f32.xlu0 %v861
      %v880 = vpop.xlane.xlu0 %879
      %vm881 = vcmask 1040384
      %v882 = vsel %vm881, %v862, 0.0
      %883 = vadd.xlane.f32.xlu0 %v882
      %v884 = vpop.xlane.xlu0 %883
      %885 = vadd.xlane.f32.xlu0 %v863
      %v886 = vpop.xlane.xlu0 %885
      %v887 = vsel %vm881, %v864, 0.0
      %888 = vadd.xlane.f32.xlu0 %v887
      %v889 = vpop.xlane.xlu0 %888
      %890 = vadd.xlane.f32.xlu0 %v865
      %v891 = vpop.xlane.xlu0 %890
      %v892 = vsel %vm881, %v866, 0.0
      %893 = vadd.xlane.f32.xlu0 %v892
      %v894 = vpop.xlane.xlu0 %893
      %895 = vadd.xlane.f32.xlu0 %v867
      %v896 = vpop.xlane.xlu0 %895
      %v897 = vsel %vm881, %v868, 0.0
      %898 = vadd.xlane.f32.xlu0 %v897
      %v899 = vpop.xlane.xlu0 %898
      %900 = vadd.xlane.f32.xlu0 %v869
      %v901 = vpop.xlane.xlu0 %900
      %v902 = vsel %vm881, %v870, 0.0
      %903 = vadd.xlane.f32.xlu0 %v902
      %v904 = vpop.xlane.xlu0 %903
      %905 = vadd.xlane.f32.xlu0 %v871
      %v906 = vpop.xlane.xlu0 %905
      %v907 = vsel %vm881, %v872, 0.0
      %908 = vadd.xlane.f32.xlu0 %v907
      %v909 = vpop.xlane.xlu0 %908
      %910 = vadd.xlane.f32.xlu0 %v873
      %v911 = vpop.xlane.xlu0 %910
      %v912 = vsel %vm881, %v874, 0.0
      %913 = vadd.xlane.f32.xlu0 %v912
      %v914 = vpop.xlane.xlu0 %913
      %915 = vadd.xlane.f32.xlu0 %v875
      %v916 = vpop.xlane.xlu0 %915
      %v917 = vsel %vm881, %v876, 0.0
      %918 = vadd.xlane.f32.xlu0 %v917
      %v919 = vpop.xlane.xlu0 %918
      %920 = vadd.xlane.f32.xlu0 %v877
      %v921 = vpop.xlane.xlu0 %920
      %v922 = vsel %vm881, %v878, 0.0
      %923 = vadd.xlane.f32.xlu0 %v922
      %v924 = vpop.xlane.xlu0 %923
      %v925 = vadd.f32 %v880, 0.0
      %v926 = vadd.f32 %v884, 0.0
      %v927 = vadd.f32 %v886, 0.0
      %v928 = vadd.f32 %v889, 0.0
      %v929 = vadd.f32 %v891, 0.0
      %v930 = vadd.f32 %v894, 0.0
      %v931 = vadd.f32 %v896, 0.0
      %v932 = vadd.f32 %v899, 0.0
      %v933 = vadd.f32 %v901, 0.0
      %v934 = vadd.f32 %v904, 0.0
      %v935 = vadd.f32 %v906, 0.0
      %v936 = vadd.f32 %v909, 0.0
      %v937 = vadd.f32 %v911, 0.0
      %v938 = vadd.f32 %v914, 0.0
      %v939 = vadd.f32 %v916, 0.0
      %v940 = vadd.f32 %v919, 0.0
      %v941 = vadd.f32 %v921, 0.0
      %v942 = vadd.f32 %v924, 0.0
      %s943 = scalar_lea.vmem %s190, 8
      %v944 = vld [vmem:[%s943] sm:$0xf]
      %v945 = vld [vmem:[%s943 + $0x4] sm:$0x1]
      %v946 = vld [vmem:[%s943 + $0x8] sm:$0xf]
      %v947 = vld [vmem:[%s943 + $0xc] sm:$0x1]
      %v948 = vld [vmem:[%s943 + $0x10] sm:$0xf]
      %v949 = vld [vmem:[%s943 + $0x14] sm:$0x1]
      %v950 = vld [vmem:[%s943 + $0x18] sm:$0xf]
      %v951 = vld [vmem:[%s943 + $0x1c] sm:$0x1]
      %v952 = vld [vmem:[%s943 + $0x20] sm:$0xf]
      %v953 = vld [vmem:[%s943 + $0x24] sm:$0x1]
      %v954 = vld [vmem:[%s943 + $0x28] sm:$0xf]
      %v955 = vld [vmem:[%s943 + $0x2c] sm:$0x1]
      %v956 = vld [vmem:[%s943 + $0x30] sm:$0xf]
      %v957 = vld [vmem:[%s943 + $0x34] sm:$0x1]
      %v958 = vld [vmem:[%s943 + $0x38] sm:$0xf]
      %v959 = vld [vmem:[%s943 + $0x3c] sm:$0x1]
      %v960 = vld [vmem:[%s943 + $0x40] sm:$0xf]
      %v961 = vld [vmem:[%s943 + $0x44] sm:$0x1]
      %v962 = vunpack.c.l.bf16 %v944
      %v963 = vunpack.c.l.bf16 %v945
      %v964 = vunpack.c.l.bf16 %v946
      %v965 = vunpack.c.l.bf16 %v947
      %v966 = vunpack.c.l.bf16 %v948
      %v967 = vunpack.c.l.bf16 %v949
      %v968 = vunpack.c.l.bf16 %v950
      %v969 = vunpack.c.l.bf16 %v951
      %v970 = vunpack.c.l.bf16 %v952
      %v971 = vunpack.c.l.bf16 %v953
      %v972 = vunpack.c.l.bf16 %v954
      %v973 = vunpack.c.l.bf16 %v955
      %v974 = vunpack.c.l.bf16 %v956
      %v975 = vunpack.c.l.bf16 %v957
      %v976 = vunpack.c.l.bf16 %v958
      %v977 = vunpack.c.l.bf16 %v959
      %v978 = vunpack.c.l.bf16 %v960
      %v979 = vunpack.c.l.bf16 %v961
      %s980 = scalar_lea.vmem %s185, 4
      %v981 = vld [vmem:[%s980] sm:$0x1]
      %v982 = vunpack.c.l.bf16 %v981
      %v983 = vlaneseq
      %v984 = vshrl.u32 %v983, 7
      %v985 = vsub.s32 0, %v984
      %v986 = vrot.slane %v982, %v985
      %v987 = vmul.f32 %v962, %v986
      %v988 = vmul.f32 %v963, %v986
      %v989 = vmul.f32 %v964, %v986
      %v990 = vmul.f32 %v965, %v986
      %v991 = vmul.f32 %v966, %v986
      %v992 = vmul.f32 %v967, %v986
      %v993 = vmul.f32 %v968, %v986
      %v994 = vmul.f32 %v969, %v986
      %v995 = vmul.f32 %v970, %v986
      %v996 = vmul.f32 %v971, %v986
      %v997 = vmul.f32 %v972, %v986
      %v998 = vmul.f32 %v973, %v986
      %v999 = vmul.f32 %v974, %v986
      %v1000 = vmul.f32 %v975, %v986
      %v1001 = vmul.f32 %v976, %v986
      %v1002 = vmul.f32 %v977, %v986
      %v1003 = vmul.f32 %v978, %v986
      %v1004 = vmul.f32 %v979, %v986
      %v1005 = vadd.f32 %v987, 0.0
      %v1006 = vadd.f32 %v988, 0.0
      %v1007 = vadd.f32 %v989, 0.0
      %v1008 = vadd.f32 %v990, 0.0
      %v1009 = vadd.f32 %v991, 0.0
      %v1010 = vadd.f32 %v992, 0.0
      %v1011 = vadd.f32 %v993, 0.0
      %v1012 = vadd.f32 %v994, 0.0
      %v1013 = vadd.f32 %v995, 0.0
      %v1014 = vadd.f32 %v996, 0.0
      %v1015 = vadd.f32 %v997, 0.0
      %v1016 = vadd.f32 %v998, 0.0
      %v1017 = vadd.f32 %v999, 0.0
      %v1018 = vadd.f32 %v1000, 0.0
      %v1019 = vadd.f32 %v1001, 0.0
      %v1020 = vadd.f32 %v1002, 0.0
      %v1021 = vadd.f32 %v1003, 0.0
      %v1022 = vadd.f32 %v1004, 0.0
      %v1023 = vlaneseq
      %v1024 = vshrl.u32 %v1023, 7
      %v1025 = vsub.s32 1, %v1024
      %v1026 = vrot.slane %v982, %v1025
      %v1027 = vmul.f32 %v962, %v1026
      %v1028 = vmul.f32 %v963, %v1026
      %v1029 = vmul.f32 %v964, %v1026
      %v1030 = vmul.f32 %v965, %v1026
      %v1031 = vmul.f32 %v966, %v1026
      %v1032 = vmul.f32 %v967, %v1026
      %v1033 = vmul.f32 %v968, %v1026
      %v1034 = vmul.f32 %v969, %v1026
      %v1035 = vmul.f32 %v970, %v1026
      %v1036 = vmul.f32 %v971, %v1026
      %v1037 = vmul.f32 %v972, %v1026
      %v1038 = vmul.f32 %v973, %v1026
      %v1039 = vmul.f32 %v974, %v1026
      %v1040 = vmul.f32 %v975, %v1026
      %v1041 = vmul.f32 %v976, %v1026
      %v1042 = vmul.f32 %v977, %v1026
      %v1043 = vmul.f32 %v978, %v1026
      %v1044 = vmul.f32 %v979, %v1026
      %v1063 = vrot.slane %v1027, 1
      %v1064 = vrot.slane %v1028, 1
      %v1065 = vsel %vm323, %v1063, %v1064
      %v1066 = vrot.slane %v1029, 1
      %v1067 = vrot.slane %v1030, 1
      %v1068 = vsel %vm323, %v1066, %v1067
      %v1069 = vrot.slane %v1031, 1
      %v1070 = vrot.slane %v1032, 1
      %v1071 = vsel %vm323, %v1069, %v1070
      %v1072 = vrot.slane %v1033, 1
      %v1073 = vrot.slane %v1034, 1
      %v1074 = vsel %vm323, %v1072, %v1073
      %v1075 = vrot.slane %v1035, 1
      %v1076 = vrot.slane %v1036, 1
      %v1077 = vsel %vm323, %v1075, %v1076
      %v1078 = vrot.slane %v1037, 1
      %v1079 = vrot.slane %v1038, 1
      %v1080 = vsel %vm323, %v1078, %v1079
      %v1081 = vrot.slane %v1039, 1
      %v1082 = vrot.slane %v1040, 1
      %v1083 = vsel %vm323, %v1081, %v1082
      %v1084 = vrot.slane %v1041, 1
      %v1085 = vrot.slane %v1042, 1
      %v1086 = vsel %vm323, %v1084, %v1085
      %v1087 = vrot.slane %v1043, 1
      %v1088 = vrot.slane %v1044, 1
      %v1089 = vsel %vm323, %v1087, %v1088
      %v1108 = vadd.f32 %v1005, %v1065
      %v1109 = vadd.f32 %v1006, %v1064
      %v1110 = vadd.f32 %v1007, %v1068
      %v1111 = vadd.f32 %v1008, %v1067
      %v1112 = vadd.f32 %v1009, %v1071
      %v1113 = vadd.f32 %v1010, %v1070
      %v1114 = vadd.f32 %v1011, %v1074
      %v1115 = vadd.f32 %v1012, %v1073
      %v1116 = vadd.f32 %v1013, %v1077
      %v1117 = vadd.f32 %v1014, %v1076
      %v1118 = vadd.f32 %v1015, %v1080
      %v1119 = vadd.f32 %v1016, %v1079
      %v1120 = vadd.f32 %v1017, %v1083
      %v1121 = vadd.f32 %v1018, %v1082
      %v1122 = vadd.f32 %v1019, %v1086
      %v1123 = vadd.f32 %v1020, %v1085
      %v1124 = vadd.f32 %v1021, %v1089
      %v1125 = vadd.f32 %v1022, %v1088
      %v1126 = vld [vmem:[%s943] sm:$0xe]
      %v1127 = vld [vmem:[%s943 + $0x4] sm:$0x3]
      %v1128 = vld [vmem:[%s943 + $0x8] sm:$0xe]
      %v1129 = vld [vmem:[%s943 + $0xc] sm:$0x3]
      %v1130 = vld [vmem:[%s943 + $0x10] sm:$0xe]
      %v1131 = vld [vmem:[%s943 + $0x14] sm:$0x3]
      %v1132 = vld [vmem:[%s943 + $0x18] sm:$0xe]
      %v1133 = vld [vmem:[%s943 + $0x1c] sm:$0x3]
      %v1134 = vld [vmem:[%s943 + $0x20] sm:$0xe]
      %v1135 = vld [vmem:[%s943 + $0x24] sm:$0x3]
      %v1136 = vld [vmem:[%s943 + $0x28] sm:$0xe]
      %v1137 = vld [vmem:[%s943 + $0x2c] sm:$0x3]
      %v1138 = vld [vmem:[%s943 + $0x30] sm:$0xe]
      %v1139 = vld [vmem:[%s943 + $0x34] sm:$0x3]
      %v1140 = vld [vmem:[%s943 + $0x38] sm:$0xe]
      %v1141 = vld [vmem:[%s943 + $0x3c] sm:$0x3]
      %v1142 = vld [vmem:[%s943 + $0x40] sm:$0xe]
      %v1143 = vld [vmem:[%s943 + $0x44] sm:$0x3]
      %v1144 = vunpack.c.l.bf16 %v1126
      %v1145 = vunpack.c.l.bf16 %v1127
      %v1146 = vunpack.c.l.bf16 %v1128
      %v1147 = vunpack.c.l.bf16 %v1129
      %v1148 = vunpack.c.l.bf16 %v1130
      %v1149 = vunpack.c.l.bf16 %v1131
      %v1150 = vunpack.c.l.bf16 %v1132
      %v1151 = vunpack.c.l.bf16 %v1133
      %v1152 = vunpack.c.l.bf16 %v1134
      %v1153 = vunpack.c.l.bf16 %v1135
      %v1154 = vunpack.c.l.bf16 %v1136
      %v1155 = vunpack.c.l.bf16 %v1137
      %v1156 = vunpack.c.l.bf16 %v1138
      %v1157 = vunpack.c.l.bf16 %v1139
      %v1158 = vunpack.c.l.bf16 %v1140
      %v1159 = vunpack.c.l.bf16 %v1141
      %v1160 = vunpack.c.l.bf16 %v1142
      %v1161 = vunpack.c.l.bf16 %v1143
      %v1162 = vld [vmem:[%s980] sm:$0x2]
      %v1163 = vunpack.c.l.bf16 %v1162
      %v1164 = vlaneseq
      %v1165 = vshrl.u32 %v1164, 7
      %v1166 = vsub.s32 2, %v1165
      %v1167 = vrot.slane %v1163, %v1166
      %v1168 = vmul.f32 %v1144, %v1167
      %v1169 = vmul.f32 %v1145, %v1167
      %v1170 = vmul.f32 %v1146, %v1167
      %v1171 = vmul.f32 %v1147, %v1167
      %v1172 = vmul.f32 %v1148, %v1167
      %v1173 = vmul.f32 %v1149, %v1167
      %v1174 = vmul.f32 %v1150, %v1167
      %v1175 = vmul.f32 %v1151, %v1167
      %v1176 = vmul.f32 %v1152, %v1167
      %v1177 = vmul.f32 %v1153, %v1167
      %v1178 = vmul.f32 %v1154, %v1167
      %v1179 = vmul.f32 %v1155, %v1167
      %v1180 = vmul.f32 %v1156, %v1167
      %v1181 = vmul.f32 %v1157, %v1167
      %v1182 = vmul.f32 %v1158, %v1167
      %v1183 = vmul.f32 %v1159, %v1167
      %v1184 = vmul.f32 %v1160, %v1167
      %v1185 = vmul.f32 %v1161, %v1167
      %v1204 = vrot.slane %v1168, 2
      %v1205 = vrot.slane %v1169, 2
      %v1206 = vsel %vm465, %v1204, %v1205
      %v1207 = vrot.slane %v1170, 2
      %v1208 = vrot.slane %v1171, 2
      %v1209 = vsel %vm465, %v1207, %v1208
      %v1210 = vrot.slane %v1172, 2
      %v1211 = vrot.slane %v1173, 2
      %v1212 = vsel %vm465, %v1210, %v1211
      %v1213 = vrot.slane %v1174, 2
      %v1214 = vrot.slane %v1175, 2
      %v1215 = vsel %vm465, %v1213, %v1214
      %v1216 = vrot.slane %v1176, 2
      %v1217 = vrot.slane %v1177, 2
      %v1218 = vsel %vm465, %v1216, %v1217
      %v1219 = vrot.slane %v1178, 2
      %v1220 = vrot.slane %v1179, 2
      %v1221 = vsel %vm465, %v1219, %v1220
      %v1222 = vrot.slane %v1180, 2
      %v1223 = vrot.slane %v1181, 2
      %v1224 = vsel %vm465, %v1222, %v1223
      %v1225 = vrot.slane %v1182, 2
      %v1226 = vrot.slane %v1183, 2
      %v1227 = vsel %vm465, %v1225, %v1226
      %v1228 = vrot.slane %v1184, 2
      %v1229 = vrot.slane %v1185, 2
      %v1230 = vsel %vm465, %v1228, %v1229
      %v1249 = vadd.f32 %v1108, %v1206
      %v1250 = vadd.f32 %v1109, %v1205
      %v1251 = vadd.f32 %v1110, %v1209
      %v1252 = vadd.f32 %v1111, %v1208
      %v1253 = vadd.f32 %v1112, %v1212
      %v1254 = vadd.f32 %v1113, %v1211
      %v1255 = vadd.f32 %v1114, %v1215
      %v1256 = vadd.f32 %v1115, %v1214
      %v1257 = vadd.f32 %v1116, %v1218
      %v1258 = vadd.f32 %v1117, %v1217
      %v1259 = vadd.f32 %v1118, %v1221
      %v1260 = vadd.f32 %v1119, %v1220
      %v1261 = vadd.f32 %v1120, %v1224
      %v1262 = vadd.f32 %v1121, %v1223
      %v1263 = vadd.f32 %v1122, %v1227
      %v1264 = vadd.f32 %v1123, %v1226
      %v1265 = vadd.f32 %v1124, %v1230
      %v1266 = vadd.f32 %v1125, %v1229
      %v1267 = vlaneseq
      %v1268 = vshrl.u32 %v1267, 7
      %v1269 = vsub.s32 3, %v1268
      %v1270 = vrot.slane %v1163, %v1269
      %v1271 = vmul.f32 %v1144, %v1270
      %v1272 = vmul.f32 %v1145, %v1270
      %v1273 = vmul.f32 %v1146, %v1270
      %v1274 = vmul.f32 %v1147, %v1270
      %v1275 = vmul.f32 %v1148, %v1270
      %v1276 = vmul.f32 %v1149, %v1270
      %v1277 = vmul.f32 %v1150, %v1270
      %v1278 = vmul.f32 %v1151, %v1270
      %v1279 = vmul.f32 %v1152, %v1270
      %v1280 = vmul.f32 %v1153, %v1270
      %v1281 = vmul.f32 %v1154, %v1270
      %v1282 = vmul.f32 %v1155, %v1270
      %v1283 = vmul.f32 %v1156, %v1270
      %v1284 = vmul.f32 %v1157, %v1270
      %v1285 = vmul.f32 %v1158, %v1270
      %v1286 = vmul.f32 %v1159, %v1270
      %v1287 = vmul.f32 %v1160, %v1270
      %v1288 = vmul.f32 %v1161, %v1270
      %v1307 = vrot.slane %v1271, 3
      %v1308 = vrot.slane %v1272, 3
      %v1309 = vsel %vm569, %v1307, %v1308
      %v1310 = vrot.slane %v1273, 3
      %v1311 = vrot.slane %v1274, 3
      %v1312 = vsel %vm569, %v1310, %v1311
      %v1313 = vrot.slane %v1275, 3
      %v1314 = vrot.slane %v1276, 3
      %v1315 = vsel %vm569, %v1313, %v1314
      %v1316 = vrot.slane %v1277, 3
      %v1317 = vrot.slane %v1278, 3
      %v1318 = vsel %vm569, %v1316, %v1317
      %v1319 = vrot.slane %v1279, 3
      %v1320 = vrot.slane %v1280, 3
      %v1321 = vsel %vm569, %v1319, %v1320
      %v1322 = vrot.slane %v1281, 3
      %v1323 = vrot.slane %v1282, 3
      %v1324 = vsel %vm569, %v1322, %v1323
      %v1325 = vrot.slane %v1283, 3
      %v1326 = vrot.slane %v1284, 3
      %v1327 = vsel %vm569, %v1325, %v1326
      %v1328 = vrot.slane %v1285, 3
      %v1329 = vrot.slane %v1286, 3
      %v1330 = vsel %vm569, %v1328, %v1329
      %v1331 = vrot.slane %v1287, 3
      %v1332 = vrot.slane %v1288, 3
      %v1333 = vsel %vm569, %v1331, %v1332
      %v1352 = vadd.f32 %v1249, %v1309
      %v1353 = vadd.f32 %v1250, %v1308
      %v1354 = vadd.f32 %v1251, %v1312
      %v1355 = vadd.f32 %v1252, %v1311
      %v1356 = vadd.f32 %v1253, %v1315
      %v1357 = vadd.f32 %v1254, %v1314
      %v1358 = vadd.f32 %v1255, %v1318
      %v1359 = vadd.f32 %v1256, %v1317
      %v1360 = vadd.f32 %v1257, %v1321
      %v1361 = vadd.f32 %v1258, %v1320
      %v1362 = vadd.f32 %v1259, %v1324
      %v1363 = vadd.f32 %v1260, %v1323
      %v1364 = vadd.f32 %v1261, %v1327
      %v1365 = vadd.f32 %v1262, %v1326
      %v1366 = vadd.f32 %v1263, %v1330
      %v1367 = vadd.f32 %v1264, %v1329
      %v1368 = vadd.f32 %v1265, %v1333
      %v1369 = vadd.f32 %v1266, %v1332
      %v1370 = vld [vmem:[%s943] sm:$0xc]
      %v1371 = vld [vmem:[%s943 + $0x4] sm:$0x7]
      %v1372 = vld [vmem:[%s943 + $0x8] sm:$0xc]
      %v1373 = vld [vmem:[%s943 + $0xc] sm:$0x7]
      %v1374 = vld [vmem:[%s943 + $0x10] sm:$0xc]
      %v1375 = vld [vmem:[%s943 + $0x14] sm:$0x7]
      %v1376 = vld [vmem:[%s943 + $0x18] sm:$0xc]
      %v1377 = vld [vmem:[%s943 + $0x1c] sm:$0x7]
      %v1378 = vld [vmem:[%s943 + $0x20] sm:$0xc]
      %v1379 = vld [vmem:[%s943 + $0x24] sm:$0x7]
      %v1380 = vld [vmem:[%s943 + $0x28] sm:$0xc]
      %v1381 = vld [vmem:[%s943 + $0x2c] sm:$0x7]
      %v1382 = vld [vmem:[%s943 + $0x30] sm:$0xc]
      %v1383 = vld [vmem:[%s943 + $0x34] sm:$0x7]
      %v1384 = vld [vmem:[%s943 + $0x38] sm:$0xc]
      %v1385 = vld [vmem:[%s943 + $0x3c] sm:$0x7]
      %v1386 = vld [vmem:[%s943 + $0x40] sm:$0xc]
      %v1387 = vld [vmem:[%s943 + $0x44] sm:$0x7]
      %v1388 = vunpack.c.l.bf16 %v1370
      %v1389 = vunpack.c.l.bf16 %v1371
      %v1390 = vunpack.c.l.bf16 %v1372
      %v1391 = vunpack.c.l.bf16 %v1373
      %v1392 = vunpack.c.l.bf16 %v1374
      %v1393 = vunpack.c.l.bf16 %v1375
      %v1394 = vunpack.c.l.bf16 %v1376
      %v1395 = vunpack.c.l.bf16 %v1377
      %v1396 = vunpack.c.l.bf16 %v1378
      %v1397 = vunpack.c.l.bf16 %v1379
      %v1398 = vunpack.c.l.bf16 %v1380
      %v1399 = vunpack.c.l.bf16 %v1381
      %v1400 = vunpack.c.l.bf16 %v1382
      %v1401 = vunpack.c.l.bf16 %v1383
      %v1402 = vunpack.c.l.bf16 %v1384
      %v1403 = vunpack.c.l.bf16 %v1385
      %v1404 = vunpack.c.l.bf16 %v1386
      %v1405 = vunpack.c.l.bf16 %v1387
      %v1406 = vld [vmem:[%s980] sm:$0x4]
      %v1407 = vunpack.c.l.bf16 %v1406
      %v1408 = vlaneseq
      %v1409 = vshrl.u32 %v1408, 7
      %v1410 = vsub.s32 4, %v1409
      %v1411 = vrot.slane %v1407, %v1410
      %v1412 = vmul.f32 %v1388, %v1411
      %v1413 = vmul.f32 %v1389, %v1411
      %v1414 = vmul.f32 %v1390, %v1411
      %v1415 = vmul.f32 %v1391, %v1411
      %v1416 = vmul.f32 %v1392, %v1411
      %v1417 = vmul.f32 %v1393, %v1411
      %v1418 = vmul.f32 %v1394, %v1411
      %v1419 = vmul.f32 %v1395, %v1411
      %v1420 = vmul.f32 %v1396, %v1411
      %v1421 = vmul.f32 %v1397, %v1411
      %v1422 = vmul.f32 %v1398, %v1411
      %v1423 = vmul.f32 %v1399, %v1411
      %v1424 = vmul.f32 %v1400, %v1411
      %v1425 = vmul.f32 %v1401, %v1411
      %v1426 = vmul.f32 %v1402, %v1411
      %v1427 = vmul.f32 %v1403, %v1411
      %v1428 = vmul.f32 %v1404, %v1411
      %v1429 = vmul.f32 %v1405, %v1411
      %v1448 = vrot.slane %v1412, 4
      %v1449 = vrot.slane %v1413, 4
      %v1450 = vsel %vm711, %v1448, %v1449
      %v1451 = vrot.slane %v1414, 4
      %v1452 = vrot.slane %v1415, 4
      %v1453 = vsel %vm711, %v1451, %v1452
      %v1454 = vrot.slane %v1416, 4
      %v1455 = vrot.slane %v1417, 4
      %v1456 = vsel %vm711, %v1454, %v1455
      %v1457 = vrot.slane %v1418, 4
      %v1458 = vrot.slane %v1419, 4
      %v1459 = vsel %vm711, %v1457, %v1458
      %v1460 = vrot.slane %v1420, 4
      %v1461 = vrot.slane %v1421, 4
      %v1462 = vsel %vm711, %v1460, %v1461
      %v1463 = vrot.slane %v1422, 4
      %v1464 = vrot.slane %v1423, 4
      %v1465 = vsel %vm711, %v1463, %v1464
      %v1466 = vrot.slane %v1424, 4
      %v1467 = vrot.slane %v1425, 4
      %v1468 = vsel %vm711, %v1466, %v1467
      %v1469 = vrot.slane %v1426, 4
      %v1470 = vrot.slane %v1427, 4
      %v1471 = vsel %vm711, %v1469, %v1470
      %v1472 = vrot.slane %v1428, 4
      %v1473 = vrot.slane %v1429, 4
      %v1474 = vsel %vm711, %v1472, %v1473
      %v1493 = vadd.f32 %v1352, %v1450
      %v1494 = vadd.f32 %v1353, %v1449
      %v1495 = vadd.f32 %v1354, %v1453
      %v1496 = vadd.f32 %v1355, %v1452
      %v1497 = vadd.f32 %v1356, %v1456
      %v1498 = vadd.f32 %v1357, %v1455
      %v1499 = vadd.f32 %v1358, %v1459
      %v1500 = vadd.f32 %v1359, %v1458
      %v1501 = vadd.f32 %v1360, %v1462
      %v1502 = vadd.f32 %v1361, %v1461
      %v1503 = vadd.f32 %v1362, %v1465
      %v1504 = vadd.f32 %v1363, %v1464
      %v1505 = vadd.f32 %v1364, %v1468
      %v1506 = vadd.f32 %v1365, %v1467
      %v1507 = vadd.f32 %v1366, %v1471
      %v1508 = vadd.f32 %v1367, %v1470
      %v1509 = vadd.f32 %v1368, %v1474
      %v1510 = vadd.f32 %v1369, %v1473
      %v1511 = vlaneseq
      %v1512 = vshrl.u32 %v1511, 7
      %v1513 = vsub.s32 5, %v1512
      %v1514 = vrot.slane %v1407, %v1513
      %v1515 = vmul.f32 %v1388, %v1514
      %v1516 = vmul.f32 %v1389, %v1514
      %v1517 = vmul.f32 %v1390, %v1514
      %v1518 = vmul.f32 %v1391, %v1514
      %v1519 = vmul.f32 %v1392, %v1514
      %v1520 = vmul.f32 %v1393, %v1514
      %v1521 = vmul.f32 %v1394, %v1514
      %v1522 = vmul.f32 %v1395, %v1514
      %v1523 = vmul.f32 %v1396, %v1514
      %v1524 = vmul.f32 %v1397, %v1514
      %v1525 = vmul.f32 %v1398, %v1514
      %v1526 = vmul.f32 %v1399, %v1514
      %v1527 = vmul.f32 %v1400, %v1514
      %v1528 = vmul.f32 %v1401, %v1514
      %v1529 = vmul.f32 %v1402, %v1514
      %v1530 = vmul.f32 %v1403, %v1514
      %v1531 = vmul.f32 %v1404, %v1514
      %v1532 = vmul.f32 %v1405, %v1514
      %v1551 = vrot.slane %v1515, 5
      %v1552 = vrot.slane %v1516, 5
      %v1553 = vsel %vm815, %v1551, %v1552
      %v1554 = vrot.slane %v1517, 5
      %v1555 = vrot.slane %v1518, 5
      %v1556 = vsel %vm815, %v1554, %v1555
      %v1557 = vrot.slane %v1519, 5
      %v1558 = vrot.slane %v1520, 5
      %v1559 = vsel %vm815, %v1557, %v1558
      %v1560 = vrot.slane %v1521, 5
      %v1561 = vrot.slane %v1522, 5
      %v1562 = vsel %vm815, %v1560, %v1561
      %v1563 = vrot.slane %v1523, 5
      %v1564 = vrot.slane %v1524, 5
      %v1565 = vsel %vm815, %v1563, %v1564
      %v1566 = vrot.slane %v1525, 5
      %v1567 = vrot.slane %v1526, 5
      %v1568 = vsel %vm815, %v1566, %v1567
      %v1569 = vrot.slane %v1527, 5
      %v1570 = vrot.slane %v1528, 5
      %v1571 = vsel %vm815, %v1569, %v1570
      %v1572 = vrot.slane %v1529, 5
      %v1573 = vrot.slane %v1530, 5
      %v1574 = vsel %vm815, %v1572, %v1573
      %v1575 = vrot.slane %v1531, 5
      %v1576 = vrot.slane %v1532, 5
      %v1577 = vsel %vm815, %v1575, %v1576
      %v1596 = vadd.f32 %v1493, %v1553
      %v1597 = vadd.f32 %v1494, %v1552
      %v1598 = vadd.f32 %v1495, %v1556
      %v1599 = vadd.f32 %v1496, %v1555
      %v1600 = vadd.f32 %v1497, %v1559
      %v1601 = vadd.f32 %v1498, %v1558
      %v1602 = vadd.f32 %v1499, %v1562
      %v1603 = vadd.f32 %v1500, %v1561
      %v1604 = vadd.f32 %v1501, %v1565
      %v1605 = vadd.f32 %v1502, %v1564
      %v1606 = vadd.f32 %v1503, %v1568
      %v1607 = vadd.f32 %v1504, %v1567
      %v1608 = vadd.f32 %v1505, %v1571
      %v1609 = vadd.f32 %v1506, %v1570
      %v1610 = vadd.f32 %v1507, %v1574
      %v1611 = vadd.f32 %v1508, %v1573
      %v1612 = vadd.f32 %v1509, %v1577
      %v1613 = vadd.f32 %v1510, %v1576
      %1614 = vadd.xlane.f32.xlu0 %v1596
      %v1615 = vpop.xlane.xlu0 %1614
      %v1616 = vsel %vm881, %v1597, 0.0
      %1617 = vadd.xlane.f32.xlu0 %v1616
      %v1618 = vpop.xlane.xlu0 %1617
      %1619 = vadd.xlane.f32.xlu0 %v1598
      %v1620 = vpop.xlane.xlu0 %1619
      %v1621 = vsel %vm881, %v1599, 0.0
      %1622 = vadd.xlane.f32.xlu0 %v1621
      %v1623 = vpop.xlane.xlu0 %1622
      %1624 = vadd.xlane.f32.xlu0 %v1600
      %v1625 = vpop.xlane.xlu0 %1624
      %v1626 = vsel %vm881, %v1601, 0.0
      %1627 = vadd.xlane.f32.xlu0 %v1626
      %v1628 = vpop.xlane.xlu0 %1627
      %1629 = vadd.xlane.f32.xlu0 %v1602
      %v1630 = vpop.xlane.xlu0 %1629
      %v1631 = vsel %vm881, %v1603, 0.0
      %1632 = vadd.xlane.f32.xlu0 %v1631
      %v1633 = vpop.xlane.xlu0 %1632
      %1634 = vadd.xlane.f32.xlu0 %v1604
      %v1635 = vpop.xlane.xlu0 %1634
      %v1636 = vsel %vm881, %v1605, 0.0
      %1637 = vadd.xlane.f32.xlu0 %v1636
      %v1638 = vpop.xlane.xlu0 %1637
      %1639 = vadd.xlane.f32.xlu0 %v1606
      %v1640 = vpop.xlane.xlu0 %1639
      %v1641 = vsel %vm881, %v1607, 0.0
      %1642 = vadd.xlane.f32.xlu0 %v1641
      %v1643 = vpop.xlane.xlu0 %1642
      %1644 = vadd.xlane.f32.xlu0 %v1608
      %v1645 = vpop.xlane.xlu0 %1644
      %v1646 = vsel %vm881, %v1609, 0.0
      %1647 = vadd.xlane.f32.xlu0 %v1646
      %v1648 = vpop.xlane.xlu0 %1647
      %1649 = vadd.xlane.f32.xlu0 %v1610
      %v1650 = vpop.xlane.xlu0 %1649
      %v1651 = vsel %vm881, %v1611, 0.0
      %1652 = vadd.xlane.f32.xlu0 %v1651
      %v1653 = vpop.xlane.xlu0 %1652
      %1654 = vadd.xlane.f32.xlu0 %v1612
      %v1655 = vpop.xlane.xlu0 %1654
      %v1656 = vsel %vm881, %v1613, 0.0
      %1657 = vadd.xlane.f32.xlu0 %v1656
      %v1658 = vpop.xlane.xlu0 %1657
      %v1659 = vadd.f32 %v925, %v1615
      %v1660 = vadd.f32 %v926, %v1618
      %v1661 = vadd.f32 %v927, %v1620
      %v1662 = vadd.f32 %v928, %v1623
      %v1663 = vadd.f32 %v929, %v1625
      %v1664 = vadd.f32 %v930, %v1628
      %v1665 = vadd.f32 %v931, %v1630
      %v1666 = vadd.f32 %v932, %v1633
      %v1667 = vadd.f32 %v933, %v1635
      %v1668 = vadd.f32 %v934, %v1638
      %v1669 = vadd.f32 %v935, %v1640
      %v1670 = vadd.f32 %v936, %v1643
      %v1671 = vadd.f32 %v937, %v1645
      %v1672 = vadd.f32 %v938, %v1648
      %v1673 = vadd.f32 %v939, %v1650
      %v1674 = vadd.f32 %v940, %v1653
      %v1675 = vadd.f32 %v941, %v1655
      %v1676 = vadd.f32 %v942, %v1658
      %s1677 = scalar_lea.vmem %s190, 16
      %v1678 = vld [vmem:[%s1677] sm:$0xf]
      %v1679 = vld [vmem:[%s1677 + $0x4] sm:$0x1]
      %v1680 = vld [vmem:[%s1677 + $0x8] sm:$0xf]
      %v1681 = vld [vmem:[%s1677 + $0xc] sm:$0x1]
      %v1682 = vld [vmem:[%s1677 + $0x10] sm:$0xf]
      %v1683 = vld [vmem:[%s1677 + $0x14] sm:$0x1]
      %v1684 = vld [vmem:[%s1677 + $0x18] sm:$0xf]
      %v1685 = vld [vmem:[%s1677 + $0x1c] sm:$0x1]
      %v1686 = vld [vmem:[%s1677 + $0x20] sm:$0xf]
      %v1687 = vld [vmem:[%s1677 + $0x24] sm:$0x1]
      %v1688 = vld [vmem:[%s1677 + $0x28] sm:$0xf]
      %v1689 = vld [vmem:[%s1677 + $0x2c] sm:$0x1]
      %v1690 = vld [vmem:[%s1677 + $0x30] sm:$0xf]
      %v1691 = vld [vmem:[%s1677 + $0x34] sm:$0x1]
      %v1692 = vld [vmem:[%s1677 + $0x38] sm:$0xf]
      %v1693 = vld [vmem:[%s1677 + $0x3c] sm:$0x1]
      %v1694 = vld [vmem:[%s1677 + $0x40] sm:$0xf]
      %v1695 = vld [vmem:[%s1677 + $0x44] sm:$0x1]
      %v1696 = vunpack.c.l.bf16 %v1678
      %v1697 = vunpack.c.l.bf16 %v1679
      %v1698 = vunpack.c.l.bf16 %v1680
      %v1699 = vunpack.c.l.bf16 %v1681
      %v1700 = vunpack.c.l.bf16 %v1682
      %v1701 = vunpack.c.l.bf16 %v1683
      %v1702 = vunpack.c.l.bf16 %v1684
      %v1703 = vunpack.c.l.bf16 %v1685
      %v1704 = vunpack.c.l.bf16 %v1686
      %v1705 = vunpack.c.l.bf16 %v1687
      %v1706 = vunpack.c.l.bf16 %v1688
      %v1707 = vunpack.c.l.bf16 %v1689
      %v1708 = vunpack.c.l.bf16 %v1690
      %v1709 = vunpack.c.l.bf16 %v1691
      %v1710 = vunpack.c.l.bf16 %v1692
      %v1711 = vunpack.c.l.bf16 %v1693
      %v1712 = vunpack.c.l.bf16 %v1694
      %v1713 = vunpack.c.l.bf16 %v1695
      %s1714 = scalar_lea.vmem %s185, 8
      %v1715 = vld [vmem:[%s1714] sm:$0x1]
      %v1716 = vunpack.c.l.bf16 %v1715
      %v1717 = vlaneseq
      %v1718 = vshrl.u32 %v1717, 7
      %v1719 = vsub.s32 0, %v1718
      %v1720 = vrot.slane %v1716, %v1719
      %v1721 = vmul.f32 %v1696, %v1720
      %v1722 = vmul.f32 %v1697, %v1720
      %v1723 = vmul.f32 %v1698, %v1720
      %v1724 = vmul.f32 %v1699, %v1720
      %v1725 = vmul.f32 %v1700, %v1720
      %v1726 = vmul.f32 %v1701, %v1720
      %v1727 = vmul.f32 %v1702, %v1720
      %v1728 = vmul.f32 %v1703, %v1720
      %v1729 = vmul.f32 %v1704, %v1720
      %v1730 = vmul.f32 %v1705, %v1720
      %v1731 = vmul.f32 %v1706, %v1720
      %v1732 = vmul.f32 %v1707, %v1720
      %v1733 = vmul.f32 %v1708, %v1720
      %v1734 = vmul.f32 %v1709, %v1720
      %v1735 = vmul.f32 %v1710, %v1720
      %v1736 = vmul.f32 %v1711, %v1720
      %v1737 = vmul.f32 %v1712, %v1720
      %v1738 = vmul.f32 %v1713, %v1720
      %v1739 = vadd.f32 %v1721, 0.0
      %v1740 = vadd.f32 %v1722, 0.0
      %v1741 = vadd.f32 %v1723, 0.0
      %v1742 = vadd.f32 %v1724, 0.0
      %v1743 = vadd.f32 %v1725, 0.0
      %v1744 = vadd.f32 %v1726, 0.0
      %v1745 = vadd.f32 %v1727, 0.0
      %v1746 = vadd.f32 %v1728, 0.0
      %v1747 = vadd.f32 %v1729, 0.0
      %v1748 = vadd.f32 %v1730, 0.0
      %v1749 = vadd.f32 %v1731, 0.0
      %v1750 = vadd.f32 %v1732, 0.0
      %v1751 = vadd.f32 %v1733, 0.0
      %v1752 = vadd.f32 %v1734, 0.0
      %v1753 = vadd.f32 %v1735, 0.0
      %v1754 = vadd.f32 %v1736, 0.0
      %v1755 = vadd.f32 %v1737, 0.0
      %v1756 = vadd.f32 %v1738, 0.0
      %v1757 = vlaneseq
      %v1758 = vshrl.u32 %v1757, 7
      %v1759 = vsub.s32 1, %v1758
      %v1760 = vrot.slane %v1716, %v1759
      %v1761 = vmul.f32 %v1696, %v1760
      %v1762 = vmul.f32 %v1697, %v1760
      %v1763 = vmul.f32 %v1698, %v1760
      %v1764 = vmul.f32 %v1699, %v1760
      %v1765 = vmul.f32 %v1700, %v1760
      %v1766 = vmul.f32 %v1701, %v1760
      %v1767 = vmul.f32 %v1702, %v1760
      %v1768 = vmul.f32 %v1703, %v1760
      %v1769 = vmul.f32 %v1704, %v1760
      %v1770 = vmul.f32 %v1705, %v1760
      %v1771 = vmul.f32 %v1706, %v1760
      %v1772 = vmul.f32 %v1707, %v1760
      %v1773 = vmul.f32 %v1708, %v1760
      %v1774 = vmul.f32 %v1709, %v1760
      %v1775 = vmul.f32 %v1710, %v1760
      %v1776 = vmul.f32 %v1711, %v1760
      %v1777 = vmul.f32 %v1712, %v1760
      %v1778 = vmul.f32 %v1713, %v1760
      %v1797 = vrot.slane %v1761, 1
      %v1798 = vrot.slane %v1762, 1
      %v1799 = vsel %vm323, %v1797, %v1798
      %v1800 = vrot.slane %v1763, 1
      %v1801 = vrot.slane %v1764, 1
      %v1802 = vsel %vm323, %v1800, %v1801
      %v1803 = vrot.slane %v1765, 1
      %v1804 = vrot.slane %v1766, 1
      %v1805 = vsel %vm323, %v1803, %v1804
      %v1806 = vrot.slane %v1767, 1
      %v1807 = vrot.slane %v1768, 1
      %v1808 = vsel %vm323, %v1806, %v1807
      %v1809 = vrot.slane %v1769, 1
      %v1810 = vrot.slane %v1770, 1
      %v1811 = vsel %vm323, %v1809, %v1810
      %v1812 = vrot.slane %v1771, 1
      %v1813 = vrot.slane %v1772, 1
      %v1814 = vsel %vm323, %v1812, %v1813
      %v1815 = vrot.slane %v1773, 1
      %v1816 = vrot.slane %v1774, 1
      %v1817 = vsel %vm323, %v1815, %v1816
      %v1818 = vrot.slane %v1775, 1
      %v1819 = vrot.slane %v1776, 1
      %v1820 = vsel %vm323, %v1818, %v1819
      %v1821 = vrot.slane %v1777, 1
      %v1822 = vrot.slane %v1778, 1
      %v1823 = vsel %vm323, %v1821, %v1822
      %v1842 = vadd.f32 %v1739, %v1799
      %v1843 = vadd.f32 %v1740, %v1798
      %v1844 = vadd.f32 %v1741, %v1802
      %v1845 = vadd.f32 %v1742, %v1801
      %v1846 = vadd.f32 %v1743, %v1805
      %v1847 = vadd.f32 %v1744, %v1804
      %v1848 = vadd.f32 %v1745, %v1808
      %v1849 = vadd.f32 %v1746, %v1807
      %v1850 = vadd.f32 %v1747, %v1811
      %v1851 = vadd.f32 %v1748, %v1810
      %v1852 = vadd.f32 %v1749, %v1814
      %v1853 = vadd.f32 %v1750, %v1813
      %v1854 = vadd.f32 %v1751, %v1817
      %v1855 = vadd.f32 %v1752, %v1816
      %v1856 = vadd.f32 %v1753, %v1820
      %v1857 = vadd.f32 %v1754, %v1819
      %v1858 = vadd.f32 %v1755, %v1823
      %v1859 = vadd.f32 %v1756, %v1822
      %v1860 = vld [vmem:[%s1677] sm:$0xe]
      %v1861 = vld [vmem:[%s1677 + $0x4] sm:$0x3]
      %v1862 = vld [vmem:[%s1677 + $0x8] sm:$0xe]
      %v1863 = vld [vmem:[%s1677 + $0xc] sm:$0x3]
      %v1864 = vld [vmem:[%s1677 + $0x10] sm:$0xe]
      %v1865 = vld [vmem:[%s1677 + $0x14] sm:$0x3]
      %v1866 = vld [vmem:[%s1677 + $0x18] sm:$0xe]
      %v1867 = vld [vmem:[%s1677 + $0x1c] sm:$0x3]
      %v1868 = vld [vmem:[%s1677 + $0x20] sm:$0xe]
      %v1869 = vld [vmem:[%s1677 + $0x24] sm:$0x3]
      %v1870 = vld [vmem:[%s1677 + $0x28] sm:$0xe]
      %v1871 = vld [vmem:[%s1677 + $0x2c] sm:$0x3]
      %v1872 = vld [vmem:[%s1677 + $0x30] sm:$0xe]
      %v1873 = vld [vmem:[%s1677 + $0x34] sm:$0x3]
      %v1874 = vld [vmem:[%s1677 + $0x38] sm:$0xe]
      %v1875 = vld [vmem:[%s1677 + $0x3c] sm:$0x3]
      %v1876 = vld [vmem:[%s1677 + $0x40] sm:$0xe]
      %v1877 = vld [vmem:[%s1677 + $0x44] sm:$0x3]
      %v1878 = vunpack.c.l.bf16 %v1860
      %v1879 = vunpack.c.l.bf16 %v1861
      %v1880 = vunpack.c.l.bf16 %v1862
      %v1881 = vunpack.c.l.bf16 %v1863
      %v1882 = vunpack.c.l.bf16 %v1864
      %v1883 = vunpack.c.l.bf16 %v1865
      %v1884 = vunpack.c.l.bf16 %v1866
      %v1885 = vunpack.c.l.bf16 %v1867
      %v1886 = vunpack.c.l.bf16 %v1868
      %v1887 = vunpack.c.l.bf16 %v1869
      %v1888 = vunpack.c.l.bf16 %v1870
      %v1889 = vunpack.c.l.bf16 %v1871
      %v1890 = vunpack.c.l.bf16 %v1872
      %v1891 = vunpack.c.l.bf16 %v1873
      %v1892 = vunpack.c.l.bf16 %v1874
      %v1893 = vunpack.c.l.bf16 %v1875
      %v1894 = vunpack.c.l.bf16 %v1876
      %v1895 = vunpack.c.l.bf16 %v1877
      %v1896 = vld [vmem:[%s1714] sm:$0x2]
      %v1897 = vunpack.c.l.bf16 %v1896
      %v1898 = vlaneseq
      %v1899 = vshrl.u32 %v1898, 7
      %v1900 = vsub.s32 2, %v1899
      %v1901 = vrot.slane %v1897, %v1900
      %v1902 = vmul.f32 %v1878, %v1901
      %v1903 = vmul.f32 %v1879, %v1901
      %v1904 = vmul.f32 %v1880, %v1901
      %v1905 = vmul.f32 %v1881, %v1901
      %v1906 = vmul.f32 %v1882, %v1901
      %v1907 = vmul.f32 %v1883, %v1901
      %v1908 = vmul.f32 %v1884, %v1901
      %v1909 = vmul.f32 %v1885, %v1901
      %v1910 = vmul.f32 %v1886, %v1901
      %v1911 = vmul.f32 %v1887, %v1901
      %v1912 = vmul.f32 %v1888, %v1901
      %v1913 = vmul.f32 %v1889, %v1901
      %v1914 = vmul.f32 %v1890, %v1901
      %v1915 = vmul.f32 %v1891, %v1901
      %v1916 = vmul.f32 %v1892, %v1901
      %v1917 = vmul.f32 %v1893, %v1901
      %v1918 = vmul.f32 %v1894, %v1901
      %v1919 = vmul.f32 %v1895, %v1901
      %v1938 = vrot.slane %v1902, 2
      %v1939 = vrot.slane %v1903, 2
      %v1940 = vsel %vm465, %v1938, %v1939
      %v1941 = vrot.slane %v1904, 2
      %v1942 = vrot.slane %v1905, 2
      %v1943 = vsel %vm465, %v1941, %v1942
      %v1944 = vrot.slane %v1906, 2
      %v1945 = vrot.slane %v1907, 2
      %v1946 = vsel %vm465, %v1944, %v1945
      %v1947 = vrot.slane %v1908, 2
      %v1948 = vrot.slane %v1909, 2
      %v1949 = vsel %vm465, %v1947, %v1948
      %v1950 = vrot.slane %v1910, 2
      %v1951 = vrot.slane %v1911, 2
      %v1952 = vsel %vm465, %v1950, %v1951
      %v1953 = vrot.slane %v1912, 2
      %v1954 = vrot.slane %v1913, 2
      %v1955 = vsel %vm465, %v1953, %v1954
      %v1956 = vrot.slane %v1914, 2
      %v1957 = vrot.slane %v1915, 2
      %v1958 = vsel %vm465, %v1956, %v1957
      %v1959 = vrot.slane %v1916, 2
      %v1960 = vrot.slane %v1917, 2
      %v1961 = vsel %vm465, %v1959, %v1960
      %v1962 = vrot.slane %v1918, 2
      %v1963 = vrot.slane %v1919, 2
      %v1964 = vsel %vm465, %v1962, %v1963
      %v1983 = vadd.f32 %v1842, %v1940
      %v1984 = vadd.f32 %v1843, %v1939
      %v1985 = vadd.f32 %v1844, %v1943
      %v1986 = vadd.f32 %v1845, %v1942
      %v1987 = vadd.f32 %v1846, %v1946
      %v1988 = vadd.f32 %v1847, %v1945
      %v1989 = vadd.f32 %v1848, %v1949
      %v1990 = vadd.f32 %v1849, %v1948
      %v1991 = vadd.f32 %v1850, %v1952
      %v1992 = vadd.f32 %v1851, %v1951
      %v1993 = vadd.f32 %v1852, %v1955
      %v1994 = vadd.f32 %v1853, %v1954
      %v1995 = vadd.f32 %v1854, %v1958
      %v1996 = vadd.f32 %v1855, %v1957
      %v1997 = vadd.f32 %v1856, %v1961
      %v1998 = vadd.f32 %v1857, %v1960
      %v1999 = vadd.f32 %v1858, %v1964
      %v2000 = vadd.f32 %v1859, %v1963
      %v2001 = vlaneseq
      %v2002 = vshrl.u32 %v2001, 7
      %v2003 = vsub.s32 3, %v2002
      %v2004 = vrot.slane %v1897, %v2003
      %v2005 = vmul.f32 %v1878, %v2004
      %v2006 = vmul.f32 %v1879, %v2004
      %v2007 = vmul.f32 %v1880, %v2004
      %v2008 = vmul.f32 %v1881, %v2004
      %v2009 = vmul.f32 %v1882, %v2004
      %v2010 = vmul.f32 %v1883, %v2004
      %v2011 = vmul.f32 %v1884, %v2004
      %v2012 = vmul.f32 %v1885, %v2004
      %v2013 = vmul.f32 %v1886, %v2004
      %v2014 = vmul.f32 %v1887, %v2004
      %v2015 = vmul.f32 %v1888, %v2004
      %v2016 = vmul.f32 %v1889, %v2004
      %v2017 = vmul.f32 %v1890, %v2004
      %v2018 = vmul.f32 %v1891, %v2004
      %v2019 = vmul.f32 %v1892, %v2004
      %v2020 = vmul.f32 %v1893, %v2004
      %v2021 = vmul.f32 %v1894, %v2004
      %v2022 = vmul.f32 %v1895, %v2004
      %v2041 = vrot.slane %v2005, 3
      %v2042 = vrot.slane %v2006, 3
      %v2043 = vsel %vm569, %v2041, %v2042
      %v2044 = vrot.slane %v2007, 3
      %v2045 = vrot.slane %v2008, 3
      %v2046 = vsel %vm569, %v2044, %v2045
      %v2047 = vrot.slane %v2009, 3
      %v2048 = vrot.slane %v2010, 3
      %v2049 = vsel %vm569, %v2047, %v2048
      %v2050 = vrot.slane %v2011, 3
      %v2051 = vrot.slane %v2012, 3
      %v2052 = vsel %vm569, %v2050, %v2051
      %v2053 = vrot.slane %v2013, 3
      %v2054 = vrot.slane %v2014, 3
      %v2055 = vsel %vm569, %v2053, %v2054
      %v2056 = vrot.slane %v2015, 3
      %v2057 = vrot.slane %v2016, 3
      %v2058 = vsel %vm569, %v2056, %v2057
      %v2059 = vrot.slane %v2017, 3
      %v2060 = vrot.slane %v2018, 3
      %v2061 = vsel %vm569, %v2059, %v2060
      %v2062 = vrot.slane %v2019, 3
      %v2063 = vrot.slane %v2020, 3
      %v2064 = vsel %vm569, %v2062, %v2063
      %v2065 = vrot.slane %v2021, 3
      %v2066 = vrot.slane %v2022, 3
      %v2067 = vsel %vm569, %v2065, %v2066
      %v2086 = vadd.f32 %v1983, %v2043
      %v2087 = vadd.f32 %v1984, %v2042
      %v2088 = vadd.f32 %v1985, %v2046
      %v2089 = vadd.f32 %v1986, %v2045
      %v2090 = vadd.f32 %v1987, %v2049
      %v2091 = vadd.f32 %v1988, %v2048
      %v2092 = vadd.f32 %v1989, %v2052
      %v2093 = vadd.f32 %v1990, %v2051
      %v2094 = vadd.f32 %v1991, %v2055
      %v2095 = vadd.f32 %v1992, %v2054
      %v2096 = vadd.f32 %v1993, %v2058
      %v2097 = vadd.f32 %v1994, %v2057
      %v2098 = vadd.f32 %v1995, %v2061
      %v2099 = vadd.f32 %v1996, %v2060
      %v2100 = vadd.f32 %v1997, %v2064
      %v2101 = vadd.f32 %v1998, %v2063
      %v2102 = vadd.f32 %v1999, %v2067
      %v2103 = vadd.f32 %v2000, %v2066
      %v2104 = vld [vmem:[%s1677] sm:$0xc]
      %v2105 = vld [vmem:[%s1677 + $0x4] sm:$0x7]
      %v2106 = vld [vmem:[%s1677 + $0x8] sm:$0xc]
      %v2107 = vld [vmem:[%s1677 + $0xc] sm:$0x7]
      %v2108 = vld [vmem:[%s1677 + $0x10] sm:$0xc]
      %v2109 = vld [vmem:[%s1677 + $0x14] sm:$0x7]
      %v2110 = vld [vmem:[%s1677 + $0x18] sm:$0xc]
      %v2111 = vld [vmem:[%s1677 + $0x1c] sm:$0x7]
      %v2112 = vld [vmem:[%s1677 + $0x20] sm:$0xc]
      %v2113 = vld [vmem:[%s1677 + $0x24] sm:$0x7]
      %v2114 = vld [vmem:[%s1677 + $0x28] sm:$0xc]
      %v2115 = vld [vmem:[%s1677 + $0x2c] sm:$0x7]
      %v2116 = vld [vmem:[%s1677 + $0x30] sm:$0xc]
      %v2117 = vld [vmem:[%s1677 + $0x34] sm:$0x7]
      %v2118 = vld [vmem:[%s1677 + $0x38] sm:$0xc]
      %v2119 = vld [vmem:[%s1677 + $0x3c] sm:$0x7]
      %v2120 = vld [vmem:[%s1677 + $0x40] sm:$0xc]
      %v2121 = vld [vmem:[%s1677 + $0x44] sm:$0x7]
      %v2122 = vunpack.c.l.bf16 %v2104
      %v2123 = vunpack.c.l.bf16 %v2105
      %v2124 = vunpack.c.l.bf16 %v2106
      %v2125 = vunpack.c.l.bf16 %v2107
      %v2126 = vunpack.c.l.bf16 %v2108
      %v2127 = vunpack.c.l.bf16 %v2109
      %v2128 = vunpack.c.l.bf16 %v2110
      %v2129 = vunpack.c.l.bf16 %v2111
      %v2130 = vunpack.c.l.bf16 %v2112
      %v2131 = vunpack.c.l.bf16 %v2113
      %v2132 = vunpack.c.l.bf16 %v2114
      %v2133 = vunpack.c.l.bf16 %v2115
      %v2134 = vunpack.c.l.bf16 %v2116
      %v2135 = vunpack.c.l.bf16 %v2117
      %v2136 = vunpack.c.l.bf16 %v2118
      %v2137 = vunpack.c.l.bf16 %v2119
      %v2138 = vunpack.c.l.bf16 %v2120
      %v2139 = vunpack.c.l.bf16 %v2121
      %v2140 = vld [vmem:[%s1714] sm:$0x4]
      %v2141 = vunpack.c.l.bf16 %v2140
      %v2142 = vlaneseq
      %v2143 = vshrl.u32 %v2142, 7
      %v2144 = vsub.s32 4, %v2143
      %v2145 = vrot.slane %v2141, %v2144
      %v2146 = vmul.f32 %v2122, %v2145
      %v2147 = vmul.f32 %v2123, %v2145
      %v2148 = vmul.f32 %v2124, %v2145
      %v2149 = vmul.f32 %v2125, %v2145
      %v2150 = vmul.f32 %v2126, %v2145
      %v2151 = vmul.f32 %v2127, %v2145
      %v2152 = vmul.f32 %v2128, %v2145
      %v2153 = vmul.f32 %v2129, %v2145
      %v2154 = vmul.f32 %v2130, %v2145
      %v2155 = vmul.f32 %v2131, %v2145
      %v2156 = vmul.f32 %v2132, %v2145
      %v2157 = vmul.f32 %v2133, %v2145
      %v2158 = vmul.f32 %v2134, %v2145
      %v2159 = vmul.f32 %v2135, %v2145
      %v2160 = vmul.f32 %v2136, %v2145
      %v2161 = vmul.f32 %v2137, %v2145
      %v2162 = vmul.f32 %v2138, %v2145
      %v2163 = vmul.f32 %v2139, %v2145
      %v2182 = vrot.slane %v2146, 4
      %v2183 = vrot.slane %v2147, 4
      %v2184 = vsel %vm711, %v2182, %v2183
      %v2185 = vrot.slane %v2148, 4
      %v2186 = vrot.slane %v2149, 4
      %v2187 = vsel %vm711, %v2185, %v2186
      %v2188 = vrot.slane %v2150, 4
      %v2189 = vrot.slane %v2151, 4
      %v2190 = vsel %vm711, %v2188, %v2189
      %v2191 = vrot.slane %v2152, 4
      %v2192 = vrot.slane %v2153, 4
      %v2193 = vsel %vm711, %v2191, %v2192
      %v2194 = vrot.slane %v2154, 4
      %v2195 = vrot.slane %v2155, 4
      %v2196 = vsel %vm711, %v2194, %v2195
      %v2197 = vrot.slane %v2156, 4
      %v2198 = vrot.slane %v2157, 4
      %v2199 = vsel %vm711, %v2197, %v2198
      %v2200 = vrot.slane %v2158, 4
      %v2201 = vrot.slane %v2159, 4
      %v2202 = vsel %vm711, %v2200, %v2201
      %v2203 = vrot.slane %v2160, 4
      %v2204 = vrot.slane %v2161, 4
      %v2205 = vsel %vm711, %v2203, %v2204
      %v2206 = vrot.slane %v2162, 4
      %v2207 = vrot.slane %v2163, 4
      %v2208 = vsel %vm711, %v2206, %v2207
      %v2227 = vadd.f32 %v2086, %v2184
      %v2228 = vadd.f32 %v2087, %v2183
      %v2229 = vadd.f32 %v2088, %v2187
      %v2230 = vadd.f32 %v2089, %v2186
      %v2231 = vadd.f32 %v2090, %v2190
      %v2232 = vadd.f32 %v2091, %v2189
      %v2233 = vadd.f32 %v2092, %v2193
      %v2234 = vadd.f32 %v2093, %v2192
      %v2235 = vadd.f32 %v2094, %v2196
      %v2236 = vadd.f32 %v2095, %v2195
      %v2237 = vadd.f32 %v2096, %v2199
      %v2238 = vadd.f32 %v2097, %v2198
      %v2239 = vadd.f32 %v2098, %v2202
      %v2240 = vadd.f32 %v2099, %v2201
      %v2241 = vadd.f32 %v2100, %v2205
      %v2242 = vadd.f32 %v2101, %v2204
      %v2243 = vadd.f32 %v2102, %v2208
      %v2244 = vadd.f32 %v2103, %v2207
      %v2245 = vlaneseq
      %v2246 = vshrl.u32 %v2245, 7
      %v2247 = vsub.s32 5, %v2246
      %v2248 = vrot.slane %v2141, %v2247
      %v2249 = vmul.f32 %v2122, %v2248
      %v2250 = vmul.f32 %v2123, %v2248
      %v2251 = vmul.f32 %v2124, %v2248
      %v2252 = vmul.f32 %v2125, %v2248
      %v2253 = vmul.f32 %v2126, %v2248
      %v2254 = vmul.f32 %v2127, %v2248
      %v2255 = vmul.f32 %v2128, %v2248
      %v2256 = vmul.f32 %v2129, %v2248
      %v2257 = vmul.f32 %v2130, %v2248
      %v2258 = vmul.f32 %v2131, %v2248
      %v2259 = vmul.f32 %v2132, %v2248
      %v2260 = vmul.f32 %v2133, %v2248
      %v2261 = vmul.f32 %v2134, %v2248
      %v2262 = vmul.f32 %v2135, %v2248
      %v2263 = vmul.f32 %v2136, %v2248
      %v2264 = vmul.f32 %v2137, %v2248
      %v2265 = vmul.f32 %v2138, %v2248
      %v2266 = vmul.f32 %v2139, %v2248
      %v2285 = vrot.slane %v2249, 5
      %v2286 = vrot.slane %v2250, 5
      %v2287 = vsel %vm815, %v2285, %v2286
      %v2288 = vrot.slane %v2251, 5
      %v2289 = vrot.slane %v2252, 5
      %v2290 = vsel %vm815, %v2288, %v2289
      %v2291 = vrot.slane %v2253, 5
      %v2292 = vrot.slane %v2254, 5
      %v2293 = vsel %vm815, %v2291, %v2292
      %v2294 = vrot.slane %v2255, 5
      %v2295 = vrot.slane %v2256, 5
      %v2296 = vsel %vm815, %v2294, %v2295
      %v2297 = vrot.slane %v2257, 5
      %v2298 = vrot.slane %v2258, 5
      %v2299 = vsel %vm815, %v2297, %v2298
      %v2300 = vrot.slane %v2259, 5
      %v2301 = vrot.slane %v2260, 5
      %v2302 = vsel %vm815, %v2300, %v2301
      %v2303 = vrot.slane %v2261, 5
      %v2304 = vrot.slane %v2262, 5
      %v2305 = vsel %vm815, %v2303, %v2304
      %v2306 = vrot.slane %v2263, 5
      %v2307 = vrot.slane %v2264, 5
      %v2308 = vsel %vm815, %v2306, %v2307
      %v2309 = vrot.slane %v2265, 5
      %v2310 = vrot.slane %v2266, 5
      %v2311 = vsel %vm815, %v2309, %v2310
      %v2330 = vadd.f32 %v2227, %v2287
      %v2331 = vadd.f32 %v2228, %v2286
      %v2332 = vadd.f32 %v2229, %v2290
      %v2333 = vadd.f32 %v2230, %v2289
      %v2334 = vadd.f32 %v2231, %v2293
      %v2335 = vadd.f32 %v2232, %v2292
      %v2336 = vadd.f32 %v2233, %v2296
      %v2337 = vadd.f32 %v2234, %v2295
      %v2338 = vadd.f32 %v2235, %v2299
      %v2339 = vadd.f32 %v2236, %v2298
      %v2340 = vadd.f32 %v2237, %v2302
      %v2341 = vadd.f32 %v2238, %v2301
      %v2342 = vadd.f32 %v2239, %v2305
      %v2343 = vadd.f32 %v2240, %v2304
      %v2344 = vadd.f32 %v2241, %v2308
      %v2345 = vadd.f32 %v2242, %v2307
      %v2346 = vadd.f32 %v2243, %v2311
      %v2347 = vadd.f32 %v2244, %v2310
      %2348 = vadd.xlane.f32.xlu0 %v2330
      %v2349 = vpop.xlane.xlu0 %2348
      %v2350 = vsel %vm881, %v2331, 0.0
      %2351 = vadd.xlane.f32.xlu0 %v2350
      %v2352 = vpop.xlane.xlu0 %2351
      %2353 = vadd.xlane.f32.xlu0 %v2332
      %v2354 = vpop.xlane.xlu0 %2353
      %v2355 = vsel %vm881, %v2333, 0.0
      %2356 = vadd.xlane.f32.xlu0 %v2355
      %v2357 = vpop.xlane.xlu0 %2356
      %2358 = vadd.xlane.f32.xlu0 %v2334
      %v2359 = vpop.xlane.xlu0 %2358
      %v2360 = vsel %vm881, %v2335, 0.0
      %2361 = vadd.xlane.f32.xlu0 %v2360
      %v2362 = vpop.xlane.xlu0 %2361
      %2363 = vadd.xlane.f32.xlu0 %v2336
      %v2364 = vpop.xlane.xlu0 %2363
      %v2365 = vsel %vm881, %v2337, 0.0
      %2366 = vadd.xlane.f32.xlu0 %v2365
      %v2367 = vpop.xlane.xlu0 %2366
      %2368 = vadd.xlane.f32.xlu0 %v2338
      %v2369 = vpop.xlane.xlu0 %2368
      %v2370 = vsel %vm881, %v2339, 0.0
      %2371 = vadd.xlane.f32.xlu0 %v2370
      %v2372 = vpop.xlane.xlu0 %2371
      %2373 = vadd.xlane.f32.xlu0 %v2340
      %v2374 = vpop.xlane.xlu0 %2373
      %v2375 = vsel %vm881, %v2341, 0.0
      %2376 = vadd.xlane.f32.xlu0 %v2375
      %v2377 = vpop.xlane.xlu0 %2376
      %2378 = vadd.xlane.f32.xlu0 %v2342
      %v2379 = vpop.xlane.xlu0 %2378
      %v2380 = vsel %vm881, %v2343, 0.0
      %2381 = vadd.xlane.f32.xlu0 %v2380
      %v2382 = vpop.xlane.xlu0 %2381
      %2383 = vadd.xlane.f32.xlu0 %v2344
      %v2384 = vpop.xlane.xlu0 %2383
      %v2385 = vsel %vm881, %v2345, 0.0
      %2386 = vadd.xlane.f32.xlu0 %v2385
      %v2387 = vpop.xlane.xlu0 %2386
      %2388 = vadd.xlane.f32.xlu0 %v2346
      %v2389 = vpop.xlane.xlu0 %2388
      %v2390 = vsel %vm881, %v2347, 0.0
      %2391 = vadd.xlane.f32.xlu0 %v2390
      %v2392 = vpop.xlane.xlu0 %2391
      %v2393 = vadd.f32 %v1659, %v2349
      %v2394 = vadd.f32 %v1660, %v2352
      %v2395 = vadd.f32 %v1661, %v2354
      %v2396 = vadd.f32 %v1662, %v2357
      %v2397 = vadd.f32 %v1663, %v2359
      %v2398 = vadd.f32 %v1664, %v2362
      %v2399 = vadd.f32 %v1665, %v2364
      %v2400 = vadd.f32 %v1666, %v2367
      %v2401 = vadd.f32 %v1667, %v2369
      %v2402 = vadd.f32 %v1668, %v2372
      %v2403 = vadd.f32 %v1669, %v2374
      %v2404 = vadd.f32 %v1670, %v2377
      %v2405 = vadd.f32 %v1671, %v2379
      %v2406 = vadd.f32 %v1672, %v2382
      %v2407 = vadd.f32 %v1673, %v2384
      %v2408 = vadd.f32 %v1674, %v2387
      %v2409 = vadd.f32 %v1675, %v2389
      %v2410 = vadd.f32 %v1676, %v2392
      %s2411 = scalar_lea.vmem %s190, 24
      %v2412 = vld [vmem:[%s2411] sm:$0xf]
      %v2413 = vld [vmem:[%s2411 + $0x4] sm:$0x1]
      %v2414 = vld [vmem:[%s2411 + $0x8] sm:$0xf]
      %v2415 = vld [vmem:[%s2411 + $0xc] sm:$0x1]
      %v2416 = vld [vmem:[%s2411 + $0x10] sm:$0xf]
      %v2417 = vld [vmem:[%s2411 + $0x14] sm:$0x1]
      %v2418 = vld [vmem:[%s2411 + $0x18] sm:$0xf]
      %v2419 = vld [vmem:[%s2411 + $0x1c] sm:$0x1]
      %v2420 = vld [vmem:[%s2411 + $0x20] sm:$0xf]
      %v2421 = vld [vmem:[%s2411 + $0x24] sm:$0x1]
      %v2422 = vld [vmem:[%s2411 + $0x28] sm:$0xf]
      %v2423 = vld [vmem:[%s2411 + $0x2c] sm:$0x1]
      %v2424 = vld [vmem:[%s2411 + $0x30] sm:$0xf]
      %v2425 = vld [vmem:[%s2411 + $0x34] sm:$0x1]
      %v2426 = vld [vmem:[%s2411 + $0x38] sm:$0xf]
      %v2427 = vld [vmem:[%s2411 + $0x3c] sm:$0x1]
      %v2428 = vld [vmem:[%s2411 + $0x40] sm:$0xf]
      %v2429 = vld [vmem:[%s2411 + $0x44] sm:$0x1]
      %v2430 = vunpack.c.l.bf16 %v2412
      %v2431 = vunpack.c.l.bf16 %v2413
      %v2432 = vunpack.c.l.bf16 %v2414
      %v2433 = vunpack.c.l.bf16 %v2415
      %v2434 = vunpack.c.l.bf16 %v2416
      %v2435 = vunpack.c.l.bf16 %v2417
      %v2436 = vunpack.c.l.bf16 %v2418
      %v2437 = vunpack.c.l.bf16 %v2419
      %v2438 = vunpack.c.l.bf16 %v2420
      %v2439 = vunpack.c.l.bf16 %v2421
      %v2440 = vunpack.c.l.bf16 %v2422
      %v2441 = vunpack.c.l.bf16 %v2423
      %v2442 = vunpack.c.l.bf16 %v2424
      %v2443 = vunpack.c.l.bf16 %v2425
      %v2444 = vunpack.c.l.bf16 %v2426
      %v2445 = vunpack.c.l.bf16 %v2427
      %v2446 = vunpack.c.l.bf16 %v2428
      %v2447 = vunpack.c.l.bf16 %v2429
      %s2448 = scalar_lea.vmem %s185, 12
      %v2449 = vld [vmem:[%s2448] sm:$0x1]
      %v2450 = vunpack.c.l.bf16 %v2449
      %v2451 = vlaneseq
      %v2452 = vshrl.u32 %v2451, 7
      %v2453 = vsub.s32 0, %v2452
      %v2454 = vrot.slane %v2450, %v2453
      %v2455 = vmul.f32 %v2430, %v2454
      %v2456 = vmul.f32 %v2431, %v2454
      %v2457 = vmul.f32 %v2432, %v2454
      %v2458 = vmul.f32 %v2433, %v2454
      %v2459 = vmul.f32 %v2434, %v2454
      %v2460 = vmul.f32 %v2435, %v2454
      %v2461 = vmul.f32 %v2436, %v2454
      %v2462 = vmul.f32 %v2437, %v2454
      %v2463 = vmul.f32 %v2438, %v2454
      %v2464 = vmul.f32 %v2439, %v2454
      %v2465 = vmul.f32 %v2440, %v2454
      %v2466 = vmul.f32 %v2441, %v2454
      %v2467 = vmul.f32 %v2442, %v2454
      %v2468 = vmul.f32 %v2443, %v2454
      %v2469 = vmul.f32 %v2444, %v2454
      %v2470 = vmul.f32 %v2445, %v2454
      %v2471 = vmul.f32 %v2446, %v2454
      %v2472 = vmul.f32 %v2447, %v2454
      %v2473 = vadd.f32 %v2455, 0.0
      %v2474 = vadd.f32 %v2456, 0.0
      %v2475 = vadd.f32 %v2457, 0.0
      %v2476 = vadd.f32 %v2458, 0.0
      %v2477 = vadd.f32 %v2459, 0.0
      %v2478 = vadd.f32 %v2460, 0.0
      %v2479 = vadd.f32 %v2461, 0.0
      %v2480 = vadd.f32 %v2462, 0.0
      %v2481 = vadd.f32 %v2463, 0.0
      %v2482 = vadd.f32 %v2464, 0.0
      %v2483 = vadd.f32 %v2465, 0.0
      %v2484 = vadd.f32 %v2466, 0.0
      %v2485 = vadd.f32 %v2467, 0.0
      %v2486 = vadd.f32 %v2468, 0.0
      %v2487 = vadd.f32 %v2469, 0.0
      %v2488 = vadd.f32 %v2470, 0.0
      %v2489 = vadd.f32 %v2471, 0.0
      %v2490 = vadd.f32 %v2472, 0.0
      %v2491 = vlaneseq
      %v2492 = vshrl.u32 %v2491, 7
      %v2493 = vsub.s32 1, %v2492
      %v2494 = vrot.slane %v2450, %v2493
      %v2495 = vmul.f32 %v2430, %v2494
      %v2496 = vmul.f32 %v2431, %v2494
      %v2497 = vmul.f32 %v2432, %v2494
      %v2498 = vmul.f32 %v2433, %v2494
      %v2499 = vmul.f32 %v2434, %v2494
      %v2500 = vmul.f32 %v2435, %v2494
      %v2501 = vmul.f32 %v2436, %v2494
      %v2502 = vmul.f32 %v2437, %v2494
      %v2503 = vmul.f32 %v2438, %v2494
      %v2504 = vmul.f32 %v2439, %v2494
      %v2505 = vmul.f32 %v2440, %v2494
      %v2506 = vmul.f32 %v2441, %v2494
      %v2507 = vmul.f32 %v2442, %v2494
      %v2508 = vmul.f32 %v2443, %v2494
      %v2509 = vmul.f32 %v2444, %v2494
      %v2510 = vmul.f32 %v2445, %v2494
      %v2511 = vmul.f32 %v2446, %v2494
      %v2512 = vmul.f32 %v2447, %v2494
      %v2531 = vrot.slane %v2495, 1
      %v2532 = vrot.slane %v2496, 1
      %v2533 = vsel %vm323, %v2531, %v2532
      %v2534 = vrot.slane %v2497, 1
      %v2535 = vrot.slane %v2498, 1
      %v2536 = vsel %vm323, %v2534, %v2535
      %v2537 = vrot.slane %v2499, 1
      %v2538 = vrot.slane %v2500, 1
      %v2539 = vsel %vm323, %v2537, %v2538
      %v2540 = vrot.slane %v2501, 1
      %v2541 = vrot.slane %v2502, 1
      %v2542 = vsel %vm323, %v2540, %v2541
      %v2543 = vrot.slane %v2503, 1
      %v2544 = vrot.slane %v2504, 1
      %v2545 = vsel %vm323, %v2543, %v2544
      %v2546 = vrot.slane %v2505, 1
      %v2547 = vrot.slane %v2506, 1
      %v2548 = vsel %vm323, %v2546, %v2547
      %v2549 = vrot.slane %v2507, 1
      %v2550 = vrot.slane %v2508, 1
      %v2551 = vsel %vm323, %v2549, %v2550
      %v2552 = vrot.slane %v2509, 1
      %v2553 = vrot.slane %v2510, 1
      %v2554 = vsel %vm323, %v2552, %v2553
      %v2555 = vrot.slane %v2511, 1
      %v2556 = vrot.slane %v2512, 1
      %v2557 = vsel %vm323, %v2555, %v2556
      %v2576 = vadd.f32 %v2473, %v2533
      %v2577 = vadd.f32 %v2474, %v2532
      %v2578 = vadd.f32 %v2475, %v2536
      %v2579 = vadd.f32 %v2476, %v2535
      %v2580 = vadd.f32 %v2477, %v2539
      %v2581 = vadd.f32 %v2478, %v2538
      %v2582 = vadd.f32 %v2479, %v2542
      %v2583 = vadd.f32 %v2480, %v2541
      %v2584 = vadd.f32 %v2481, %v2545
      %v2585 = vadd.f32 %v2482, %v2544
      %v2586 = vadd.f32 %v2483, %v2548
      %v2587 = vadd.f32 %v2484, %v2547
      %v2588 = vadd.f32 %v2485, %v2551
      %v2589 = vadd.f32 %v2486, %v2550
      %v2590 = vadd.f32 %v2487, %v2554
      %v2591 = vadd.f32 %v2488, %v2553
      %v2592 = vadd.f32 %v2489, %v2557
      %v2593 = vadd.f32 %v2490, %v2556
      %v2594 = vld [vmem:[%s2411] sm:$0xe]
      %v2595 = vld [vmem:[%s2411 + $0x4] sm:$0x3]
      %v2596 = vld [vmem:[%s2411 + $0x8] sm:$0xe]
      %v2597 = vld [vmem:[%s2411 + $0xc] sm:$0x3]
      %v2598 = vld [vmem:[%s2411 + $0x10] sm:$0xe]
      %v2599 = vld [vmem:[%s2411 + $0x14] sm:$0x3]
      %v2600 = vld [vmem:[%s2411 + $0x18] sm:$0xe]
      %v2601 = vld [vmem:[%s2411 + $0x1c] sm:$0x3]
      %v2602 = vld [vmem:[%s2411 + $0x20] sm:$0xe]
      %v2603 = vld [vmem:[%s2411 + $0x24] sm:$0x3]
      %v2604 = vld [vmem:[%s2411 + $0x28] sm:$0xe]
      %v2605 = vld [vmem:[%s2411 + $0x2c] sm:$0x3]
      %v2606 = vld [vmem:[%s2411 + $0x30] sm:$0xe]
      %v2607 = vld [vmem:[%s2411 + $0x34] sm:$0x3]
      %v2608 = vld [vmem:[%s2411 + $0x38] sm:$0xe]
      %v2609 = vld [vmem:[%s2411 + $0x3c] sm:$0x3]
      %v2610 = vld [vmem:[%s2411 + $0x40] sm:$0xe]
      %v2611 = vld [vmem:[%s2411 + $0x44] sm:$0x3]
      %v2612 = vunpack.c.l.bf16 %v2594
      %v2613 = vunpack.c.l.bf16 %v2595
      %v2614 = vunpack.c.l.bf16 %v2596
      %v2615 = vunpack.c.l.bf16 %v2597
      %v2616 = vunpack.c.l.bf16 %v2598
      %v2617 = vunpack.c.l.bf16 %v2599
      %v2618 = vunpack.c.l.bf16 %v2600
      %v2619 = vunpack.c.l.bf16 %v2601
      %v2620 = vunpack.c.l.bf16 %v2602
      %v2621 = vunpack.c.l.bf16 %v2603
      %v2622 = vunpack.c.l.bf16 %v2604
      %v2623 = vunpack.c.l.bf16 %v2605
      %v2624 = vunpack.c.l.bf16 %v2606
      %v2625 = vunpack.c.l.bf16 %v2607
      %v2626 = vunpack.c.l.bf16 %v2608
      %v2627 = vunpack.c.l.bf16 %v2609
      %v2628 = vunpack.c.l.bf16 %v2610
      %v2629 = vunpack.c.l.bf16 %v2611
      %v2630 = vld [vmem:[%s2448] sm:$0x2]
      %v2631 = vunpack.c.l.bf16 %v2630
      %v2632 = vlaneseq
      %v2633 = vshrl.u32 %v2632, 7
      %v2634 = vsub.s32 2, %v2633
      %v2635 = vrot.slane %v2631, %v2634
      %v2636 = vmul.f32 %v2612, %v2635
      %v2637 = vmul.f32 %v2613, %v2635
      %v2638 = vmul.f32 %v2614, %v2635
      %v2639 = vmul.f32 %v2615, %v2635
      %v2640 = vmul.f32 %v2616, %v2635
      %v2641 = vmul.f32 %v2617, %v2635
      %v2642 = vmul.f32 %v2618, %v2635
      %v2643 = vmul.f32 %v2619, %v2635
      %v2644 = vmul.f32 %v2620, %v2635
      %v2645 = vmul.f32 %v2621, %v2635
      %v2646 = vmul.f32 %v2622, %v2635
      %v2647 = vmul.f32 %v2623, %v2635
      %v2648 = vmul.f32 %v2624, %v2635
      %v2649 = vmul.f32 %v2625, %v2635
      %v2650 = vmul.f32 %v2626, %v2635
      %v2651 = vmul.f32 %v2627, %v2635
      %v2652 = vmul.f32 %v2628, %v2635
      %v2653 = vmul.f32 %v2629, %v2635
      %v2672 = vrot.slane %v2636, 2
      %v2673 = vrot.slane %v2637, 2
      %v2674 = vsel %vm465, %v2672, %v2673
      %v2675 = vrot.slane %v2638, 2
      %v2676 = vrot.slane %v2639, 2
      %v2677 = vsel %vm465, %v2675, %v2676
      %v2678 = vrot.slane %v2640, 2
      %v2679 = vrot.slane %v2641, 2
      %v2680 = vsel %vm465, %v2678, %v2679
      %v2681 = vrot.slane %v2642, 2
      %v2682 = vrot.slane %v2643, 2
      %v2683 = vsel %vm465, %v2681, %v2682
      %v2684 = vrot.slane %v2644, 2
      %v2685 = vrot.slane %v2645, 2
      %v2686 = vsel %vm465, %v2684, %v2685
      %v2687 = vrot.slane %v2646, 2
      %v2688 = vrot.slane %v2647, 2
      %v2689 = vsel %vm465, %v2687, %v2688
      %v2690 = vrot.slane %v2648, 2
      %v2691 = vrot.slane %v2649, 2
      %v2692 = vsel %vm465, %v2690, %v2691
      %v2693 = vrot.slane %v2650, 2
      %v2694 = vrot.slane %v2651, 2
      %v2695 = vsel %vm465, %v2693, %v2694
      %v2696 = vrot.slane %v2652, 2
      %v2697 = vrot.slane %v2653, 2
      %v2698 = vsel %vm465, %v2696, %v2697
      %v2717 = vadd.f32 %v2576, %v2674
      %v2718 = vadd.f32 %v2577, %v2673
      %v2719 = vadd.f32 %v2578, %v2677
      %v2720 = vadd.f32 %v2579, %v2676
      %v2721 = vadd.f32 %v2580, %v2680
      %v2722 = vadd.f32 %v2581, %v2679
      %v2723 = vadd.f32 %v2582, %v2683
      %v2724 = vadd.f32 %v2583, %v2682
      %v2725 = vadd.f32 %v2584, %v2686
      %v2726 = vadd.f32 %v2585, %v2685
      %v2727 = vadd.f32 %v2586, %v2689
      %v2728 = vadd.f32 %v2587, %v2688
      %v2729 = vadd.f32 %v2588, %v2692
      %v2730 = vadd.f32 %v2589, %v2691
      %v2731 = vadd.f32 %v2590, %v2695
      %v2732 = vadd.f32 %v2591, %v2694
      %v2733 = vadd.f32 %v2592, %v2698
      %v2734 = vadd.f32 %v2593, %v2697
      %v2735 = vlaneseq
      %v2736 = vshrl.u32 %v2735, 7
      %v2737 = vsub.s32 3, %v2736
      %v2738 = vrot.slane %v2631, %v2737
      %v2739 = vmul.f32 %v2612, %v2738
      %v2740 = vmul.f32 %v2613, %v2738
      %v2741 = vmul.f32 %v2614, %v2738
      %v2742 = vmul.f32 %v2615, %v2738
      %v2743 = vmul.f32 %v2616, %v2738
      %v2744 = vmul.f32 %v2617, %v2738
      %v2745 = vmul.f32 %v2618, %v2738
      %v2746 = vmul.f32 %v2619, %v2738
      %v2747 = vmul.f32 %v2620, %v2738
      %v2748 = vmul.f32 %v2621, %v2738
      %v2749 = vmul.f32 %v2622, %v2738
      %v2750 = vmul.f32 %v2623, %v2738
      %v2751 = vmul.f32 %v2624, %v2738
      %v2752 = vmul.f32 %v2625, %v2738
      %v2753 = vmul.f32 %v2626, %v2738
      %v2754 = vmul.f32 %v2627, %v2738
      %v2755 = vmul.f32 %v2628, %v2738
      %v2756 = vmul.f32 %v2629, %v2738
      %v2775 = vrot.slane %v2739, 3
      %v2776 = vrot.slane %v2740, 3
      %v2777 = vsel %vm569, %v2775, %v2776
      %v2778 = vrot.slane %v2741, 3
      %v2779 = vrot.slane %v2742, 3
      %v2780 = vsel %vm569, %v2778, %v2779
      %v2781 = vrot.slane %v2743, 3
      %v2782 = vrot.slane %v2744, 3
      %v2783 = vsel %vm569, %v2781, %v2782
      %v2784 = vrot.slane %v2745, 3
      %v2785 = vrot.slane %v2746, 3
      %v2786 = vsel %vm569, %v2784, %v2785
      %v2787 = vrot.slane %v2747, 3
      %v2788 = vrot.slane %v2748, 3
      %v2789 = vsel %vm569, %v2787, %v2788
      %v2790 = vrot.slane %v2749, 3
      %v2791 = vrot.slane %v2750, 3
      %v2792 = vsel %vm569, %v2790, %v2791
      %v2793 = vrot.slane %v2751, 3
      %v2794 = vrot.slane %v2752, 3
      %v2795 = vsel %vm569, %v2793, %v2794
      %v2796 = vrot.slane %v2753, 3
      %v2797 = vrot.slane %v2754, 3
      %v2798 = vsel %vm569, %v2796, %v2797
      %v2799 = vrot.slane %v2755, 3
      %v2800 = vrot.slane %v2756, 3
      %v2801 = vsel %vm569, %v2799, %v2800
      %v2820 = vadd.f32 %v2717, %v2777
      %v2821 = vadd.f32 %v2718, %v2776
      %v2822 = vadd.f32 %v2719, %v2780
      %v2823 = vadd.f32 %v2720, %v2779
      %v2824 = vadd.f32 %v2721, %v2783
      %v2825 = vadd.f32 %v2722, %v2782
      %v2826 = vadd.f32 %v2723, %v2786
      %v2827 = vadd.f32 %v2724, %v2785
      %v2828 = vadd.f32 %v2725, %v2789
      %v2829 = vadd.f32 %v2726, %v2788
      %v2830 = vadd.f32 %v2727, %v2792
      %v2831 = vadd.f32 %v2728, %v2791
      %v2832 = vadd.f32 %v2729, %v2795
      %v2833 = vadd.f32 %v2730, %v2794
      %v2834 = vadd.f32 %v2731, %v2798
      %v2835 = vadd.f32 %v2732, %v2797
      %v2836 = vadd.f32 %v2733, %v2801
      %v2837 = vadd.f32 %v2734, %v2800
      %v2838 = vld [vmem:[%s2411] sm:$0xc]
      %v2839 = vld [vmem:[%s2411 + $0x4] sm:$0x7]
      %v2840 = vld [vmem:[%s2411 + $0x8] sm:$0xc]
      %v2841 = vld [vmem:[%s2411 + $0xc] sm:$0x7]
      %v2842 = vld [vmem:[%s2411 + $0x10] sm:$0xc]
      %v2843 = vld [vmem:[%s2411 + $0x14] sm:$0x7]
      %v2844 = vld [vmem:[%s2411 + $0x18] sm:$0xc]
      %v2845 = vld [vmem:[%s2411 + $0x1c] sm:$0x7]
      %v2846 = vld [vmem:[%s2411 + $0x20] sm:$0xc]
      %v2847 = vld [vmem:[%s2411 + $0x24] sm:$0x7]
      %v2848 = vld [vmem:[%s2411 + $0x28] sm:$0xc]
      %v2849 = vld [vmem:[%s2411 + $0x2c] sm:$0x7]
      %v2850 = vld [vmem:[%s2411 + $0x30] sm:$0xc]
      %v2851 = vld [vmem:[%s2411 + $0x34] sm:$0x7]
      %v2852 = vld [vmem:[%s2411 + $0x38] sm:$0xc]
      %v2853 = vld [vmem:[%s2411 + $0x3c] sm:$0x7]
      %v2854 = vld [vmem:[%s2411 + $0x40] sm:$0xc]
      %v2855 = vld [vmem:[%s2411 + $0x44] sm:$0x7]
      %v2856 = vunpack.c.l.bf16 %v2838
      %v2857 = vunpack.c.l.bf16 %v2839
      %v2858 = vunpack.c.l.bf16 %v2840
      %v2859 = vunpack.c.l.bf16 %v2841
      %v2860 = vunpack.c.l.bf16 %v2842
      %v2861 = vunpack.c.l.bf16 %v2843
      %v2862 = vunpack.c.l.bf16 %v2844
      %v2863 = vunpack.c.l.bf16 %v2845
      %v2864 = vunpack.c.l.bf16 %v2846
      %v2865 = vunpack.c.l.bf16 %v2847
      %v2866 = vunpack.c.l.bf16 %v2848
      %v2867 = vunpack.c.l.bf16 %v2849
      %v2868 = vunpack.c.l.bf16 %v2850
      %v2869 = vunpack.c.l.bf16 %v2851
      %v2870 = vunpack.c.l.bf16 %v2852
      %v2871 = vunpack.c.l.bf16 %v2853
      %v2872 = vunpack.c.l.bf16 %v2854
      %v2873 = vunpack.c.l.bf16 %v2855
      %v2874 = vld [vmem:[%s2448] sm:$0x4]
      %v2875 = vunpack.c.l.bf16 %v2874
      %v2876 = vlaneseq
      %v2877 = vshrl.u32 %v2876, 7
      %v2878 = vsub.s32 4, %v2877
      %v2879 = vrot.slane %v2875, %v2878
      %v2880 = vmul.f32 %v2856, %v2879
      %v2881 = vmul.f32 %v2857, %v2879
      %v2882 = vmul.f32 %v2858, %v2879
      %v2883 = vmul.f32 %v2859, %v2879
      %v2884 = vmul.f32 %v2860, %v2879
      %v2885 = vmul.f32 %v2861, %v2879
      %v2886 = vmul.f32 %v2862, %v2879
      %v2887 = vmul.f32 %v2863, %v2879
      %v2888 = vmul.f32 %v2864, %v2879
      %v2889 = vmul.f32 %v2865, %v2879
      %v2890 = vmul.f32 %v2866, %v2879
      %v2891 = vmul.f32 %v2867, %v2879
      %v2892 = vmul.f32 %v2868, %v2879
      %v2893 = vmul.f32 %v2869, %v2879
      %v2894 = vmul.f32 %v2870, %v2879
      %v2895 = vmul.f32 %v2871, %v2879
      %v2896 = vmul.f32 %v2872, %v2879
      %v2897 = vmul.f32 %v2873, %v2879
      %v2916 = vrot.slane %v2880, 4
      %v2917 = vrot.slane %v2881, 4
      %v2918 = vsel %vm711, %v2916, %v2917
      %v2919 = vrot.slane %v2882, 4
      %v2920 = vrot.slane %v2883, 4
      %v2921 = vsel %vm711, %v2919, %v2920
      %v2922 = vrot.slane %v2884, 4
      %v2923 = vrot.slane %v2885, 4
      %v2924 = vsel %vm711, %v2922, %v2923
      %v2925 = vrot.slane %v2886, 4
      %v2926 = vrot.slane %v2887, 4
      %v2927 = vsel %vm711, %v2925, %v2926
      %v2928 = vrot.slane %v2888, 4
      %v2929 = vrot.slane %v2889, 4
      %v2930 = vsel %vm711, %v2928, %v2929
      %v2931 = vrot.slane %v2890, 4
      %v2932 = vrot.slane %v2891, 4
      %v2933 = vsel %vm711, %v2931, %v2932
      %v2934 = vrot.slane %v2892, 4
      %v2935 = vrot.slane %v2893, 4
      %v2936 = vsel %vm711, %v2934, %v2935
      %v2937 = vrot.slane %v2894, 4
      %v2938 = vrot.slane %v2895, 4
      %v2939 = vsel %vm711, %v2937, %v2938
      %v2940 = vrot.slane %v2896, 4
      %v2941 = vrot.slane %v2897, 4
      %v2942 = vsel %vm711, %v2940, %v2941
      %v2961 = vadd.f32 %v2820, %v2918
      %v2962 = vadd.f32 %v2821, %v2917
      %v2963 = vadd.f32 %v2822, %v2921
      %v2964 = vadd.f32 %v2823, %v2920
      %v2965 = vadd.f32 %v2824, %v2924
      %v2966 = vadd.f32 %v2825, %v2923
      %v2967 = vadd.f32 %v2826, %v2927
      %v2968 = vadd.f32 %v2827, %v2926
      %v2969 = vadd.f32 %v2828, %v2930
      %v2970 = vadd.f32 %v2829, %v2929
      %v2971 = vadd.f32 %v2830, %v2933
      %v2972 = vadd.f32 %v2831, %v2932
      %v2973 = vadd.f32 %v2832, %v2936
      %v2974 = vadd.f32 %v2833, %v2935
      %v2975 = vadd.f32 %v2834, %v2939
      %v2976 = vadd.f32 %v2835, %v2938
      %v2977 = vadd.f32 %v2836, %v2942
      %v2978 = vadd.f32 %v2837, %v2941
      %v2979 = vlaneseq
      %v2980 = vshrl.u32 %v2979, 7
      %v2981 = vsub.s32 5, %v2980
      %v2982 = vrot.slane %v2875, %v2981
      %v2983 = vmul.f32 %v2856, %v2982
      %v2984 = vmul.f32 %v2857, %v2982
      %v2985 = vmul.f32 %v2858, %v2982
      %v2986 = vmul.f32 %v2859, %v2982
      %v2987 = vmul.f32 %v2860, %v2982
      %v2988 = vmul.f32 %v2861, %v2982
      %v2989 = vmul.f32 %v2862, %v2982
      %v2990 = vmul.f32 %v2863, %v2982
      %v2991 = vmul.f32 %v2864, %v2982
      %v2992 = vmul.f32 %v2865, %v2982
      %v2993 = vmul.f32 %v2866, %v2982
      %v2994 = vmul.f32 %v2867, %v2982
      %v2995 = vmul.f32 %v2868, %v2982
      %v2996 = vmul.f32 %v2869, %v2982
      %v2997 = vmul.f32 %v2870, %v2982
      %v2998 = vmul.f32 %v2871, %v2982
      %v2999 = vmul.f32 %v2872, %v2982
      %v3000 = vmul.f32 %v2873, %v2982
      %v3019 = vrot.slane %v2983, 5
      %v3020 = vrot.slane %v2984, 5
      %v3021 = vsel %vm815, %v3019, %v3020
      %v3022 = vrot.slane %v2985, 5
      %v3023 = vrot.slane %v2986, 5
      %v3024 = vsel %vm815, %v3022, %v3023
      %v3025 = vrot.slane %v2987, 5
      %v3026 = vrot.slane %v2988, 5
      %v3027 = vsel %vm815, %v3025, %v3026
      %v3028 = vrot.slane %v2989, 5
      %v3029 = vrot.slane %v2990, 5
      %v3030 = vsel %vm815, %v3028, %v3029
      %v3031 = vrot.slane %v2991, 5
      %v3032 = vrot.slane %v2992, 5
      %v3033 = vsel %vm815, %v3031, %v3032
      %v3034 = vrot.slane %v2993, 5
      %v3035 = vrot.slane %v2994, 5
      %v3036 = vsel %vm815, %v3034, %v3035
      %v3037 = vrot.slane %v2995, 5
      %v3038 = vrot.slane %v2996, 5
      %v3039 = vsel %vm815, %v3037, %v3038
      %v3040 = vrot.slane %v2997, 5
      %v3041 = vrot.slane %v2998, 5
      %v3042 = vsel %vm815, %v3040, %v3041
      %v3043 = vrot.slane %v2999, 5
      %v3044 = vrot.slane %v3000, 5
      %v3045 = vsel %vm815, %v3043, %v3044
      %v3064 = vadd.f32 %v2961, %v3021
      %v3065 = vadd.f32 %v2962, %v3020
      %v3066 = vadd.f32 %v2963, %v3024
      %v3067 = vadd.f32 %v2964, %v3023
      %v3068 = vadd.f32 %v2965, %v3027
      %v3069 = vadd.f32 %v2966, %v3026
      %v3070 = vadd.f32 %v2967, %v3030
      %v3071 = vadd.f32 %v2968, %v3029
      %v3072 = vadd.f32 %v2969, %v3033
      %v3073 = vadd.f32 %v2970, %v3032
      %v3074 = vadd.f32 %v2971, %v3036
      %v3075 = vadd.f32 %v2972, %v3035
      %v3076 = vadd.f32 %v2973, %v3039
      %v3077 = vadd.f32 %v2974, %v3038
      %v3078 = vadd.f32 %v2975, %v3042
      %v3079 = vadd.f32 %v2976, %v3041
      %v3080 = vadd.f32 %v2977, %v3045
      %v3081 = vadd.f32 %v2978, %v3044
      %3082 = vadd.xlane.f32.xlu0 %v3064
      %v3083 = vpop.xlane.xlu0 %3082
      %v3084 = vsel %vm881, %v3065, 0.0
      %3085 = vadd.xlane.f32.xlu0 %v3084
      %v3086 = vpop.xlane.xlu0 %3085
      %3087 = vadd.xlane.f32.xlu0 %v3066
      %v3088 = vpop.xlane.xlu0 %3087
      %v3089 = vsel %vm881, %v3067, 0.0
      %3090 = vadd.xlane.f32.xlu0 %v3089
      %v3091 = vpop.xlane.xlu0 %3090
      %3092 = vadd.xlane.f32.xlu0 %v3068
      %v3093 = vpop.xlane.xlu0 %3092
      %v3094 = vsel %vm881, %v3069, 0.0
      %3095 = vadd.xlane.f32.xlu0 %v3094
      %v3096 = vpop.xlane.xlu0 %3095
      %3097 = vadd.xlane.f32.xlu0 %v3070
      %v3098 = vpop.xlane.xlu0 %3097
      %v3099 = vsel %vm881, %v3071, 0.0
      %3100 = vadd.xlane.f32.xlu0 %v3099
      %v3101 = vpop.xlane.xlu0 %3100
      %3102 = vadd.xlane.f32.xlu0 %v3072
      %v3103 = vpop.xlane.xlu0 %3102
      %v3104 = vsel %vm881, %v3073, 0.0
      %3105 = vadd.xlane.f32.xlu0 %v3104
      %v3106 = vpop.xlane.xlu0 %3105
      %3107 = vadd.xlane.f32.xlu0 %v3074
      %v3108 = vpop.xlane.xlu0 %3107
      %v3109 = vsel %vm881, %v3075, 0.0
      %3110 = vadd.xlane.f32.xlu0 %v3109
      %v3111 = vpop.xlane.xlu0 %3110
      %3112 = vadd.xlane.f32.xlu0 %v3076
      %v3113 = vpop.xlane.xlu0 %3112
      %v3114 = vsel %vm881, %v3077, 0.0
      %3115 = vadd.xlane.f32.xlu0 %v3114
      %v3116 = vpop.xlane.xlu0 %3115
      %3117 = vadd.xlane.f32.xlu0 %v3078
      %v3118 = vpop.xlane.xlu0 %3117
      %v3119 = vsel %vm881, %v3079, 0.0
      %3120 = vadd.xlane.f32.xlu0 %v3119
      %v3121 = vpop.xlane.xlu0 %3120
      %3122 = vadd.xlane.f32.xlu0 %v3080
      %v3123 = vpop.xlane.xlu0 %3122
      %v3124 = vsel %vm881, %v3081, 0.0
      %3125 = vadd.xlane.f32.xlu0 %v3124
      %v3126 = vpop.xlane.xlu0 %3125
      %v3127 = vadd.f32 %v2393, %v3083
      %v3128 = vadd.f32 %v2394, %v3086
      %v3129 = vadd.f32 %v2395, %v3088
      %v3130 = vadd.f32 %v2396, %v3091
      %v3131 = vadd.f32 %v2397, %v3093
      %v3132 = vadd.f32 %v2398, %v3096
      %v3133 = vadd.f32 %v2399, %v3098
      %v3134 = vadd.f32 %v2400, %v3101
      %v3135 = vadd.f32 %v2401, %v3103
      %v3136 = vadd.f32 %v2402, %v3106
      %v3137 = vadd.f32 %v2403, %v3108
      %v3138 = vadd.f32 %v2404, %v3111
      %v3139 = vadd.f32 %v2405, %v3113
      %v3140 = vadd.f32 %v2406, %v3116
      %v3141 = vadd.f32 %v2407, %v3118
      %v3142 = vadd.f32 %v2408, %v3121
      %v3143 = vadd.f32 %v2409, %v3123
      %v3144 = vadd.f32 %v2410, %v3126
      %s3145 = scalar_lea.vmem %s190, 32
      %v3146 = vld [vmem:[%s3145] sm:$0xf]
      %v3147 = vld [vmem:[%s3145 + $0x4] sm:$0x1]
      %v3148 = vld [vmem:[%s3145 + $0x8] sm:$0xf]
      %v3149 = vld [vmem:[%s3145 + $0xc] sm:$0x1]
      %v3150 = vld [vmem:[%s3145 + $0x10] sm:$0xf]
      %v3151 = vld [vmem:[%s3145 + $0x14] sm:$0x1]
      %v3152 = vld [vmem:[%s3145 + $0x18] sm:$0xf]
      %v3153 = vld [vmem:[%s3145 + $0x1c] sm:$0x1]
      %v3154 = vld [vmem:[%s3145 + $0x20] sm:$0xf]
      %v3155 = vld [vmem:[%s3145 + $0x24] sm:$0x1]
      %v3156 = vld [vmem:[%s3145 + $0x28] sm:$0xf]
      %v3157 = vld [vmem:[%s3145 + $0x2c] sm:$0x1]
      %v3158 = vld [vmem:[%s3145 + $0x30] sm:$0xf]
      %v3159 = vld [vmem:[%s3145 + $0x34] sm:$0x1]
      %v3160 = vld [vmem:[%s3145 + $0x38] sm:$0xf]
      %v3161 = vld [vmem:[%s3145 + $0x3c] sm:$0x1]
      %v3162 = vld [vmem:[%s3145 + $0x40] sm:$0xf]
      %v3163 = vld [vmem:[%s3145 + $0x44] sm:$0x1]
      %v3164 = vunpack.c.l.bf16 %v3146
      %v3165 = vunpack.c.l.bf16 %v3147
      %v3166 = vunpack.c.l.bf16 %v3148
      %v3167 = vunpack.c.l.bf16 %v3149
      %v3168 = vunpack.c.l.bf16 %v3150
      %v3169 = vunpack.c.l.bf16 %v3151
      %v3170 = vunpack.c.l.bf16 %v3152
      %v3171 = vunpack.c.l.bf16 %v3153
      %v3172 = vunpack.c.l.bf16 %v3154
      %v3173 = vunpack.c.l.bf16 %v3155
      %v3174 = vunpack.c.l.bf16 %v3156
      %v3175 = vunpack.c.l.bf16 %v3157
      %v3176 = vunpack.c.l.bf16 %v3158
      %v3177 = vunpack.c.l.bf16 %v3159
      %v3178 = vunpack.c.l.bf16 %v3160
      %v3179 = vunpack.c.l.bf16 %v3161
      %v3180 = vunpack.c.l.bf16 %v3162
      %v3181 = vunpack.c.l.bf16 %v3163
      %s3182 = scalar_lea.vmem %s185, 16
      %v3183 = vld [vmem:[%s3182] sm:$0x1]
      %v3184 = vunpack.c.l.bf16 %v3183
      %v3185 = vlaneseq
      %v3186 = vshrl.u32 %v3185, 7
      %v3187 = vsub.s32 0, %v3186
      %v3188 = vrot.slane %v3184, %v3187
      %v3189 = vmul.f32 %v3164, %v3188
      %v3190 = vmul.f32 %v3165, %v3188
      %v3191 = vmul.f32 %v3166, %v3188
      %v3192 = vmul.f32 %v3167, %v3188
      %v3193 = vmul.f32 %v3168, %v3188
      %v3194 = vmul.f32 %v3169, %v3188
      %v3195 = vmul.f32 %v3170, %v3188
      %v3196 = vmul.f32 %v3171, %v3188
      %v3197 = vmul.f32 %v3172, %v3188
      %v3198 = vmul.f32 %v3173, %v3188
      %v3199 = vmul.f32 %v3174, %v3188
      %v3200 = vmul.f32 %v3175, %v3188
      %v3201 = vmul.f32 %v3176, %v3188
      %v3202 = vmul.f32 %v3177, %v3188
      %v3203 = vmul.f32 %v3178, %v3188
      %v3204 = vmul.f32 %v3179, %v3188
      %v3205 = vmul.f32 %v3180, %v3188
      %v3206 = vmul.f32 %v3181, %v3188
      %v3207 = vadd.f32 %v3189, 0.0
      %v3208 = vadd.f32 %v3190, 0.0
      %v3209 = vadd.f32 %v3191, 0.0
      %v3210 = vadd.f32 %v3192, 0.0
      %v3211 = vadd.f32 %v3193, 0.0
      %v3212 = vadd.f32 %v3194, 0.0
      %v3213 = vadd.f32 %v3195, 0.0
      %v3214 = vadd.f32 %v3196, 0.0
      %v3215 = vadd.f32 %v3197, 0.0
      %v3216 = vadd.f32 %v3198, 0.0
      %v3217 = vadd.f32 %v3199, 0.0
      %v3218 = vadd.f32 %v3200, 0.0
      %v3219 = vadd.f32 %v3201, 0.0
      %v3220 = vadd.f32 %v3202, 0.0
      %v3221 = vadd.f32 %v3203, 0.0
      %v3222 = vadd.f32 %v3204, 0.0
      %v3223 = vadd.f32 %v3205, 0.0
      %v3224 = vadd.f32 %v3206, 0.0
      %v3225 = vlaneseq
      %v3226 = vshrl.u32 %v3225, 7
      %v3227 = vsub.s32 1, %v3226
      %v3228 = vrot.slane %v3184, %v3227
      %v3229 = vmul.f32 %v3164, %v3228
      %v3230 = vmul.f32 %v3165, %v3228
      %v3231 = vmul.f32 %v3166, %v3228
      %v3232 = vmul.f32 %v3167, %v3228
      %v3233 = vmul.f32 %v3168, %v3228
      %v3234 = vmul.f32 %v3169, %v3228
      %v3235 = vmul.f32 %v3170, %v3228
      %v3236 = vmul.f32 %v3171, %v3228
      %v3237 = vmul.f32 %v3172, %v3228
      %v3238 = vmul.f32 %v3173, %v3228
      %v3239 = vmul.f32 %v3174, %v3228
      %v3240 = vmul.f32 %v3175, %v3228
      %v3241 = vmul.f32 %v3176, %v3228
      %v3242 = vmul.f32 %v3177, %v3228
      %v3243 = vmul.f32 %v3178, %v3228
      %v3244 = vmul.f32 %v3179, %v3228
      %v3245 = vmul.f32 %v3180, %v3228
      %v3246 = vmul.f32 %v3181, %v3228
      %v3265 = vrot.slane %v3229, 1
      %v3266 = vrot.slane %v3230, 1
      %v3267 = vsel %vm323, %v3265, %v3266
      %v3268 = vrot.slane %v3231, 1
      %v3269 = vrot.slane %v3232, 1
      %v3270 = vsel %vm323, %v3268, %v3269
      %v3271 = vrot.slane %v3233, 1
      %v3272 = vrot.slane %v3234, 1
      %v3273 = vsel %vm323, %v3271, %v3272
      %v3274 = vrot.slane %v3235, 1
      %v3275 = vrot.slane %v3236, 1
      %v3276 = vsel %vm323, %v3274, %v3275
      %v3277 = vrot.slane %v3237, 1
      %v3278 = vrot.slane %v3238, 1
      %v3279 = vsel %vm323, %v3277, %v3278
      %v3280 = vrot.slane %v3239, 1
      %v3281 = vrot.slane %v3240, 1
      %v3282 = vsel %vm323, %v3280, %v3281
      %v3283 = vrot.slane %v3241, 1
      %v3284 = vrot.slane %v3242, 1
      %v3285 = vsel %vm323, %v3283, %v3284
      %v3286 = vrot.slane %v3243, 1
      %v3287 = vrot.slane %v3244, 1
      %v3288 = vsel %vm323, %v3286, %v3287
      %v3289 = vrot.slane %v3245, 1
      %v3290 = vrot.slane %v3246, 1
      %v3291 = vsel %vm323, %v3289, %v3290
      %v3310 = vadd.f32 %v3207, %v3267
      %v3311 = vadd.f32 %v3208, %v3266
      %v3312 = vadd.f32 %v3209, %v3270
      %v3313 = vadd.f32 %v3210, %v3269
      %v3314 = vadd.f32 %v3211, %v3273
      %v3315 = vadd.f32 %v3212, %v3272
      %v3316 = vadd.f32 %v3213, %v3276
      %v3317 = vadd.f32 %v3214, %v3275
      %v3318 = vadd.f32 %v3215, %v3279
      %v3319 = vadd.f32 %v3216, %v3278
      %v3320 = vadd.f32 %v3217, %v3282
      %v3321 = vadd.f32 %v3218, %v3281
      %v3322 = vadd.f32 %v3219, %v3285
      %v3323 = vadd.f32 %v3220, %v3284
      %v3324 = vadd.f32 %v3221, %v3288
      %v3325 = vadd.f32 %v3222, %v3287
      %v3326 = vadd.f32 %v3223, %v3291
      %v3327 = vadd.f32 %v3224, %v3290
      %v3328 = vld [vmem:[%s3145] sm:$0xe]
      %v3329 = vld [vmem:[%s3145 + $0x4] sm:$0x3]
      %v3330 = vld [vmem:[%s3145 + $0x8] sm:$0xe]
      %v3331 = vld [vmem:[%s3145 + $0xc] sm:$0x3]
      %v3332 = vld [vmem:[%s3145 + $0x10] sm:$0xe]
      %v3333 = vld [vmem:[%s3145 + $0x14] sm:$0x3]
      %v3334 = vld [vmem:[%s3145 + $0x18] sm:$0xe]
      %v3335 = vld [vmem:[%s3145 + $0x1c] sm:$0x3]
      %v3336 = vld [vmem:[%s3145 + $0x20] sm:$0xe]
      %v3337 = vld [vmem:[%s3145 + $0x24] sm:$0x3]
      %v3338 = vld [vmem:[%s3145 + $0x28] sm:$0xe]
      %v3339 = vld [vmem:[%s3145 + $0x2c] sm:$0x3]
      %v3340 = vld [vmem:[%s3145 + $0x30] sm:$0xe]
      %v3341 = vld [vmem:[%s3145 + $0x34] sm:$0x3]
      %v3342 = vld [vmem:[%s3145 + $0x38] sm:$0xe]
      %v3343 = vld [vmem:[%s3145 + $0x3c] sm:$0x3]
      %v3344 = vld [vmem:[%s3145 + $0x40] sm:$0xe]
      %v3345 = vld [vmem:[%s3145 + $0x44] sm:$0x3]
      %v3346 = vunpack.c.l.bf16 %v3328
      %v3347 = vunpack.c.l.bf16 %v3329
      %v3348 = vunpack.c.l.bf16 %v3330
      %v3349 = vunpack.c.l.bf16 %v3331
      %v3350 = vunpack.c.l.bf16 %v3332
      %v3351 = vunpack.c.l.bf16 %v3333
      %v3352 = vunpack.c.l.bf16 %v3334
      %v3353 = vunpack.c.l.bf16 %v3335
      %v3354 = vunpack.c.l.bf16 %v3336
      %v3355 = vunpack.c.l.bf16 %v3337
      %v3356 = vunpack.c.l.bf16 %v3338
      %v3357 = vunpack.c.l.bf16 %v3339
      %v3358 = vunpack.c.l.bf16 %v3340
      %v3359 = vunpack.c.l.bf16 %v3341
      %v3360 = vunpack.c.l.bf16 %v3342
      %v3361 = vunpack.c.l.bf16 %v3343
      %v3362 = vunpack.c.l.bf16 %v3344
      %v3363 = vunpack.c.l.bf16 %v3345
      %v3364 = vld [vmem:[%s3182] sm:$0x2]
      %v3365 = vunpack.c.l.bf16 %v3364
      %v3366 = vlaneseq
      %v3367 = vshrl.u32 %v3366, 7
      %v3368 = vsub.s32 2, %v3367
      %v3369 = vrot.slane %v3365, %v3368
      %v3370 = vmul.f32 %v3346, %v3369
      %v3371 = vmul.f32 %v3347, %v3369
      %v3372 = vmul.f32 %v3348, %v3369
      %v3373 = vmul.f32 %v3349, %v3369
      %v3374 = vmul.f32 %v3350, %v3369
      %v3375 = vmul.f32 %v3351, %v3369
      %v3376 = vmul.f32 %v3352, %v3369
      %v3377 = vmul.f32 %v3353, %v3369
      %v3378 = vmul.f32 %v3354, %v3369
      %v3379 = vmul.f32 %v3355, %v3369
      %v3380 = vmul.f32 %v3356, %v3369
      %v3381 = vmul.f32 %v3357, %v3369
      %v3382 = vmul.f32 %v3358, %v3369
      %v3383 = vmul.f32 %v3359, %v3369
      %v3384 = vmul.f32 %v3360, %v3369
      %v3385 = vmul.f32 %v3361, %v3369
      %v3386 = vmul.f32 %v3362, %v3369
      %v3387 = vmul.f32 %v3363, %v3369
      %v3406 = vrot.slane %v3370, 2
      %v3407 = vrot.slane %v3371, 2
      %v3408 = vsel %vm465, %v3406, %v3407
      %v3409 = vrot.slane %v3372, 2
      %v3410 = vrot.slane %v3373, 2
      %v3411 = vsel %vm465, %v3409, %v3410
      %v3412 = vrot.slane %v3374, 2
      %v3413 = vrot.slane %v3375, 2
      %v3414 = vsel %vm465, %v3412, %v3413
      %v3415 = vrot.slane %v3376, 2
      %v3416 = vrot.slane %v3377, 2
      %v3417 = vsel %vm465, %v3415, %v3416
      %v3418 = vrot.slane %v3378, 2
      %v3419 = vrot.slane %v3379, 2
      %v3420 = vsel %vm465, %v3418, %v3419
      %v3421 = vrot.slane %v3380, 2
      %v3422 = vrot.slane %v3381, 2
      %v3423 = vsel %vm465, %v3421, %v3422
      %v3424 = vrot.slane %v3382, 2
      %v3425 = vrot.slane %v3383, 2
      %v3426 = vsel %vm465, %v3424, %v3425
      %v3427 = vrot.slane %v3384, 2
      %v3428 = vrot.slane %v3385, 2
      %v3429 = vsel %vm465, %v3427, %v3428
      %v3430 = vrot.slane %v3386, 2
      %v3431 = vrot.slane %v3387, 2
      %v3432 = vsel %vm465, %v3430, %v3431
      %v3451 = vadd.f32 %v3310, %v3408
      %v3452 = vadd.f32 %v3311, %v3407
      %v3453 = vadd.f32 %v3312, %v3411
      %v3454 = vadd.f32 %v3313, %v3410
      %v3455 = vadd.f32 %v3314, %v3414
      %v3456 = vadd.f32 %v3315, %v3413
      %v3457 = vadd.f32 %v3316, %v3417
      %v3458 = vadd.f32 %v3317, %v3416
      %v3459 = vadd.f32 %v3318, %v3420
      %v3460 = vadd.f32 %v3319, %v3419
      %v3461 = vadd.f32 %v3320, %v3423
      %v3462 = vadd.f32 %v3321, %v3422
      %v3463 = vadd.f32 %v3322, %v3426
      %v3464 = vadd.f32 %v3323, %v3425
      %v3465 = vadd.f32 %v3324, %v3429
      %v3466 = vadd.f32 %v3325, %v3428
      %v3467 = vadd.f32 %v3326, %v3432
      %v3468 = vadd.f32 %v3327, %v3431
      %v3469 = vlaneseq
      %v3470 = vshrl.u32 %v3469, 7
      %v3471 = vsub.s32 3, %v3470
      %v3472 = vrot.slane %v3365, %v3471
      %v3473 = vmul.f32 %v3346, %v3472
      %v3474 = vmul.f32 %v3347, %v3472
      %v3475 = vmul.f32 %v3348, %v3472
      %v3476 = vmul.f32 %v3349, %v3472
      %v3477 = vmul.f32 %v3350, %v3472
      %v3478 = vmul.f32 %v3351, %v3472
      %v3479 = vmul.f32 %v3352, %v3472
      %v3480 = vmul.f32 %v3353, %v3472
      %v3481 = vmul.f32 %v3354, %v3472
      %v3482 = vmul.f32 %v3355, %v3472
      %v3483 = vmul.f32 %v3356, %v3472
      %v3484 = vmul.f32 %v3357, %v3472
      %v3485 = vmul.f32 %v3358, %v3472
      %v3486 = vmul.f32 %v3359, %v3472
      %v3487 = vmul.f32 %v3360, %v3472
      %v3488 = vmul.f32 %v3361, %v3472
      %v3489 = vmul.f32 %v3362, %v3472
      %v3490 = vmul.f32 %v3363, %v3472
      %v3509 = vrot.slane %v3473, 3
      %v3510 = vrot.slane %v3474, 3
      %v3511 = vsel %vm569, %v3509, %v3510
      %v3512 = vrot.slane %v3475, 3
      %v3513 = vrot.slane %v3476, 3
      %v3514 = vsel %vm569, %v3512, %v3513
      %v3515 = vrot.slane %v3477, 3
      %v3516 = vrot.slane %v3478, 3
      %v3517 = vsel %vm569, %v3515, %v3516
      %v3518 = vrot.slane %v3479, 3
      %v3519 = vrot.slane %v3480, 3
      %v3520 = vsel %vm569, %v3518, %v3519
      %v3521 = vrot.slane %v3481, 3
      %v3522 = vrot.slane %v3482, 3
      %v3523 = vsel %vm569, %v3521, %v3522
      %v3524 = vrot.slane %v3483, 3
      %v3525 = vrot.slane %v3484, 3
      %v3526 = vsel %vm569, %v3524, %v3525
      %v3527 = vrot.slane %v3485, 3
      %v3528 = vrot.slane %v3486, 3
      %v3529 = vsel %vm569, %v3527, %v3528
      %v3530 = vrot.slane %v3487, 3
      %v3531 = vrot.slane %v3488, 3
      %v3532 = vsel %vm569, %v3530, %v3531
      %v3533 = vrot.slane %v3489, 3
      %v3534 = vrot.slane %v3490, 3
      %v3535 = vsel %vm569, %v3533, %v3534
      %v3554 = vadd.f32 %v3451, %v3511
      %v3555 = vadd.f32 %v3452, %v3510
      %v3556 = vadd.f32 %v3453, %v3514
      %v3557 = vadd.f32 %v3454, %v3513
      %v3558 = vadd.f32 %v3455, %v3517
      %v3559 = vadd.f32 %v3456, %v3516
      %v3560 = vadd.f32 %v3457, %v3520
      %v3561 = vadd.f32 %v3458, %v3519
      %v3562 = vadd.f32 %v3459, %v3523
      %v3563 = vadd.f32 %v3460, %v3522
      %v3564 = vadd.f32 %v3461, %v3526
      %v3565 = vadd.f32 %v3462, %v3525
      %v3566 = vadd.f32 %v3463, %v3529
      %v3567 = vadd.f32 %v3464, %v3528
      %v3568 = vadd.f32 %v3465, %v3532
      %v3569 = vadd.f32 %v3466, %v3531
      %v3570 = vadd.f32 %v3467, %v3535
      %v3571 = vadd.f32 %v3468, %v3534
      %v3572 = vld [vmem:[%s3145] sm:$0xc]
      %v3573 = vld [vmem:[%s3145 + $0x4] sm:$0x7]
      %v3574 = vld [vmem:[%s3145 + $0x8] sm:$0xc]
      %v3575 = vld [vmem:[%s3145 + $0xc] sm:$0x7]
      %v3576 = vld [vmem:[%s3145 + $0x10] sm:$0xc]
      %v3577 = vld [vmem:[%s3145 + $0x14] sm:$0x7]
      %v3578 = vld [vmem:[%s3145 + $0x18] sm:$0xc]
      %v3579 = vld [vmem:[%s3145 + $0x1c] sm:$0x7]
      %v3580 = vld [vmem:[%s3145 + $0x20] sm:$0xc]
      %v3581 = vld [vmem:[%s3145 + $0x24] sm:$0x7]
      %v3582 = vld [vmem:[%s3145 + $0x28] sm:$0xc]
      %v3583 = vld [vmem:[%s3145 + $0x2c] sm:$0x7]
      %v3584 = vld [vmem:[%s3145 + $0x30] sm:$0xc]
      %v3585 = vld [vmem:[%s3145 + $0x34] sm:$0x7]
      %v3586 = vld [vmem:[%s3145 + $0x38] sm:$0xc]
      %v3587 = vld [vmem:[%s3145 + $0x3c] sm:$0x7]
      %v3588 = vld [vmem:[%s3145 + $0x40] sm:$0xc]
      %v3589 = vld [vmem:[%s3145 + $0x44] sm:$0x7]
      %v3590 = vunpack.c.l.bf16 %v3572
      %v3591 = vunpack.c.l.bf16 %v3573
      %v3592 = vunpack.c.l.bf16 %v3574
      %v3593 = vunpack.c.l.bf16 %v3575
      %v3594 = vunpack.c.l.bf16 %v3576
      %v3595 = vunpack.c.l.bf16 %v3577
      %v3596 = vunpack.c.l.bf16 %v3578
      %v3597 = vunpack.c.l.bf16 %v3579
      %v3598 = vunpack.c.l.bf16 %v3580
      %v3599 = vunpack.c.l.bf16 %v3581
      %v3600 = vunpack.c.l.bf16 %v3582
      %v3601 = vunpack.c.l.bf16 %v3583
      %v3602 = vunpack.c.l.bf16 %v3584
      %v3603 = vunpack.c.l.bf16 %v3585
      %v3604 = vunpack.c.l.bf16 %v3586
      %v3605 = vunpack.c.l.bf16 %v3587
      %v3606 = vunpack.c.l.bf16 %v3588
      %v3607 = vunpack.c.l.bf16 %v3589
      %v3608 = vld [vmem:[%s3182] sm:$0x4]
      %v3609 = vunpack.c.l.bf16 %v3608
      %v3610 = vlaneseq
      %v3611 = vshrl.u32 %v3610, 7
      %v3612 = vsub.s32 4, %v3611
      %v3613 = vrot.slane %v3609, %v3612
      %v3614 = vmul.f32 %v3590, %v3613
      %v3615 = vmul.f32 %v3591, %v3613
      %v3616 = vmul.f32 %v3592, %v3613
      %v3617 = vmul.f32 %v3593, %v3613
      %v3618 = vmul.f32 %v3594, %v3613
      %v3619 = vmul.f32 %v3595, %v3613
      %v3620 = vmul.f32 %v3596, %v3613
      %v3621 = vmul.f32 %v3597, %v3613
      %v3622 = vmul.f32 %v3598, %v3613
      %v3623 = vmul.f32 %v3599, %v3613
      %v3624 = vmul.f32 %v3600, %v3613
      %v3625 = vmul.f32 %v3601, %v3613
      %v3626 = vmul.f32 %v3602, %v3613
      %v3627 = vmul.f32 %v3603, %v3613
      %v3628 = vmul.f32 %v3604, %v3613
      %v3629 = vmul.f32 %v3605, %v3613
      %v3630 = vmul.f32 %v3606, %v3613
      %v3631 = vmul.f32 %v3607, %v3613
      %v3650 = vrot.slane %v3614, 4
      %v3651 = vrot.slane %v3615, 4
      %v3652 = vsel %vm711, %v3650, %v3651
      %v3653 = vrot.slane %v3616, 4
      %v3654 = vrot.slane %v3617, 4
      %v3655 = vsel %vm711, %v3653, %v3654
      %v3656 = vrot.slane %v3618, 4
      %v3657 = vrot.slane %v3619, 4
      %v3658 = vsel %vm711, %v3656, %v3657
      %v3659 = vrot.slane %v3620, 4
      %v3660 = vrot.slane %v3621, 4
      %v3661 = vsel %vm711, %v3659, %v3660
      %v3662 = vrot.slane %v3622, 4
      %v3663 = vrot.slane %v3623, 4
      %v3664 = vsel %vm711, %v3662, %v3663
      %v3665 = vrot.slane %v3624, 4
      %v3666 = vrot.slane %v3625, 4
      %v3667 = vsel %vm711, %v3665, %v3666
      %v3668 = vrot.slane %v3626, 4
      %v3669 = vrot.slane %v3627, 4
      %v3670 = vsel %vm711, %v3668, %v3669
      %v3671 = vrot.slane %v3628, 4
      %v3672 = vrot.slane %v3629, 4
      %v3673 = vsel %vm711, %v3671, %v3672
      %v3674 = vrot.slane %v3630, 4
      %v3675 = vrot.slane %v3631, 4
      %v3676 = vsel %vm711, %v3674, %v3675
      %v3695 = vadd.f32 %v3554, %v3652
      %v3696 = vadd.f32 %v3555, %v3651
      %v3697 = vadd.f32 %v3556, %v3655
      %v3698 = vadd.f32 %v3557, %v3654
      %v3699 = vadd.f32 %v3558, %v3658
      %v3700 = vadd.f32 %v3559, %v3657
      %v3701 = vadd.f32 %v3560, %v3661
      %v3702 = vadd.f32 %v3561, %v3660
      %v3703 = vadd.f32 %v3562, %v3664
      %v3704 = vadd.f32 %v3563, %v3663
      %v3705 = vadd.f32 %v3564, %v3667
      %v3706 = vadd.f32 %v3565, %v3666
      %v3707 = vadd.f32 %v3566, %v3670
      %v3708 = vadd.f32 %v3567, %v3669
      %v3709 = vadd.f32 %v3568, %v3673
      %v3710 = vadd.f32 %v3569, %v3672
      %v3711 = vadd.f32 %v3570, %v3676
      %v3712 = vadd.f32 %v3571, %v3675
      %v3713 = vlaneseq
      %v3714 = vshrl.u32 %v3713, 7
      %v3715 = vsub.s32 5, %v3714
      %v3716 = vrot.slane %v3609, %v3715
      %v3717 = vmul.f32 %v3590, %v3716
      %v3718 = vmul.f32 %v3591, %v3716
      %v3719 = vmul.f32 %v3592, %v3716
      %v3720 = vmul.f32 %v3593, %v3716
      %v3721 = vmul.f32 %v3594, %v3716
      %v3722 = vmul.f32 %v3595, %v3716
      %v3723 = vmul.f32 %v3596, %v3716
      %v3724 = vmul.f32 %v3597, %v3716
      %v3725 = vmul.f32 %v3598, %v3716
      %v3726 = vmul.f32 %v3599, %v3716
      %v3727 = vmul.f32 %v3600, %v3716
      %v3728 = vmul.f32 %v3601, %v3716
      %v3729 = vmul.f32 %v3602, %v3716
      %v3730 = vmul.f32 %v3603, %v3716
      %v3731 = vmul.f32 %v3604, %v3716
      %v3732 = vmul.f32 %v3605, %v3716
      %v3733 = vmul.f32 %v3606, %v3716
      %v3734 = vmul.f32 %v3607, %v3716
      %v3753 = vrot.slane %v3717, 5
      %v3754 = vrot.slane %v3718, 5
      %v3755 = vsel %vm815, %v3753, %v3754
      %v3756 = vrot.slane %v3719, 5
      %v3757 = vrot.slane %v3720, 5
      %v3758 = vsel %vm815, %v3756, %v3757
      %v3759 = vrot.slane %v3721, 5
      %v3760 = vrot.slane %v3722, 5
      %v3761 = vsel %vm815, %v3759, %v3760
      %v3762 = vrot.slane %v3723, 5
      %v3763 = vrot.slane %v3724, 5
      %v3764 = vsel %vm815, %v3762, %v3763
      %v3765 = vrot.slane %v3725, 5
      %v3766 = vrot.slane %v3726, 5
      %v3767 = vsel %vm815, %v3765, %v3766
      %v3768 = vrot.slane %v3727, 5
      %v3769 = vrot.slane %v3728, 5
      %v3770 = vsel %vm815, %v3768, %v3769
      %v3771 = vrot.slane %v3729, 5
      %v3772 = vrot.slane %v3730, 5
      %v3773 = vsel %vm815, %v3771, %v3772
      %v3774 = vrot.slane %v3731, 5
      %v3775 = vrot.slane %v3732, 5
      %v3776 = vsel %vm815, %v3774, %v3775
      %v3777 = vrot.slane %v3733, 5
      %v3778 = vrot.slane %v3734, 5
      %v3779 = vsel %vm815, %v3777, %v3778
      %v3798 = vadd.f32 %v3695, %v3755
      %v3799 = vadd.f32 %v3696, %v3754
      %v3800 = vadd.f32 %v3697, %v3758
      %v3801 = vadd.f32 %v3698, %v3757
      %v3802 = vadd.f32 %v3699, %v3761
      %v3803 = vadd.f32 %v3700, %v3760
      %v3804 = vadd.f32 %v3701, %v3764
      %v3805 = vadd.f32 %v3702, %v3763
      %v3806 = vadd.f32 %v3703, %v3767
      %v3807 = vadd.f32 %v3704, %v3766
      %v3808 = vadd.f32 %v3705, %v3770
      %v3809 = vadd.f32 %v3706, %v3769
      %v3810 = vadd.f32 %v3707, %v3773
      %v3811 = vadd.f32 %v3708, %v3772
      %v3812 = vadd.f32 %v3709, %v3776
      %v3813 = vadd.f32 %v3710, %v3775
      %v3814 = vadd.f32 %v3711, %v3779
      %v3815 = vadd.f32 %v3712, %v3778
      %3816 = vadd.xlane.f32.xlu0 %v3798
      %v3817 = vpop.xlane.xlu0 %3816
      %v3818 = vsel %vm881, %v3799, 0.0
      %3819 = vadd.xlane.f32.xlu0 %v3818
      %v3820 = vpop.xlane.xlu0 %3819
      %3821 = vadd.xlane.f32.xlu0 %v3800
      %v3822 = vpop.xlane.xlu0 %3821
      %v3823 = vsel %vm881, %v3801, 0.0
      %3824 = vadd.xlane.f32.xlu0 %v3823
      %v3825 = vpop.xlane.xlu0 %3824
      %3826 = vadd.xlane.f32.xlu0 %v3802
      %v3827 = vpop.xlane.xlu0 %3826
      %v3828 = vsel %vm881, %v3803, 0.0
      %3829 = vadd.xlane.f32.xlu0 %v3828
      %v3830 = vpop.xlane.xlu0 %3829
      %3831 = vadd.xlane.f32.xlu0 %v3804
      %v3832 = vpop.xlane.xlu0 %3831
      %v3833 = vsel %vm881, %v3805, 0.0
      %3834 = vadd.xlane.f32.xlu0 %v3833
      %v3835 = vpop.xlane.xlu0 %3834
      %3836 = vadd.xlane.f32.xlu0 %v3806
      %v3837 = vpop.xlane.xlu0 %3836
      %v3838 = vsel %vm881, %v3807, 0.0
      %3839 = vadd.xlane.f32.xlu0 %v3838
      %v3840 = vpop.xlane.xlu0 %3839
      %3841 = vadd.xlane.f32.xlu0 %v3808
      %v3842 = vpop.xlane.xlu0 %3841
      %v3843 = vsel %vm881, %v3809, 0.0
      %3844 = vadd.xlane.f32.xlu0 %v3843
      %v3845 = vpop.xlane.xlu0 %3844
      %3846 = vadd.xlane.f32.xlu0 %v3810
      %v3847 = vpop.xlane.xlu0 %3846
      %v3848 = vsel %vm881, %v3811, 0.0
      %3849 = vadd.xlane.f32.xlu0 %v3848
      %v3850 = vpop.xlane.xlu0 %3849
      %3851 = vadd.xlane.f32.xlu0 %v3812
      %v3852 = vpop.xlane.xlu0 %3851
      %v3853 = vsel %vm881, %v3813, 0.0
      %3854 = vadd.xlane.f32.xlu0 %v3853
      %v3855 = vpop.xlane.xlu0 %3854
      %3856 = vadd.xlane.f32.xlu0 %v3814
      %v3857 = vpop.xlane.xlu0 %3856
      %v3858 = vsel %vm881, %v3815, 0.0
      %3859 = vadd.xlane.f32.xlu0 %v3858
      %v3860 = vpop.xlane.xlu0 %3859
      %v3861 = vadd.f32 %v3127, %v3817
      %v3862 = vadd.f32 %v3128, %v3820
      %v3863 = vadd.f32 %v3129, %v3822
      %v3864 = vadd.f32 %v3130, %v3825
      %v3865 = vadd.f32 %v3131, %v3827
      %v3866 = vadd.f32 %v3132, %v3830
      %v3867 = vadd.f32 %v3133, %v3832
      %v3868 = vadd.f32 %v3134, %v3835
      %v3869 = vadd.f32 %v3135, %v3837
      %v3870 = vadd.f32 %v3136, %v3840
      %v3871 = vadd.f32 %v3137, %v3842
      %v3872 = vadd.f32 %v3138, %v3845
      %v3873 = vadd.f32 %v3139, %v3847
      %v3874 = vadd.f32 %v3140, %v3850
      %v3875 = vadd.f32 %v3141, %v3852
      %v3876 = vadd.f32 %v3142, %v3855
      %v3877 = vadd.f32 %v3143, %v3857
      %v3878 = vadd.f32 %v3144, %v3860
      %s3879 = scalar_lea.vmem %s190, 40
      %v3880 = vld [vmem:[%s3879] sm:$0xf]
      %v3881 = vld [vmem:[%s3879 + $0x4] sm:$0x1]
      %v3882 = vld [vmem:[%s3879 + $0x8] sm:$0xf]
      %v3883 = vld [vmem:[%s3879 + $0xc] sm:$0x1]
      %v3884 = vld [vmem:[%s3879 + $0x10] sm:$0xf]
      %v3885 = vld [vmem:[%s3879 + $0x14] sm:$0x1]
      %v3886 = vld [vmem:[%s3879 + $0x18] sm:$0xf]
      %v3887 = vld [vmem:[%s3879 + $0x1c] sm:$0x1]
      %v3888 = vld [vmem:[%s3879 + $0x20] sm:$0xf]
      %v3889 = vld [vmem:[%s3879 + $0x24] sm:$0x1]
      %v3890 = vld [vmem:[%s3879 + $0x28] sm:$0xf]
      %v3891 = vld [vmem:[%s3879 + $0x2c] sm:$0x1]
      %v3892 = vld [vmem:[%s3879 + $0x30] sm:$0xf]
      %v3893 = vld [vmem:[%s3879 + $0x34] sm:$0x1]
      %v3894 = vld [vmem:[%s3879 + $0x38] sm:$0xf]
      %v3895 = vld [vmem:[%s3879 + $0x3c] sm:$0x1]
      %v3896 = vld [vmem:[%s3879 + $0x40] sm:$0xf]
      %v3897 = vld [vmem:[%s3879 + $0x44] sm:$0x1]
      %v3898 = vunpack.c.l.bf16 %v3880
      %v3899 = vunpack.c.l.bf16 %v3881
      %v3900 = vunpack.c.l.bf16 %v3882
      %v3901 = vunpack.c.l.bf16 %v3883
      %v3902 = vunpack.c.l.bf16 %v3884
      %v3903 = vunpack.c.l.bf16 %v3885
      %v3904 = vunpack.c.l.bf16 %v3886
      %v3905 = vunpack.c.l.bf16 %v3887
      %v3906 = vunpack.c.l.bf16 %v3888
      %v3907 = vunpack.c.l.bf16 %v3889
      %v3908 = vunpack.c.l.bf16 %v3890
      %v3909 = vunpack.c.l.bf16 %v3891
      %v3910 = vunpack.c.l.bf16 %v3892
      %v3911 = vunpack.c.l.bf16 %v3893
      %v3912 = vunpack.c.l.bf16 %v3894
      %v3913 = vunpack.c.l.bf16 %v3895
      %v3914 = vunpack.c.l.bf16 %v3896
      %v3915 = vunpack.c.l.bf16 %v3897
      %s3916 = scalar_lea.vmem %s185, 20
      %v3917 = vld [vmem:[%s3916] sm:$0x1]
      %v3918 = vunpack.c.l.bf16 %v3917
      %v3919 = vlaneseq
      %v3920 = vshrl.u32 %v3919, 7
      %v3921 = vsub.s32 0, %v3920
      %v3922 = vrot.slane %v3918, %v3921
      %v3923 = vmul.f32 %v3898, %v3922
      %v3924 = vmul.f32 %v3899, %v3922
      %v3925 = vmul.f32 %v3900, %v3922
      %v3926 = vmul.f32 %v3901, %v3922
      %v3927 = vmul.f32 %v3902, %v3922
      %v3928 = vmul.f32 %v3903, %v3922
      %v3929 = vmul.f32 %v3904, %v3922
      %v3930 = vmul.f32 %v3905, %v3922
      %v3931 = vmul.f32 %v3906, %v3922
      %v3932 = vmul.f32 %v3907, %v3922
      %v3933 = vmul.f32 %v3908, %v3922
      %v3934 = vmul.f32 %v3909, %v3922
      %v3935 = vmul.f32 %v3910, %v3922
      %v3936 = vmul.f32 %v3911, %v3922
      %v3937 = vmul.f32 %v3912, %v3922
      %v3938 = vmul.f32 %v3913, %v3922
      %v3939 = vmul.f32 %v3914, %v3922
      %v3940 = vmul.f32 %v3915, %v3922
      %v3941 = vadd.f32 %v3923, 0.0
      %v3942 = vadd.f32 %v3924, 0.0
      %v3943 = vadd.f32 %v3925, 0.0
      %v3944 = vadd.f32 %v3926, 0.0
      %v3945 = vadd.f32 %v3927, 0.0
      %v3946 = vadd.f32 %v3928, 0.0
      %v3947 = vadd.f32 %v3929, 0.0
      %v3948 = vadd.f32 %v3930, 0.0
      %v3949 = vadd.f32 %v3931, 0.0
      %v3950 = vadd.f32 %v3932, 0.0
      %v3951 = vadd.f32 %v3933, 0.0
      %v3952 = vadd.f32 %v3934, 0.0
      %v3953 = vadd.f32 %v3935, 0.0
      %v3954 = vadd.f32 %v3936, 0.0
      %v3955 = vadd.f32 %v3937, 0.0
      %v3956 = vadd.f32 %v3938, 0.0
      %v3957 = vadd.f32 %v3939, 0.0
      %v3958 = vadd.f32 %v3940, 0.0
      %v3959 = vlaneseq
      %v3960 = vshrl.u32 %v3959, 7
      %v3961 = vsub.s32 1, %v3960
      %v3962 = vrot.slane %v3918, %v3961
      %v3963 = vmul.f32 %v3898, %v3962
      %v3964 = vmul.f32 %v3899, %v3962
      %v3965 = vmul.f32 %v3900, %v3962
      %v3966 = vmul.f32 %v3901, %v3962
      %v3967 = vmul.f32 %v3902, %v3962
      %v3968 = vmul.f32 %v3903, %v3962
      %v3969 = vmul.f32 %v3904, %v3962
      %v3970 = vmul.f32 %v3905, %v3962
      %v3971 = vmul.f32 %v3906, %v3962
      %v3972 = vmul.f32 %v3907, %v3962
      %v3973 = vmul.f32 %v3908, %v3962
      %v3974 = vmul.f32 %v3909, %v3962
      %v3975 = vmul.f32 %v3910, %v3962
      %v3976 = vmul.f32 %v3911, %v3962
      %v3977 = vmul.f32 %v3912, %v3962
      %v3978 = vmul.f32 %v3913, %v3962
      %v3979 = vmul.f32 %v3914, %v3962
      %v3980 = vmul.f32 %v3915, %v3962
      %v3999 = vrot.slane %v3963, 1
      %v4000 = vrot.slane %v3964, 1
      %v4001 = vsel %vm323, %v3999, %v4000
      %v4002 = vrot.slane %v3965, 1
      %v4003 = vrot.slane %v3966, 1
      %v4004 = vsel %vm323, %v4002, %v4003
      %v4005 = vrot.slane %v3967, 1
      %v4006 = vrot.slane %v3968, 1
      %v4007 = vsel %vm323, %v4005, %v4006
      %v4008 = vrot.slane %v3969, 1
      %v4009 = vrot.slane %v3970, 1
      %v4010 = vsel %vm323, %v4008, %v4009
      %v4011 = vrot.slane %v3971, 1
      %v4012 = vrot.slane %v3972, 1
      %v4013 = vsel %vm323, %v4011, %v4012
      %v4014 = vrot.slane %v3973, 1
      %v4015 = vrot.slane %v3974, 1
      %v4016 = vsel %vm323, %v4014, %v4015
      %v4017 = vrot.slane %v3975, 1
      %v4018 = vrot.slane %v3976, 1
      %v4019 = vsel %vm323, %v4017, %v4018
      %v4020 = vrot.slane %v3977, 1
      %v4021 = vrot.slane %v3978, 1
      %v4022 = vsel %vm323, %v4020, %v4021
      %v4023 = vrot.slane %v3979, 1
      %v4024 = vrot.slane %v3980, 1
      %v4025 = vsel %vm323, %v4023, %v4024
      %v4044 = vadd.f32 %v3941, %v4001
      %v4045 = vadd.f32 %v3942, %v4000
      %v4046 = vadd.f32 %v3943, %v4004
      %v4047 = vadd.f32 %v3944, %v4003
      %v4048 = vadd.f32 %v3945, %v4007
      %v4049 = vadd.f32 %v3946, %v4006
      %v4050 = vadd.f32 %v3947, %v4010
      %v4051 = vadd.f32 %v3948, %v4009
      %v4052 = vadd.f32 %v3949, %v4013
      %v4053 = vadd.f32 %v3950, %v4012
      %v4054 = vadd.f32 %v3951, %v4016
      %v4055 = vadd.f32 %v3952, %v4015
      %v4056 = vadd.f32 %v3953, %v4019
      %v4057 = vadd.f32 %v3954, %v4018
      %v4058 = vadd.f32 %v3955, %v4022
      %v4059 = vadd.f32 %v3956, %v4021
      %v4060 = vadd.f32 %v3957, %v4025
      %v4061 = vadd.f32 %v3958, %v4024
      %v4062 = vld [vmem:[%s3879] sm:$0xe]
      %v4063 = vld [vmem:[%s3879 + $0x4] sm:$0x3]
      %v4064 = vld [vmem:[%s3879 + $0x8] sm:$0xe]
      %v4065 = vld [vmem:[%s3879 + $0xc] sm:$0x3]
      %v4066 = vld [vmem:[%s3879 + $0x10] sm:$0xe]
      %v4067 = vld [vmem:[%s3879 + $0x14] sm:$0x3]
      %v4068 = vld [vmem:[%s3879 + $0x18] sm:$0xe]
      %v4069 = vld [vmem:[%s3879 + $0x1c] sm:$0x3]
      %v4070 = vld [vmem:[%s3879 + $0x20] sm:$0xe]
      %v4071 = vld [vmem:[%s3879 + $0x24] sm:$0x3]
      %v4072 = vld [vmem:[%s3879 + $0x28] sm:$0xe]
      %v4073 = vld [vmem:[%s3879 + $0x2c] sm:$0x3]
      %v4074 = vld [vmem:[%s3879 + $0x30] sm:$0xe]
      %v4075 = vld [vmem:[%s3879 + $0x34] sm:$0x3]
      %v4076 = vld [vmem:[%s3879 + $0x38] sm:$0xe]
      %v4077 = vld [vmem:[%s3879 + $0x3c] sm:$0x3]
      %v4078 = vld [vmem:[%s3879 + $0x40] sm:$0xe]
      %v4079 = vld [vmem:[%s3879 + $0x44] sm:$0x3]
      %v4080 = vunpack.c.l.bf16 %v4062
      %v4081 = vunpack.c.l.bf16 %v4063
      %v4082 = vunpack.c.l.bf16 %v4064
      %v4083 = vunpack.c.l.bf16 %v4065
      %v4084 = vunpack.c.l.bf16 %v4066
      %v4085 = vunpack.c.l.bf16 %v4067
      %v4086 = vunpack.c.l.bf16 %v4068
      %v4087 = vunpack.c.l.bf16 %v4069
      %v4088 = vunpack.c.l.bf16 %v4070
      %v4089 = vunpack.c.l.bf16 %v4071
      %v4090 = vunpack.c.l.bf16 %v4072
      %v4091 = vunpack.c.l.bf16 %v4073
      %v4092 = vunpack.c.l.bf16 %v4074
      %v4093 = vunpack.c.l.bf16 %v4075
      %v4094 = vunpack.c.l.bf16 %v4076
      %v4095 = vunpack.c.l.bf16 %v4077
      %v4096 = vunpack.c.l.bf16 %v4078
      %v4097 = vunpack.c.l.bf16 %v4079
      %v4098 = vld [vmem:[%s3916] sm:$0x2]
      %v4099 = vunpack.c.l.bf16 %v4098
      %v4100 = vlaneseq
      %v4101 = vshrl.u32 %v4100, 7
      %v4102 = vsub.s32 2, %v4101
      %v4103 = vrot.slane %v4099, %v4102
      %v4104 = vmul.f32 %v4080, %v4103
      %v4105 = vmul.f32 %v4081, %v4103
      %v4106 = vmul.f32 %v4082, %v4103
      %v4107 = vmul.f32 %v4083, %v4103
      %v4108 = vmul.f32 %v4084, %v4103
      %v4109 = vmul.f32 %v4085, %v4103
      %v4110 = vmul.f32 %v4086, %v4103
      %v4111 = vmul.f32 %v4087, %v4103
      %v4112 = vmul.f32 %v4088, %v4103
      %v4113 = vmul.f32 %v4089, %v4103
      %v4114 = vmul.f32 %v4090, %v4103
      %v4115 = vmul.f32 %v4091, %v4103
      %v4116 = vmul.f32 %v4092, %v4103
      %v4117 = vmul.f32 %v4093, %v4103
      %v4118 = vmul.f32 %v4094, %v4103
      %v4119 = vmul.f32 %v4095, %v4103
      %v4120 = vmul.f32 %v4096, %v4103
      %v4121 = vmul.f32 %v4097, %v4103
      %v4140 = vrot.slane %v4104, 2
      %v4141 = vrot.slane %v4105, 2
      %v4142 = vsel %vm465, %v4140, %v4141
      %v4143 = vrot.slane %v4106, 2
      %v4144 = vrot.slane %v4107, 2
      %v4145 = vsel %vm465, %v4143, %v4144
      %v4146 = vrot.slane %v4108, 2
      %v4147 = vrot.slane %v4109, 2
      %v4148 = vsel %vm465, %v4146, %v4147
      %v4149 = vrot.slane %v4110, 2
      %v4150 = vrot.slane %v4111, 2
      %v4151 = vsel %vm465, %v4149, %v4150
      %v4152 = vrot.slane %v4112, 2
      %v4153 = vrot.slane %v4113, 2
      %v4154 = vsel %vm465, %v4152, %v4153
      %v4155 = vrot.slane %v4114, 2
      %v4156 = vrot.slane %v4115, 2
      %v4157 = vsel %vm465, %v4155, %v4156
      %v4158 = vrot.slane %v4116, 2
      %v4159 = vrot.slane %v4117, 2
      %v4160 = vsel %vm465, %v4158, %v4159
      %v4161 = vrot.slane %v4118, 2
      %v4162 = vrot.slane %v4119, 2
      %v4163 = vsel %vm465, %v4161, %v4162
      %v4164 = vrot.slane %v4120, 2
      %v4165 = vrot.slane %v4121, 2
      %v4166 = vsel %vm465, %v4164, %v4165
      %v4185 = vadd.f32 %v4044, %v4142
      %v4186 = vadd.f32 %v4045, %v4141
      %v4187 = vadd.f32 %v4046, %v4145
      %v4188 = vadd.f32 %v4047, %v4144
      %v4189 = vadd.f32 %v4048, %v4148
      %v4190 = vadd.f32 %v4049, %v4147
      %v4191 = vadd.f32 %v4050, %v4151
      %v4192 = vadd.f32 %v4051, %v4150
      %v4193 = vadd.f32 %v4052, %v4154
      %v4194 = vadd.f32 %v4053, %v4153
      %v4195 = vadd.f32 %v4054, %v4157
      %v4196 = vadd.f32 %v4055, %v4156
      %v4197 = vadd.f32 %v4056, %v4160
      %v4198 = vadd.f32 %v4057, %v4159
      %v4199 = vadd.f32 %v4058, %v4163
      %v4200 = vadd.f32 %v4059, %v4162
      %v4201 = vadd.f32 %v4060, %v4166
      %v4202 = vadd.f32 %v4061, %v4165
      %v4203 = vlaneseq
      %v4204 = vshrl.u32 %v4203, 7
      %v4205 = vsub.s32 3, %v4204
      %v4206 = vrot.slane %v4099, %v4205
      %v4207 = vmul.f32 %v4080, %v4206
      %v4208 = vmul.f32 %v4081, %v4206
      %v4209 = vmul.f32 %v4082, %v4206
      %v4210 = vmul.f32 %v4083, %v4206
      %v4211 = vmul.f32 %v4084, %v4206
      %v4212 = vmul.f32 %v4085, %v4206
      %v4213 = vmul.f32 %v4086, %v4206
      %v4214 = vmul.f32 %v4087, %v4206
      %v4215 = vmul.f32 %v4088, %v4206
      %v4216 = vmul.f32 %v4089, %v4206
      %v4217 = vmul.f32 %v4090, %v4206
      %v4218 = vmul.f32 %v4091, %v4206
      %v4219 = vmul.f32 %v4092, %v4206
      %v4220 = vmul.f32 %v4093, %v4206
      %v4221 = vmul.f32 %v4094, %v4206
      %v4222 = vmul.f32 %v4095, %v4206
      %v4223 = vmul.f32 %v4096, %v4206
      %v4224 = vmul.f32 %v4097, %v4206
      %v4243 = vrot.slane %v4207, 3
      %v4244 = vrot.slane %v4208, 3
      %v4245 = vsel %vm569, %v4243, %v4244
      %v4246 = vrot.slane %v4209, 3
      %v4247 = vrot.slane %v4210, 3
      %v4248 = vsel %vm569, %v4246, %v4247
      %v4249 = vrot.slane %v4211, 3
      %v4250 = vrot.slane %v4212, 3
      %v4251 = vsel %vm569, %v4249, %v4250
      %v4252 = vrot.slane %v4213, 3
      %v4253 = vrot.slane %v4214, 3
      %v4254 = vsel %vm569, %v4252, %v4253
      %v4255 = vrot.slane %v4215, 3
      %v4256 = vrot.slane %v4216, 3
      %v4257 = vsel %vm569, %v4255, %v4256
      %v4258 = vrot.slane %v4217, 3
      %v4259 = vrot.slane %v4218, 3
      %v4260 = vsel %vm569, %v4258, %v4259
      %v4261 = vrot.slane %v4219, 3
      %v4262 = vrot.slane %v4220, 3
      %v4263 = vsel %vm569, %v4261, %v4262
      %v4264 = vrot.slane %v4221, 3
      %v4265 = vrot.slane %v4222, 3
      %v4266 = vsel %vm569, %v4264, %v4265
      %v4267 = vrot.slane %v4223, 3
      %v4268 = vrot.slane %v4224, 3
      %v4269 = vsel %vm569, %v4267, %v4268
      %v4288 = vadd.f32 %v4185, %v4245
      %v4289 = vadd.f32 %v4186, %v4244
      %v4290 = vadd.f32 %v4187, %v4248
      %v4291 = vadd.f32 %v4188, %v4247
      %v4292 = vadd.f32 %v4189, %v4251
      %v4293 = vadd.f32 %v4190, %v4250
      %v4294 = vadd.f32 %v4191, %v4254
      %v4295 = vadd.f32 %v4192, %v4253
      %v4296 = vadd.f32 %v4193, %v4257
      %v4297 = vadd.f32 %v4194, %v4256
      %v4298 = vadd.f32 %v4195, %v4260
      %v4299 = vadd.f32 %v4196, %v4259
      %v4300 = vadd.f32 %v4197, %v4263
      %v4301 = vadd.f32 %v4198, %v4262
      %v4302 = vadd.f32 %v4199, %v4266
      %v4303 = vadd.f32 %v4200, %v4265
      %v4304 = vadd.f32 %v4201, %v4269
      %v4305 = vadd.f32 %v4202, %v4268
      %v4306 = vld [vmem:[%s3879] sm:$0xc]
      %v4307 = vld [vmem:[%s3879 + $0x4] sm:$0x7]
      %v4308 = vld [vmem:[%s3879 + $0x8] sm:$0xc]
      %v4309 = vld [vmem:[%s3879 + $0xc] sm:$0x7]
      %v4310 = vld [vmem:[%s3879 + $0x10] sm:$0xc]
      %v4311 = vld [vmem:[%s3879 + $0x14] sm:$0x7]
      %v4312 = vld [vmem:[%s3879 + $0x18] sm:$0xc]
      %v4313 = vld [vmem:[%s3879 + $0x1c] sm:$0x7]
      %v4314 = vld [vmem:[%s3879 + $0x20] sm:$0xc]
      %v4315 = vld [vmem:[%s3879 + $0x24] sm:$0x7]
      %v4316 = vld [vmem:[%s3879 + $0x28] sm:$0xc]
      %v4317 = vld [vmem:[%s3879 + $0x2c] sm:$0x7]
      %v4318 = vld [vmem:[%s3879 + $0x30] sm:$0xc]
      %v4319 = vld [vmem:[%s3879 + $0x34] sm:$0x7]
      %v4320 = vld [vmem:[%s3879 + $0x38] sm:$0xc]
      %v4321 = vld [vmem:[%s3879 + $0x3c] sm:$0x7]
      %v4322 = vld [vmem:[%s3879 + $0x40] sm:$0xc]
      %v4323 = vld [vmem:[%s3879 + $0x44] sm:$0x7]
      %v4324 = vunpack.c.l.bf16 %v4306
      %v4325 = vunpack.c.l.bf16 %v4307
      %v4326 = vunpack.c.l.bf16 %v4308
      %v4327 = vunpack.c.l.bf16 %v4309
      %v4328 = vunpack.c.l.bf16 %v4310
      %v4329 = vunpack.c.l.bf16 %v4311
      %v4330 = vunpack.c.l.bf16 %v4312
      %v4331 = vunpack.c.l.bf16 %v4313
      %v4332 = vunpack.c.l.bf16 %v4314
      %v4333 = vunpack.c.l.bf16 %v4315
      %v4334 = vunpack.c.l.bf16 %v4316
      %v4335 = vunpack.c.l.bf16 %v4317
      %v4336 = vunpack.c.l.bf16 %v4318
      %v4337 = vunpack.c.l.bf16 %v4319
      %v4338 = vunpack.c.l.bf16 %v4320
      %v4339 = vunpack.c.l.bf16 %v4321
      %v4340 = vunpack.c.l.bf16 %v4322
      %v4341 = vunpack.c.l.bf16 %v4323
      %v4342 = vld [vmem:[%s3916] sm:$0x4]
      %v4343 = vunpack.c.l.bf16 %v4342
      %v4344 = vlaneseq
      %v4345 = vshrl.u32 %v4344, 7
      %v4346 = vsub.s32 4, %v4345
      %v4347 = vrot.slane %v4343, %v4346
      %v4348 = vmul.f32 %v4324, %v4347
      %v4349 = vmul.f32 %v4325, %v4347
      %v4350 = vmul.f32 %v4326, %v4347
      %v4351 = vmul.f32 %v4327, %v4347
      %v4352 = vmul.f32 %v4328, %v4347
      %v4353 = vmul.f32 %v4329, %v4347
      %v4354 = vmul.f32 %v4330, %v4347
      %v4355 = vmul.f32 %v4331, %v4347
      %v4356 = vmul.f32 %v4332, %v4347
      %v4357 = vmul.f32 %v4333, %v4347
      %v4358 = vmul.f32 %v4334, %v4347
      %v4359 = vmul.f32 %v4335, %v4347
      %v4360 = vmul.f32 %v4336, %v4347
      %v4361 = vmul.f32 %v4337, %v4347
      %v4362 = vmul.f32 %v4338, %v4347
      %v4363 = vmul.f32 %v4339, %v4347
      %v4364 = vmul.f32 %v4340, %v4347
      %v4365 = vmul.f32 %v4341, %v4347
      %v4384 = vrot.slane %v4348, 4
      %v4385 = vrot.slane %v4349, 4
      %v4386 = vsel %vm711, %v4384, %v4385
      %v4387 = vrot.slane %v4350, 4
      %v4388 = vrot.slane %v4351, 4
      %v4389 = vsel %vm711, %v4387, %v4388
      %v4390 = vrot.slane %v4352, 4
      %v4391 = vrot.slane %v4353, 4
      %v4392 = vsel %vm711, %v4390, %v4391
      %v4393 = vrot.slane %v4354, 4
      %v4394 = vrot.slane %v4355, 4
      %v4395 = vsel %vm711, %v4393, %v4394
      %v4396 = vrot.slane %v4356, 4
      %v4397 = vrot.slane %v4357, 4
      %v4398 = vsel %vm711, %v4396, %v4397
      %v4399 = vrot.slane %v4358, 4
      %v4400 = vrot.slane %v4359, 4
      %v4401 = vsel %vm711, %v4399, %v4400
      %v4402 = vrot.slane %v4360, 4
      %v4403 = vrot.slane %v4361, 4
      %v4404 = vsel %vm711, %v4402, %v4403
      %v4405 = vrot.slane %v4362, 4
      %v4406 = vrot.slane %v4363, 4
      %v4407 = vsel %vm711, %v4405, %v4406
      %v4408 = vrot.slane %v4364, 4
      %v4409 = vrot.slane %v4365, 4
      %v4410 = vsel %vm711, %v4408, %v4409
      %v4429 = vadd.f32 %v4288, %v4386
      %v4430 = vadd.f32 %v4289, %v4385
      %v4431 = vadd.f32 %v4290, %v4389
      %v4432 = vadd.f32 %v4291, %v4388
      %v4433 = vadd.f32 %v4292, %v4392
      %v4434 = vadd.f32 %v4293, %v4391
      %v4435 = vadd.f32 %v4294, %v4395
      %v4436 = vadd.f32 %v4295, %v4394
      %v4437 = vadd.f32 %v4296, %v4398
      %v4438 = vadd.f32 %v4297, %v4397
      %v4439 = vadd.f32 %v4298, %v4401
      %v4440 = vadd.f32 %v4299, %v4400
      %v4441 = vadd.f32 %v4300, %v4404
      %v4442 = vadd.f32 %v4301, %v4403
      %v4443 = vadd.f32 %v4302, %v4407
      %v4444 = vadd.f32 %v4303, %v4406
      %v4445 = vadd.f32 %v4304, %v4410
      %v4446 = vadd.f32 %v4305, %v4409
      %v4447 = vlaneseq
      %v4448 = vshrl.u32 %v4447, 7
      %v4449 = vsub.s32 5, %v4448
      %v4450 = vrot.slane %v4343, %v4449
      %v4451 = vmul.f32 %v4324, %v4450
      %v4452 = vmul.f32 %v4325, %v4450
      %v4453 = vmul.f32 %v4326, %v4450
      %v4454 = vmul.f32 %v4327, %v4450
      %v4455 = vmul.f32 %v4328, %v4450
      %v4456 = vmul.f32 %v4329, %v4450
      %v4457 = vmul.f32 %v4330, %v4450
      %v4458 = vmul.f32 %v4331, %v4450
      %v4459 = vmul.f32 %v4332, %v4450
      %v4460 = vmul.f32 %v4333, %v4450
      %v4461 = vmul.f32 %v4334, %v4450
      %v4462 = vmul.f32 %v4335, %v4450
      %v4463 = vmul.f32 %v4336, %v4450
      %v4464 = vmul.f32 %v4337, %v4450
      %v4465 = vmul.f32 %v4338, %v4450
      %v4466 = vmul.f32 %v4339, %v4450
      %v4467 = vmul.f32 %v4340, %v4450
      %v4468 = vmul.f32 %v4341, %v4450
      %v4487 = vrot.slane %v4451, 5
      %v4488 = vrot.slane %v4452, 5
      %v4489 = vsel %vm815, %v4487, %v4488
      %v4490 = vrot.slane %v4453, 5
      %v4491 = vrot.slane %v4454, 5
      %v4492 = vsel %vm815, %v4490, %v4491
      %v4493 = vrot.slane %v4455, 5
      %v4494 = vrot.slane %v4456, 5
      %v4495 = vsel %vm815, %v4493, %v4494
      %v4496 = vrot.slane %v4457, 5
      %v4497 = vrot.slane %v4458, 5
      %v4498 = vsel %vm815, %v4496, %v4497
      %v4499 = vrot.slane %v4459, 5
      %v4500 = vrot.slane %v4460, 5
      %v4501 = vsel %vm815, %v4499, %v4500
      %v4502 = vrot.slane %v4461, 5
      %v4503 = vrot.slane %v4462, 5
      %v4504 = vsel %vm815, %v4502, %v4503
      %v4505 = vrot.slane %v4463, 5
      %v4506 = vrot.slane %v4464, 5
      %v4507 = vsel %vm815, %v4505, %v4506
      %v4508 = vrot.slane %v4465, 5
      %v4509 = vrot.slane %v4466, 5
      %v4510 = vsel %vm815, %v4508, %v4509
      %v4511 = vrot.slane %v4467, 5
      %v4512 = vrot.slane %v4468, 5
      %v4513 = vsel %vm815, %v4511, %v4512
      %v4532 = vadd.f32 %v4429, %v4489
      %v4533 = vadd.f32 %v4430, %v4488
      %v4534 = vadd.f32 %v4431, %v4492
      %v4535 = vadd.f32 %v4432, %v4491
      %v4536 = vadd.f32 %v4433, %v4495
      %v4537 = vadd.f32 %v4434, %v4494
      %v4538 = vadd.f32 %v4435, %v4498
      %v4539 = vadd.f32 %v4436, %v4497
      %v4540 = vadd.f32 %v4437, %v4501
      %v4541 = vadd.f32 %v4438, %v4500
      %v4542 = vadd.f32 %v4439, %v4504
      %v4543 = vadd.f32 %v4440, %v4503
      %v4544 = vadd.f32 %v4441, %v4507
      %v4545 = vadd.f32 %v4442, %v4506
      %v4546 = vadd.f32 %v4443, %v4510
      %v4547 = vadd.f32 %v4444, %v4509
      %v4548 = vadd.f32 %v4445, %v4513
      %v4549 = vadd.f32 %v4446, %v4512
      %4550 = vadd.xlane.f32.xlu0 %v4532
      %v4551 = vpop.xlane.xlu0 %4550
      %v4552 = vsel %vm881, %v4533, 0.0
      %4553 = vadd.xlane.f32.xlu0 %v4552
      %v4554 = vpop.xlane.xlu0 %4553
      %4555 = vadd.xlane.f32.xlu0 %v4534
      %v4556 = vpop.xlane.xlu0 %4555
      %v4557 = vsel %vm881, %v4535, 0.0
      %4558 = vadd.xlane.f32.xlu0 %v4557
      %v4559 = vpop.xlane.xlu0 %4558
      %4560 = vadd.xlane.f32.xlu0 %v4536
      %v4561 = vpop.xlane.xlu0 %4560
      %v4562 = vsel %vm881, %v4537, 0.0
      %4563 = vadd.xlane.f32.xlu0 %v4562
      %v4564 = vpop.xlane.xlu0 %4563
      %4565 = vadd.xlane.f32.xlu0 %v4538
      %v4566 = vpop.xlane.xlu0 %4565
      %v4567 = vsel %vm881, %v4539, 0.0
      %4568 = vadd.xlane.f32.xlu0 %v4567
      %v4569 = vpop.xlane.xlu0 %4568
      %4570 = vadd.xlane.f32.xlu0 %v4540
      %v4571 = vpop.xlane.xlu0 %4570
      %v4572 = vsel %vm881, %v4541, 0.0
      %4573 = vadd.xlane.f32.xlu0 %v4572
      %v4574 = vpop.xlane.xlu0 %4573
      %4575 = vadd.xlane.f32.xlu0 %v4542
      %v4576 = vpop.xlane.xlu0 %4575
      %v4577 = vsel %vm881, %v4543, 0.0
      %4578 = vadd.xlane.f32.xlu0 %v4577
      %v4579 = vpop.xlane.xlu0 %4578
      %4580 = vadd.xlane.f32.xlu0 %v4544
      %v4581 = vpop.xlane.xlu0 %4580
      %v4582 = vsel %vm881, %v4545, 0.0
      %4583 = vadd.xlane.f32.xlu0 %v4582
      %v4584 = vpop.xlane.xlu0 %4583
      %4585 = vadd.xlane.f32.xlu0 %v4546
      %v4586 = vpop.xlane.xlu0 %4585
      %v4587 = vsel %vm881, %v4547, 0.0
      %4588 = vadd.xlane.f32.xlu0 %v4587
      %v4589 = vpop.xlane.xlu0 %4588
      %4590 = vadd.xlane.f32.xlu0 %v4548
      %v4591 = vpop.xlane.xlu0 %4590
      %v4592 = vsel %vm881, %v4549, 0.0
      %4593 = vadd.xlane.f32.xlu0 %v4592
      %v4594 = vpop.xlane.xlu0 %4593
      %v4595 = vadd.f32 %v3861, %v4551
      %v4596 = vadd.f32 %v3862, %v4554
      %v4597 = vadd.f32 %v3863, %v4556
      %v4598 = vadd.f32 %v3864, %v4559
      %v4599 = vadd.f32 %v3865, %v4561
      %v4600 = vadd.f32 %v3866, %v4564
      %v4601 = vadd.f32 %v3867, %v4566
      %v4602 = vadd.f32 %v3868, %v4569
      %v4603 = vadd.f32 %v3869, %v4571
      %v4604 = vadd.f32 %v3870, %v4574
      %v4605 = vadd.f32 %v3871, %v4576
      %v4606 = vadd.f32 %v3872, %v4579
      %v4607 = vadd.f32 %v3873, %v4581
      %v4608 = vadd.f32 %v3874, %v4584
      %v4609 = vadd.f32 %v3875, %v4586
      %v4610 = vadd.f32 %v3876, %v4589
      %v4611 = vadd.f32 %v3877, %v4591
      %v4612 = vadd.f32 %v3878, %v4594
      %v4613 = vmul.f32 %v4595, 0.001
      %v4614 = vmul.f32 %v4596, 0.001
      %v4615 = vmul.f32 %v4597, 0.001
      %v4616 = vmul.f32 %v4598, 0.001
      %v4617 = vmul.f32 %v4599, 0.001
      %v4618 = vmul.f32 %v4600, 0.001
      %v4619 = vmul.f32 %v4601, 0.001
      %v4620 = vmul.f32 %v4602, 0.001
      %v4621 = vmul.f32 %v4603, 0.001
      %v4622 = vmul.f32 %v4604, 0.001
      %v4623 = vmul.f32 %v4605, 0.001
      %v4624 = vmul.f32 %v4606, 0.001
      %v4625 = vmul.f32 %v4607, 0.001
      %v4626 = vmul.f32 %v4608, 0.001
      %v4627 = vmul.f32 %v4609, 0.001
      %v4628 = vmul.f32 %v4610, 0.001
      %v4629 = vmul.f32 %v4611, 0.001
      %v4630 = vmul.f32 %v4612, 0.001
      %v4631 = vld [vmem:[%s195] sm:$0xff]
      %v4632 = vld [vmem:[%s195 + $0x8] sm:$0x1]
      %v4633 = vmax.f32 %v4613, 0.0
      %v4634 = vmax.f32 %v4614, 0.0
      %v4635 = vmax.f32 %v4615, 0.0
      %v4636 = vmax.f32 %v4616, 0.0
      %v4637 = vmax.f32 %v4617, 0.0
      %v4638 = vmax.f32 %v4618, 0.0
      %v4639 = vmax.f32 %v4619, 0.0
      %v4640 = vmax.f32 %v4620, 0.0
      %v4641 = vmax.f32 %v4621, 0.0
      %v4642 = vmax.f32 %v4622, 0.0
      %v4643 = vmax.f32 %v4623, 0.0
      %v4644 = vmax.f32 %v4624, 0.0
      %v4645 = vmax.f32 %v4625, 0.0
      %v4646 = vmax.f32 %v4626, 0.0
      %v4647 = vmax.f32 %v4627, 0.0
      %v4648 = vmax.f32 %v4628, 0.0
      %v4649 = vmax.f32 %v4629, 0.0
      %v4650 = vmax.f32 %v4630, 0.0
      %v4653 = vlaneseq
      %v4654 = vshrl.u32 %v4653, 7
      %v4655 = vsub.s32 0, %v4654
      %v4656 = vrot.slane %v4631, %v4655
      %4658 = vbcast.lane.b32.xlu0 %v4656, 256
      %v4659 = vpop.permute.xlu0 %4658
      %s4661 = sor.u32 256, 8
      %4662 = vbcast.lane.b32.xlu0 %v4656, %s4661
      %v4663 = vpop.permute.xlu0 %4662
      %v4664 = vlaneseq
      %v4665 = vshrl.u32 %v4664, 7
      %v4666 = vsub.s32 1, %v4665
      %v4667 = vrot.slane %v4631, %v4666
      %4669 = vbcast.lane.b32.xlu0 %v4667, 256
      %v4670 = vpop.permute.xlu0 %4669
      %s4672 = sor.u32 256, 8
      %4673 = vbcast.lane.b32.xlu0 %v4667, %s4672
      %v4674 = vpop.permute.xlu0 %4673
      %v4675 = vlaneseq
      %v4676 = vshrl.u32 %v4675, 7
      %v4677 = vsub.s32 2, %v4676
      %v4678 = vrot.slane %v4631, %v4677
      %4680 = vbcast.lane.b32.xlu0 %v4678, 256
      %v4681 = vpop.permute.xlu0 %4680
      %s4683 = sor.u32 256, 8
      %4684 = vbcast.lane.b32.xlu0 %v4678, %s4683
      %v4685 = vpop.permute.xlu0 %4684
      %v4686 = vlaneseq
      %v4687 = vshrl.u32 %v4686, 7
      %v4688 = vsub.s32 3, %v4687
      %v4689 = vrot.slane %v4631, %v4688
      %4691 = vbcast.lane.b32.xlu0 %v4689, 256
      %v4692 = vpop.permute.xlu0 %4691
      %s4694 = sor.u32 256, 8
      %4695 = vbcast.lane.b32.xlu0 %v4689, %s4694
      %v4696 = vpop.permute.xlu0 %4695
      %v4697 = vlaneseq
      %v4698 = vshrl.u32 %v4697, 7
      %v4699 = vsub.s32 4, %v4698
      %v4700 = vrot.slane %v4631, %v4699
      %4702 = vbcast.lane.b32.xlu0 %v4700, 256
      %v4703 = vpop.permute.xlu0 %4702
      %s4705 = sor.u32 256, 8
      %4706 = vbcast.lane.b32.xlu0 %v4700, %s4705
      %v4707 = vpop.permute.xlu0 %4706
      %v4708 = vlaneseq
      %v4709 = vshrl.u32 %v4708, 7
      %v4710 = vsub.s32 5, %v4709
      %v4711 = vrot.slane %v4631, %v4710
      %4713 = vbcast.lane.b32.xlu0 %v4711, 256
      %v4714 = vpop.permute.xlu0 %4713
      %s4716 = sor.u32 256, 8
      %4717 = vbcast.lane.b32.xlu0 %v4711, %s4716
      %v4718 = vpop.permute.xlu0 %4717
      %v4719 = vlaneseq
      %v4720 = vshrl.u32 %v4719, 7
      %v4721 = vsub.s32 6, %v4720
      %v4722 = vrot.slane %v4631, %v4721
      %4724 = vbcast.lane.b32.xlu0 %v4722, 256
      %v4725 = vpop.permute.xlu0 %4724
      %s4727 = sor.u32 256, 8
      %4728 = vbcast.lane.b32.xlu0 %v4722, %s4727
      %v4729 = vpop.permute.xlu0 %4728
      %v4730 = vlaneseq
      %v4731 = vshrl.u32 %v4730, 7
      %v4732 = vsub.s32 7, %v4731
      %v4733 = vrot.slane %v4631, %v4732
      %4735 = vbcast.lane.b32.xlu0 %v4733, 256
      %v4736 = vpop.permute.xlu0 %4735
      %s4738 = sor.u32 256, 8
      %4739 = vbcast.lane.b32.xlu0 %v4733, %s4738
      %v4740 = vpop.permute.xlu0 %4739
      %v4741 = vlaneseq
      %v4742 = vshrl.u32 %v4741, 7
      %v4743 = vsub.s32 0, %v4742
      %v4744 = vrot.slane %v4632, %v4743
      %4746 = vbcast.lane.b32.xlu0 %v4744, 256
      %v4747 = vpop.permute.xlu0 %4746
      %s4749 = sor.u32 256, 8
      %4750 = vbcast.lane.b32.xlu0 %v4744, %s4749
      %v4751 = vpop.permute.xlu0 %4750
      %v4770 = vmul.f32 %v4613, %v4659
      %v4771 = vmul.f32 %v4614, %v4663
      %v4772 = vmul.f32 %v4615, %v4670
      %v4773 = vmul.f32 %v4616, %v4674
      %v4774 = vmul.f32 %v4617, %v4681
      %v4775 = vmul.f32 %v4618, %v4685
      %v4776 = vmul.f32 %v4619, %v4692
      %v4777 = vmul.f32 %v4620, %v4696
      %v4778 = vmul.f32 %v4621, %v4703
      %v4779 = vmul.f32 %v4622, %v4707
      %v4780 = vmul.f32 %v4623, %v4714
      %v4781 = vmul.f32 %v4624, %v4718
      %v4782 = vmul.f32 %v4625, %v4725
      %v4783 = vmul.f32 %v4626, %v4729
      %v4784 = vmul.f32 %v4627, %v4736
      %v4785 = vmul.f32 %v4628, %v4740
      %v4786 = vmul.f32 %v4629, %v4747
      %v4787 = vmul.f32 %v4630, %v4751
      %v4788 = vsub.f32 %v4633, %v4770
      %v4789 = vsub.f32 %v4634, %v4771
      %v4790 = vsub.f32 %v4635, %v4772
      %v4791 = vsub.f32 %v4636, %v4773
      %v4792 = vsub.f32 %v4637, %v4774
      %v4793 = vsub.f32 %v4638, %v4775
      %v4794 = vsub.f32 %v4639, %v4776
      %v4795 = vsub.f32 %v4640, %v4777
      %v4796 = vsub.f32 %v4641, %v4778
      %v4797 = vsub.f32 %v4642, %v4779
      %v4798 = vsub.f32 %v4643, %v4780
      %v4799 = vsub.f32 %v4644, %v4781
      %v4800 = vsub.f32 %v4645, %v4782
      %v4801 = vsub.f32 %v4646, %v4783
      %v4802 = vsub.f32 %v4647, %v4784
      %v4803 = vsub.f32 %v4648, %v4785
      %v4804 = vsub.f32 %v4649, %v4786
      %v4805 = vsub.f32 %v4650, %v4787
      %v4806 = vand.u32 2147483647, %v4613
      %v4807 = vand.u32 2147483647, %v4614
      %v4808 = vand.u32 2147483647, %v4615
      %v4809 = vand.u32 2147483647, %v4616
      %v4810 = vand.u32 2147483647, %v4617
      %v4811 = vand.u32 2147483647, %v4618
      %v4812 = vand.u32 2147483647, %v4619
      %v4813 = vand.u32 2147483647, %v4620
      %v4814 = vand.u32 2147483647, %v4621
      %v4815 = vand.u32 2147483647, %v4622
      %v4816 = vand.u32 2147483647, %v4623
      %v4817 = vand.u32 2147483647, %v4624
      %v4818 = vand.u32 2147483647, %v4625
      %v4819 = vand.u32 2147483647, %v4626
      %v4820 = vand.u32 2147483647, %v4627
      %v4821 = vand.u32 2147483647, %v4628
      %v4822 = vand.u32 2147483647, %v4629
      %v4823 = vand.u32 2147483647, %v4630
      %v4824 = vsub.f32 0.0, %v4806
      %v4825 = vsub.f32 0.0, %v4807
      %v4826 = vsub.f32 0.0, %v4808
      %v4827 = vsub.f32 0.0, %v4809
      %v4828 = vsub.f32 0.0, %v4810
      %v4829 = vsub.f32 0.0, %v4811
      %v4830 = vsub.f32 0.0, %v4812
      %v4831 = vsub.f32 0.0, %v4813
      %v4832 = vsub.f32 0.0, %v4814
      %v4833 = vsub.f32 0.0, %v4815
      %v4834 = vsub.f32 0.0, %v4816
      %v4835 = vsub.f32 0.0, %v4817
      %v4836 = vsub.f32 0.0, %v4818
      %v4837 = vsub.f32 0.0, %v4819
      %v4838 = vsub.f32 0.0, %v4820
      %v4839 = vsub.f32 0.0, %v4821
      %v4840 = vsub.f32 0.0, %v4822
      %v4841 = vsub.f32 0.0, %v4823
      %v4842 = vmul.f32 %v4824, 1.442695
      %v4843 = vpow.pop %v4842
      %v4844 = vmul.f32 %v4825, 1.442695
      %v4845 = vpow.pop %v4844
      %v4846 = vmul.f32 %v4826, 1.442695
      %v4847 = vpow.pop %v4846
      %v4848 = vmul.f32 %v4827, 1.442695
      %v4849 = vpow.pop %v4848
      %v4850 = vmul.f32 %v4828, 1.442695
      %v4851 = vpow.pop %v4850
      %v4852 = vmul.f32 %v4829, 1.442695
      %v4853 = vpow.pop %v4852
      %v4854 = vmul.f32 %v4830, 1.442695
      %v4855 = vpow.pop %v4854
      %v4856 = vmul.f32 %v4831, 1.442695
      %v4857 = vpow.pop %v4856
      %v4858 = vmul.f32 %v4832, 1.442695
      %v4859 = vpow.pop %v4858
      %v4860 = vmul.f32 %v4833, 1.442695
      %v4861 = vpow.pop %v4860
      %v4862 = vmul.f32 %v4834, 1.442695
      %v4863 = vpow.pop %v4862
      %v4864 = vmul.f32 %v4835, 1.442695
      %v4865 = vpow.pop %v4864
      %v4866 = vmul.f32 %v4836, 1.442695
      %v4867 = vpow.pop %v4866
      %v4868 = vmul.f32 %v4837, 1.442695
      %v4869 = vpow.pop %v4868
      %v4870 = vmul.f32 %v4838, 1.442695
      %v4871 = vpow.pop %v4870
      %v4872 = vmul.f32 %v4839, 1.442695
      %v4873 = vpow.pop %v4872
      %v4874 = vmul.f32 %v4840, 1.442695
      %v4875 = vpow.pop %v4874
      %v4876 = vmul.f32 %v4841, 1.442695
      %v4877 = vpow.pop %v4876
      %v4878 = vadd.f32 %v4843, 1.0
      %v4879 = vlog2.pop %v4878
      %v4880 = vmul.f32 %v4879, 0.6931472
      %v4881 = vmul.f32 -0.5, %v4843
      %v4882 = vadd.f32 %v4881, 1.0
      %v4883 = vmul.f32 %v4882, %v4843
      %v4884 = vand.u32 2147483647, %v4843
      %vm4885 = vcmp.lt.f32.partialorder %v4884, 0.0004427343
      %v4886 = vsel %vm4885, %v4883, %v4880
      %v4887 = vadd.f32 %v4845, 1.0
      %v4888 = vlog2.pop %v4887
      %v4889 = vmul.f32 %v4888, 0.6931472
      %v4890 = vmul.f32 -0.5, %v4845
      %v4891 = vadd.f32 %v4890, 1.0
      %v4892 = vmul.f32 %v4891, %v4845
      %v4893 = vand.u32 2147483647, %v4845
      %vm4894 = vcmp.lt.f32.partialorder %v4893, 0.0004427343
      %v4895 = vsel %vm4894, %v4892, %v4889
      %v4896 = vadd.f32 %v4847, 1.0
      %v4897 = vlog2.pop %v4896
      %v4898 = vmul.f32 %v4897, 0.6931472
      %v4899 = vmul.f32 -0.5, %v4847
      %v4900 = vadd.f32 %v4899, 1.0
      %v4901 = vmul.f32 %v4900, %v4847
      %v4902 = vand.u32 2147483647, %v4847
      %vm4903 = vcmp.lt.f32.partialorder %v4902, 0.0004427343
      %v4904 = vsel %vm4903, %v4901, %v4898
      %v4905 = vadd.f32 %v4849, 1.0
      %v4906 = vlog2.pop %v4905
      %v4907 = vmul.f32 %v4906, 0.6931472
      %v4908 = vmul.f32 -0.5, %v4849
      %v4909 = vadd.f32 %v4908, 1.0
      %v4910 = vmul.f32 %v4909, %v4849
      %v4911 = vand.u32 2147483647, %v4849
      %vm4912 = vcmp.lt.f32.partialorder %v4911, 0.0004427343
      %v4913 = vsel %vm4912, %v4910, %v4907
      %v4914 = vadd.f32 %v4851, 1.0
      %v4915 = vlog2.pop %v4914
      %v4916 = vmul.f32 %v4915, 0.6931472
      %v4917 = vmul.f32 -0.5, %v4851
      %v4918 = vadd.f32 %v4917, 1.0
      %v4919 = vmul.f32 %v4918, %v4851
      %v4920 = vand.u32 2147483647, %v4851
      %vm4921 = vcmp.lt.f32.partialorder %v4920, 0.0004427343
      %v4922 = vsel %vm4921, %v4919, %v4916
      %v4923 = vadd.f32 %v4853, 1.0
      %v4924 = vlog2.pop %v4923
      %v4925 = vmul.f32 %v4924, 0.6931472
      %v4926 = vmul.f32 -0.5, %v4853
      %v4927 = vadd.f32 %v4926, 1.0
      %v4928 = vmul.f32 %v4927, %v4853
      %v4929 = vand.u32 2147483647, %v4853
      %vm4930 = vcmp.lt.f32.partialorder %v4929, 0.0004427343
      %v4931 = vsel %vm4930, %v4928, %v4925
      %v4932 = vadd.f32 %v4855, 1.0
      %v4933 = vlog2.pop %v4932
      %v4934 = vmul.f32 %v4933, 0.6931472
      %v4935 = vmul.f32 -0.5, %v4855
      %v4936 = vadd.f32 %v4935, 1.0
      %v4937 = vmul.f32 %v4936, %v4855
      %v4938 = vand.u32 2147483647, %v4855
      %vm4939 = vcmp.lt.f32.partialorder %v4938, 0.0004427343
      %v4940 = vsel %vm4939, %v4937, %v4934
      %v4941 = vadd.f32 %v4857, 1.0
      %v4942 = vlog2.pop %v4941
      %v4943 = vmul.f32 %v4942, 0.6931472
      %v4944 = vmul.f32 -0.5, %v4857
      %v4945 = vadd.f32 %v4944, 1.0
      %v4946 = vmul.f32 %v4945, %v4857
      %v4947 = vand.u32 2147483647, %v4857
      %vm4948 = vcmp.lt.f32.partialorder %v4947, 0.0004427343
      %v4949 = vsel %vm4948, %v4946, %v4943
      %v4950 = vadd.f32 %v4859, 1.0
      %v4951 = vlog2.pop %v4950
      %v4952 = vmul.f32 %v4951, 0.6931472
      %v4953 = vmul.f32 -0.5, %v4859
      %v4954 = vadd.f32 %v4953, 1.0
      %v4955 = vmul.f32 %v4954, %v4859
      %v4956 = vand.u32 2147483647, %v4859
      %vm4957 = vcmp.lt.f32.partialorder %v4956, 0.0004427343
      %v4958 = vsel %vm4957, %v4955, %v4952
      %v4959 = vadd.f32 %v4861, 1.0
      %v4960 = vlog2.pop %v4959
      %v4961 = vmul.f32 %v4960, 0.6931472
      %v4962 = vmul.f32 -0.5, %v4861
      %v4963 = vadd.f32 %v4962, 1.0
      %v4964 = vmul.f32 %v4963, %v4861
      %v4965 = vand.u32 2147483647, %v4861
      %vm4966 = vcmp.lt.f32.partialorder %v4965, 0.0004427343
      %v4967 = vsel %vm4966, %v4964, %v4961
      %v4968 = vadd.f32 %v4863, 1.0
      %v4969 = vlog2.pop %v4968
      %v4970 = vmul.f32 %v4969, 0.6931472
      %v4971 = vmul.f32 -0.5, %v4863
      %v4972 = vadd.f32 %v4971, 1.0
      %v4973 = vmul.f32 %v4972, %v4863
      %v4974 = vand.u32 2147483647, %v4863
      %vm4975 = vcmp.lt.f32.partialorder %v4974, 0.0004427343
      %v4976 = vsel %vm4975, %v4973, %v4970
      %v4977 = vadd.f32 %v4865, 1.0
      %v4978 = vlog2.pop %v4977
      %v4979 = vmul.f32 %v4978, 0.6931472
      %v4980 = vmul.f32 -0.5, %v4865
      %v4981 = vadd.f32 %v4980, 1.0
      %v4982 = vmul.f32 %v4981, %v4865
      %v4983 = vand.u32 2147483647, %v4865
      %vm4984 = vcmp.lt.f32.partialorder %v4983, 0.0004427343
      %v4985 = vsel %vm4984, %v4982, %v4979
      %v4986 = vadd.f32 %v4867, 1.0
      %v4987 = vlog2.pop %v4986
      %v4988 = vmul.f32 %v4987, 0.6931472
      %v4989 = vmul.f32 -0.5, %v4867
      %v4990 = vadd.f32 %v4989, 1.0
      %v4991 = vmul.f32 %v4990, %v4867
      %v4992 = vand.u32 2147483647, %v4867
      %vm4993 = vcmp.lt.f32.partialorder %v4992, 0.0004427343
      %v4994 = vsel %vm4993, %v4991, %v4988
      %v4995 = vadd.f32 %v4869, 1.0
      %v4996 = vlog2.pop %v4995
      %v4997 = vmul.f32 %v4996, 0.6931472
      %v4998 = vmul.f32 -0.5, %v4869
      %v4999 = vadd.f32 %v4998, 1.0
      %v5000 = vmul.f32 %v4999, %v4869
      %v5001 = vand.u32 2147483647, %v4869
      %vm5002 = vcmp.lt.f32.partialorder %v5001, 0.0004427343
      %v5003 = vsel %vm5002, %v5000, %v4997
      %v5004 = vadd.f32 %v4871, 1.0
      %v5005 = vlog2.pop %v5004
      %v5006 = vmul.f32 %v5005, 0.6931472
      %v5007 = vmul.f32 -0.5, %v4871
      %v5008 = vadd.f32 %v5007, 1.0
      %v5009 = vmul.f32 %v5008, %v4871
      %v5010 = vand.u32 2147483647, %v4871
      %vm5011 = vcmp.lt.f32.partialorder %v5010, 0.0004427343
      %v5012 = vsel %vm5011, %v5009, %v5006
      %v5013 = vadd.f32 %v4873, 1.0
      %v5014 = vlog2.pop %v5013
      %v5015 = vmul.f32 %v5014, 0.6931472
      %v5016 = vmul.f32 -0.5, %v4873
      %v5017 = vadd.f32 %v5016, 1.0
      %v5018 = vmul.f32 %v5017, %v4873
      %v5019 = vand.u32 2147483647, %v4873
      %vm5020 = vcmp.lt.f32.partialorder %v5019, 0.0004427343
      %v5021 = vsel %vm5020, %v5018, %v5015
      %v5022 = vadd.f32 %v4875, 1.0
      %v5023 = vlog2.pop %v5022
      %v5024 = vmul.f32 %v5023, 0.6931472
      %v5025 = vmul.f32 -0.5, %v4875
      %v5026 = vadd.f32 %v5025, 1.0
      %v5027 = vmul.f32 %v5026, %v4875
      %v5028 = vand.u32 2147483647, %v4875
      %vm5029 = vcmp.lt.f32.partialorder %v5028, 0.0004427343
      %v5030 = vsel %vm5029, %v5027, %v5024
      %v5031 = vadd.f32 %v4877, 1.0
      %v5032 = vlog2.pop %v5031
      %v5033 = vmul.f32 %v5032, 0.6931472
      %v5034 = vmul.f32 -0.5, %v4877
      %v5035 = vadd.f32 %v5034, 1.0
      %v5036 = vmul.f32 %v5035, %v4877
      %v5037 = vand.u32 2147483647, %v4877
      %vm5038 = vcmp.lt.f32.partialorder %v5037, 0.0004427343
      %v5039 = vsel %vm5038, %v5036, %v5033
      %v5040 = vadd.f32 %v4788, %v4886
      %v5041 = vadd.f32 %v4789, %v4895
      %v5042 = vadd.f32 %v4790, %v4904
      %v5043 = vadd.f32 %v4791, %v4913
      %v5044 = vadd.f32 %v4792, %v4922
      %v5045 = vadd.f32 %v4793, %v4931
      %v5046 = vadd.f32 %v4794, %v4940
      %v5047 = vadd.f32 %v4795, %v4949
      %v5048 = vadd.f32 %v4796, %v4958
      %v5049 = vadd.f32 %v4797, %v4967
      %v5050 = vadd.f32 %v4798, %v4976
      %v5051 = vadd.f32 %v4799, %v4985
      %v5052 = vadd.f32 %v4800, %v4994
      %v5053 = vadd.f32 %v4801, %v5003
      %v5054 = vadd.f32 %v4802, %v5012
      %v5055 = vadd.f32 %v4803, %v5021
      %v5056 = vadd.f32 %v4804, %v5030
      %v5057 = vadd.f32 %v4805, %v5039
      %vm5058 = vcmp.eq.f32.partialorder %v4631, 1.0
      %vm5059 = vcmp.eq.f32.partialorder %v4632, 1.0
      %v5060 = vsel %vm5058, 1, 0
      %v5061 = vsel %vm5059, 1, 0
      %v5062 = vcvt.s32.f32 %v5060
      %v5063 = vcvt.s32.f32 %v5061
      %vm5064 = vcmp.eq.f32.partialorder %v4631, 0.0
      %vm5065 = vcmp.eq.f32.partialorder %v4632, 0.0
      %v5066 = vsel %vm5064, 1, 0
      %v5067 = vsel %vm5065, 1, 0
      %v5068 = vcvt.s32.f32 %v5066
      %v5069 = vcvt.s32.f32 %v5067
      %v5070 = vld [vmem:[#allocation2] sm:$0x1]
      %v5073 = vlaneseq
      %v5074 = vshrl.u32 %v5073, 7
      %v5075 = vsub.s32 0, %v5074
      %v5076 = vrot.slane %v5062, %v5075
      %5078 = vbcast.lane.b32.xlu0 %v5076, 256
      %v5079 = vpop.permute.xlu0 %5078
      %s5081 = sor.u32 256, 8
      %5082 = vbcast.lane.b32.xlu0 %v5076, %s5081
      %v5083 = vpop.permute.xlu0 %5082
      %v5084 = vlaneseq
      %v5085 = vshrl.u32 %v5084, 7
      %v5086 = vsub.s32 1, %v5085
      %v5087 = vrot.slane %v5062, %v5086
      %5089 = vbcast.lane.b32.xlu0 %v5087, 256
      %v5090 = vpop.permute.xlu0 %5089
      %s5092 = sor.u32 256, 8
      %5093 = vbcast.lane.b32.xlu0 %v5087, %s5092
      %v5094 = vpop.permute.xlu0 %5093
      %v5095 = vlaneseq
      %v5096 = vshrl.u32 %v5095, 7
      %v5097 = vsub.s32 2, %v5096
      %v5098 = vrot.slane %v5062, %v5097
      %5100 = vbcast.lane.b32.xlu0 %v5098, 256
      %v5101 = vpop.permute.xlu0 %5100
      %s5103 = sor.u32 256, 8
      %5104 = vbcast.lane.b32.xlu0 %v5098, %s5103
      %v5105 = vpop.permute.xlu0 %5104
      %v5106 = vlaneseq
      %v5107 = vshrl.u32 %v5106, 7
      %v5108 = vsub.s32 3, %v5107
      %v5109 = vrot.slane %v5062, %v5108
      %5111 = vbcast.lane.b32.xlu0 %v5109, 256
      %v5112 = vpop.permute.xlu0 %5111
      %s5114 = sor.u32 256, 8
      %5115 = vbcast.lane.b32.xlu0 %v5109, %s5114
      %v5116 = vpop.permute.xlu0 %5115
      %v5117 = vlaneseq
      %v5118 = vshrl.u32 %v5117, 7
      %v5119 = vsub.s32 4, %v5118
      %v5120 = vrot.slane %v5062, %v5119
      %5122 = vbcast.lane.b32.xlu0 %v5120, 256
      %v5123 = vpop.permute.xlu0 %5122
      %s5125 = sor.u32 256, 8
      %5126 = vbcast.lane.b32.xlu0 %v5120, %s5125
      %v5127 = vpop.permute.xlu0 %5126
      %v5128 = vlaneseq
      %v5129 = vshrl.u32 %v5128, 7
      %v5130 = vsub.s32 5, %v5129
      %v5131 = vrot.slane %v5062, %v5130
      %5133 = vbcast.lane.b32.xlu0 %v5131, 256
      %v5134 = vpop.permute.xlu0 %5133
      %s5136 = sor.u32 256, 8
      %5137 = vbcast.lane.b32.xlu0 %v5131, %s5136
      %v5138 = vpop.permute.xlu0 %5137
      %v5139 = vlaneseq
      %v5140 = vshrl.u32 %v5139, 7
      %v5141 = vsub.s32 6, %v5140
      %v5142 = vrot.slane %v5062, %v5141
      %5144 = vbcast.lane.b32.xlu0 %v5142, 256
      %v5145 = vpop.permute.xlu0 %5144
      %s5147 = sor.u32 256, 8
      %5148 = vbcast.lane.b32.xlu0 %v5142, %s5147
      %v5149 = vpop.permute.xlu0 %5148
      %v5150 = vlaneseq
      %v5151 = vshrl.u32 %v5150, 7
      %v5152 = vsub.s32 7, %v5151
      %v5153 = vrot.slane %v5062, %v5152
      %5155 = vbcast.lane.b32.xlu0 %v5153, 256
      %v5156 = vpop.permute.xlu0 %5155
      %s5158 = sor.u32 256, 8
      %5159 = vbcast.lane.b32.xlu0 %v5153, %s5158
      %v5160 = vpop.permute.xlu0 %5159
      %v5161 = vlaneseq
      %v5162 = vshrl.u32 %v5161, 7
      %v5163 = vsub.s32 0, %v5162
      %v5164 = vrot.slane %v5063, %v5163
      %5166 = vbcast.lane.b32.xlu0 %v5164, 256
      %v5167 = vpop.permute.xlu0 %5166
      %s5169 = sor.u32 256, 8
      %5170 = vbcast.lane.b32.xlu0 %v5164, %s5169
      %v5171 = vpop.permute.xlu0 %5170
      %v5190 = vmul.f32 %v5040, %v5079
      %v5191 = vmul.f32 %v5041, %v5083
      %v5192 = vmul.f32 %v5042, %v5090
      %v5193 = vmul.f32 %v5043, %v5094
      %v5194 = vmul.f32 %v5044, %v5101
      %v5195 = vmul.f32 %v5045, %v5105
      %v5196 = vmul.f32 %v5046, %v5112
      %v5197 = vmul.f32 %v5047, %v5116
      %v5198 = vmul.f32 %v5048, %v5123
      %v5199 = vmul.f32 %v5049, %v5127
      %v5200 = vmul.f32 %v5050, %v5134
      %v5201 = vmul.f32 %v5051, %v5138
      %v5202 = vmul.f32 %v5052, %v5145
      %v5203 = vmul.f32 %v5053, %v5149
      %v5204 = vmul.f32 %v5054, %v5156
      %v5205 = vmul.f32 %v5055, %v5160
      %v5206 = vmul.f32 %v5056, %v5167
      %v5207 = vmul.f32 %v5057, %v5171
      %5226 = vset.pattern.permute.xlu0 0
      %5227 = vperm.xlu0 %5226, %v5190
      %v5228 = vpop.permute.xlu0 %5227
      %5229 = vset.pattern.permute.xlu0 0
      %5230 = vperm.xlu0 %5229, %v5191
      %v5231 = vpop.permute.xlu0 %5230
      %5232 = vset.pattern.permute.xlu0 0
      %5233 = vperm.xlu0 %5232, %v5192
      %v5234 = vpop.permute.xlu0 %5233
      %5235 = vset.pattern.permute.xlu0 0
      %5236 = vperm.xlu0 %5235, %v5193
      %v5237 = vpop.permute.xlu0 %5236
      %5238 = vset.pattern.permute.xlu0 0
      %5239 = vperm.xlu0 %5238, %v5194
      %v5240 = vpop.permute.xlu0 %5239
      %5241 = vset.pattern.permute.xlu0 0
      %5242 = vperm.xlu0 %5241, %v5195
      %v5243 = vpop.permute.xlu0 %5242
      %5244 = vset.pattern.permute.xlu0 0
      %5245 = vperm.xlu0 %5244, %v5196
      %v5246 = vpop.permute.xlu0 %5245
      %5247 = vset.pattern.permute.xlu0 0
      %5248 = vperm.xlu0 %5247, %v5197
      %v5249 = vpop.permute.xlu0 %5248
      %5250 = vset.pattern.permute.xlu0 0
      %5251 = vperm.xlu0 %5250, %v5198
      %v5252 = vpop.permute.xlu0 %5251
      %5253 = vset.pattern.permute.xlu0 0
      %5254 = vperm.xlu0 %5253, %v5199
      %v5255 = vpop.permute.xlu0 %5254
      %5256 = vset.pattern.permute.xlu0 0
      %5257 = vperm.xlu0 %5256, %v5200
      %v5258 = vpop.permute.xlu0 %5257
      %5259 = vset.pattern.permute.xlu0 0
      %5260 = vperm.xlu0 %5259, %v5201
      %v5261 = vpop.permute.xlu0 %5260
      %5262 = vset.pattern.permute.xlu0 0
      %5263 = vperm.xlu0 %5262, %v5202
      %v5264 = vpop.permute.xlu0 %5263
      %5265 = vset.pattern.permute.xlu0 0
      %5266 = vperm.xlu0 %5265, %v5203
      %v5267 = vpop.permute.xlu0 %5266
      %5268 = vset.pattern.permute.xlu0 0
      %5269 = vperm.xlu0 %5268, %v5204
      %v5270 = vpop.permute.xlu0 %5269
      %5271 = vset.pattern.permute.xlu0 0
      %5272 = vperm.xlu0 %5271, %v5205
      %v5273 = vpop.permute.xlu0 %5272
      %5274 = vset.pattern.permute.xlu0 0
      %5275 = vperm.xlu0 %5274, %v5206
      %v5276 = vpop.permute.xlu0 %5275
      %5277 = vset.pattern.permute.xlu0 0
      %5278 = vperm.xlu0 %5277, %v5207
      %v5279 = vpop.permute.xlu0 %5278
      %v5280 = vlaneseq
      %v5281 = vand.u32 %v5280, 127
      %v5282 = vlaneseq
      %v5283 = vshrl.u32 %v5282, 7
      %v5284 = vsub.s32 %v5281, %v5283
      %v5285 = vrot.slane %v5228, %v5284
      %v5286 = vadd.s32 %v5281, 4294967288
      %v5287 = vlaneseq
      %v5288 = vshrl.u32 %v5287, 7
      %v5289 = vsub.s32 %v5286, %v5288
      %v5290 = vrot.slane %v5231, %v5289
      %vm5291 = vcmask 130112
      %v5292 = vsel %vm5291, %v5290, %v5285
      %v5293 = vlaneseq
      %v5294 = vshrl.u32 %v5293, 7
      %v5295 = vsub.s32 %v5281, %v5294
      %v5296 = vrot.slane %v5234, %v5295
      %v5297 = vlaneseq
      %v5298 = vshrl.u32 %v5297, 7
      %v5299 = vsub.s32 %v5286, %v5298
      %v5300 = vrot.slane %v5237, %v5299
      %v5301 = vsel %vm5291, %v5300, %v5296
      %v5302 = vlaneseq
      %v5303 = vshrl.u32 %v5302, 7
      %v5304 = vsub.s32 %v5281, %v5303
      %v5305 = vrot.slane %v5240, %v5304
      %v5306 = vlaneseq
      %v5307 = vshrl.u32 %v5306, 7
      %v5308 = vsub.s32 %v5286, %v5307
      %v5309 = vrot.slane %v5243, %v5308
      %v5310 = vsel %vm5291, %v5309, %v5305
      %v5311 = vlaneseq
      %v5312 = vshrl.u32 %v5311, 7
      %v5313 = vsub.s32 %v5281, %v5312
      %v5314 = vrot.slane %v5246, %v5313
      %v5315 = vlaneseq
      %v5316 = vshrl.u32 %v5315, 7
      %v5317 = vsub.s32 %v5286, %v5316
      %v5318 = vrot.slane %v5249, %v5317
      %v5319 = vsel %vm5291, %v5318, %v5314
      %v5320 = vlaneseq
      %v5321 = vshrl.u32 %v5320, 7
      %v5322 = vsub.s32 %v5281, %v5321
      %v5323 = vrot.slane %v5252, %v5322
      %v5324 = vlaneseq
      %v5325 = vshrl.u32 %v5324, 7
      %v5326 = vsub.s32 %v5286, %v5325
      %v5327 = vrot.slane %v5255, %v5326
      %v5328 = vsel %vm5291, %v5327, %v5323
      %v5329 = vlaneseq
      %v5330 = vshrl.u32 %v5329, 7
      %v5331 = vsub.s32 %v5281, %v5330
      %v5332 = vrot.slane %v5258, %v5331
      %v5333 = vlaneseq
      %v5334 = vshrl.u32 %v5333, 7
      %v5335 = vsub.s32 %v5286, %v5334
      %v5336 = vrot.slane %v5261, %v5335
      %v5337 = vsel %vm5291, %v5336, %v5332
      %v5338 = vlaneseq
      %v5339 = vshrl.u32 %v5338, 7
      %v5340 = vsub.s32 %v5281, %v5339
      %v5341 = vrot.slane %v5264, %v5340
      %v5342 = vlaneseq
      %v5343 = vshrl.u32 %v5342, 7
      %v5344 = vsub.s32 %v5286, %v5343
      %v5345 = vrot.slane %v5267, %v5344
      %v5346 = vsel %vm5291, %v5345, %v5341
      %v5347 = vlaneseq
      %v5348 = vshrl.u32 %v5347, 7
      %v5349 = vsub.s32 %v5281, %v5348
      %v5350 = vrot.slane %v5270, %v5349
      %v5351 = vlaneseq
      %v5352 = vshrl.u32 %v5351, 7
      %v5353 = vsub.s32 %v5286, %v5352
      %v5354 = vrot.slane %v5273, %v5353
      %v5355 = vsel %vm5291, %v5354, %v5350
      %v5356 = vlaneseq
      %v5357 = vshrl.u32 %v5356, 7
      %v5358 = vsub.s32 %v5281, %v5357
      %v5359 = vrot.slane %v5276, %v5358
      %v5360 = vlaneseq
      %v5361 = vshrl.u32 %v5360, 7
      %v5362 = vsub.s32 %v5286, %v5361
      %v5363 = vrot.slane %v5279, %v5362
      %v5364 = vsel %vm5291, %v5363, %v5359
      %vm5365 = vcmask 1041409
      %v5366 = vsel %vm5365, %v5301, %v5292
      %vm5367 = vcmask 1042434
      %v5368 = vsel %vm5367, %v5310, %v5366
      %vm5369 = vcmask 1043459
      %v5370 = vsel %vm5369, %v5319, %v5368
      %vm5371 = vcmask 1044484
      %v5372 = vsel %vm5371, %v5328, %v5370
      %vm5373 = vcmask 1045509
      %v5374 = vsel %vm5373, %v5337, %v5372
      %vm5375 = vcmask 1046534
      %v5376 = vsel %vm5375, %v5346, %v5374
      %vm5377 = vcmask 1047559
      %v5378 = vsel %vm5377, %v5355, %v5376
      %vm5381 = vcmask 72704
      %v5382 = vsel %vm5381, %v5378, 0.0
      %vm5383 = vcmask 65536
      %v5384 = vsel %vm5383, %v5364, 0.0
      %v5385 = vadd.f32 %v5382, %v5384
      %5386 = vadd.xlane.f32.xlu0 %v5385
      %v5387 = vpop.xlane.xlu0 %5386
      %v5388 = vrot.slane %v5387, 4
      %v5389 = vadd.f32 %v5387, %v5388
      %v5390 = vrot.slane %v5389, 2
      %v5391 = vadd.f32 %v5389, %v5390
      %v5392 = vrot.slane %v5391, 1
      %v5393 = vadd.f32 %v5391, %v5392
      %s5394 = vtos %v5393
      %v5395 = vstv %s5394
      %v5396 = vadd.f32 %v5070, %v5395
      %vm5397 = vcmask 0
      %5398 = vst.msk [vmem:[#allocation2] sm:$0x1] %vm5397, %v5396
      %v5399 = vld [vmem:[#allocation3] sm:$0x1]
      %v5400 = vsel %vm5381, %v5062, 0.0
      %v5401 = vsel %vm5383, %v5063, 0.0
      %v5402 = vadd.f32 %v5400, %v5401
      %5403 = vadd.xlane.f32.xlu0 %v5402
      %v5404 = vpop.xlane.xlu0 %5403
      %v5405 = vrot.slane %v5404, 4
      %v5406 = vadd.f32 %v5404, %v5405
      %v5407 = vrot.slane %v5406, 2
      %v5408 = vadd.f32 %v5406, %v5407
      %v5409 = vrot.slane %v5408, 1
      %v5410 = vadd.f32 %v5408, %v5409
      %s5411 = vtos %v5410
      %v5412 = vstv %s5411
      %v5413 = vadd.f32 %v5399, %v5412
      %5414 = vst.msk [vmem:[#allocation3] sm:$0x1] %vm5397, %v5413
      %v5415 = vld [vmem:[#allocation4] sm:$0x1]
      %v5418 = vlaneseq
      %v5419 = vshrl.u32 %v5418, 7
      %v5420 = vsub.s32 0, %v5419
      %v5421 = vrot.slane %v5068, %v5420
      %5423 = vbcast.lane.b32.xlu0 %v5421, 256
      %v5424 = vpop.permute.xlu0 %5423
      %s5426 = sor.u32 256, 8
      %5427 = vbcast.lane.b32.xlu0 %v5421, %s5426
      %v5428 = vpop.permute.xlu0 %5427
      %v5429 = vlaneseq
      %v5430 = vshrl.u32 %v5429, 7
      %v5431 = vsub.s32 1, %v5430
      %v5432 = vrot.slane %v5068, %v5431
      %5434 = vbcast.lane.b32.xlu0 %v5432, 256
      %v5435 = vpop.permute.xlu0 %5434
      %s5437 = sor.u32 256, 8
      %5438 = vbcast.lane.b32.xlu0 %v5432, %s5437
      %v5439 = vpop.permute.xlu0 %5438
      %v5440 = vlaneseq
      %v5441 = vshrl.u32 %v5440, 7
      %v5442 = vsub.s32 2, %v5441
      %v5443 = vrot.slane %v5068, %v5442
      %5445 = vbcast.lane.b32.xlu0 %v5443, 256
      %v5446 = vpop.permute.xlu0 %5445
      %s5448 = sor.u32 256, 8
      %5449 = vbcast.lane.b32.xlu0 %v5443, %s5448
      %v5450 = vpop.permute.xlu0 %5449
      %v5451 = vlaneseq
      %v5452 = vshrl.u32 %v5451, 7
      %v5453 = vsub.s32 3, %v5452
      %v5454 = vrot.slane %v5068, %v5453
      %5456 = vbcast.lane.b32.xlu0 %v5454, 256
      %v5457 = vpop.permute.xlu0 %5456
      %s5459 = sor.u32 256, 8
      %5460 = vbcast.lane.b32.xlu0 %v5454, %s5459
      %v5461 = vpop.permute.xlu0 %5460
      %v5462 = vlaneseq
      %v5463 = vshrl.u32 %v5462, 7
      %v5464 = vsub.s32 4, %v5463
      %v5465 = vrot.slane %v5068, %v5464
      %5467 = vbcast.lane.b32.xlu0 %v5465, 256
      %v5468 = vpop.permute.xlu0 %5467
      %s5470 = sor.u32 256, 8
      %5471 = vbcast.lane.b32.xlu0 %v5465, %s5470
      %v5472 = vpop.permute.xlu0 %5471
      %v5473 = vlaneseq
      %v5474 = vshrl.u32 %v5473, 7
      %v5475 = vsub.s32 5, %v5474
      %v5476 = vrot.slane %v5068, %v5475
      %5478 = vbcast.lane.b32.xlu0 %v5476, 256
      %v5479 = vpop.permute.xlu0 %5478
      %s5481 = sor.u32 256, 8
      %5482 = vbcast.lane.b32.xlu0 %v5476, %s5481
      %v5483 = vpop.permute.xlu0 %5482
      %v5484 = vlaneseq
      %v5485 = vshrl.u32 %v5484, 7
      %v5486 = vsub.s32 6, %v5485
      %v5487 = vrot.slane %v5068, %v5486
      %5489 = vbcast.lane.b32.xlu0 %v5487, 256
      %v5490 = vpop.permute.xlu0 %5489
      %s5492 = sor.u32 256, 8
      %5493 = vbcast.lane.b32.xlu0 %v5487, %s5492
      %v5494 = vpop.permute.xlu0 %5493
      %v5495 = vlaneseq
      %v5496 = vshrl.u32 %v5495, 7
      %v5497 = vsub.s32 7, %v5496
      %v5498 = vrot.slane %v5068, %v5497
      %5500 = vbcast.lane.b32.xlu0 %v5498, 256
      %v5501 = vpop.permute.xlu0 %5500
      %s5503 = sor.u32 256, 8
      %5504 = vbcast.lane.b32.xlu0 %v5498, %s5503
      %v5505 = vpop.permute.xlu0 %5504
      %v5506 = vlaneseq
      %v5507 = vshrl.u32 %v5506, 7
      %v5508 = vsub.s32 0, %v5507
      %v5509 = vrot.slane %v5069, %v5508
      %5511 = vbcast.lane.b32.xlu0 %v5509, 256
      %v5512 = vpop.permute.xlu0 %5511
      %s5514 = sor.u32 256, 8
      %5515 = vbcast.lane.b32.xlu0 %v5509, %s5514
      %v5516 = vpop.permute.xlu0 %5515
      %v5535 = vmul.f32 %v5040, %v5424
      %v5536 = vmul.f32 %v5041, %v5428
      %v5537 = vmul.f32 %v5042, %v5435
      %v5538 = vmul.f32 %v5043, %v5439
      %v5539 = vmul.f32 %v5044, %v5446
      %v5540 = vmul.f32 %v5045, %v5450
      %v5541 = vmul.f32 %v5046, %v5457
      %v5542 = vmul.f32 %v5047, %v5461
      %v5543 = vmul.f32 %v5048, %v5468
      %v5544 = vmul.f32 %v5049, %v5472
      %v5545 = vmul.f32 %v5050, %v5479
      %v5546 = vmul.f32 %v5051, %v5483
      %v5547 = vmul.f32 %v5052, %v5490
      %v5548 = vmul.f32 %v5053, %v5494
      %v5549 = vmul.f32 %v5054, %v5501
      %v5550 = vmul.f32 %v5055, %v5505
      %v5551 = vmul.f32 %v5056, %v5512
      %v5552 = vmul.f32 %v5057, %v5516
      %5571 = vset.pattern.permute.xlu0 0
      %5572 = vperm.xlu0 %5571, %v5535
      %v5573 = vpop.permute.xlu0 %5572
      %5574 = vset.pattern.permute.xlu0 0
      %5575 = vperm.xlu0 %5574, %v5536
      %v5576 = vpop.permute.xlu0 %5575
      %5577 = vset.pattern.permute.xlu0 0
      %5578 = vperm.xlu0 %5577, %v5537
      %v5579 = vpop.permute.xlu0 %5578
      %5580 = vset.pattern.permute.xlu0 0
      %5581 = vperm.xlu0 %5580, %v5538
      %v5582 = vpop.permute.xlu0 %5581
      %5583 = vset.pattern.permute.xlu0 0
      %5584 = vperm.xlu0 %5583, %v5539
      %v5585 = vpop.permute.xlu0 %5584
      %5586 = vset.pattern.permute.xlu0 0
      %5587 = vperm.xlu0 %5586, %v5540
      %v5588 = vpop.permute.xlu0 %5587
      %5589 = vset.pattern.permute.xlu0 0
      %5590 = vperm.xlu0 %5589, %v5541
      %v5591 = vpop.permute.xlu0 %5590
      %5592 = vset.pattern.permute.xlu0 0
      %5593 = vperm.xlu0 %5592, %v5542
      %v5594 = vpop.permute.xlu0 %5593
      %5595 = vset.pattern.permute.xlu0 0
      %5596 = vperm.xlu0 %5595, %v5543
      %v5597 = vpop.permute.xlu0 %5596
      %5598 = vset.pattern.permute.xlu0 0
      %5599 = vperm.xlu0 %5598, %v5544
      %v5600 = vpop.permute.xlu0 %5599
      %5601 = vset.pattern.permute.xlu0 0
      %5602 = vperm.xlu0 %5601, %v5545
      %v5603 = vpop.permute.xlu0 %5602
      %5604 = vset.pattern.permute.xlu0 0
      %5605 = vperm.xlu0 %5604, %v5546
      %v5606 = vpop.permute.xlu0 %5605
      %5607 = vset.pattern.permute.xlu0 0
      %5608 = vperm.xlu0 %5607, %v5547
      %v5609 = vpop.permute.xlu0 %5608
      %5610 = vset.pattern.permute.xlu0 0
      %5611 = vperm.xlu0 %5610, %v5548
      %v5612 = vpop.permute.xlu0 %5611
      %5613 = vset.pattern.permute.xlu0 0
      %5614 = vperm.xlu0 %5613, %v5549
      %v5615 = vpop.permute.xlu0 %5614
      %5616 = vset.pattern.permute.xlu0 0
      %5617 = vperm.xlu0 %5616, %v5550
      %v5618 = vpop.permute.xlu0 %5617
      %5619 = vset.pattern.permute.xlu0 0
      %5620 = vperm.xlu0 %5619, %v5551
      %v5621 = vpop.permute.xlu0 %5620
      %5622 = vset.pattern.permute.xlu0 0
      %5623 = vperm.xlu0 %5622, %v5552
      %v5624 = vpop.permute.xlu0 %5623
      %v5625 = vlaneseq
      %v5626 = vshrl.u32 %v5625, 7
      %v5627 = vsub.s32 %v5281, %v5626
      %v5628 = vrot.slane %v5573, %v5627
      %v5629 = vlaneseq
      %v5630 = vshrl.u32 %v5629, 7
      %v5631 = vsub.s32 %v5286, %v5630
      %v5632 = vrot.slane %v5576, %v5631
      %v5633 = vsel %vm5291, %v5632, %v5628
      %v5634 = vlaneseq
      %v5635 = vshrl.u32 %v5634, 7
      %v5636 = vsub.s32 %v5281, %v5635
      %v5637 = vrot.slane %v5579, %v5636
      %v5638 = vlaneseq
      %v5639 = vshrl.u32 %v5638, 7
      %v5640 = vsub.s32 %v5286, %v5639
      %v5641 = vrot.slane %v5582, %v5640
      %v5642 = vsel %vm5291, %v5641, %v5637
      %v5643 = vlaneseq
      %v5644 = vshrl.u32 %v5643, 7
      %v5645 = vsub.s32 %v5281, %v5644
      %v5646 = vrot.slane %v5585, %v5645
      %v5647 = vlaneseq
      %v5648 = vshrl.u32 %v5647, 7
      %v5649 = vsub.s32 %v5286, %v5648
      %v5650 = vrot.slane %v5588, %v5649
      %v5651 = vsel %vm5291, %v5650, %v5646
      %v5652 = vlaneseq
      %v5653 = vshrl.u32 %v5652, 7
      %v5654 = vsub.s32 %v5281, %v5653
      %v5655 = vrot.slane %v5591, %v5654
      %v5656 = vlaneseq
      %v5657 = vshrl.u32 %v5656, 7
      %v5658 = vsub.s32 %v5286, %v5657
      %v5659 = vrot.slane %v5594, %v5658
      %v5660 = vsel %vm5291, %v5659, %v5655
      %v5661 = vlaneseq
      %v5662 = vshrl.u32 %v5661, 7
      %v5663 = vsub.s32 %v5281, %v5662
      %v5664 = vrot.slane %v5597, %v5663
      %v5665 = vlaneseq
      %v5666 = vshrl.u32 %v5665, 7
      %v5667 = vsub.s32 %v5286, %v5666
      %v5668 = vrot.slane %v5600, %v5667
      %v5669 = vsel %vm5291, %v5668, %v5664
      %v5670 = vlaneseq
      %v5671 = vshrl.u32 %v5670, 7
      %v5672 = vsub.s32 %v5281, %v5671
      %v5673 = vrot.slane %v5603, %v5672
      %v5674 = vlaneseq
      %v5675 = vshrl.u32 %v5674, 7
      %v5676 = vsub.s32 %v5286, %v5675
      %v5677 = vrot.slane %v5606, %v5676
      %v5678 = vsel %vm5291, %v5677, %v5673
      %v5679 = vlaneseq
      %v5680 = vshrl.u32 %v5679, 7
      %v5681 = vsub.s32 %v5281, %v5680
      %v5682 = vrot.slane %v5609, %v5681
      %v5683 = vlaneseq
      %v5684 = vshrl.u32 %v5683, 7
      %v5685 = vsub.s32 %v5286, %v5684
      %v5686 = vrot.slane %v5612, %v5685
      %v5687 = vsel %vm5291, %v5686, %v5682
      %v5688 = vlaneseq
      %v5689 = vshrl.u32 %v5688, 7
      %v5690 = vsub.s32 %v5281, %v5689
      %v5691 = vrot.slane %v5615, %v5690
      %v5692 = vlaneseq
      %v5693 = vshrl.u32 %v5692, 7
      %v5694 = vsub.s32 %v5286, %v5693
      %v5695 = vrot.slane %v5618, %v5694
      %v5696 = vsel %vm5291, %v5695, %v5691
      %v5697 = vlaneseq
      %v5698 = vshrl.u32 %v5697, 7
      %v5699 = vsub.s32 %v5281, %v5698
      %v5700 = vrot.slane %v5621, %v5699
      %v5701 = vlaneseq
      %v5702 = vshrl.u32 %v5701, 7
      %v5703 = vsub.s32 %v5286, %v5702
      %v5704 = vrot.slane %v5624, %v5703
      %v5705 = vsel %vm5291, %v5704, %v5700
      %v5706 = vsel %vm5365, %v5642, %v5633
      %v5707 = vsel %vm5367, %v5651, %v5706
      %v5708 = vsel %vm5369, %v5660, %v5707
      %v5709 = vsel %vm5371, %v5669, %v5708
      %v5710 = vsel %vm5373, %v5678, %v5709
      %v5711 = vsel %vm5375, %v5687, %v5710
      %v5712 = vsel %vm5377, %v5696, %v5711
      %v5715 = vsel %vm5381, %v5712, 0.0
      %v5716 = vsel %vm5383, %v5705, 0.0
      %v5717 = vadd.f32 %v5715, %v5716
      %5718 = vadd.xlane.f32.xlu0 %v5717
      %v5719 = vpop.xlane.xlu0 %5718
      %v5720 = vrot.slane %v5719, 4
      %v5721 = vadd.f32 %v5719, %v5720
      %v5722 = vrot.slane %v5721, 2
      %v5723 = vadd.f32 %v5721, %v5722
      %v5724 = vrot.slane %v5723, 1
      %v5725 = vadd.f32 %v5723, %v5724
      %s5726 = vtos %v5725
      %v5727 = vstv %s5726
      %v5728 = vadd.f32 %v5415, %v5727
      %5729 = vst.msk [vmem:[#allocation4] sm:$0x1] %vm5397, %v5728
      %v5730 = vld [vmem:[#allocation5] sm:$0x1]
      %v5731 = vsel %vm5381, %v5068, 0.0
      %v5732 = vsel %vm5383, %v5069, 0.0
      %v5733 = vadd.f32 %v5731, %v5732
      %5734 = vadd.xlane.f32.xlu0 %v5733
      %v5735 = vpop.xlane.xlu0 %5734
      %v5736 = vrot.slane %v5735, 4
      %v5737 = vadd.f32 %v5735, %v5736
      %v5738 = vrot.slane %v5737, 2
      %v5739 = vadd.f32 %v5737, %v5738
      %v5740 = vrot.slane %v5739, 1
      %v5741 = vadd.f32 %v5739, %v5740
      %s5742 = vtos %v5741
      %v5743 = vstv %s5742
      %v5744 = vadd.f32 %v5730, %v5743
      %5745 = vst.msk [vmem:[#allocation5] sm:$0x1] %vm5397, %v5744
      %p5746 = scmp.eq.s32.totalorder %s14, 1
      // Predicated region
      $region37: #{siamfc_forward.5} parent=31 // pred_check
        %p5747 = pneg %p5746
      $region38: #{siamfc_forward.5} parent=31 // pred_check_branch
        %5749 = sbr.rel (%p5747) target = $region40
      $region39: #{siamfc_forward.5} parent=31 // pred_region
        %v5750 = vld [vmem:[#allocation2] sm:$0x1]
        %v5751 = vld [vmem:[#allocation3] sm:$0x1]
        %v5752 = vmax.f32 %v5751, 1.0
        %v5753 = vrcp.pop %v5752
        %v5754 = vmul.f32 %v5750, %v5753
        %v5755 = vld [vmem:[#allocation4] sm:$0x1]
        %v5756 = vld [vmem:[#allocation5] sm:$0x1]
        %v5757 = vmax.f32 %v5756, 1.0
        %v5758 = vrcp.pop %v5757
        %v5759 = vmul.f32 %v5755, %v5758
        %v5760 = vmul.f32 %v5754, 0.5
        %v5761 = vmul.f32 %v5759, 0.5
        %v5762 = vadd.f32 %v5760, %v5761
        %v5764 = vlaneseq
        %v5765 = vshrl.u32 %v5764, 7
        %v5766 = vsub.s32 0, %v5765
        %v5767 = vrot.slane %v5762, %v5766
        %5768 = vset.pattern.permute.xlu0 0
        %5769 = vperm.xlu0 %5768, %v5767
        %v5770 = vpop.permute.xlu0 %5769
        %5772 = vst [vmem:[%s3] sm:$0xff] %v5770
      $region40: #{siamfc_forward.5} parent=31 // pred_fallthru
        _
      // Predicated region
      $region41: #{siamfc_forward.5} parent=31 // pred_check
        %p5773 = pneg %p105
      $region42: #{siamfc_forward.5} parent=31 // pred_check_branch
        %5775 = sbr.rel (%p5773) target = $region44
      $region43: #{siamfc_forward.5} parent=31 // pred_region
        _
      $region44: #{siamfc_forward.5} parent=31 // pred_fallthru
        _
      // Predicated region
      $region45: #{siamfc_forward.5} parent=31 // pred_check
        %p5776 = pneg %p105
      $region46: #{siamfc_forward.5} parent=31 // pred_check_branch
        %5778 = sbr.rel (%p5776) target = $region48
      $region47: #{siamfc_forward.5} parent=31 // pred_region
        _
      $region48: #{siamfc_forward.5} parent=31 // pred_fallthru
        _
    $region32: #{siamfc_forward.5} parent=5 // pred_fallthru
      _
    %p5779 = scmp.le.s32.totalorder 2, %s9
    // Predicated region
    $region49: #{siamfc_forward.5} parent=5 // pred_check
      %p5780 = pneg %p5779
    $region50: #{siamfc_forward.5} parent=5 // pred_check_branch
      %5782 = sbr.rel (%p5780) target = $region52
    $region51: #{siamfc_forward.5} parent=5 // pred_region
      %s5783 = ssub.s32 %s9, 2
    $region52: #{siamfc_forward.5} parent=5 // pred_fallthru
      _
  $region6: #{siamfc_forward.5} parent=0 // loop_footer
    %s13 = sadd.s32 1, %s9
  $region7: #{siamfc_forward.5} parent=0 // loop_footer_branch
    %8 = sbr.rel target = $region3
  $region8: #{siamfc_forward.5} parent=0 // loop_exit
    _

</llo_original>
